<compile_context>
chip_gen: v7x
topology: tpu7x:2x2x1
jax: 0.10.0
libtpu: 0.0.40
codegen_flags: <defaults>
</compile_context>

<pallas_src>
import functools
import math

import jax
import jax.numpy as jnp
from jax.experimental import pallas as pl
from jax.experimental.pallas import tpu as pltpu


# ----------------------------------------------------------------------------
# Fused MLP kernel
# ----------------------------------------------------------------------------
def _fused_mlp_kernel(x_ref, w1_ref, b1_ref, wh_ref, bh_ref, whd_ref, bhd_ref,
                      out_ref, act_ref):
    """Grid = (num_hidden_layers,).

    x_ref   : (B, in_dim)        bf16   (resident)
    w1_ref  : (in_dim, H)        bf16   (resident)  first Linear
    b1_ref  : (1, H)             f32    (resident)
    wh_ref  : (1, H, H)          bf16   hidden layer l's weight (streamed per step)
    bh_ref  : (L, 1, H)          f32    all hidden biases (resident, indexed by l)
    whd_ref : (H, 128)           bf16   fused [policy | value | 0-pad] head weight
    bhd_ref : (1, 128)           f32
    out_ref : (B, 128)           f32    lane-dense fused head output
    act_ref : (2, B, H)          bf16   VMEM ping-pong activation scratch
    """
    l = pl.program_id(0)          # hidden layer index (0..L-1)
    n_layers = pl.num_programs(0)

    # ---- prologue: first Linear(in_dim -> H) + ReLU, done once ----
    @pl.when(l == 0)
    def _():
        h0 = jnp.dot(x_ref[...], w1_ref[...], preferred_element_type=jnp.float32)
        act_ref[0] = jnp.maximum(h0 + b1_ref[...], 0.0).astype(jnp.bfloat16)

    # ---- hidden layer l: (B,H) @ (H,H) + bias, ReLU ----
    src = l % 2                    # layer l reads act[src], writes act[1-src]
    dst = 1 - src
    y = jnp.dot(act_ref[src], wh_ref[0], preferred_element_type=jnp.float32)
    y = jnp.maximum(y + bh_ref[l], 0.0)                      # (B, H) f32
    act_ref[dst] = y.astype(jnp.bfloat16)

    # ---- epilogue: fused policy+value head, single lane-dense store ----
    @pl.when(l == n_layers - 1)
    def _():
        lat = act_ref[dst]                                   # final latent (B, H) bf16
        head = jnp.dot(lat, whd_ref[...], preferred_element_type=jnp.float32)
        out_ref[...] = head + bhd_ref[...]


@functools.partial(jax.jit, static_argnames=("policy_dim",))
def mlp_forward(x, w1, b1, wh, bh, w_head, b_head, *, policy_dim):
    """x:(B,Din) bf16, w1:(Din,H) bf16, b1:(1,H) f32, wh:(L,H,H) bf16, bh:(L,1,H) f32,
    w_head:(H,128) bf16, b_head:(1,128) f32  ->  (policy (B,P), value (B,1)) f32."""
    B, Din = x.shape
    L, H, _ = wh.shape
    head_pad = w_head.shape[1]

    out = pl.pallas_call(
        _fused_mlp_kernel,
        out_shape=jax.ShapeDtypeStruct((B, head_pad), jnp.float32),
        grid=(L,),
        in_specs=[
            pl.BlockSpec((B, Din), lambda l: (0, 0)),          # x (resident)
            pl.BlockSpec((Din, H), lambda l: (0, 0)),          # w1 (resident)
            pl.BlockSpec((1, H), lambda l: (0, 0)),            # b1 (resident)
            pl.BlockSpec((1, H, H), lambda l: (l, 0, 0)),      # hidden weight (streamed)
            pl.BlockSpec((L, 1, H), lambda l: (0, 0, 0)),      # hidden biases (resident)
            pl.BlockSpec((H, head_pad), lambda l: (0, 0)),     # fused head weight
            pl.BlockSpec((1, head_pad), lambda l: (0, 0)),     # fused head bias
        ],
        out_specs=pl.BlockSpec((B, head_pad), lambda l: (0, 0)),
        scratch_shapes=[pltpu.VMEM((2, B, H), jnp.bfloat16)],  # activation ping-pong
        compiler_params=pltpu.CompilerParams(
            # layers depend on each other through the shared act_ref scratch:
            # this axis must stay sequential ("arbitrary"), never "parallel".
            dimension_semantics=("arbitrary",)),
    )(x, w1, b1, wh, bh, w_head, b_head)

    policy = out[:, :policy_dim]
    value = out[:, policy_dim:policy_dim + 1]
    return policy, value


# ----------------------------------------------------------------------------
# Deterministic parameter init (mirrors nn.init.orthogonal_(gain) + zero bias)
# ----------------------------------------------------------------------------
def orthogonal(key, out_dim, in_dim, gain):
    rows, cols = out_dim, in_dim
    a = jax.random.normal(key, (max(rows, cols), min(rows, cols)), jnp.float32)
    q, r = jnp.linalg.qr(a)
    q = q * jnp.sign(jnp.diag(r))           # make decomposition unique
    if rows < cols:
        q = q.T
    return gain * q[:rows, :cols]           # (out_dim, in_dim), PyTorch convention


if __name__ == "__main__":
    in_dim, policy_dim, hidden, batch = 32, 6, 1024, 128
    HEAD_PAD = 128                           # policy_dim + 1 padded lane-dense

    key = jax.random.PRNGKey(0)
    kx, k1, k2, k3, k4, kp, kv = jax.random.split(key, 7)

    # Inputs
    x = jax.random.normal(kx, (batch, in_dim), jnp.float32)

    # Parameters (stored transposed: (in_features, out_features))
    w1 = orthogonal(k1, hidden, in_dim, math.sqrt(2)).T                       # (Din, H)
    wh = jnp.stack([orthogonal(k, hidden, hidden, math.sqrt(2)).T
                    for k in (k2, k3, k4)])                                    # (3, H, H)
    wp = orthogonal(kp, policy_dim, hidden, 0.01).T                            # (H, P)
    wv = orthogonal(kv, 1, hidden, 1.0).T                                      # (H, 1)

    b1 = jnp.zeros((1, hidden), jnp.float32)
    bh = jnp.zeros((wh.shape[0], 1, hidden), jnp.float32)
    w_head = (jnp.zeros((hidden, HEAD_PAD), jnp.float32)
              .at[:, :policy_dim].set(wp)
              .at[:, policy_dim:policy_dim + 1].set(wv))                       # [wp|wv|0]
    b_head = jnp.zeros((1, HEAD_PAD), jnp.float32)

    # bf16 weights/activations on the MXU; biases + accumulation stay f32
    x_bf = x.astype(jnp.bfloat16)
    w1_bf = w1.astype(jnp.bfloat16)
    wh_bf = wh.astype(jnp.bfloat16)
    whd_bf = w_head.astype(jnp.bfloat16)

    policy_out, value_out = mlp_forward(x_bf, w1_bf, b1, wh_bf, bh, whd_bf, b_head,
                                        policy_dim=policy_dim)
    jax.block_until_ready((policy_out, value_out))

    # Pure-JAX reference with identical bf16-matmul / f32-accumulate math
    h = jnp.maximum(jnp.dot(x_bf, w1_bf, preferred_element_type=jnp.float32) + b1, 0.0)
    for i in range(wh_bf.shape[0]):
        h = jnp.maximum(
            jnp.dot(h.astype(jnp.bfloat16), wh_bf[i],
                    preferred_element_type=jnp.float32) + bh[i], 0.0)
    full = jnp.dot(h.astype(jnp.bfloat16), whd_bf,
                   preferred_element_type=jnp.float32) + b_head
    p_ref = full[:, :policy_dim]
    v_ref = full[:, policy_dim:policy_dim + 1]

    assert policy_out.shape == (batch, policy_dim)
    assert value_out.shape == (batch, 1)
    assert jnp.allclose(policy_out, p_ref, atol=1e-3, rtol=1e-3)
    assert jnp.allclose(value_out, v_ref, atol=1e-3, rtol=1e-3)

    print("KERNEL_OK")
</pallas_src>

<mosaic_0001>
module attributes {stable_mosaic.version = 11 : i64} {
  func.func @_fused_mlp_kernel(%arg0: i32, %arg1: memref<128x32xbf16, #tpu.memory_space<vmem>>, %arg2: memref<32x1024xbf16, #tpu.memory_space<vmem>>, %arg3: memref<1x1024xf32, #tpu.memory_space<vmem>>, %arg4: memref<1x1024x1024xbf16, #tpu.memory_space<vmem>>, %arg5: memref<3x1x1024xf32, #tpu.memory_space<vmem>>, %arg6: memref<1024x128xbf16, #tpu.memory_space<vmem>>, %arg7: memref<1x128xf32, #tpu.memory_space<vmem>>, %arg8: memref<128x128xf32, #tpu.memory_space<vmem>>, %arg9: memref<2x128x1024xbf16, #tpu.memory_space<vmem>>) attributes {dimension_semantics = [#tpu.dimension_semantics<arbitrary>], iteration_bounds = array<i64: 3>, scalar_prefetch = 0 : i64, scratch_operands = 1 : i64, tpu.core_type = #tpu.core_type<tc>, window_params = [{pipeline_mode = #tpu.pipeline_mode<synchronous>, transform_indices = @transform_0, window_bounds = array<i64: 128, 32>}, {pipeline_mode = #tpu.pipeline_mode<synchronous>, transform_indices = @transform_1, window_bounds = array<i64: 32, 1024>}, {pipeline_mode = #tpu.pipeline_mode<synchronous>, transform_indices = @transform_2, window_bounds = array<i64: 1, 1024>}, {transform_indices = @transform_3, window_bounds = array<i64: 1, 1024, 1024>}, {pipeline_mode = #tpu.pipeline_mode<synchronous>, transform_indices = @transform_4, window_bounds = array<i64: 3, 1, 1024>}, {pipeline_mode = #tpu.pipeline_mode<synchronous>, transform_indices = @transform_5, window_bounds = array<i64: 1024, 128>}, {pipeline_mode = #tpu.pipeline_mode<synchronous>, transform_indices = @transform_6, window_bounds = array<i64: 1, 128>}, {pipeline_mode = #tpu.pipeline_mode<synchronous>, transform_indices = @transform_7, window_bounds = array<i64: 128, 128>}]} {
    %c0_i32 = arith.constant 0 : i32
    %0 = arith.cmpi eq, %arg0, %c0_i32 : i32
    %1 = arith.extui %0 : i1 to i32
    %c0_i32_0 = arith.constant 0 : i32
    %2 = arith.cmpi ne, %1, %c0_i32_0 : i32
    scf.if %2 {
      %c0_17 = arith.constant 0 : index
      %c0_18 = arith.constant 0 : index
      %35 = vector.load %arg1[%c0_17, %c0_18] : memref<128x32xbf16, #tpu.memory_space<vmem>>, vector<128x32xbf16>
      %c0_19 = arith.constant 0 : index
      %c0_20 = arith.constant 0 : index
      %36 = vector.load %arg2[%c0_19, %c0_20] : memref<32x1024xbf16, #tpu.memory_space<vmem>>, vector<32x1024xbf16>
      %cst_21 = arith.constant dense<0.000000e+00> : vector<128x1024xf32>
      %37 = tpu.matmul %35, %36, %cst_21 {dimension_numbers = #tpu.dot_dimension_numbers<[1], [0], [0], [1], [0, 0, 1, 1], [], []>} : vector<128x32xbf16>, vector<32x1024xbf16>, vector<128x1024xf32> -> vector<128x1024xf32>
      %c0_22 = arith.constant 0 : index
      %c0_23 = arith.constant 0 : index
      %38 = vector.load %arg3[%c0_22, %c0_23] : memref<1x1024xf32, #tpu.memory_space<vmem>>, vector<1x1024xf32>
      %39 = vector.broadcast %38 : vector<1x1024xf32> to vector<128x1024xf32>
      %40 = arith.addf %37, %39 : vector<128x1024xf32>
      %cst_24 = arith.constant 0.000000e+00 : f32
      %41 = vector.broadcast %cst_24 : f32 to vector<128x1024xf32>
      %42 = arith.maximumf %40, %41 : vector<128x1024xf32>
      %43 = arith.truncf %42 : vector<128x1024xf32> to vector<128x1024xbf16>
      %c0_25 = arith.constant 0 : index
      %c0_26 = arith.constant 0 : index
      %c0_27 = arith.constant 0 : index
      %44 = vector.load %arg9[%c0_25, %c0_26, %c0_27] : memref<2x128x1024xbf16, #tpu.memory_space<vmem>>, vector<1x128x1024xbf16>
      %45 = vector.shape_cast %44 : vector<1x128x1024xbf16> to vector<128x1024xbf16>
      %46 = vector.shape_cast %43 : vector<128x1024xbf16> to vector<1x128x1024xbf16>
      tpu.vector_store %arg9[%c0_25, %c0_26, %c0_27], %46 {strides = array<i32>} : memref<2x128x1024xbf16, #tpu.memory_space<vmem>>, vector<1x128x1024xbf16>,
    } else {
    }
    %c2_i32 = arith.constant 2 : i32
    %c0_i32_1 = arith.constant 0 : i32
    %3 = arith.cmpi eq, %c2_i32, %c0_i32_1 : i32
    %c1_i32 = arith.constant 1 : i32
    %4 = arith.select %3, %c1_i32, %c2_i32 : i32
    %5 = arith.remsi %arg0, %4 : i32
    %c0_i32_2 = arith.constant 0 : i32
    %6 = arith.cmpi ne, %5, %c0_i32_2 : i32
    %c0_i32_3 = arith.constant 0 : i32
    %7 = arith.cmpi slt, %5, %c0_i32_3 : i32
    %c0_i32_4 = arith.constant 0 : i32
    %8 = arith.cmpi slt, %4, %c0_i32_4 : i32
    %9 = arith.xori %7, %8 : i1
    %10 = arith.andi %9, %6 : i1
    %11 = arith.addi %5, %4 : i32
    %12 = arith.select %10, %11, %5 : i32
    %c1_i32_5 = arith.constant 1 : i32
    %13 = arith.subi %c1_i32_5, %12 : i32
    %14 = arith.index_cast %12 : i32 to index
    %c0 = arith.constant 0 : index
    %c0_6 = arith.constant 0 : index
    %15 = vector.load %arg9[%14, %c0, %c0_6] : memref<2x128x1024xbf16, #tpu.memory_space<vmem>>, vector<1x128x1024xbf16>
    %16 = vector.shape_cast %15 : vector<1x128x1024xbf16> to vector<128x1024xbf16>
    %c0_7 = arith.constant 0 : index
    %c0_8 = arith.constant 0 : index
    %c0_9 = arith.constant 0 : index
    %17 = vector.load %arg4[%c0_7, %c0_8, %c0_9] : memref<1x1024x1024xbf16, #tpu.memory_space<vmem>>, vector<1x1024x1024xbf16>
    %18 = vector.shape_cast %17 : vector<1x1024x1024xbf16> to vector<1024x1024xbf16>
    %cst = arith.constant dense<0.000000e+00> : vector<128x1024xf32>
    %19 = tpu.matmul %16, %18, %cst {dimension_numbers = #tpu.dot_dimension_numbers<[1], [0], [0], [1], [0, 0, 1, 1], [], []>} : vector<128x1024xbf16>, vector<1024x1024xbf16>, vector<128x1024xf32> -> vector<128x1024xf32>
    %20 = arith.index_cast %arg0 : i32 to index
    %c0_10 = arith.constant 0 : index
    %c0_11 = arith.constant 0 : index
    %21 = vector.load %arg5[%20, %c0_10, %c0_11] : memref<3x1x1024xf32, #tpu.memory_space<vmem>>, vector<1x1x1024xf32>
    %22 = vector.shape_cast %21 : vector<1x1x1024xf32> to vector<1x1024xf32>
    %23 = vector.broadcast %22 : vector<1x1024xf32> to vector<128x1024xf32>
    %24 = arith.addf %19, %23 : vector<128x1024xf32>
    %cst_12 = arith.constant 0.000000e+00 : f32
    %25 = vector.broadcast %cst_12 : f32 to vector<128x1024xf32>
    %26 = arith.maximumf %24, %25 : vector<128x1024xf32>
    %27 = arith.truncf %26 : vector<128x1024xf32> to vector<128x1024xbf16>
    %28 = arith.index_cast %13 : i32 to index
    %c0_13 = arith.constant 0 : index
    %c0_14 = arith.constant 0 : index
    %29 = vector.load %arg9[%28, %c0_13, %c0_14] : memref<2x128x1024xbf16, #tpu.memory_space<vmem>>, vector<1x128x1024xbf16>
    %30 = vector.shape_cast %29 : vector<1x128x1024xbf16> to vector<128x1024xbf16>
    %31 = vector.shape_cast %27 : vector<128x1024xbf16> to vector<1x128x1024xbf16>
    tpu.vector_store %arg9[%28, %c0_13, %c0_14], %31 {strides = array<i32>} : memref<2x128x1024xbf16, #tpu.memory_space<vmem>>, vector<1x128x1024xbf16>,
    %c2_i32_15 = arith.constant 2 : i32
    %32 = arith.cmpi eq, %arg0, %c2_i32_15 : i32
    %33 = arith.extui %32 : i1 to i32
    %c0_i32_16 = arith.constant 0 : i32
    %34 = arith.cmpi ne, %33, %c0_i32_16 : i32
    scf.if %34 {
      %35 = arith.index_cast %13 : i32 to index
      %c0_17 = arith.constant 0 : index
      %c0_18 = arith.constant 0 : index
      %36 = vector.load %arg9[%35, %c0_17, %c0_18] : memref<2x128x1024xbf16, #tpu.memory_space<vmem>>, vector<1x128x1024xbf16>
      %37 = vector.shape_cast %36 : vector<1x128x1024xbf16> to vector<128x1024xbf16>
      %c0_19 = arith.constant 0 : index
      %c0_20 = arith.constant 0 : index
      %38 = vector.load %arg6[%c0_19, %c0_20] : memref<1024x128xbf16, #tpu.memory_space<vmem>>, vector<1024x128xbf16>
      %cst_21 = arith.constant dense<0.000000e+00> : vector<128x128xf32>
      %39 = tpu.matmul %37, %38, %cst_21 {dimension_numbers = #tpu.dot_dimension_numbers<[1], [0], [0], [1], [0, 0, 1, 1], [], []>} : vector<128x1024xbf16>, vector<1024x128xbf16>, vector<128x128xf32> -> vector<128x128xf32>
      %c0_22 = arith.constant 0 : index
      %c0_23 = arith.constant 0 : index
      %40 = vector.load %arg7[%c0_22, %c0_23] : memref<1x128xf32, #tpu.memory_space<vmem>>, vector<1x128xf32>
      %41 = vector.broadcast %40 : vector<1x128xf32> to vector<128x128xf32>
      %42 = arith.addf %39, %41 : vector<128x128xf32>
      %c0_24 = arith.constant 0 : index
      %c0_25 = arith.constant 0 : index
      %43 = vector.load %arg8[%c0_24, %c0_25] : memref<128x128xf32, #tpu.memory_space<vmem>>, vector<128x128xf32>
      tpu.vector_store %arg8[%c0_24, %c0_25], %42 {strides = array<i32>} : memref<128x128xf32, #tpu.memory_space<vmem>>, vector<128x128xf32>,
    } else {
    }
    return
  }
  func.func @transform_0(%arg0: i32) -> (i32, i32) {
    %c0_i32 = arith.constant 0 : i32
    %c0_i32_0 = arith.constant 0 : i32
    %c0_i32_1 = arith.constant 0 : i32
    return %c0_i32, %c0_i32_0 : i32, i32
  }
  func.func @transform_1(%arg0: i32) -> (i32, i32) {
    %c0_i32 = arith.constant 0 : i32
    %c0_i32_0 = arith.constant 0 : i32
    %c0_i32_1 = arith.constant 0 : i32
    return %c0_i32, %c0_i32_0 : i32, i32
  }
  func.func @transform_2(%arg0: i32) -> (i32, i32) {
    %c0_i32 = arith.constant 0 : i32
    %c0_i32_0 = arith.constant 0 : i32
    %c0_i32_1 = arith.constant 0 : i32
    return %c0_i32, %c0_i32_0 : i32, i32
  }
  func.func @transform_3(%arg0: i32) -> (i32, i32, i32) {
    %c0_i32 = arith.constant 0 : i32
    %c0_i32_0 = arith.constant 0 : i32
    %c0_i32_1 = arith.constant 0 : i32
    return %arg0, %c0_i32, %c0_i32_0 : i32, i32, i32
  }
  func.func @transform_4(%arg0: i32) -> (i32, i32, i32) {
    %c0_i32 = arith.constant 0 : i32
    %c0_i32_0 = arith.constant 0 : i32
    %c0_i32_1 = arith.constant 0 : i32
    %c0_i32_2 = arith.constant 0 : i32
    return %c0_i32, %c0_i32_0, %c0_i32_1 : i32, i32, i32
  }
  func.func @transform_5(%arg0: i32) -> (i32, i32) {
    %c0_i32 = arith.constant 0 : i32
    %c0_i32_0 = arith.constant 0 : i32
    %c0_i32_1 = arith.constant 0 : i32
    return %c0_i32, %c0_i32_0 : i32, i32
  }
  func.func @transform_6(%arg0: i32) -> (i32, i32) {
    %c0_i32 = arith.constant 0 : i32
    %c0_i32_0 = arith.constant 0 : i32
    %c0_i32_1 = arith.constant 0 : i32
    return %c0_i32, %c0_i32_0 : i32, i32
  }
  func.func @transform_7(%arg0: i32) -> (i32, i32) {
    %c0_i32 = arith.constant 0 : i32
    %c0_i32_0 = arith.constant 0 : i32
    %c0_i32_1 = arith.constant 0 : i32
    return %c0_i32, %c0_i32_0 : i32, i32
  }
}

</mosaic_0001>

<llo_original>
// kernel: mlp_forward.1
$region0: #{mlp_forward.1}
  #allocation0 [shape = 'u32[]', space=smem, size = 0x4, offset = 0x4, fixed_abs, tag = 'smem constant byte address 0x4 - core index']
  #allocation1 [shape = 'u32[144,128]{1,0:T(1,128)}', space=vmem, size = 0x12000, scoped, tag = 'internal scratch']
  #allocation2 [shape = 'bf16[2,128,1024]{2,1,0:T(16,128)(2,1)}', space=vmem, size = 0x80000, scoped, tag = 'scratch operand']
  %s0 = inlined_call_operand.vmem [shape: bf16[128,32], index: 0, kind: input, shape index: {}]
  %s1 = inlined_call_operand.hbm [shape: bf16[32,1024], index: 1, kind: input, shape index: {}]
  %s2 = inlined_call_operand.hbm [shape: f32[1,1024], index: 2, kind: input, shape index: {}]
  %s3 = inlined_call_operand.hbm [shape: bf16[3,1024,1024], index: 3, kind: input, shape index: {}]
  %s4 = inlined_call_operand.hbm [shape: f32[3,1,1024], index: 4, kind: input, shape index: {}]
  %s5 = inlined_call_operand.hbm [shape: bf16[1024,128], index: 5, kind: input, shape index: {}]
  %s6 = inlined_call_operand.hbm [shape: f32[1,128], index: 6, kind: input, shape index: {}]
  %s7 = inlined_call_operand.vmem [shape: f32[128,128], index: 7, kind: output, shape index: {}]
  %s8 = sld [smem:[#allocation0]]
  $region93: #{mlp_forward.1} parent=0
    _
  %s10 = ssub.s32 1, %s8
  %s11 = scalar_select 0, %s10, %s8
  $region1: #{mlp_forward.1} parent=0
    #allocation3 [shape = 'u8[65536]{0}', space=vmem, size = 0x10000, scoped, tag = 'input window, operand 1, single buffered']
    #allocation4 [shape = 's32[2]{0}', space=sflag, size = 0x8, scoped, tag = 'scoped memory for mlp_forward.1']
    #allocation5 [shape = 'u8[4096]{0}', space=vmem, size = 0x1000, scoped, tag = 'input window, operand 2, single buffered']
    #allocation6 [shape = 's32[1]{0}', space=sflag, size = 0x4, scoped, tag = 'scoped memory for mlp_forward.1']
    #allocation7 [shape = 'u8[4194304]{0}', space=vmem, size = 0x400000, scoped, tag = 'input window, operand 3']
    #allocation8 [shape = 'u8[12288]{0}', space=vmem, size = 0x3000, scoped, tag = 'input window, operand 4, single buffered']
    #allocation9 [shape = 'u8[262144]{0}', space=vmem, size = 0x40000, scoped, tag = 'input window, operand 5, single buffered']
    #allocation10 [shape = 's32[1]{0}', space=sflag, size = 0x4, scoped, tag = 'scoped memory for mlp_forward.1']
    #allocation11 [shape = 'u8[512]{0}', space=vmem, size = 0x400, scoped, tag = 'input window, operand 6, single buffered']
    %12 = vsyncpa [#allocation4], 0
    %13 = vsyncpa [#allocation6], 0
    %14 = vsyncpa [#allocation10], 0
    loop: start=0, step=1, limit=5
    $region2: #{mlp_forward.1} parent=1 // loop_pre_header
      _
    $region3: #{mlp_forward.1} parent=1 // loop_header
      %s16 = sphi 0, %s20
      %p17 = scmp.ge.s32.totalorder %s16, 5
      %s24 = sphi 0, %s24
      %s26 = sphi 0, %s24
      %s27 = sphi 0, %s26
      %s41 = sphi 0, %s27
      %s45 = sphi 0, %s45
      %s47 = sphi 0, %s45
      %s48 = sphi 0, %s47
      %s62 = sphi 0, %s48
      %s66 = sphi 0, %s66
      %s68 = sphi 0, %s66
      %s69 = sphi 0, %s68
      %s83 = sphi 0, %s69
      %s89 = sphi 0, %s91
      %s92 = sphi 0, %s89
      %s93 = sphi 0, %s92
      %s109 = sphi 0, %s93
      %s113 = sphi 0, %s113
      %s115 = sphi 0, %s113
      %s116 = sphi 0, %s115
      %s130 = sphi 0, %s116
      %s134 = sphi 0, %s134
      %s136 = sphi 0, %s134
      %s137 = sphi 0, %s136
      %s151 = sphi 0, %s137
      %s155 = sphi 0, %s155
      %s157 = sphi 0, %s155
      %s158 = sphi 0, %s157
      %s172 = sphi 0, %s158
      %s176 = sphi 0, %s176
      %s178 = sphi 0, %s176
      %s179 = sphi 0, %s178
      %s193 = sphi 0, %s179
    $region4: #{mlp_forward.1} parent=1 // loop_header_branch
      %19 = sbr.rel (%p17) target = $region8
    $region5: #{mlp_forward.1} parent=1 // loop_body
      %s21 = ssub.s32 %s16, 1
      %s22 = ssub.s32 %s16, 2
      %s23 = sadd.s32 %s16, 1
      %s25 = sadd.s32 %s24, 1
      %p28 = scmp.eq.s32.totalorder %s16, 2
      %p29 = scmp.ne.s32.totalorder %s24, %s26
      %p30 = scmp.eq.s32.totalorder %s16, 0
      %p31 = por %p29, %p30
      %p32 = scmp.ne.s32.totalorder %s24, %s26
      %p33 = scmp.eq.s32.totalorder %s21, 2
      %p34 = por %p32, %p33
      %p35 = scmp.ne.s32.totalorder %s26, %s27
      %p36 = scmp.eq.s32.totalorder %s21, 0
      %p37 = por %p35, %p36
      %p38 = scmp.ne.s32.totalorder %s26, %s27
      %p39 = scmp.eq.s32.totalorder %s22, 2
      %p40 = por %p38, %p39
      %p42 = scmp.ne.s32.totalorder %s27, %s41
      %p43 = scmp.eq.s32.totalorder %s22, 0
      %p44 = por %p42, %p43
      %s46 = sadd.s32 %s45, 1
      %p49 = scmp.eq.s32.totalorder %s16, 2
      %p50 = scmp.ne.s32.totalorder %s45, %s47
      %p51 = scmp.eq.s32.totalorder %s16, 0
      %p52 = por %p50, %p51
      %p53 = scmp.ne.s32.totalorder %s45, %s47
      %p54 = scmp.eq.s32.totalorder %s21, 2
      %p55 = por %p53, %p54
      %p56 = scmp.ne.s32.totalorder %s47, %s48
      %p57 = scmp.eq.s32.totalorder %s21, 0
      %p58 = por %p56, %p57
      %p59 = scmp.ne.s32.totalorder %s47, %s48
      %p60 = scmp.eq.s32.totalorder %s22, 2
      %p61 = por %p59, %p60
      %p63 = scmp.ne.s32.totalorder %s48, %s62
      %p64 = scmp.eq.s32.totalorder %s22, 0
      %p65 = por %p63, %p64
      %s67 = sadd.s32 %s66, 1
      %p70 = scmp.eq.s32.totalorder %s16, 2
      %p71 = scmp.ne.s32.totalorder %s66, %s68
      %p72 = scmp.eq.s32.totalorder %s16, 0
      %p73 = por %p71, %p72
      %p74 = scmp.ne.s32.totalorder %s66, %s68
      %p75 = scmp.eq.s32.totalorder %s21, 2
      %p76 = por %p74, %p75
      %p77 = scmp.ne.s32.totalorder %s68, %s69
      %p78 = scmp.eq.s32.totalorder %s21, 0
      %p79 = por %p77, %p78
      %p80 = scmp.ne.s32.totalorder %s68, %s69
      %p81 = scmp.eq.s32.totalorder %s22, 2
      %p82 = por %p80, %p81
      %p84 = scmp.ne.s32.totalorder %s69, %s83
      %p85 = scmp.eq.s32.totalorder %s22, 0
      %p86 = por %p84, %p85
      %s87 = ssub.s32 %s16, %s23
      %p88 = scmp.eq.s32.totalorder %s87, 0
      %s90 = sadd.s32 %s89, 1
      %s91 = scalar_select %p88, %s89, %s90
      %p94 = pneg %p88
      %p95 = scmp.eq.s32.totalorder %s16, 2
      %p96 = por %p94, %p95
      %p97 = scmp.ne.s32.totalorder %s89, %s92
      %p98 = scmp.eq.s32.totalorder %s16, 0
      %p99 = por %p97, %p98
      %p100 = scmp.ne.s32.totalorder %s89, %s92
      %p101 = scmp.eq.s32.totalorder %s21, 2
      %p102 = por %p100, %p101
      %p103 = scmp.ne.s32.totalorder %s92, %s93
      %p104 = scmp.eq.s32.totalorder %s21, 0
      %p105 = por %p103, %p104
      %p106 = scmp.ne.s32.totalorder %s92, %s93
      %p107 = scmp.eq.s32.totalorder %s22, 2
      %p108 = por %p106, %p107
      %p110 = scmp.ne.s32.totalorder %s93, %s109
      %p111 = scmp.eq.s32.totalorder %s22, 0
      %p112 = por %p110, %p111
      %s114 = sadd.s32 %s113, 1
      %p117 = scmp.eq.s32.totalorder %s16, 2
      %p118 = scmp.ne.s32.totalorder %s113, %s115
      %p119 = scmp.eq.s32.totalorder %s16, 0
      %p120 = por %p118, %p119
      %p121 = scmp.ne.s32.totalorder %s113, %s115
      %p122 = scmp.eq.s32.totalorder %s21, 2
      %p123 = por %p121, %p122
      %p124 = scmp.ne.s32.totalorder %s115, %s116
      %p125 = scmp.eq.s32.totalorder %s21, 0
      %p126 = por %p124, %p125
      %p127 = scmp.ne.s32.totalorder %s115, %s116
      %p128 = scmp.eq.s32.totalorder %s22, 2
      %p129 = por %p127, %p128
      %p131 = scmp.ne.s32.totalorder %s116, %s130
      %p132 = scmp.eq.s32.totalorder %s22, 0
      %p133 = por %p131, %p132
      %s135 = sadd.s32 %s134, 1
      %p138 = scmp.eq.s32.totalorder %s16, 2
      %p139 = scmp.ne.s32.totalorder %s134, %s136
      %p140 = scmp.eq.s32.totalorder %s16, 0
      %p141 = por %p139, %p140
      %p142 = scmp.ne.s32.totalorder %s134, %s136
      %p143 = scmp.eq.s32.totalorder %s21, 2
      %p144 = por %p142, %p143
      %p145 = scmp.ne.s32.totalorder %s136, %s137
      %p146 = scmp.eq.s32.totalorder %s21, 0
      %p147 = por %p145, %p146
      %p148 = scmp.ne.s32.totalorder %s136, %s137
      %p149 = scmp.eq.s32.totalorder %s22, 2
      %p150 = por %p148, %p149
      %p152 = scmp.ne.s32.totalorder %s137, %s151
      %p153 = scmp.eq.s32.totalorder %s22, 0
      %p154 = por %p152, %p153
      %s156 = sadd.s32 %s155, 1
      %p159 = scmp.eq.s32.totalorder %s16, 2
      %p160 = scmp.ne.s32.totalorder %s155, %s157
      %p161 = scmp.eq.s32.totalorder %s16, 0
      %p162 = por %p160, %p161
      %p163 = scmp.ne.s32.totalorder %s155, %s157
      %p164 = scmp.eq.s32.totalorder %s21, 2
      %p165 = por %p163, %p164
      %p166 = scmp.ne.s32.totalorder %s157, %s158
      %p167 = scmp.eq.s32.totalorder %s21, 0
      %p168 = por %p166, %p167
      %p169 = scmp.ne.s32.totalorder %s157, %s158
      %p170 = scmp.eq.s32.totalorder %s22, 2
      %p171 = por %p169, %p170
      %p173 = scmp.ne.s32.totalorder %s158, %s172
      %p174 = scmp.eq.s32.totalorder %s22, 0
      %p175 = por %p173, %p174
      %s177 = sadd.s32 %s176, 1
      %p180 = scmp.eq.s32.totalorder %s16, 2
      %p181 = scmp.ne.s32.totalorder %s176, %s178
      %p182 = scmp.eq.s32.totalorder %s16, 0
      %p183 = por %p181, %p182
      %p184 = scmp.ne.s32.totalorder %s176, %s178
      %p185 = scmp.eq.s32.totalorder %s21, 2
      %p186 = por %p184, %p185
      %p187 = scmp.ne.s32.totalorder %s178, %s179
      %p188 = scmp.eq.s32.totalorder %s21, 0
      %p189 = por %p187, %p188
      %p190 = scmp.ne.s32.totalorder %s178, %s179
      %p191 = scmp.eq.s32.totalorder %s22, 2
      %p192 = por %p190, %p191
      %p194 = scmp.ne.s32.totalorder %s179, %s193
      %p195 = scmp.eq.s32.totalorder %s22, 0
      %p196 = por %p194, %p195
      %p197 = scmp.le.s32.totalorder 1, %s16
      %p198 = scmp.lt.s32.totalorder %s16, 4
      %p199 = pnand %p197, %p198
      %p200 = pneg %p199
      // Predicated region
      $region9: #{mlp_forward.1} parent=5 // pred_check
        _
      $region10: #{mlp_forward.1} parent=5 // pred_check_branch
        %202 = sbr.rel (%p199) target = $region12
      $region11: #{mlp_forward.1} parent=5 // pred_region
        %s203 = ssub.s32 %s16, 1
        // Predicated region
        $region13: #{mlp_forward.1} parent=11 // pred_check
          %p204 = pneg %p37
        $region14: #{mlp_forward.1} parent=11 // pred_check_branch
          %206 = sbr.rel (%p204) target = $region16
        $region15: #{mlp_forward.1} parent=11 // pred_region
          _
        $region16: #{mlp_forward.1} parent=11 // pred_fallthru
          _
        // Predicated region
        $region17: #{mlp_forward.1} parent=11 // pred_check
          %p207 = pneg %p58
        $region18: #{mlp_forward.1} parent=11 // pred_check_branch
          %209 = sbr.rel (%p207) target = $region20
        $region19: #{mlp_forward.1} parent=11 // pred_region
          %s211 = ssub.s32 2048, 2048
          %212 = vsyncadd [#allocation4], %s211
          %s213 = sshll.u32 [#allocation3], 4
          %s214 = int_to_ptr.vmem [resolvable:$true] %s213
          %219 = dma.hbm_to_vmem [thread:$0]  %s1, 2048, %s214, [#allocation4], 512, 512, 32
        $region20: #{mlp_forward.1} parent=11 // pred_fallthru
          _
        // Predicated region
        $region21: #{mlp_forward.1} parent=11 // pred_check
          %p220 = pneg %p79
        $region22: #{mlp_forward.1} parent=11 // pred_check_branch
          %222 = sbr.rel (%p220) target = $region24
        $region23: #{mlp_forward.1} parent=11 // pred_region
          %s224 = ssub.s32 128, 128
          %225 = vsyncadd [#allocation6], %s224
          %s227 = sshll.u32 [#allocation5], 4
          %s228 = int_to_ptr.vmem [resolvable:$true] %s227
          %230 = dma.hbm_to_vmem [thread:$0]  %s2, 128, %s228, [#allocation6]
        $region24: #{mlp_forward.1} parent=11 // pred_fallthru
          _
        // Predicated region
        $region25: #{mlp_forward.1} parent=11 // pred_check
          %p231 = pneg %p126
        $region26: #{mlp_forward.1} parent=11 // pred_check_branch
          %233 = sbr.rel (%p231) target = $region28
        $region27: #{mlp_forward.1} parent=11 // pred_region
          %s235 = ssub.s32 384, 384
          %236 = vsyncadd [#allocation6], %s235
          %s237 = sshll.u32 [#allocation8], 4
          %s238 = int_to_ptr.vmem [resolvable:$true] %s237
          %243 = dma.hbm_to_vmem [thread:$0]  %s4, 384, %s238, [#allocation6], 128, 128, 8
        $region28: #{mlp_forward.1} parent=11 // pred_fallthru
          _
        // Predicated region
        $region29: #{mlp_forward.1} parent=11 // pred_check
          %p244 = pneg %p147
        $region30: #{mlp_forward.1} parent=11 // pred_check_branch
          %246 = sbr.rel (%p244) target = $region32
        $region31: #{mlp_forward.1} parent=11 // pred_region
          %s248 = ssub.s32 8192, 8192
          %249 = vsyncadd [#allocation10], %s248
          %s250 = sshll.u32 [#allocation9], 4
          %s251 = int_to_ptr.vmem [resolvable:$true] %s250
          %256 = dma.hbm_to_vmem [thread:$0]  %s5, 8192, %s251, [#allocation10], 64, 64, 4
        $region32: #{mlp_forward.1} parent=11 // pred_fallthru
          _
        // Predicated region
        $region33: #{mlp_forward.1} parent=11 // pred_check
          %p257 = pneg %p168
        $region34: #{mlp_forward.1} parent=11 // pred_check_branch
          %259 = sbr.rel (%p257) target = $region36
        $region35: #{mlp_forward.1} parent=11 // pred_region
          %s261 = ssub.s32 16, 16
          %262 = vsyncadd [#allocation10], %s261
          %s264 = sshll.u32 [#allocation11], 4
          %s265 = int_to_ptr.vmem [resolvable:$true] %s264
          %267 = dma.hbm_to_vmem [thread:$0]  %s6, 16, %s265, [#allocation10]
        $region36: #{mlp_forward.1} parent=11 // pred_fallthru
          _
      $region12: #{mlp_forward.1} parent=5 // pred_fallthru
        _
      %p268 = scmp.lt.s32.totalorder %s16, 3
      // Predicated region
      $region37: #{mlp_forward.1} parent=5 // pred_check
        %p269 = pneg %p268
      $region38: #{mlp_forward.1} parent=5 // pred_check_branch
        %271 = sbr.rel (%p269) target = $region40
      $region39: #{mlp_forward.1} parent=5 // pred_region
        // Predicated region
        $region41: #{mlp_forward.1} parent=39 // pred_check
          %p272 = pneg %p99
        $region42: #{mlp_forward.1} parent=39 // pred_check_branch
          %274 = sbr.rel (%p272) target = $region44
        $region43: #{mlp_forward.1} parent=39 // pred_region
          %s275 = sand.u32 %s16, 1
          %s276 = scalar_lea.sflag [#allocation4], %s275
          %s277 = sand.u32 %s89, 1
          %s278 = smul.addr %s277, 4096
          %s279 = scalar_lea.vmem [#allocation7], %s278
          %s281 = ssub.s32 65536, 65536
          %282 = vsyncadd %s276, %s281
          %s283 = smul.addr %s16, 1024
          %s284 = smul.addr %s283, 64
          %s285 = scalar_lea.hbm %s3, %s284
          %s286 = sshll.u32 %s279, 4
          %s287 = int_to_ptr.vmem [resolvable:$true] %s286
          %292 = dma.hbm_to_vmem [thread:$0]  %s285, 65536, %s287, %s276, 512, 512, 32
        $region44: #{mlp_forward.1} parent=39 // pred_fallthru
          _
      $region40: #{mlp_forward.1} parent=5 // pred_fallthru
        _
      %p293 = scmp.le.s32.totalorder 1, %s16
      %p294 = scmp.lt.s32.totalorder %s16, 4
      %p295 = pnand %p293, %p294
      %p296 = pneg %p295
      // Predicated region
      $region45: #{mlp_forward.1} parent=5 // pred_check
        _
      $region46: #{mlp_forward.1} parent=5 // pred_check_branch
        %298 = sbr.rel (%p295) target = $region48
      $region47: #{mlp_forward.1} parent=5 // pred_region
        %s299 = ssub.s32 %s16, 1
        // Predicated region
        $region49: #{mlp_forward.1} parent=47 // pred_check
          %p300 = pneg %p58
        $region50: #{mlp_forward.1} parent=47 // pred_check_branch
          %302 = sbr.rel (%p300) target = $region52
        $region51: #{mlp_forward.1} parent=47 // pred_region
          %303 = dma.done [#allocation4], 2048
        $region52: #{mlp_forward.1} parent=47 // pred_fallthru
          _
        // Predicated region
        $region53: #{mlp_forward.1} parent=47 // pred_check
          %p304 = pneg %p79
        $region54: #{mlp_forward.1} parent=47 // pred_check_branch
          %306 = sbr.rel (%p304) target = $region56
        $region55: #{mlp_forward.1} parent=47 // pred_region
          %307 = dma.done [#allocation6], 128
        $region56: #{mlp_forward.1} parent=47 // pred_fallthru
          _
        %s308 = sand.u32 %s21, 1
        %s309 = scalar_lea.sflag [#allocation4], %s308
        %s310 = sand.u32 %s92, 1
        %s311 = smul.addr %s310, 4096
        %s312 = scalar_lea.vmem [#allocation7], %s311
        // Predicated region
        $region57: #{mlp_forward.1} parent=47 // pred_check
          %p313 = pneg %p105
        $region58: #{mlp_forward.1} parent=47 // pred_check_branch
          %315 = sbr.rel (%p313) target = $region60
        $region59: #{mlp_forward.1} parent=47 // pred_region
          %316 = dma.done %s309, 65536
        $region60: #{mlp_forward.1} parent=47 // pred_fallthru
          _
        // Predicated region
        $region61: #{mlp_forward.1} parent=47 // pred_check
          %p317 = pneg %p126
        $region62: #{mlp_forward.1} parent=47 // pred_check_branch
          %319 = sbr.rel (%p317) target = $region64
        $region63: #{mlp_forward.1} parent=47 // pred_region
          %320 = dma.done [#allocation6], 384
        $region64: #{mlp_forward.1} parent=47 // pred_fallthru
          _
        // Predicated region
        $region65: #{mlp_forward.1} parent=47 // pred_check
          %p321 = pneg %p147
        $region66: #{mlp_forward.1} parent=47 // pred_check_branch
          %323 = sbr.rel (%p321) target = $region68
        $region67: #{mlp_forward.1} parent=47 // pred_region
          %324 = dma.done [#allocation10], 8192
        $region68: #{mlp_forward.1} parent=47 // pred_fallthru
          _
        // Predicated region
        $region69: #{mlp_forward.1} parent=47 // pred_check
          %p325 = pneg %p168
        $region70: #{mlp_forward.1} parent=47 // pred_check_branch
          %327 = sbr.rel (%p325) target = $region72
        $region71: #{mlp_forward.1} parent=47 // pred_region
          %328 = dma.done [#allocation10], 16
        $region72: #{mlp_forward.1} parent=47 // pred_fallthru
          _
        %p329 = pneg %p37
        %p330 = pneg %p34
        %p331 = pneg %p58
        %p332 = pneg %p55
        %p333 = pneg %p79
        %p334 = pneg %p76
        %s335 = sand.u32 %s21, 1
        %s336 = scalar_lea.sflag [#allocation4], %s335
        %s337 = sand.u32 %s92, 1
        %s338 = smul.addr %s337, 4096
        %s339 = scalar_lea.vmem [#allocation7], %s338
        %p340 = pneg %p105
        %p341 = pneg %p102
        %p342 = pneg %p126
        %p343 = pneg %p123
        %p344 = pneg %p147
        %p345 = pneg %p144
        %p346 = pneg %p168
        %p347 = pneg %p165
        %p348 = pneg %p189
        %p349 = pneg %p186
        %p351 = scmp.eq.s32.totalorder %s21, 0
        // Predicated region
        $region73: #{mlp_forward.1} parent=47 // pred_check
          %p352 = pneg %p351
        $region74: #{mlp_forward.1} parent=47 // pred_check_branch
          %354 = sbr.rel (%p352) target = $region76
        $region75: #{mlp_forward.1} parent=47 // pred_region
          %v355 = vld [vmem:[%s0] sm:$0xf]
          %v356 = vld [vmem:[%s0 + $0x4] sm:$0xf]
          %v357 = vld [vmem:[%s0 + $0x8] sm:$0xf]
          %v358 = vld [vmem:[%s0 + $0xc] sm:$0xf]
          %v359 = vld [vmem:[%s0 + $0x10] sm:$0xf]
          %v360 = vld [vmem:[%s0 + $0x14] sm:$0xf]
          %v361 = vld [vmem:[%s0 + $0x18] sm:$0xf]
          %v362 = vld [vmem:[%s0 + $0x1c] sm:$0xf]
          %v363 = vld [vmem:[%s0 + $0x20] sm:$0xf]
          %v364 = vld [vmem:[%s0 + $0x24] sm:$0xf]
          %v365 = vld [vmem:[%s0 + $0x28] sm:$0xf]
          %v366 = vld [vmem:[%s0 + $0x2c] sm:$0xf]
          %v367 = vld [vmem:[%s0 + $0x30] sm:$0xf]
          %v368 = vld [vmem:[%s0 + $0x34] sm:$0xf]
          %v369 = vld [vmem:[%s0 + $0x38] sm:$0xf]
          %v370 = vld [vmem:[%s0 + $0x3c] sm:$0xf]
          %v371 = vld [vmem:[#allocation3] sm:$0xff]
          %v372 = vld [vmem:[#allocation3 + $0x8] sm:$0xff]
          %v373 = vld [vmem:[#allocation3 + $0x10] sm:$0xff]
          %v374 = vld [vmem:[#allocation3 + $0x18] sm:$0xff]
          %v375 = vld [vmem:[#allocation3 + $0x20] sm:$0xff]
          %v376 = vld [vmem:[#allocation3 + $0x28] sm:$0xff]
          %v377 = vld [vmem:[#allocation3 + $0x30] sm:$0xff]
          %v378 = vld [vmem:[#allocation3 + $0x38] sm:$0xff]
          %v379 = vld [vmem:[#allocation3 + $0x40] sm:$0xff]
          %v380 = vld [vmem:[#allocation3 + $0x48] sm:$0xff]
          %v381 = vld [vmem:[#allocation3 + $0x50] sm:$0xff]
          %v382 = vld [vmem:[#allocation3 + $0x58] sm:$0xff]
          %v383 = vld [vmem:[#allocation3 + $0x60] sm:$0xff]
          %v384 = vld [vmem:[#allocation3 + $0x68] sm:$0xff]
          %v385 = vld [vmem:[#allocation3 + $0x70] sm:$0xff]
          %v386 = vld [vmem:[#allocation3 + $0x78] sm:$0xff]
          %v387 = vld [vmem:[#allocation5] sm:$0xff]
          %v389 = vlaneseq
          %v390 = vshrl.u32 %v389, 7
          %v391 = vsub.s32 0, %v390
          %v392 = vrot.slane %v387, %v391
          %v393 = vlaneseq
          %v394 = vshrl.u32 %v393, 7
          %v395 = vsub.s32 1, %v394
          %v396 = vrot.slane %v387, %v395
          %v397 = vlaneseq
          %v398 = vshrl.u32 %v397, 7
          %v399 = vsub.s32 2, %v398
          %v400 = vrot.slane %v387, %v399
          %v401 = vlaneseq
          %v402 = vshrl.u32 %v401, 7
          %v403 = vsub.s32 3, %v402
          %v404 = vrot.slane %v387, %v403
          %v405 = vlaneseq
          %v406 = vshrl.u32 %v405, 7
          %v407 = vsub.s32 4, %v406
          %v408 = vrot.slane %v387, %v407
          %v409 = vlaneseq
          %v410 = vshrl.u32 %v409, 7
          %v411 = vsub.s32 5, %v410
          %v412 = vrot.slane %v387, %v411
          %v413 = vlaneseq
          %v414 = vshrl.u32 %v413, 7
          %v415 = vsub.s32 6, %v414
          %v416 = vrot.slane %v387, %v415
          %v417 = vlaneseq
          %v418 = vshrl.u32 %v417, 7
          %v419 = vsub.s32 7, %v418
          %v420 = vrot.slane %v387, %v419
          %v445 = vunpack.c.l.b16 %v355
          %v446 = vunpack.c.l.b16 %v356
          %v447 = vunpack.c.l.b16 %v357
          %v448 = vunpack.c.l.b16 %v358
          %v449 = vunpack.c.l.b16 %v359
          %v450 = vunpack.c.l.b16 %v360
          %v451 = vunpack.c.l.b16 %v361
          %v452 = vunpack.c.l.b16 %v362
          %v453 = vunpack.c.l.b16 %v363
          %v454 = vunpack.c.l.b16 %v364
          %v455 = vunpack.c.l.b16 %v365
          %v456 = vunpack.c.l.b16 %v366
          %v457 = vunpack.c.l.b16 %v367
          %v458 = vunpack.c.l.b16 %v368
          %v459 = vunpack.c.l.b16 %v369
          %v460 = vunpack.c.l.b16 %v370
          %v461 = vpack.c.b16 %v446, %v445
          %v462 = vpack.c.b16 %v448, %v447
          %v463 = vpack.c.b16 %v450, %v449
          %v464 = vpack.c.b16 %v452, %v451
          %v465 = vpack.c.b16 %v454, %v453
          %v466 = vpack.c.b16 %v456, %v455
          %v467 = vpack.c.b16 %v458, %v457
          %v468 = vpack.c.b16 %v460, %v459
          %v485 = vunpack.c.l.b16 %v371
          %v486 = vunpack.c.h.b16 %v371
          %v487 = vunpack.c.l.b16 %v372
          %v488 = vunpack.c.h.b16 %v372
          %v489 = vunpack.c.l.b16 %v373
          %v490 = vunpack.c.h.b16 %v373
          %v491 = vunpack.c.l.b16 %v374
          %v492 = vunpack.c.h.b16 %v374
          %v493 = vunpack.c.l.b16 %v375
          %v494 = vunpack.c.h.b16 %v375
          %v495 = vunpack.c.l.b16 %v376
          %v496 = vunpack.c.h.b16 %v376
          %v497 = vunpack.c.l.b16 %v377
          %v498 = vunpack.c.h.b16 %v377
          %v499 = vunpack.c.l.b16 %v378
          %v500 = vunpack.c.h.b16 %v378
          %v501 = vunpack.c.l.b16 %v379
          %v502 = vunpack.c.h.b16 %v379
          %v503 = vunpack.c.l.b16 %v380
          %v504 = vunpack.c.h.b16 %v380
          %v505 = vunpack.c.l.b16 %v381
          %v506 = vunpack.c.h.b16 %v381
          %v507 = vunpack.c.l.b16 %v382
          %v508 = vunpack.c.h.b16 %v382
          %v509 = vunpack.c.l.b16 %v383
          %v510 = vunpack.c.h.b16 %v383
          %v511 = vunpack.c.l.b16 %v384
          %v512 = vunpack.c.h.b16 %v384
          %v513 = vunpack.c.l.b16 %v385
          %v514 = vunpack.c.h.b16 %v385
          %v515 = vunpack.c.l.b16 %v386
          %v516 = vunpack.c.h.b16 %v386
          %v517 = vpack.c.b16 %v493, %v485
          %v518 = vpack.c.b16 %v494, %v486
          %v519 = vpack.c.b16 %v495, %v487
          %v520 = vpack.c.b16 %v496, %v488
          %v521 = vpack.c.b16 %v497, %v489
          %v522 = vpack.c.b16 %v498, %v490
          %v523 = vpack.c.b16 %v499, %v491
          %v524 = vpack.c.b16 %v500, %v492
          %v525 = vpack.c.b16 %v509, %v501
          %v526 = vpack.c.b16 %v510, %v502
          %v527 = vpack.c.b16 %v511, %v503
          %v528 = vpack.c.b16 %v512, %v504
          %v529 = vpack.c.b16 %v513, %v505
          %v530 = vpack.c.b16 %v514, %v506
          %v531 = vpack.c.b16 %v515, %v507
          %v532 = vpack.c.b16 %v516, %v508
          %vm549 = vcmask 261120
          %v551 = vsel %vm549, %v461, 0
          %v554 = vsel %vm549, %v462, 0
          %v557 = vsel %vm549, %v463, 0
          %v560 = vsel %vm549, %v464, 0
          %v563 = vsel %vm549, %v465, 0
          %v566 = vsel %vm549, %v466, 0
          %v569 = vsel %vm549, %v467, 0
          %v572 = vsel %vm549, %v468, 0
          %574 = vmatprep.subr.bf16.mxu0 %v518
          %575 = vmatpush1.bf16.msra.mxu0 %v517
          %576 = vmatprep.subr.bf16.mxu0 %v526
          %577 = vmatpush1.bf16.msra.mxu0 %v525
          %578 = vmatprep.subr.bf16.mxu0 0
          %579 = vmatpush1.bf16.msra.mxu0 0
          %580 = vmatprep.subr.bf16.mxu0 0
          %581 = vmatpush1.bf16.msra.mxu0 0
          %582 = vmatprep.subr.bf16.mxu0 0
          %583 = vmatpush1.bf16.msra.mxu0 0
          %584 = vmatprep.subr.bf16.mxu0 0
          %585 = vmatpush1.bf16.msra.mxu0 0
          %586 = vmatprep.subr.bf16.mxu0 0
          %587 = vmatpush1.bf16.msra.mxu0 0
          %588 = vmatprep.subr.bf16.mxu0 0
          %589 = vmatpush1.bf16.msra.mxu0 0
          %590 = vmatprep.subr.bf16.mxu0 0
          %591 = vmatpush1.bf16.msra.mxu0 0
          %592 = vmatprep.subr.bf16.mxu0 0
          %593 = vmatpush1.bf16.msra.mxu0 0
          %594 = vmatprep.subr.bf16.mxu0 0
          %595 = vmatpush1.bf16.msra.mxu0 0
          %596 = vmatprep.subr.bf16.mxu0 0
          %597 = vmatpush1.bf16.msra.mxu0 0
          %598 = vmatprep.subr.bf16.mxu0 0
          %599 = vmatpush1.bf16.msra.mxu0 0
          %600 = vmatprep.subr.bf16.mxu0 0
          %601 = vmatpush1.bf16.msra.mxu0 0
          %602 = vmatprep.subr.bf16.mxu0 0
          %603 = vmatpush1.bf16.msra.mxu0 0
          %604 = vmatprep.subr.bf16.mxu0 0
          %605 = vmatpush1.bf16.msra.mxu0 0
          %606 = vmatprep.mubr.bf16.mxu0 0
          %607 = vmatmul.mubr.bf16.gmra.mrb[0].mxu0 %v551
          %v608 = vpop.f32.mrb[0].mxu0
          %v609 = vadd.f32 %v392, %v608
          %v610 = vpop.f32.mrb[0].mxu0
          %v611 = vadd.f32 %v396, %v610
          %v612 = vpop.f32.mrb[0].mxu0
          %v613 = vadd.f32 %v392, %v612
          %v614 = vpop.f32.mrb[0].mxu0
          %v615 = vadd.f32 %v396, %v614
          %616 = vmatprep.mubr.bf16.mxu0 0
          %617 = vmatmul.mubr.bf16.gmra.mrb[0].mxu0 %v554
          %v618 = vpop.f32.mrb[0].mxu0
          %v619 = vadd.f32 %v392, %v618
          %v620 = vpop.f32.mrb[0].mxu0
          %v621 = vadd.f32 %v396, %v620
          %v622 = vpop.f32.mrb[0].mxu0
          %v623 = vadd.f32 %v392, %v622
          %v624 = vpop.f32.mrb[0].mxu0
          %v625 = vadd.f32 %v396, %v624
          %626 = vmatprep.mubr.bf16.mxu0 0
          %627 = vmatmul.mubr.bf16.gmra.mrb[0].mxu0 %v557
          %v628 = vpop.f32.mrb[0].mxu0
          %v629 = vadd.f32 %v392, %v628
          %v630 = vpop.f32.mrb[0].mxu0
          %v631 = vadd.f32 %v396, %v630
          %v632 = vpop.f32.mrb[0].mxu0
          %v633 = vadd.f32 %v392, %v632
          %v634 = vpop.f32.mrb[0].mxu0
          %v635 = vadd.f32 %v396, %v634
          %636 = vmatprep.mubr.bf16.mxu0 0
          %637 = vmatmul.mubr.bf16.gmra.mrb[0].mxu0 %v560
          %v638 = vpop.f32.mrb[0].mxu0
          %v639 = vadd.f32 %v392, %v638
          %v640 = vpop.f32.mrb[0].mxu0
          %v641 = vadd.f32 %v396, %v640
          %v642 = vpop.f32.mrb[0].mxu0
          %v643 = vadd.f32 %v392, %v642
          %v644 = vpop.f32.mrb[0].mxu0
          %v645 = vadd.f32 %v396, %v644
          %646 = vmatprep.mubr.bf16.mxu0 0
          %647 = vmatmul.mubr.bf16.gmra.mrb[0].mxu0 %v563
          %v648 = vpop.f32.mrb[0].mxu0
          %v649 = vadd.f32 %v392, %v648
          %v650 = vpop.f32.mrb[0].mxu0
          %v651 = vadd.f32 %v396, %v650
          %v652 = vpop.f32.mrb[0].mxu0
          %v653 = vadd.f32 %v392, %v652
          %v654 = vpop.f32.mrb[0].mxu0
          %v655 = vadd.f32 %v396, %v654
          %656 = vmatprep.mubr.bf16.mxu0 0
          %657 = vmatmul.mubr.bf16.gmra.mrb[0].mxu0 %v566
          %v658 = vpop.f32.mrb[0].mxu0
          %v659 = vadd.f32 %v392, %v658
          %v660 = vpop.f32.mrb[0].mxu0
          %v661 = vadd.f32 %v396, %v660
          %v662 = vpop.f32.mrb[0].mxu0
          %v663 = vadd.f32 %v392, %v662
          %v664 = vpop.f32.mrb[0].mxu0
          %v665 = vadd.f32 %v396, %v664
          %666 = vmatprep.mubr.bf16.mxu0 0
          %667 = vmatmul.mubr.bf16.gmra.mrb[0].mxu0 %v569
          %v668 = vpop.f32.mrb[0].mxu0
          %v669 = vadd.f32 %v392, %v668
          %v670 = vpop.f32.mrb[0].mxu0
          %v671 = vadd.f32 %v396, %v670
          %v672 = vpop.f32.mrb[0].mxu0
          %v673 = vadd.f32 %v392, %v672
          %v674 = vpop.f32.mrb[0].mxu0
          %v675 = vadd.f32 %v396, %v674
          %676 = vmatprep.mubr.bf16.mxu0 0
          %677 = vmatmul.mubr.bf16.gmra.mrb[0].mxu0 %v572
          %v678 = vpop.f32.mrb[0].mxu0
          %v679 = vadd.f32 %v392, %v678
          %v680 = vpop.f32.mrb[0].mxu0
          %v681 = vadd.f32 %v396, %v680
          %v682 = vpop.f32.mrb[0].mxu0
          %v683 = vadd.f32 %v392, %v682
          %v684 = vpop.f32.mrb[0].mxu0
          %v685 = vadd.f32 %v396, %v684
          %686 = vdwg.mxu0
          %687 = vmatprep.subr.bf16.mxu0 %v520
          %688 = vmatpush1.bf16.msra.mxu0 %v519
          %689 = vmatprep.subr.bf16.mxu0 %v528
          %690 = vmatpush1.bf16.msra.mxu0 %v527
          %691 = vmatprep.subr.bf16.mxu0 0
          %692 = vmatpush1.bf16.msra.mxu0 0
          %693 = vmatprep.subr.bf16.mxu0 0
          %694 = vmatpush1.bf16.msra.mxu0 0
          %695 = vmatprep.subr.bf16.mxu0 0
          %696 = vmatpush1.bf16.msra.mxu0 0
          %697 = vmatprep.subr.bf16.mxu0 0
          %698 = vmatpush1.bf16.msra.mxu0 0
          %699 = vmatprep.subr.bf16.mxu0 0
          %700 = vmatpush1.bf16.msra.mxu0 0
          %701 = vmatprep.subr.bf16.mxu0 0
          %702 = vmatpush1.bf16.msra.mxu0 0
          %703 = vmatprep.subr.bf16.mxu0 0
          %704 = vmatpush1.bf16.msra.mxu0 0
          %705 = vmatprep.subr.bf16.mxu0 0
          %706 = vmatpush1.bf16.msra.mxu0 0
          %707 = vmatprep.subr.bf16.mxu0 0
          %708 = vmatpush1.bf16.msra.mxu0 0
          %709 = vmatprep.subr.bf16.mxu0 0
          %710 = vmatpush1.bf16.msra.mxu0 0
          %711 = vmatprep.subr.bf16.mxu0 0
          %712 = vmatpush1.bf16.msra.mxu0 0
          %713 = vmatprep.subr.bf16.mxu0 0
          %714 = vmatpush1.bf16.msra.mxu0 0
          %715 = vmatprep.subr.bf16.mxu0 0
          %716 = vmatpush1.bf16.msra.mxu0 0
          %717 = vmatprep.subr.bf16.mxu0 0
          %718 = vmatpush1.bf16.msra.mxu0 0
          %719 = vmatprep.mubr.bf16.mxu0 0
          %720 = vmatmul.mubr.bf16.gmra.mrb[0].mxu0 %v551
          %v721 = vpop.f32.mrb[0].mxu0
          %v722 = vadd.f32 %v400, %v721
          %v723 = vpop.f32.mrb[0].mxu0
          %v724 = vadd.f32 %v404, %v723
          %v725 = vpop.f32.mrb[0].mxu0
          %v726 = vadd.f32 %v400, %v725
          %v727 = vpop.f32.mrb[0].mxu0
          %v728 = vadd.f32 %v404, %v727
          %729 = vmatprep.mubr.bf16.mxu0 0
          %730 = vmatmul.mubr.bf16.gmra.mrb[0].mxu0 %v554
          %v731 = vpop.f32.mrb[0].mxu0
          %v732 = vadd.f32 %v400, %v731
          %v733 = vpop.f32.mrb[0].mxu0
          %v734 = vadd.f32 %v404, %v733
          %v735 = vpop.f32.mrb[0].mxu0
          %v736 = vadd.f32 %v400, %v735
          %v737 = vpop.f32.mrb[0].mxu0
          %v738 = vadd.f32 %v404, %v737
          %739 = vmatprep.mubr.bf16.mxu0 0
          %740 = vmatmul.mubr.bf16.gmra.mrb[0].mxu0 %v557
          %v741 = vpop.f32.mrb[0].mxu0
          %v742 = vadd.f32 %v400, %v741
          %v743 = vpop.f32.mrb[0].mxu0
          %v744 = vadd.f32 %v404, %v743
          %v745 = vpop.f32.mrb[0].mxu0
          %v746 = vadd.f32 %v400, %v745
          %v747 = vpop.f32.mrb[0].mxu0
          %v748 = vadd.f32 %v404, %v747
          %749 = vmatprep.mubr.bf16.mxu0 0
          %750 = vmatmul.mubr.bf16.gmra.mrb[0].mxu0 %v560
          %v751 = vpop.f32.mrb[0].mxu0
          %v752 = vadd.f32 %v400, %v751
          %v753 = vpop.f32.mrb[0].mxu0
          %v754 = vadd.f32 %v404, %v753
          %v755 = vpop.f32.mrb[0].mxu0
          %v756 = vadd.f32 %v400, %v755
          %v757 = vpop.f32.mrb[0].mxu0
          %v758 = vadd.f32 %v404, %v757
          %759 = vmatprep.mubr.bf16.mxu0 0
          %760 = vmatmul.mubr.bf16.gmra.mrb[0].mxu0 %v563
          %v761 = vpop.f32.mrb[0].mxu0
          %v762 = vadd.f32 %v400, %v761
          %v763 = vpop.f32.mrb[0].mxu0
          %v764 = vadd.f32 %v404, %v763
          %v765 = vpop.f32.mrb[0].mxu0
          %v766 = vadd.f32 %v400, %v765
          %v767 = vpop.f32.mrb[0].mxu0
          %v768 = vadd.f32 %v404, %v767
          %769 = vmatprep.mubr.bf16.mxu0 0
          %770 = vmatmul.mubr.bf16.gmra.mrb[0].mxu0 %v566
          %v771 = vpop.f32.mrb[0].mxu0
          %v772 = vadd.f32 %v400, %v771
          %v773 = vpop.f32.mrb[0].mxu0
          %v774 = vadd.f32 %v404, %v773
          %v775 = vpop.f32.mrb[0].mxu0
          %v776 = vadd.f32 %v400, %v775
          %v777 = vpop.f32.mrb[0].mxu0
          %v778 = vadd.f32 %v404, %v777
          %779 = vmatprep.mubr.bf16.mxu0 0
          %780 = vmatmul.mubr.bf16.gmra.mrb[0].mxu0 %v569
          %v781 = vpop.f32.mrb[0].mxu0
          %v782 = vadd.f32 %v400, %v781
          %v783 = vpop.f32.mrb[0].mxu0
          %v784 = vadd.f32 %v404, %v783
          %v785 = vpop.f32.mrb[0].mxu0
          %v786 = vadd.f32 %v400, %v785
          %v787 = vpop.f32.mrb[0].mxu0
          %v788 = vadd.f32 %v404, %v787
          %789 = vmatprep.mubr.bf16.mxu0 0
          %790 = vmatmul.mubr.bf16.gmra.mrb[0].mxu0 %v572
          %v791 = vpop.f32.mrb[0].mxu0
          %v792 = vadd.f32 %v400, %v791
          %v793 = vpop.f32.mrb[0].mxu0
          %v794 = vadd.f32 %v404, %v793
          %v795 = vpop.f32.mrb[0].mxu0
          %v796 = vadd.f32 %v400, %v795
          %v797 = vpop.f32.mrb[0].mxu0
          %v798 = vadd.f32 %v404, %v797
          %799 = vdwg.mxu0
          %800 = vmatprep.subr.bf16.mxu0 %v522
          %801 = vmatpush1.bf16.msra.mxu0 %v521
          %802 = vmatprep.subr.bf16.mxu0 %v530
          %803 = vmatpush1.bf16.msra.mxu0 %v529
          %804 = vmatprep.subr.bf16.mxu0 0
          %805 = vmatpush1.bf16.msra.mxu0 0
          %806 = vmatprep.subr.bf16.mxu0 0
          %807 = vmatpush1.bf16.msra.mxu0 0
          %808 = vmatprep.subr.bf16.mxu0 0
          %809 = vmatpush1.bf16.msra.mxu0 0
          %810 = vmatprep.subr.bf16.mxu0 0
          %811 = vmatpush1.bf16.msra.mxu0 0
          %812 = vmatprep.subr.bf16.mxu0 0
          %813 = vmatpush1.bf16.msra.mxu0 0
          %814 = vmatprep.subr.bf16.mxu0 0
          %815 = vmatpush1.bf16.msra.mxu0 0
          %816 = vmatprep.subr.bf16.mxu0 0
          %817 = vmatpush1.bf16.msra.mxu0 0
          %818 = vmatprep.subr.bf16.mxu0 0
          %819 = vmatpush1.bf16.msra.mxu0 0
          %820 = vmatprep.subr.bf16.mxu0 0
          %821 = vmatpush1.bf16.msra.mxu0 0
          %822 = vmatprep.subr.bf16.mxu0 0
          %823 = vmatpush1.bf16.msra.mxu0 0
          %824 = vmatprep.subr.bf16.mxu0 0
          %825 = vmatpush1.bf16.msra.mxu0 0
          %826 = vmatprep.subr.bf16.mxu0 0
          %827 = vmatpush1.bf16.msra.mxu0 0
          %828 = vmatprep.subr.bf16.mxu0 0
          %829 = vmatpush1.bf16.msra.mxu0 0
          %830 = vmatprep.subr.bf16.mxu0 0
          %831 = vmatpush1.bf16.msra.mxu0 0
          %832 = vmatprep.mubr.bf16.mxu0 0
          %833 = vmatmul.mubr.bf16.gmra.mrb[0].mxu0 %v551
          %v834 = vpop.f32.mrb[0].mxu0
          %v835 = vadd.f32 %v408, %v834
          %v836 = vpop.f32.mrb[0].mxu0
          %v837 = vadd.f32 %v412, %v836
          %v838 = vpop.f32.mrb[0].mxu0
          %v839 = vadd.f32 %v408, %v838
          %v840 = vpop.f32.mrb[0].mxu0
          %v841 = vadd.f32 %v412, %v840
          %842 = vmatprep.mubr.bf16.mxu0 0
          %843 = vmatmul.mubr.bf16.gmra.mrb[0].mxu0 %v554
          %v844 = vpop.f32.mrb[0].mxu0
          %v845 = vadd.f32 %v408, %v844
          %v846 = vpop.f32.mrb[0].mxu0
          %v847 = vadd.f32 %v412, %v846
          %v848 = vpop.f32.mrb[0].mxu0
          %v849 = vadd.f32 %v408, %v848
          %v850 = vpop.f32.mrb[0].mxu0
          %v851 = vadd.f32 %v412, %v850
          %852 = vmatprep.mubr.bf16.mxu0 0
          %853 = vmatmul.mubr.bf16.gmra.mrb[0].mxu0 %v557
          %v854 = vpop.f32.mrb[0].mxu0
          %v855 = vadd.f32 %v408, %v854
          %v856 = vpop.f32.mrb[0].mxu0
          %v857 = vadd.f32 %v412, %v856
          %v858 = vpop.f32.mrb[0].mxu0
          %v859 = vadd.f32 %v408, %v858
          %v860 = vpop.f32.mrb[0].mxu0
          %v861 = vadd.f32 %v412, %v860
          %862 = vmatprep.mubr.bf16.mxu0 0
          %863 = vmatmul.mubr.bf16.gmra.mrb[0].mxu0 %v560
          %v864 = vpop.f32.mrb[0].mxu0
          %v865 = vadd.f32 %v408, %v864
          %v866 = vpop.f32.mrb[0].mxu0
          %v867 = vadd.f32 %v412, %v866
          %v868 = vpop.f32.mrb[0].mxu0
          %v869 = vadd.f32 %v408, %v868
          %v870 = vpop.f32.mrb[0].mxu0
          %v871 = vadd.f32 %v412, %v870
          %872 = vmatprep.mubr.bf16.mxu0 0
          %873 = vmatmul.mubr.bf16.gmra.mrb[0].mxu0 %v563
          %v874 = vpop.f32.mrb[0].mxu0
          %v875 = vadd.f32 %v408, %v874
          %v876 = vpop.f32.mrb[0].mxu0
          %v877 = vadd.f32 %v412, %v876
          %v878 = vpop.f32.mrb[0].mxu0
          %v879 = vadd.f32 %v408, %v878
          %v880 = vpop.f32.mrb[0].mxu0
          %v881 = vadd.f32 %v412, %v880
          %882 = vmatprep.mubr.bf16.mxu0 0
          %883 = vmatmul.mubr.bf16.gmra.mrb[0].mxu0 %v566
          %v884 = vpop.f32.mrb[0].mxu0
          %v885 = vadd.f32 %v408, %v884
          %v886 = vpop.f32.mrb[0].mxu0
          %v887 = vadd.f32 %v412, %v886
          %v888 = vpop.f32.mrb[0].mxu0
          %v889 = vadd.f32 %v408, %v888
          %v890 = vpop.f32.mrb[0].mxu0
          %v891 = vadd.f32 %v412, %v890
          %892 = vmatprep.mubr.bf16.mxu0 0
          %893 = vmatmul.mubr.bf16.gmra.mrb[0].mxu0 %v569
          %v894 = vpop.f32.mrb[0].mxu0
          %v895 = vadd.f32 %v408, %v894
          %v896 = vpop.f32.mrb[0].mxu0
          %v897 = vadd.f32 %v412, %v896
          %v898 = vpop.f32.mrb[0].mxu0
          %v899 = vadd.f32 %v408, %v898
          %v900 = vpop.f32.mrb[0].mxu0
          %v901 = vadd.f32 %v412, %v900
          %902 = vmatprep.mubr.bf16.mxu0 0
          %903 = vmatmul.mubr.bf16.gmra.mrb[0].mxu0 %v572
          %v904 = vpop.f32.mrb[0].mxu0
          %v905 = vadd.f32 %v408, %v904
          %v906 = vpop.f32.mrb[0].mxu0
          %v907 = vadd.f32 %v412, %v906
          %v908 = vpop.f32.mrb[0].mxu0
          %v909 = vadd.f32 %v408, %v908
          %v910 = vpop.f32.mrb[0].mxu0
          %v911 = vadd.f32 %v412, %v910
          %912 = vdwg.mxu0
          %913 = vmatprep.subr.bf16.mxu0 %v524
          %914 = vmatpush1.bf16.msra.mxu0 %v523
          %915 = vmatprep.subr.bf16.mxu0 %v532
          %916 = vmatpush1.bf16.msra.mxu0 %v531
          %917 = vmatprep.subr.bf16.mxu0 0
          %918 = vmatpush1.bf16.msra.mxu0 0
          %919 = vmatprep.subr.bf16.mxu0 0
          %920 = vmatpush1.bf16.msra.mxu0 0
          %921 = vmatprep.subr.bf16.mxu0 0
          %922 = vmatpush1.bf16.msra.mxu0 0
          %923 = vmatprep.subr.bf16.mxu0 0
          %924 = vmatpush1.bf16.msra.mxu0 0
          %925 = vmatprep.subr.bf16.mxu0 0
          %926 = vmatpush1.bf16.msra.mxu0 0
          %927 = vmatprep.subr.bf16.mxu0 0
          %928 = vmatpush1.bf16.msra.mxu0 0
          %929 = vmatprep.subr.bf16.mxu0 0
          %930 = vmatpush1.bf16.msra.mxu0 0
          %931 = vmatprep.subr.bf16.mxu0 0
          %932 = vmatpush1.bf16.msra.mxu0 0
          %933 = vmatprep.subr.bf16.mxu0 0
          %934 = vmatpush1.bf16.msra.mxu0 0
          %935 = vmatprep.subr.bf16.mxu0 0
          %936 = vmatpush1.bf16.msra.mxu0 0
          %937 = vmatprep.subr.bf16.mxu0 0
          %938 = vmatpush1.bf16.msra.mxu0 0
          %939 = vmatprep.subr.bf16.mxu0 0
          %940 = vmatpush1.bf16.msra.mxu0 0
          %941 = vmatprep.subr.bf16.mxu0 0
          %942 = vmatpush1.bf16.msra.mxu0 0
          %943 = vmatprep.subr.bf16.mxu0 0
          %944 = vmatpush1.bf16.msra.mxu0 0
          %945 = vmatprep.mubr.bf16.mxu0 0
          %946 = vmatmul.mubr.bf16.gmra.mrb[0].mxu0 %v551
          %v947 = vpop.f32.mrb[0].mxu0
          %v948 = vadd.f32 %v416, %v947
          %v949 = vpop.f32.mrb[0].mxu0
          %v950 = vadd.f32 %v420, %v949
          %v951 = vpop.f32.mrb[0].mxu0
          %v952 = vadd.f32 %v416, %v951
          %v953 = vpop.f32.mrb[0].mxu0
          %v954 = vadd.f32 %v420, %v953
          %955 = vmatprep.mubr.bf16.mxu0 0
          %956 = vmatmul.mubr.bf16.gmra.mrb[0].mxu0 %v554
          %v957 = vpop.f32.mrb[0].mxu0
          %v958 = vadd.f32 %v416, %v957
          %v959 = vpop.f32.mrb[0].mxu0
          %v960 = vadd.f32 %v420, %v959
          %v961 = vpop.f32.mrb[0].mxu0
          %v962 = vadd.f32 %v416, %v961
          %v963 = vpop.f32.mrb[0].mxu0
          %v964 = vadd.f32 %v420, %v963
          %965 = vmatprep.mubr.bf16.mxu0 0
          %966 = vmatmul.mubr.bf16.gmra.mrb[0].mxu0 %v557
          %v967 = vpop.f32.mrb[0].mxu0
          %v968 = vadd.f32 %v416, %v967
          %v969 = vpop.f32.mrb[0].mxu0
          %v970 = vadd.f32 %v420, %v969
          %v971 = vpop.f32.mrb[0].mxu0
          %v972 = vadd.f32 %v416, %v971
          %v973 = vpop.f32.mrb[0].mxu0
          %v974 = vadd.f32 %v420, %v973
          %975 = vmatprep.mubr.bf16.mxu0 0
          %976 = vmatmul.mubr.bf16.gmra.mrb[0].mxu0 %v560
          %v977 = vpop.f32.mrb[0].mxu0
          %v978 = vadd.f32 %v416, %v977
          %v979 = vpop.f32.mrb[0].mxu0
          %v980 = vadd.f32 %v420, %v979
          %v981 = vpop.f32.mrb[0].mxu0
          %v982 = vadd.f32 %v416, %v981
          %v983 = vpop.f32.mrb[0].mxu0
          %v984 = vadd.f32 %v420, %v983
          %985 = vmatprep.mubr.bf16.mxu0 0
          %986 = vmatmul.mubr.bf16.gmra.mrb[0].mxu0 %v563
          %v987 = vpop.f32.mrb[0].mxu0
          %v988 = vadd.f32 %v416, %v987
          %v989 = vpop.f32.mrb[0].mxu0
          %v990 = vadd.f32 %v420, %v989
          %v991 = vpop.f32.mrb[0].mxu0
          %v992 = vadd.f32 %v416, %v991
          %v993 = vpop.f32.mrb[0].mxu0
          %v994 = vadd.f32 %v420, %v993
          %995 = vmatprep.mubr.bf16.mxu0 0
          %996 = vmatmul.mubr.bf16.gmra.mrb[0].mxu0 %v566
          %v997 = vpop.f32.mrb[0].mxu0
          %v998 = vadd.f32 %v416, %v997
          %v999 = vpop.f32.mrb[0].mxu0
          %v1000 = vadd.f32 %v420, %v999
          %v1001 = vpop.f32.mrb[0].mxu0
          %v1002 = vadd.f32 %v416, %v1001
          %v1003 = vpop.f32.mrb[0].mxu0
          %v1004 = vadd.f32 %v420, %v1003
          %1005 = vmatprep.mubr.bf16.mxu0 0
          %1006 = vmatmul.mubr.bf16.gmra.mrb[0].mxu0 %v569
          %v1007 = vpop.f32.mrb[0].mxu0
          %v1008 = vadd.f32 %v416, %v1007
          %v1009 = vpop.f32.mrb[0].mxu0
          %v1010 = vadd.f32 %v420, %v1009
          %v1011 = vpop.f32.mrb[0].mxu0
          %v1012 = vadd.f32 %v416, %v1011
          %v1013 = vpop.f32.mrb[0].mxu0
          %v1014 = vadd.f32 %v420, %v1013
          %1015 = vmatprep.mubr.bf16.mxu0 0
          %1016 = vmatmul.mubr.bf16.gmra.mrb[0].mxu0 %v572
          %v1017 = vpop.f32.mrb[0].mxu0
          %v1018 = vadd.f32 %v416, %v1017
          %v1019 = vpop.f32.mrb[0].mxu0
          %v1020 = vadd.f32 %v420, %v1019
          %v1021 = vpop.f32.mrb[0].mxu0
          %v1022 = vadd.f32 %v416, %v1021
          %v1023 = vpop.f32.mrb[0].mxu0
          %v1024 = vadd.f32 %v420, %v1023
          %1025 = vdwg.mxu0
          %v1026 = vmax.f32 %v609, 0.0
          %v1027 = vmax.f32 %v611, 0.0
          %v1028 = vmax.f32 %v722, 0.0
          %v1029 = vmax.f32 %v724, 0.0
          %v1030 = vmax.f32 %v835, 0.0
          %v1031 = vmax.f32 %v837, 0.0
          %v1032 = vmax.f32 %v948, 0.0
          %v1033 = vmax.f32 %v950, 0.0
          %v1034 = vmax.f32 %v613, 0.0
          %v1035 = vmax.f32 %v615, 0.0
          %v1036 = vmax.f32 %v726, 0.0
          %v1037 = vmax.f32 %v728, 0.0
          %v1038 = vmax.f32 %v839, 0.0
          %v1039 = vmax.f32 %v841, 0.0
          %v1040 = vmax.f32 %v952, 0.0
          %v1041 = vmax.f32 %v954, 0.0
          %v1042 = vmax.f32 %v619, 0.0
          %v1043 = vmax.f32 %v621, 0.0
          %v1044 = vmax.f32 %v732, 0.0
          %v1045 = vmax.f32 %v734, 0.0
          %v1046 = vmax.f32 %v845, 0.0
          %v1047 = vmax.f32 %v847, 0.0
          %v1048 = vmax.f32 %v958, 0.0
          %v1049 = vmax.f32 %v960, 0.0
          %v1050 = vmax.f32 %v623, 0.0
          %v1051 = vmax.f32 %v625, 0.0
          %v1052 = vmax.f32 %v736, 0.0
          %v1053 = vmax.f32 %v738, 0.0
          %v1054 = vmax.f32 %v849, 0.0
          %v1055 = vmax.f32 %v851, 0.0
          %v1056 = vmax.f32 %v962, 0.0
          %v1057 = vmax.f32 %v964, 0.0
          %v1058 = vmax.f32 %v629, 0.0
          %v1059 = vmax.f32 %v631, 0.0
          %v1060 = vmax.f32 %v742, 0.0
          %v1061 = vmax.f32 %v744, 0.0
          %v1062 = vmax.f32 %v855, 0.0
          %v1063 = vmax.f32 %v857, 0.0
          %v1064 = vmax.f32 %v968, 0.0
          %v1065 = vmax.f32 %v970, 0.0
          %v1066 = vmax.f32 %v633, 0.0
          %v1067 = vmax.f32 %v635, 0.0
          %v1068 = vmax.f32 %v746, 0.0
          %v1069 = vmax.f32 %v748, 0.0
          %v1070 = vmax.f32 %v859, 0.0
          %v1071 = vmax.f32 %v861, 0.0
          %v1072 = vmax.f32 %v972, 0.0
          %v1073 = vmax.f32 %v974, 0.0
          %v1074 = vmax.f32 %v639, 0.0
          %v1075 = vmax.f32 %v641, 0.0
          %v1076 = vmax.f32 %v752, 0.0
          %v1077 = vmax.f32 %v754, 0.0
          %v1078 = vmax.f32 %v865, 0.0
          %v1079 = vmax.f32 %v867, 0.0
          %v1080 = vmax.f32 %v978, 0.0
          %v1081 = vmax.f32 %v980, 0.0
          %v1082 = vmax.f32 %v643, 0.0
          %v1083 = vmax.f32 %v645, 0.0
          %v1084 = vmax.f32 %v756, 0.0
          %v1085 = vmax.f32 %v758, 0.0
          %v1086 = vmax.f32 %v869, 0.0
          %v1087 = vmax.f32 %v871, 0.0
          %v1088 = vmax.f32 %v982, 0.0
          %v1089 = vmax.f32 %v984, 0.0
          %v1090 = vmax.f32 %v649, 0.0
          %v1091 = vmax.f32 %v651, 0.0
          %v1092 = vmax.f32 %v762, 0.0
          %v1093 = vmax.f32 %v764, 0.0
          %v1094 = vmax.f32 %v875, 0.0
          %v1095 = vmax.f32 %v877, 0.0
          %v1096 = vmax.f32 %v988, 0.0
          %v1097 = vmax.f32 %v990, 0.0
          %v1098 = vmax.f32 %v653, 0.0
          %v1099 = vmax.f32 %v655, 0.0
          %v1100 = vmax.f32 %v766, 0.0
          %v1101 = vmax.f32 %v768, 0.0
          %v1102 = vmax.f32 %v879, 0.0
          %v1103 = vmax.f32 %v881, 0.0
          %v1104 = vmax.f32 %v992, 0.0
          %v1105 = vmax.f32 %v994, 0.0
          %v1106 = vmax.f32 %v659, 0.0
          %v1107 = vmax.f32 %v661, 0.0
          %v1108 = vmax.f32 %v772, 0.0
          %v1109 = vmax.f32 %v774, 0.0
          %v1110 = vmax.f32 %v885, 0.0
          %v1111 = vmax.f32 %v887, 0.0
          %v1112 = vmax.f32 %v998, 0.0
          %v1113 = vmax.f32 %v1000, 0.0
          %v1114 = vmax.f32 %v663, 0.0
          %v1115 = vmax.f32 %v665, 0.0
          %v1116 = vmax.f32 %v776, 0.0
          %v1117 = vmax.f32 %v778, 0.0
          %v1118 = vmax.f32 %v889, 0.0
          %v1119 = vmax.f32 %v891, 0.0
          %v1120 = vmax.f32 %v1002, 0.0
          %v1121 = vmax.f32 %v1004, 0.0
          %v1122 = vmax.f32 %v669, 0.0
          %v1123 = vmax.f32 %v671, 0.0
          %v1124 = vmax.f32 %v782, 0.0
          %v1125 = vmax.f32 %v784, 0.0
          %v1126 = vmax.f32 %v895, 0.0
          %v1127 = vmax.f32 %v897, 0.0
          %v1128 = vmax.f32 %v1008, 0.0
          %v1129 = vmax.f32 %v1010, 0.0
          %v1130 = vmax.f32 %v673, 0.0
          %v1131 = vmax.f32 %v675, 0.0
          %v1132 = vmax.f32 %v786, 0.0
          %v1133 = vmax.f32 %v788, 0.0
          %v1134 = vmax.f32 %v899, 0.0
          %v1135 = vmax.f32 %v901, 0.0
          %v1136 = vmax.f32 %v1012, 0.0
          %v1137 = vmax.f32 %v1014, 0.0
          %v1138 = vmax.f32 %v679, 0.0
          %v1139 = vmax.f32 %v681, 0.0
          %v1140 = vmax.f32 %v792, 0.0
          %v1141 = vmax.f32 %v794, 0.0
          %v1142 = vmax.f32 %v905, 0.0
          %v1143 = vmax.f32 %v907, 0.0
          %v1144 = vmax.f32 %v1018, 0.0
          %v1145 = vmax.f32 %v1020, 0.0
          %v1146 = vmax.f32 %v683, 0.0
          %v1147 = vmax.f32 %v685, 0.0
          %v1148 = vmax.f32 %v796, 0.0
          %v1149 = vmax.f32 %v798, 0.0
          %v1150 = vmax.f32 %v909, 0.0
          %v1151 = vmax.f32 %v911, 0.0
          %v1152 = vmax.f32 %v1022, 0.0
          %v1153 = vmax.f32 %v1024, 0.0
          %v1154 = vpack.c.bf16 %v1034, %v1026
          %v1155 = vpack.c.bf16 %v1035, %v1027
          %v1156 = vpack.c.bf16 %v1036, %v1028
          %v1157 = vpack.c.bf16 %v1037, %v1029
          %v1158 = vpack.c.bf16 %v1038, %v1030
          %v1159 = vpack.c.bf16 %v1039, %v1031
          %v1160 = vpack.c.bf16 %v1040, %v1032
          %v1161 = vpack.c.bf16 %v1041, %v1033
          %v1162 = vpack.c.bf16 %v1050, %v1042
          %v1163 = vpack.c.bf16 %v1051, %v1043
          %v1164 = vpack.c.bf16 %v1052, %v1044
          %v1165 = vpack.c.bf16 %v1053, %v1045
          %v1166 = vpack.c.bf16 %v1054, %v1046
          %v1167 = vpack.c.bf16 %v1055, %v1047
          %v1168 = vpack.c.bf16 %v1056, %v1048
          %v1169 = vpack.c.bf16 %v1057, %v1049
          %v1170 = vpack.c.bf16 %v1066, %v1058
          %v1171 = vpack.c.bf16 %v1067, %v1059
          %v1172 = vpack.c.bf16 %v1068, %v1060
          %v1173 = vpack.c.bf16 %v1069, %v1061
          %v1174 = vpack.c.bf16 %v1070, %v1062
          %v1175 = vpack.c.bf16 %v1071, %v1063
          %v1176 = vpack.c.bf16 %v1072, %v1064
          %v1177 = vpack.c.bf16 %v1073, %v1065
          %v1178 = vpack.c.bf16 %v1082, %v1074
          %v1179 = vpack.c.bf16 %v1083, %v1075
          %v1180 = vpack.c.bf16 %v1084, %v1076
          %v1181 = vpack.c.bf16 %v1085, %v1077
          %v1182 = vpack.c.bf16 %v1086, %v1078
          %v1183 = vpack.c.bf16 %v1087, %v1079
          %v1184 = vpack.c.bf16 %v1088, %v1080
          %v1185 = vpack.c.bf16 %v1089, %v1081
          %v1186 = vpack.c.bf16 %v1098, %v1090
          %v1187 = vpack.c.bf16 %v1099, %v1091
          %v1188 = vpack.c.bf16 %v1100, %v1092
          %v1189 = vpack.c.bf16 %v1101, %v1093
          %v1190 = vpack.c.bf16 %v1102, %v1094
          %v1191 = vpack.c.bf16 %v1103, %v1095
          %v1192 = vpack.c.bf16 %v1104, %v1096
          %v1193 = vpack.c.bf16 %v1105, %v1097
          %v1194 = vpack.c.bf16 %v1114, %v1106
          %v1195 = vpack.c.bf16 %v1115, %v1107
          %v1196 = vpack.c.bf16 %v1116, %v1108
          %v1197 = vpack.c.bf16 %v1117, %v1109
          %v1198 = vpack.c.bf16 %v1118, %v1110
          %v1199 = vpack.c.bf16 %v1119, %v1111
          %v1200 = vpack.c.bf16 %v1120, %v1112
          %v1201 = vpack.c.bf16 %v1121, %v1113
          %v1202 = vpack.c.bf16 %v1130, %v1122
          %v1203 = vpack.c.bf16 %v1131, %v1123
          %v1204 = vpack.c.bf16 %v1132, %v1124
          %v1205 = vpack.c.bf16 %v1133, %v1125
          %v1206 = vpack.c.bf16 %v1134, %v1126
          %v1207 = vpack.c.bf16 %v1135, %v1127
          %v1208 = vpack.c.bf16 %v1136, %v1128
          %v1209 = vpack.c.bf16 %v1137, %v1129
          %v1210 = vpack.c.bf16 %v1146, %v1138
          %v1211 = vpack.c.bf16 %v1147, %v1139
          %v1212 = vpack.c.bf16 %v1148, %v1140
          %v1213 = vpack.c.bf16 %v1149, %v1141
          %v1214 = vpack.c.bf16 %v1150, %v1142
          %v1215 = vpack.c.bf16 %v1151, %v1143
          %v1216 = vpack.c.bf16 %v1152, %v1144
          %v1217 = vpack.c.bf16 %v1153, %v1145
          %1218 = vst [vmem:[#allocation2] sm:$0xff] %v1154
          %1219 = vst [vmem:[#allocation2 + $0x8] sm:$0xff] %v1155
          %1220 = vst [vmem:[#allocation2 + $0x10] sm:$0xff] %v1156
          %1221 = vst [vmem:[#allocation2 + $0x18] sm:$0xff] %v1157
          %1222 = vst [vmem:[#allocation2 + $0x20] sm:$0xff] %v1158
          %1223 = vst [vmem:[#allocation2 + $0x28] sm:$0xff] %v1159
          %1224 = vst [vmem:[#allocation2 + $0x30] sm:$0xff] %v1160
          %1225 = vst [vmem:[#allocation2 + $0x38] sm:$0xff] %v1161
          %1226 = vst [vmem:[#allocation2 + $0x40] sm:$0xff] %v1162
          %1227 = vst [vmem:[#allocation2 + $0x48] sm:$0xff] %v1163
          %1228 = vst [vmem:[#allocation2 + $0x50] sm:$0xff] %v1164
          %1229 = vst [vmem:[#allocation2 + $0x58] sm:$0xff] %v1165
          %1230 = vst [vmem:[#allocation2 + $0x60] sm:$0xff] %v1166
          %1231 = vst [vmem:[#allocation2 + $0x68] sm:$0xff] %v1167
          %1232 = vst [vmem:[#allocation2 + $0x70] sm:$0xff] %v1168
          %1233 = vst [vmem:[#allocation2 + $0x78] sm:$0xff] %v1169
          %1234 = vst [vmem:[#allocation2 + $0x80] sm:$0xff] %v1170
          %1235 = vst [vmem:[#allocation2 + $0x88] sm:$0xff] %v1171
          %1236 = vst [vmem:[#allocation2 + $0x90] sm:$0xff] %v1172
          %1237 = vst [vmem:[#allocation2 + $0x98] sm:$0xff] %v1173
          %1238 = vst [vmem:[#allocation2 + $0xa0] sm:$0xff] %v1174
          %1239 = vst [vmem:[#allocation2 + $0xa8] sm:$0xff] %v1175
          %1240 = vst [vmem:[#allocation2 + $0xb0] sm:$0xff] %v1176
          %1241 = vst [vmem:[#allocation2 + $0xb8] sm:$0xff] %v1177
          %1242 = vst [vmem:[#allocation2 + $0xc0] sm:$0xff] %v1178
          %1243 = vst [vmem:[#allocation2 + $0xc8] sm:$0xff] %v1179
          %1244 = vst [vmem:[#allocation2 + $0xd0] sm:$0xff] %v1180
          %1245 = vst [vmem:[#allocation2 + $0xd8] sm:$0xff] %v1181
          %1246 = vst [vmem:[#allocation2 + $0xe0] sm:$0xff] %v1182
          %1247 = vst [vmem:[#allocation2 + $0xe8] sm:$0xff] %v1183
          %1248 = vst [vmem:[#allocation2 + $0xf0] sm:$0xff] %v1184
          %1249 = vst [vmem:[#allocation2 + $0xf8] sm:$0xff] %v1185
          %1250 = vst [vmem:[#allocation2 + $0x100] sm:$0xff] %v1186
          %1251 = vst [vmem:[#allocation2 + $0x108] sm:$0xff] %v1187
          %1252 = vst [vmem:[#allocation2 + $0x110] sm:$0xff] %v1188
          %1253 = vst [vmem:[#allocation2 + $0x118] sm:$0xff] %v1189
          %1254 = vst [vmem:[#allocation2 + $0x120] sm:$0xff] %v1190
          %1255 = vst [vmem:[#allocation2 + $0x128] sm:$0xff] %v1191
          %1256 = vst [vmem:[#allocation2 + $0x130] sm:$0xff] %v1192
          %1257 = vst [vmem:[#allocation2 + $0x138] sm:$0xff] %v1193
          %1258 = vst [vmem:[#allocation2 + $0x140] sm:$0xff] %v1194
          %1259 = vst [vmem:[#allocation2 + $0x148] sm:$0xff] %v1195
          %1260 = vst [vmem:[#allocation2 + $0x150] sm:$0xff] %v1196
          %1261 = vst [vmem:[#allocation2 + $0x158] sm:$0xff] %v1197
          %1262 = vst [vmem:[#allocation2 + $0x160] sm:$0xff] %v1198
          %1263 = vst [vmem:[#allocation2 + $0x168] sm:$0xff] %v1199
          %1264 = vst [vmem:[#allocation2 + $0x170] sm:$0xff] %v1200
          %1265 = vst [vmem:[#allocation2 + $0x178] sm:$0xff] %v1201
          %1266 = vst [vmem:[#allocation2 + $0x180] sm:$0xff] %v1202
          %1267 = vst [vmem:[#allocation2 + $0x188] sm:$0xff] %v1203
          %1268 = vst [vmem:[#allocation2 + $0x190] sm:$0xff] %v1204
          %1269 = vst [vmem:[#allocation2 + $0x198] sm:$0xff] %v1205
          %1270 = vst [vmem:[#allocation2 + $0x1a0] sm:$0xff] %v1206
          %1271 = vst [vmem:[#allocation2 + $0x1a8] sm:$0xff] %v1207
          %1272 = vst [vmem:[#allocation2 + $0x1b0] sm:$0xff] %v1208
          %1273 = vst [vmem:[#allocation2 + $0x1b8] sm:$0xff] %v1209
          %1274 = vst [vmem:[#allocation2 + $0x1c0] sm:$0xff] %v1210
          %1275 = vst [vmem:[#allocation2 + $0x1c8] sm:$0xff] %v1211
          %1276 = vst [vmem:[#allocation2 + $0x1d0] sm:$0xff] %v1212
          %1277 = vst [vmem:[#allocation2 + $0x1d8] sm:$0xff] %v1213
          %1278 = vst [vmem:[#allocation2 + $0x1e0] sm:$0xff] %v1214
          %1279 = vst [vmem:[#allocation2 + $0x1e8] sm:$0xff] %v1215
          %1280 = vst [vmem:[#allocation2 + $0x1f0] sm:$0xff] %v1216
          %1281 = vst [vmem:[#allocation2 + $0x1f8] sm:$0xff] %v1217
        $region76: #{mlp_forward.1} parent=47 // pred_fallthru
          _
        %p1282 = scmp.lt.s32.totalorder %s21, 0
        %s1283 = ssub.s32 0, %s21
        %s1284 = scalar_select %p1282, %s1283, %s21
        %s1285 = sand.u32 %s1284, 1
        %s1286 = ssub.s32 0, %s1285
        %s1287 = scalar_select %p1282, %s1286, %s1285
        %p1288 = scmp.ne.s32.totalorder %s1287, 0
        %p1289 = scmp.lt.s32.totalorder %s1287, 0
        %p1290 = pnand %p1289, %p1288
        %p1291 = pneg %p1290
        %s1292 = sadd.s32 %s1287, 2
        %s1293 = scalar_select %p1291, %s1292, %s1287
        %s1294 = ssub.s32 1, %s1293
        %s1295 = smul.u32 %s1293, 64
        %s1296 = smul.addr %s1295, 8
        %s1297 = scalar_lea.vmem [#allocation2], %s1296
        %v1298 = vld [vmem:[%s1297] sm:$0xff]
        %v1299 = vld [vmem:[%s1297 + $0x8] sm:$0xff]
        %v1300 = vld [vmem:[%s1297 + $0x10] sm:$0xff]
        %v1301 = vld [vmem:[%s1297 + $0x18] sm:$0xff]
        %v1302 = vld [vmem:[%s1297 + $0x20] sm:$0xff]
        %v1303 = vld [vmem:[%s1297 + $0x28] sm:$0xff]
        %v1304 = vld [vmem:[%s1297 + $0x30] sm:$0xff]
        %v1305 = vld [vmem:[%s1297 + $0x38] sm:$0xff]
        %v1306 = vld [vmem:[%s1297 + $0x40] sm:$0xff]
        %v1307 = vld [vmem:[%s1297 + $0x48] sm:$0xff]
        %v1308 = vld [vmem:[%s1297 + $0x50] sm:$0xff]
        %v1309 = vld [vmem:[%s1297 + $0x58] sm:$0xff]
        %v1310 = vld [vmem:[%s1297 + $0x60] sm:$0xff]
        %v1311 = vld [vmem:[%s1297 + $0x68] sm:$0xff]
        %v1312 = vld [vmem:[%s1297 + $0x70] sm:$0xff]
        %v1313 = vld [vmem:[%s1297 + $0x78] sm:$0xff]
        %v1314 = vld [vmem:[%s1297 + $0x80] sm:$0xff]
        %v1315 = vld [vmem:[%s1297 + $0x88] sm:$0xff]
        %v1316 = vld [vmem:[%s1297 + $0x90] sm:$0xff]
        %v1317 = vld [vmem:[%s1297 + $0x98] sm:$0xff]
        %v1318 = vld [vmem:[%s1297 + $0xa0] sm:$0xff]
        %v1319 = vld [vmem:[%s1297 + $0xa8] sm:$0xff]
        %v1320 = vld [vmem:[%s1297 + $0xb0] sm:$0xff]
        %v1321 = vld [vmem:[%s1297 + $0xb8] sm:$0xff]
        %v1322 = vld [vmem:[%s1297 + $0xc0] sm:$0xff]
        %v1323 = vld [vmem:[%s1297 + $0xc8] sm:$0xff]
        %v1324 = vld [vmem:[%s1297 + $0xd0] sm:$0xff]
        %v1325 = vld [vmem:[%s1297 + $0xd8] sm:$0xff]
        %v1326 = vld [vmem:[%s1297 + $0xe0] sm:$0xff]
        %v1327 = vld [vmem:[%s1297 + $0xe8] sm:$0xff]
        %v1328 = vld [vmem:[%s1297 + $0xf0] sm:$0xff]
        %v1329 = vld [vmem:[%s1297 + $0xf8] sm:$0xff]
        %v1330 = vld [vmem:[%s1297 + $0x100] sm:$0xff]
        %v1331 = vld [vmem:[%s1297 + $0x108] sm:$0xff]
        %v1332 = vld [vmem:[%s1297 + $0x110] sm:$0xff]
        %v1333 = vld [vmem:[%s1297 + $0x118] sm:$0xff]
        %v1334 = vld [vmem:[%s1297 + $0x120] sm:$0xff]
        %v1335 = vld [vmem:[%s1297 + $0x128] sm:$0xff]
        %v1336 = vld [vmem:[%s1297 + $0x130] sm:$0xff]
        %v1337 = vld [vmem:[%s1297 + $0x138] sm:$0xff]
        %v1338 = vld [vmem:[%s1297 + $0x140] sm:$0xff]
        %v1339 = vld [vmem:[%s1297 + $0x148] sm:$0xff]
        %v1340 = vld [vmem:[%s1297 + $0x150] sm:$0xff]
        %v1341 = vld [vmem:[%s1297 + $0x158] sm:$0xff]
        %v1342 = vld [vmem:[%s1297 + $0x160] sm:$0xff]
        %v1343 = vld [vmem:[%s1297 + $0x168] sm:$0xff]
        %v1344 = vld [vmem:[%s1297 + $0x170] sm:$0xff]
        %v1345 = vld [vmem:[%s1297 + $0x178] sm:$0xff]
        %v1346 = vld [vmem:[%s1297 + $0x180] sm:$0xff]
        %v1347 = vld [vmem:[%s1297 + $0x188] sm:$0xff]
        %v1348 = vld [vmem:[%s1297 + $0x190] sm:$0xff]
        %v1349 = vld [vmem:[%s1297 + $0x198] sm:$0xff]
        %v1350 = vld [vmem:[%s1297 + $0x1a0] sm:$0xff]
        %v1351 = vld [vmem:[%s1297 + $0x1a8] sm:$0xff]
        %v1352 = vld [vmem:[%s1297 + $0x1b0] sm:$0xff]
        %v1353 = vld [vmem:[%s1297 + $0x1b8] sm:$0xff]
        %v1354 = vld [vmem:[%s1297 + $0x1c0] sm:$0xff]
        %v1355 = vld [vmem:[%s1297 + $0x1c8] sm:$0xff]
        %v1356 = vld [vmem:[%s1297 + $0x1d0] sm:$0xff]
        %v1357 = vld [vmem:[%s1297 + $0x1d8] sm:$0xff]
        %v1358 = vld [vmem:[%s1297 + $0x1e0] sm:$0xff]
        %v1359 = vld [vmem:[%s1297 + $0x1e8] sm:$0xff]
        %v1360 = vld [vmem:[%s1297 + $0x1f0] sm:$0xff]
        %v1361 = vld [vmem:[%s1297 + $0x1f8] sm:$0xff]
        %v1362 = vld [vmem:[%s312] sm:$0xff]
        %v1363 = vld [vmem:[%s312 + $0x8] sm:$0xff]
        %v1364 = vld [vmem:[%s312 + $0x10] sm:$0xff]
        %v1365 = vld [vmem:[%s312 + $0x18] sm:$0xff]
        %v1366 = vld [vmem:[%s312 + $0x20] sm:$0xff]
        %v1367 = vld [vmem:[%s312 + $0x28] sm:$0xff]
        %v1368 = vld [vmem:[%s312 + $0x30] sm:$0xff]
        %v1369 = vld [vmem:[%s312 + $0x38] sm:$0xff]
        %v1370 = vld [vmem:[%s312 + $0x40] sm:$0xff]
        %v1371 = vld [vmem:[%s312 + $0x48] sm:$0xff]
        %v1372 = vld [vmem:[%s312 + $0x50] sm:$0xff]
        %v1373 = vld [vmem:[%s312 + $0x58] sm:$0xff]
        %v1374 = vld [vmem:[%s312 + $0x60] sm:$0xff]
        %v1375 = vld [vmem:[%s312 + $0x68] sm:$0xff]
        %v1376 = vld [vmem:[%s312 + $0x70] sm:$0xff]
        %v1377 = vld [vmem:[%s312 + $0x78] sm:$0xff]
        %v1378 = vld [vmem:[%s312 + $0x80] sm:$0xff]
        %v1379 = vld [vmem:[%s312 + $0x88] sm:$0xff]
        %v1380 = vld [vmem:[%s312 + $0x90] sm:$0xff]
        %v1381 = vld [vmem:[%s312 + $0x98] sm:$0xff]
        %v1382 = vld [vmem:[%s312 + $0xa0] sm:$0xff]
        %v1383 = vld [vmem:[%s312 + $0xa8] sm:$0xff]
        %v1384 = vld [vmem:[%s312 + $0xb0] sm:$0xff]
        %v1385 = vld [vmem:[%s312 + $0xb8] sm:$0xff]
        %v1386 = vld [vmem:[%s312 + $0xc0] sm:$0xff]
        %v1387 = vld [vmem:[%s312 + $0xc8] sm:$0xff]
        %v1388 = vld [vmem:[%s312 + $0xd0] sm:$0xff]
        %v1389 = vld [vmem:[%s312 + $0xd8] sm:$0xff]
        %v1390 = vld [vmem:[%s312 + $0xe0] sm:$0xff]
        %v1391 = vld [vmem:[%s312 + $0xe8] sm:$0xff]
        %v1392 = vld [vmem:[%s312 + $0xf0] sm:$0xff]
        %v1393 = vld [vmem:[%s312 + $0xf8] sm:$0xff]
        %v1394 = vld [vmem:[%s312 + $0x100] sm:$0xff]
        %v1395 = vld [vmem:[%s312 + $0x108] sm:$0xff]
        %v1396 = vld [vmem:[%s312 + $0x110] sm:$0xff]
        %v1397 = vld [vmem:[%s312 + $0x118] sm:$0xff]
        %v1398 = vld [vmem:[%s312 + $0x120] sm:$0xff]
        %v1399 = vld [vmem:[%s312 + $0x128] sm:$0xff]
        %v1400 = vld [vmem:[%s312 + $0x130] sm:$0xff]
        %v1401 = vld [vmem:[%s312 + $0x138] sm:$0xff]
        %v1402 = vld [vmem:[%s312 + $0x140] sm:$0xff]
        %v1403 = vld [vmem:[%s312 + $0x148] sm:$0xff]
        %v1404 = vld [vmem:[%s312 + $0x150] sm:$0xff]
        %v1405 = vld [vmem:[%s312 + $0x158] sm:$0xff]
        %v1406 = vld [vmem:[%s312 + $0x160] sm:$0xff]
        %v1407 = vld [vmem:[%s312 + $0x168] sm:$0xff]
        %v1408 = vld [vmem:[%s312 + $0x170] sm:$0xff]
        %v1409 = vld [vmem:[%s312 + $0x178] sm:$0xff]
        %v1410 = vld [vmem:[%s312 + $0x180] sm:$0xff]
        %v1411 = vld [vmem:[%s312 + $0x188] sm:$0xff]
        %v1412 = vld [vmem:[%s312 + $0x190] sm:$0xff]
        %v1413 = vld [vmem:[%s312 + $0x198] sm:$0xff]
        %v1414 = vld [vmem:[%s312 + $0x1a0] sm:$0xff]
        %v1415 = vld [vmem:[%s312 + $0x1a8] sm:$0xff]
        %v1416 = vld [vmem:[%s312 + $0x1b0] sm:$0xff]
        %v1417 = vld [vmem:[%s312 + $0x1b8] sm:$0xff]
        %v1418 = vld [vmem:[%s312 + $0x1c0] sm:$0xff]
        %v1419 = vld [vmem:[%s312 + $0x1c8] sm:$0xff]
        %v1420 = vld [vmem:[%s312 + $0x1d0] sm:$0xff]
        %v1421 = vld [vmem:[%s312 + $0x1d8] sm:$0xff]
        %v1422 = vld [vmem:[%s312 + $0x1e0] sm:$0xff]
        %v1423 = vld [vmem:[%s312 + $0x1e8] sm:$0xff]
        %v1424 = vld [vmem:[%s312 + $0x1f0] sm:$0xff]
        %v1425 = vld [vmem:[%s312 + $0x1f8] sm:$0xff]
        %v1426 = vld [vmem:[%s312 + $0x200] sm:$0xff]
        %v1427 = vld [vmem:[%s312 + $0x208] sm:$0xff]
        %v1428 = vld [vmem:[%s312 + $0x210] sm:$0xff]
        %v1429 = vld [vmem:[%s312 + $0x218] sm:$0xff]
        %v1430 = vld [vmem:[%s312 + $0x220] sm:$0xff]
        %v1431 = vld [vmem:[%s312 + $0x228] sm:$0xff]
        %v1432 = vld [vmem:[%s312 + $0x230] sm:$0xff]
        %v1433 = vld [vmem:[%s312 + $0x238] sm:$0xff]
        %v1434 = vld [vmem:[%s312 + $0x240] sm:$0xff]
        %v1435 = vld [vmem:[%s312 + $0x248] sm:$0xff]
        %v1436 = vld [vmem:[%s312 + $0x250] sm:$0xff]
        %v1437 = vld [vmem:[%s312 + $0x258] sm:$0xff]
        %v1438 = vld [vmem:[%s312 + $0x260] sm:$0xff]
        %v1439 = vld [vmem:[%s312 + $0x268] sm:$0xff]
        %v1440 = vld [vmem:[%s312 + $0x270] sm:$0xff]
        %v1441 = vld [vmem:[%s312 + $0x278] sm:$0xff]
        %v1442 = vld [vmem:[%s312 + $0x280] sm:$0xff]
        %v1443 = vld [vmem:[%s312 + $0x288] sm:$0xff]
        %v1444 = vld [vmem:[%s312 + $0x290] sm:$0xff]
        %v1445 = vld [vmem:[%s312 + $0x298] sm:$0xff]
        %v1446 = vld [vmem:[%s312 + $0x2a0] sm:$0xff]
        %v1447 = vld [vmem:[%s312 + $0x2a8] sm:$0xff]
        %v1448 = vld [vmem:[%s312 + $0x2b0] sm:$0xff]
        %v1449 = vld [vmem:[%s312 + $0x2b8] sm:$0xff]
        %v1450 = vld [vmem:[%s312 + $0x2c0] sm:$0xff]
        %v1451 = vld [vmem:[%s312 + $0x2c8] sm:$0xff]
        %v1452 = vld [vmem:[%s312 + $0x2d0] sm:$0xff]
        %v1453 = vld [vmem:[%s312 + $0x2d8] sm:$0xff]
        %v1454 = vld [vmem:[%s312 + $0x2e0] sm:$0xff]
        %v1455 = vld [vmem:[%s312 + $0x2e8] sm:$0xff]
        %v1456 = vld [vmem:[%s312 + $0x2f0] sm:$0xff]
        %v1457 = vld [vmem:[%s312 + $0x2f8] sm:$0xff]
        %v1458 = vld [vmem:[%s312 + $0x300] sm:$0xff]
        %v1459 = vld [vmem:[%s312 + $0x308] sm:$0xff]
        %v1460 = vld [vmem:[%s312 + $0x310] sm:$0xff]
        %v1461 = vld [vmem:[%s312 + $0x318] sm:$0xff]
        %v1462 = vld [vmem:[%s312 + $0x320] sm:$0xff]
        %v1463 = vld [vmem:[%s312 + $0x328] sm:$0xff]
        %v1464 = vld [vmem:[%s312 + $0x330] sm:$0xff]
        %v1465 = vld [vmem:[%s312 + $0x338] sm:$0xff]
        %v1466 = vld [vmem:[%s312 + $0x340] sm:$0xff]
        %v1467 = vld [vmem:[%s312 + $0x348] sm:$0xff]
        %v1468 = vld [vmem:[%s312 + $0x350] sm:$0xff]
        %v1469 = vld [vmem:[%s312 + $0x358] sm:$0xff]
        %v1470 = vld [vmem:[%s312 + $0x360] sm:$0xff]
        %v1471 = vld [vmem:[%s312 + $0x368] sm:$0xff]
        %v1472 = vld [vmem:[%s312 + $0x370] sm:$0xff]
        %v1473 = vld [vmem:[%s312 + $0x378] sm:$0xff]
        %v1474 = vld [vmem:[%s312 + $0x380] sm:$0xff]
        %v1475 = vld [vmem:[%s312 + $0x388] sm:$0xff]
        %v1476 = vld [vmem:[%s312 + $0x390] sm:$0xff]
        %v1477 = vld [vmem:[%s312 + $0x398] sm:$0xff]
        %v1478 = vld [vmem:[%s312 + $0x3a0] sm:$0xff]
        %v1479 = vld [vmem:[%s312 + $0x3a8] sm:$0xff]
        %v1480 = vld [vmem:[%s312 + $0x3b0] sm:$0xff]
        %v1481 = vld [vmem:[%s312 + $0x3b8] sm:$0xff]
        %v1482 = vld [vmem:[%s312 + $0x3c0] sm:$0xff]
        %v1483 = vld [vmem:[%s312 + $0x3c8] sm:$0xff]
        %v1484 = vld [vmem:[%s312 + $0x3d0] sm:$0xff]
        %v1485 = vld [vmem:[%s312 + $0x3d8] sm:$0xff]
        %v1486 = vld [vmem:[%s312 + $0x3e0] sm:$0xff]
        %v1487 = vld [vmem:[%s312 + $0x3e8] sm:$0xff]
        %v1488 = vld [vmem:[%s312 + $0x3f0] sm:$0xff]
        %v1489 = vld [vmem:[%s312 + $0x3f8] sm:$0xff]
        %v1490 = vld [vmem:[%s312 + $0x400] sm:$0xff]
        %v1491 = vld [vmem:[%s312 + $0x408] sm:$0xff]
        %v1492 = vld [vmem:[%s312 + $0x410] sm:$0xff]
        %v1493 = vld [vmem:[%s312 + $0x418] sm:$0xff]
        %v1494 = vld [vmem:[%s312 + $0x420] sm:$0xff]
        %v1495 = vld [vmem:[%s312 + $0x428] sm:$0xff]
        %v1496 = vld [vmem:[%s312 + $0x430] sm:$0xff]
        %v1497 = vld [vmem:[%s312 + $0x438] sm:$0xff]
        %v1498 = vld [vmem:[%s312 + $0x440] sm:$0xff]
        %v1499 = vld [vmem:[%s312 + $0x448] sm:$0xff]
        %v1500 = vld [vmem:[%s312 + $0x450] sm:$0xff]
        %v1501 = vld [vmem:[%s312 + $0x458] sm:$0xff]
        %v1502 = vld [vmem:[%s312 + $0x460] sm:$0xff]
        %v1503 = vld [vmem:[%s312 + $0x468] sm:$0xff]
        %v1504 = vld [vmem:[%s312 + $0x470] sm:$0xff]
        %v1505 = vld [vmem:[%s312 + $0x478] sm:$0xff]
        %v1506 = vld [vmem:[%s312 + $0x480] sm:$0xff]
        %v1507 = vld [vmem:[%s312 + $0x488] sm:$0xff]
        %v1508 = vld [vmem:[%s312 + $0x490] sm:$0xff]
        %v1509 = vld [vmem:[%s312 + $0x498] sm:$0xff]
        %v1510 = vld [vmem:[%s312 + $0x4a0] sm:$0xff]
        %v1511 = vld [vmem:[%s312 + $0x4a8] sm:$0xff]
        %v1512 = vld [vmem:[%s312 + $0x4b0] sm:$0xff]
        %v1513 = vld [vmem:[%s312 + $0x4b8] sm:$0xff]
        %v1514 = vld [vmem:[%s312 + $0x4c0] sm:$0xff]
        %v1515 = vld [vmem:[%s312 + $0x4c8] sm:$0xff]
        %v1516 = vld [vmem:[%s312 + $0x4d0] sm:$0xff]
        %v1517 = vld [vmem:[%s312 + $0x4d8] sm:$0xff]
        %v1518 = vld [vmem:[%s312 + $0x4e0] sm:$0xff]
        %v1519 = vld [vmem:[%s312 + $0x4e8] sm:$0xff]
        %v1520 = vld [vmem:[%s312 + $0x4f0] sm:$0xff]
        %v1521 = vld [vmem:[%s312 + $0x4f8] sm:$0xff]
        %v1522 = vld [vmem:[%s312 + $0x500] sm:$0xff]
        %v1523 = vld [vmem:[%s312 + $0x508] sm:$0xff]
        %v1524 = vld [vmem:[%s312 + $0x510] sm:$0xff]
        %v1525 = vld [vmem:[%s312 + $0x518] sm:$0xff]
        %v1526 = vld [vmem:[%s312 + $0x520] sm:$0xff]
        %v1527 = vld [vmem:[%s312 + $0x528] sm:$0xff]
        %v1528 = vld [vmem:[%s312 + $0x530] sm:$0xff]
        %v1529 = vld [vmem:[%s312 + $0x538] sm:$0xff]
        %v1530 = vld [vmem:[%s312 + $0x540] sm:$0xff]
        %v1531 = vld [vmem:[%s312 + $0x548] sm:$0xff]
        %v1532 = vld [vmem:[%s312 + $0x550] sm:$0xff]
        %v1533 = vld [vmem:[%s312 + $0x558] sm:$0xff]
        %v1534 = vld [vmem:[%s312 + $0x560] sm:$0xff]
        %v1535 = vld [vmem:[%s312 + $0x568] sm:$0xff]
        %v1536 = vld [vmem:[%s312 + $0x570] sm:$0xff]
        %v1537 = vld [vmem:[%s312 + $0x578] sm:$0xff]
        %v1538 = vld [vmem:[%s312 + $0x580] sm:$0xff]
        %v1539 = vld [vmem:[%s312 + $0x588] sm:$0xff]
        %v1540 = vld [vmem:[%s312 + $0x590] sm:$0xff]
        %v1541 = vld [vmem:[%s312 + $0x598] sm:$0xff]
        %v1542 = vld [vmem:[%s312 + $0x5a0] sm:$0xff]
        %v1543 = vld [vmem:[%s312 + $0x5a8] sm:$0xff]
        %v1544 = vld [vmem:[%s312 + $0x5b0] sm:$0xff]
        %v1545 = vld [vmem:[%s312 + $0x5b8] sm:$0xff]
        %v1546 = vld [vmem:[%s312 + $0x5c0] sm:$0xff]
        %v1547 = vld [vmem:[%s312 + $0x5c8] sm:$0xff]
        %v1548 = vld [vmem:[%s312 + $0x5d0] sm:$0xff]
        %v1549 = vld [vmem:[%s312 + $0x5d8] sm:$0xff]
        %v1550 = vld [vmem:[%s312 + $0x5e0] sm:$0xff]
        %v1551 = vld [vmem:[%s312 + $0x5e8] sm:$0xff]
        %v1552 = vld [vmem:[%s312 + $0x5f0] sm:$0xff]
        %v1553 = vld [vmem:[%s312 + $0x5f8] sm:$0xff]
        %v1554 = vld [vmem:[%s312 + $0x600] sm:$0xff]
        %v1555 = vld [vmem:[%s312 + $0x608] sm:$0xff]
        %v1556 = vld [vmem:[%s312 + $0x610] sm:$0xff]
        %v1557 = vld [vmem:[%s312 + $0x618] sm:$0xff]
        %v1558 = vld [vmem:[%s312 + $0x620] sm:$0xff]
        %v1559 = vld [vmem:[%s312 + $0x628] sm:$0xff]
        %v1560 = vld [vmem:[%s312 + $0x630] sm:$0xff]
        %v1561 = vld [vmem:[%s312 + $0x638] sm:$0xff]
        %v1562 = vld [vmem:[%s312 + $0x640] sm:$0xff]
        %v1563 = vld [vmem:[%s312 + $0x648] sm:$0xff]
        %v1564 = vld [vmem:[%s312 + $0x650] sm:$0xff]
        %v1565 = vld [vmem:[%s312 + $0x658] sm:$0xff]
        %v1566 = vld [vmem:[%s312 + $0x660] sm:$0xff]
        %v1567 = vld [vmem:[%s312 + $0x668] sm:$0xff]
        %v1568 = vld [vmem:[%s312 + $0x670] sm:$0xff]
        %v1569 = vld [vmem:[%s312 + $0x678] sm:$0xff]
        %v1570 = vld [vmem:[%s312 + $0x680] sm:$0xff]
        %v1571 = vld [vmem:[%s312 + $0x688] sm:$0xff]
        %v1572 = vld [vmem:[%s312 + $0x690] sm:$0xff]
        %v1573 = vld [vmem:[%s312 + $0x698] sm:$0xff]
        %v1574 = vld [vmem:[%s312 + $0x6a0] sm:$0xff]
        %v1575 = vld [vmem:[%s312 + $0x6a8] sm:$0xff]
        %v1576 = vld [vmem:[%s312 + $0x6b0] sm:$0xff]
        %v1577 = vld [vmem:[%s312 + $0x6b8] sm:$0xff]
        %v1578 = vld [vmem:[%s312 + $0x6c0] sm:$0xff]
        %v1579 = vld [vmem:[%s312 + $0x6c8] sm:$0xff]
        %v1580 = vld [vmem:[%s312 + $0x6d0] sm:$0xff]
        %v1581 = vld [vmem:[%s312 + $0x6d8] sm:$0xff]
        %v1582 = vld [vmem:[%s312 + $0x6e0] sm:$0xff]
        %v1583 = vld [vmem:[%s312 + $0x6e8] sm:$0xff]
        %v1584 = vld [vmem:[%s312 + $0x6f0] sm:$0xff]
        %v1585 = vld [vmem:[%s312 + $0x6f8] sm:$0xff]
        %v1586 = vld [vmem:[%s312 + $0x700] sm:$0xff]
        %v1587 = vld [vmem:[%s312 + $0x708] sm:$0xff]
        %v1588 = vld [vmem:[%s312 + $0x710] sm:$0xff]
        %v1589 = vld [vmem:[%s312 + $0x718] sm:$0xff]
        %v1590 = vld [vmem:[%s312 + $0x720] sm:$0xff]
        %v1591 = vld [vmem:[%s312 + $0x728] sm:$0xff]
        %v1592 = vld [vmem:[%s312 + $0x730] sm:$0xff]
        %v1593 = vld [vmem:[%s312 + $0x738] sm:$0xff]
        %v1594 = vld [vmem:[%s312 + $0x740] sm:$0xff]
        %v1595 = vld [vmem:[%s312 + $0x748] sm:$0xff]
        %v1596 = vld [vmem:[%s312 + $0x750] sm:$0xff]
        %v1597 = vld [vmem:[%s312 + $0x758] sm:$0xff]
        %v1598 = vld [vmem:[%s312 + $0x760] sm:$0xff]
        %v1599 = vld [vmem:[%s312 + $0x768] sm:$0xff]
        %v1600 = vld [vmem:[%s312 + $0x770] sm:$0xff]
        %v1601 = vld [vmem:[%s312 + $0x778] sm:$0xff]
        %v1602 = vld [vmem:[%s312 + $0x780] sm:$0xff]
        %v1603 = vld [vmem:[%s312 + $0x788] sm:$0xff]
        %v1604 = vld [vmem:[%s312 + $0x790] sm:$0xff]
        %v1605 = vld [vmem:[%s312 + $0x798] sm:$0xff]
        %v1606 = vld [vmem:[%s312 + $0x7a0] sm:$0xff]
        %v1607 = vld [vmem:[%s312 + $0x7a8] sm:$0xff]
        %v1608 = vld [vmem:[%s312 + $0x7b0] sm:$0xff]
        %v1609 = vld [vmem:[%s312 + $0x7b8] sm:$0xff]
        %v1610 = vld [vmem:[%s312 + $0x7c0] sm:$0xff]
        %v1611 = vld [vmem:[%s312 + $0x7c8] sm:$0xff]
        %v1612 = vld [vmem:[%s312 + $0x7d0] sm:$0xff]
        %v1613 = vld [vmem:[%s312 + $0x7d8] sm:$0xff]
        %v1614 = vld [vmem:[%s312 + $0x7e0] sm:$0xff]
        %v1615 = vld [vmem:[%s312 + $0x7e8] sm:$0xff]
        %v1616 = vld [vmem:[%s312 + $0x7f0] sm:$0xff]
        %v1617 = vld [vmem:[%s312 + $0x7f8] sm:$0xff]
        %v1618 = vld [vmem:[%s312 + $0x800] sm:$0xff]
        %v1619 = vld [vmem:[%s312 + $0x808] sm:$0xff]
        %v1620 = vld [vmem:[%s312 + $0x810] sm:$0xff]
        %v1621 = vld [vmem:[%s312 + $0x818] sm:$0xff]
        %v1622 = vld [vmem:[%s312 + $0x820] sm:$0xff]
        %v1623 = vld [vmem:[%s312 + $0x828] sm:$0xff]
        %v1624 = vld [vmem:[%s312 + $0x830] sm:$0xff]
        %v1625 = vld [vmem:[%s312 + $0x838] sm:$0xff]
        %v1626 = vld [vmem:[%s312 + $0x840] sm:$0xff]
        %v1627 = vld [vmem:[%s312 + $0x848] sm:$0xff]
        %v1628 = vld [vmem:[%s312 + $0x850] sm:$0xff]
        %v1629 = vld [vmem:[%s312 + $0x858] sm:$0xff]
        %v1630 = vld [vmem:[%s312 + $0x860] sm:$0xff]
        %v1631 = vld [vmem:[%s312 + $0x868] sm:$0xff]
        %v1632 = vld [vmem:[%s312 + $0x870] sm:$0xff]
        %v1633 = vld [vmem:[%s312 + $0x878] sm:$0xff]
        %v1634 = vld [vmem:[%s312 + $0x880] sm:$0xff]
        %v1635 = vld [vmem:[%s312 + $0x888] sm:$0xff]
        %v1636 = vld [vmem:[%s312 + $0x890] sm:$0xff]
        %v1637 = vld [vmem:[%s312 + $0x898] sm:$0xff]
        %v1638 = vld [vmem:[%s312 + $0x8a0] sm:$0xff]
        %v1639 = vld [vmem:[%s312 + $0x8a8] sm:$0xff]
        %v1640 = vld [vmem:[%s312 + $0x8b0] sm:$0xff]
        %v1641 = vld [vmem:[%s312 + $0x8b8] sm:$0xff]
        %v1642 = vld [vmem:[%s312 + $0x8c0] sm:$0xff]
        %v1643 = vld [vmem:[%s312 + $0x8c8] sm:$0xff]
        %v1644 = vld [vmem:[%s312 + $0x8d0] sm:$0xff]
        %v1645 = vld [vmem:[%s312 + $0x8d8] sm:$0xff]
        %v1646 = vld [vmem:[%s312 + $0x8e0] sm:$0xff]
        %v1647 = vld [vmem:[%s312 + $0x8e8] sm:$0xff]
        %v1648 = vld [vmem:[%s312 + $0x8f0] sm:$0xff]
        %v1649 = vld [vmem:[%s312 + $0x8f8] sm:$0xff]
        %v1650 = vld [vmem:[%s312 + $0x900] sm:$0xff]
        %v1651 = vld [vmem:[%s312 + $0x908] sm:$0xff]
        %v1652 = vld [vmem:[%s312 + $0x910] sm:$0xff]
        %v1653 = vld [vmem:[%s312 + $0x918] sm:$0xff]
        %v1654 = vld [vmem:[%s312 + $0x920] sm:$0xff]
        %v1655 = vld [vmem:[%s312 + $0x928] sm:$0xff]
        %v1656 = vld [vmem:[%s312 + $0x930] sm:$0xff]
        %v1657 = vld [vmem:[%s312 + $0x938] sm:$0xff]
        %v1658 = vld [vmem:[%s312 + $0x940] sm:$0xff]
        %v1659 = vld [vmem:[%s312 + $0x948] sm:$0xff]
        %v1660 = vld [vmem:[%s312 + $0x950] sm:$0xff]
        %v1661 = vld [vmem:[%s312 + $0x958] sm:$0xff]
        %v1662 = vld [vmem:[%s312 + $0x960] sm:$0xff]
        %v1663 = vld [vmem:[%s312 + $0x968] sm:$0xff]
        %v1664 = vld [vmem:[%s312 + $0x970] sm:$0xff]
        %v1665 = vld [vmem:[%s312 + $0x978] sm:$0xff]
        %v1666 = vld [vmem:[%s312 + $0x980] sm:$0xff]
        %v1667 = vld [vmem:[%s312 + $0x988] sm:$0xff]
        %v1668 = vld [vmem:[%s312 + $0x990] sm:$0xff]
        %v1669 = vld [vmem:[%s312 + $0x998] sm:$0xff]
        %v1670 = vld [vmem:[%s312 + $0x9a0] sm:$0xff]
        %v1671 = vld [vmem:[%s312 + $0x9a8] sm:$0xff]
        %v1672 = vld [vmem:[%s312 + $0x9b0] sm:$0xff]
        %v1673 = vld [vmem:[%s312 + $0x9b8] sm:$0xff]
        %v1674 = vld [vmem:[%s312 + $0x9c0] sm:$0xff]
        %v1675 = vld [vmem:[%s312 + $0x9c8] sm:$0xff]
        %v1676 = vld [vmem:[%s312 + $0x9d0] sm:$0xff]
        %v1677 = vld [vmem:[%s312 + $0x9d8] sm:$0xff]
        %v1678 = vld [vmem:[%s312 + $0x9e0] sm:$0xff]
        %v1679 = vld [vmem:[%s312 + $0x9e8] sm:$0xff]
        %v1680 = vld [vmem:[%s312 + $0x9f0] sm:$0xff]
        %v1681 = vld [vmem:[%s312 + $0x9f8] sm:$0xff]
        %v1682 = vld [vmem:[%s312 + $0xa00] sm:$0xff]
        %v1683 = vld [vmem:[%s312 + $0xa08] sm:$0xff]
        %v1684 = vld [vmem:[%s312 + $0xa10] sm:$0xff]
        %v1685 = vld [vmem:[%s312 + $0xa18] sm:$0xff]
        %v1686 = vld [vmem:[%s312 + $0xa20] sm:$0xff]
        %v1687 = vld [vmem:[%s312 + $0xa28] sm:$0xff]
        %v1688 = vld [vmem:[%s312 + $0xa30] sm:$0xff]
        %v1689 = vld [vmem:[%s312 + $0xa38] sm:$0xff]
        %v1690 = vld [vmem:[%s312 + $0xa40] sm:$0xff]
        %v1691 = vld [vmem:[%s312 + $0xa48] sm:$0xff]
        %v1692 = vld [vmem:[%s312 + $0xa50] sm:$0xff]
        %v1693 = vld [vmem:[%s312 + $0xa58] sm:$0xff]
        %v1694 = vld [vmem:[%s312 + $0xa60] sm:$0xff]
        %v1695 = vld [vmem:[%s312 + $0xa68] sm:$0xff]
        %v1696 = vld [vmem:[%s312 + $0xa70] sm:$0xff]
        %v1697 = vld [vmem:[%s312 + $0xa78] sm:$0xff]
        %v1698 = vld [vmem:[%s312 + $0xa80] sm:$0xff]
        %v1699 = vld [vmem:[%s312 + $0xa88] sm:$0xff]
        %v1700 = vld [vmem:[%s312 + $0xa90] sm:$0xff]
        %v1701 = vld [vmem:[%s312 + $0xa98] sm:$0xff]
        %v1702 = vld [vmem:[%s312 + $0xaa0] sm:$0xff]
        %v1703 = vld [vmem:[%s312 + $0xaa8] sm:$0xff]
        %v1704 = vld [vmem:[%s312 + $0xab0] sm:$0xff]
        %v1705 = vld [vmem:[%s312 + $0xab8] sm:$0xff]
        %v1706 = vld [vmem:[%s312 + $0xac0] sm:$0xff]
        %v1707 = vld [vmem:[%s312 + $0xac8] sm:$0xff]
        %v1708 = vld [vmem:[%s312 + $0xad0] sm:$0xff]
        %v1709 = vld [vmem:[%s312 + $0xad8] sm:$0xff]
        %v1710 = vld [vmem:[%s312 + $0xae0] sm:$0xff]
        %v1711 = vld [vmem:[%s312 + $0xae8] sm:$0xff]
        %v1712 = vld [vmem:[%s312 + $0xaf0] sm:$0xff]
        %v1713 = vld [vmem:[%s312 + $0xaf8] sm:$0xff]
        %v1714 = vld [vmem:[%s312 + $0xb00] sm:$0xff]
        %v1715 = vld [vmem:[%s312 + $0xb08] sm:$0xff]
        %v1716 = vld [vmem:[%s312 + $0xb10] sm:$0xff]
        %v1717 = vld [vmem:[%s312 + $0xb18] sm:$0xff]
        %v1718 = vld [vmem:[%s312 + $0xb20] sm:$0xff]
        %v1719 = vld [vmem:[%s312 + $0xb28] sm:$0xff]
        %v1720 = vld [vmem:[%s312 + $0xb30] sm:$0xff]
        %v1721 = vld [vmem:[%s312 + $0xb38] sm:$0xff]
        %v1722 = vld [vmem:[%s312 + $0xb40] sm:$0xff]
        %v1723 = vld [vmem:[%s312 + $0xb48] sm:$0xff]
        %v1724 = vld [vmem:[%s312 + $0xb50] sm:$0xff]
        %v1725 = vld [vmem:[%s312 + $0xb58] sm:$0xff]
        %v1726 = vld [vmem:[%s312 + $0xb60] sm:$0xff]
        %v1727 = vld [vmem:[%s312 + $0xb68] sm:$0xff]
        %v1728 = vld [vmem:[%s312 + $0xb70] sm:$0xff]
        %v1729 = vld [vmem:[%s312 + $0xb78] sm:$0xff]
        %v1730 = vld [vmem:[%s312 + $0xb80] sm:$0xff]
        %v1731 = vld [vmem:[%s312 + $0xb88] sm:$0xff]
        %v1732 = vld [vmem:[%s312 + $0xb90] sm:$0xff]
        %v1733 = vld [vmem:[%s312 + $0xb98] sm:$0xff]
        %v1734 = vld [vmem:[%s312 + $0xba0] sm:$0xff]
        %v1735 = vld [vmem:[%s312 + $0xba8] sm:$0xff]
        %v1736 = vld [vmem:[%s312 + $0xbb0] sm:$0xff]
        %v1737 = vld [vmem:[%s312 + $0xbb8] sm:$0xff]
        %v1738 = vld [vmem:[%s312 + $0xbc0] sm:$0xff]
        %v1739 = vld [vmem:[%s312 + $0xbc8] sm:$0xff]
        %v1740 = vld [vmem:[%s312 + $0xbd0] sm:$0xff]
        %v1741 = vld [vmem:[%s312 + $0xbd8] sm:$0xff]
        %v1742 = vld [vmem:[%s312 + $0xbe0] sm:$0xff]
        %v1743 = vld [vmem:[%s312 + $0xbe8] sm:$0xff]
        %v1744 = vld [vmem:[%s312 + $0xbf0] sm:$0xff]
        %v1745 = vld [vmem:[%s312 + $0xbf8] sm:$0xff]
        %v1746 = vld [vmem:[%s312 + $0xc00] sm:$0xff]
        %v1747 = vld [vmem:[%s312 + $0xc08] sm:$0xff]
        %v1748 = vld [vmem:[%s312 + $0xc10] sm:$0xff]
        %v1749 = vld [vmem:[%s312 + $0xc18] sm:$0xff]
        %v1750 = vld [vmem:[%s312 + $0xc20] sm:$0xff]
        %v1751 = vld [vmem:[%s312 + $0xc28] sm:$0xff]
        %v1752 = vld [vmem:[%s312 + $0xc30] sm:$0xff]
        %v1753 = vld [vmem:[%s312 + $0xc38] sm:$0xff]
        %v1754 = vld [vmem:[%s312 + $0xc40] sm:$0xff]
        %v1755 = vld [vmem:[%s312 + $0xc48] sm:$0xff]
        %v1756 = vld [vmem:[%s312 + $0xc50] sm:$0xff]
        %v1757 = vld [vmem:[%s312 + $0xc58] sm:$0xff]
        %v1758 = vld [vmem:[%s312 + $0xc60] sm:$0xff]
        %v1759 = vld [vmem:[%s312 + $0xc68] sm:$0xff]
        %v1760 = vld [vmem:[%s312 + $0xc70] sm:$0xff]
        %v1761 = vld [vmem:[%s312 + $0xc78] sm:$0xff]
        %v1762 = vld [vmem:[%s312 + $0xc80] sm:$0xff]
        %v1763 = vld [vmem:[%s312 + $0xc88] sm:$0xff]
        %v1764 = vld [vmem:[%s312 + $0xc90] sm:$0xff]
        %v1765 = vld [vmem:[%s312 + $0xc98] sm:$0xff]
        %v1766 = vld [vmem:[%s312 + $0xca0] sm:$0xff]
        %v1767 = vld [vmem:[%s312 + $0xca8] sm:$0xff]
        %v1768 = vld [vmem:[%s312 + $0xcb0] sm:$0xff]
        %v1769 = vld [vmem:[%s312 + $0xcb8] sm:$0xff]
        %v1770 = vld [vmem:[%s312 + $0xcc0] sm:$0xff]
        %v1771 = vld [vmem:[%s312 + $0xcc8] sm:$0xff]
        %v1772 = vld [vmem:[%s312 + $0xcd0] sm:$0xff]
        %v1773 = vld [vmem:[%s312 + $0xcd8] sm:$0xff]
        %v1774 = vld [vmem:[%s312 + $0xce0] sm:$0xff]
        %v1775 = vld [vmem:[%s312 + $0xce8] sm:$0xff]
        %v1776 = vld [vmem:[%s312 + $0xcf0] sm:$0xff]
        %v1777 = vld [vmem:[%s312 + $0xcf8] sm:$0xff]
        %v1778 = vld [vmem:[%s312 + $0xd00] sm:$0xff]
        %v1779 = vld [vmem:[%s312 + $0xd08] sm:$0xff]
        %v1780 = vld [vmem:[%s312 + $0xd10] sm:$0xff]
        %v1781 = vld [vmem:[%s312 + $0xd18] sm:$0xff]
        %v1782 = vld [vmem:[%s312 + $0xd20] sm:$0xff]
        %v1783 = vld [vmem:[%s312 + $0xd28] sm:$0xff]
        %v1784 = vld [vmem:[%s312 + $0xd30] sm:$0xff]
        %v1785 = vld [vmem:[%s312 + $0xd38] sm:$0xff]
        %v1786 = vld [vmem:[%s312 + $0xd40] sm:$0xff]
        %v1787 = vld [vmem:[%s312 + $0xd48] sm:$0xff]
        %v1788 = vld [vmem:[%s312 + $0xd50] sm:$0xff]
        %v1789 = vld [vmem:[%s312 + $0xd58] sm:$0xff]
        %v1790 = vld [vmem:[%s312 + $0xd60] sm:$0xff]
        %v1791 = vld [vmem:[%s312 + $0xd68] sm:$0xff]
        %v1792 = vld [vmem:[%s312 + $0xd70] sm:$0xff]
        %v1793 = vld [vmem:[%s312 + $0xd78] sm:$0xff]
        %v1794 = vld [vmem:[%s312 + $0xd80] sm:$0xff]
        %v1795 = vld [vmem:[%s312 + $0xd88] sm:$0xff]
        %v1796 = vld [vmem:[%s312 + $0xd90] sm:$0xff]
        %v1797 = vld [vmem:[%s312 + $0xd98] sm:$0xff]
        %v1798 = vld [vmem:[%s312 + $0xda0] sm:$0xff]
        %v1799 = vld [vmem:[%s312 + $0xda8] sm:$0xff]
        %v1800 = vld [vmem:[%s312 + $0xdb0] sm:$0xff]
        %v1801 = vld [vmem:[%s312 + $0xdb8] sm:$0xff]
        %v1802 = vld [vmem:[%s312 + $0xdc0] sm:$0xff]
        %v1803 = vld [vmem:[%s312 + $0xdc8] sm:$0xff]
        %v1804 = vld [vmem:[%s312 + $0xdd0] sm:$0xff]
        %v1805 = vld [vmem:[%s312 + $0xdd8] sm:$0xff]
        %v1806 = vld [vmem:[%s312 + $0xde0] sm:$0xff]
        %v1807 = vld [vmem:[%s312 + $0xde8] sm:$0xff]
        %v1808 = vld [vmem:[%s312 + $0xdf0] sm:$0xff]
        %v1809 = vld [vmem:[%s312 + $0xdf8] sm:$0xff]
        %v1810 = vld [vmem:[%s312 + $0xe00] sm:$0xff]
        %v1811 = vld [vmem:[%s312 + $0xe08] sm:$0xff]
        %v1812 = vld [vmem:[%s312 + $0xe10] sm:$0xff]
        %v1813 = vld [vmem:[%s312 + $0xe18] sm:$0xff]
        %v1814 = vld [vmem:[%s312 + $0xe20] sm:$0xff]
        %v1815 = vld [vmem:[%s312 + $0xe28] sm:$0xff]
        %v1816 = vld [vmem:[%s312 + $0xe30] sm:$0xff]
        %v1817 = vld [vmem:[%s312 + $0xe38] sm:$0xff]
        %v1818 = vld [vmem:[%s312 + $0xe40] sm:$0xff]
        %v1819 = vld [vmem:[%s312 + $0xe48] sm:$0xff]
        %v1820 = vld [vmem:[%s312 + $0xe50] sm:$0xff]
        %v1821 = vld [vmem:[%s312 + $0xe58] sm:$0xff]
        %v1822 = vld [vmem:[%s312 + $0xe60] sm:$0xff]
        %v1823 = vld [vmem:[%s312 + $0xe68] sm:$0xff]
        %v1824 = vld [vmem:[%s312 + $0xe70] sm:$0xff]
        %v1825 = vld [vmem:[%s312 + $0xe78] sm:$0xff]
        %v1826 = vld [vmem:[%s312 + $0xe80] sm:$0xff]
        %v1827 = vld [vmem:[%s312 + $0xe88] sm:$0xff]
        %v1828 = vld [vmem:[%s312 + $0xe90] sm:$0xff]
        %v1829 = vld [vmem:[%s312 + $0xe98] sm:$0xff]
        %v1830 = vld [vmem:[%s312 + $0xea0] sm:$0xff]
        %v1831 = vld [vmem:[%s312 + $0xea8] sm:$0xff]
        %v1832 = vld [vmem:[%s312 + $0xeb0] sm:$0xff]
        %v1833 = vld [vmem:[%s312 + $0xeb8] sm:$0xff]
        %v1834 = vld [vmem:[%s312 + $0xec0] sm:$0xff]
        %v1835 = vld [vmem:[%s312 + $0xec8] sm:$0xff]
        %v1836 = vld [vmem:[%s312 + $0xed0] sm:$0xff]
        %v1837 = vld [vmem:[%s312 + $0xed8] sm:$0xff]
        %v1838 = vld [vmem:[%s312 + $0xee0] sm:$0xff]
        %v1839 = vld [vmem:[%s312 + $0xee8] sm:$0xff]
        %v1840 = vld [vmem:[%s312 + $0xef0] sm:$0xff]
        %v1841 = vld [vmem:[%s312 + $0xef8] sm:$0xff]
        %v1842 = vld [vmem:[%s312 + $0xf00] sm:$0xff]
        %v1843 = vld [vmem:[%s312 + $0xf08] sm:$0xff]
        %v1844 = vld [vmem:[%s312 + $0xf10] sm:$0xff]
        %v1845 = vld [vmem:[%s312 + $0xf18] sm:$0xff]
        %v1846 = vld [vmem:[%s312 + $0xf20] sm:$0xff]
        %v1847 = vld [vmem:[%s312 + $0xf28] sm:$0xff]
        %v1848 = vld [vmem:[%s312 + $0xf30] sm:$0xff]
        %v1849 = vld [vmem:[%s312 + $0xf38] sm:$0xff]
        %v1850 = vld [vmem:[%s312 + $0xf40] sm:$0xff]
        %v1851 = vld [vmem:[%s312 + $0xf48] sm:$0xff]
        %v1852 = vld [vmem:[%s312 + $0xf50] sm:$0xff]
        %v1853 = vld [vmem:[%s312 + $0xf58] sm:$0xff]
        %v1854 = vld [vmem:[%s312 + $0xf60] sm:$0xff]
        %v1855 = vld [vmem:[%s312 + $0xf68] sm:$0xff]
        %v1856 = vld [vmem:[%s312 + $0xf70] sm:$0xff]
        %v1857 = vld [vmem:[%s312 + $0xf78] sm:$0xff]
        %v1858 = vld [vmem:[%s312 + $0xf80] sm:$0xff]
        %v1859 = vld [vmem:[%s312 + $0xf88] sm:$0xff]
        %v1860 = vld [vmem:[%s312 + $0xf90] sm:$0xff]
        %v1861 = vld [vmem:[%s312 + $0xf98] sm:$0xff]
        %v1862 = vld [vmem:[%s312 + $0xfa0] sm:$0xff]
        %v1863 = vld [vmem:[%s312 + $0xfa8] sm:$0xff]
        %v1864 = vld [vmem:[%s312 + $0xfb0] sm:$0xff]
        %v1865 = vld [vmem:[%s312 + $0xfb8] sm:$0xff]
        %v1866 = vld [vmem:[%s312 + $0xfc0] sm:$0xff]
        %v1867 = vld [vmem:[%s312 + $0xfc8] sm:$0xff]
        %v1868 = vld [vmem:[%s312 + $0xfd0] sm:$0xff]
        %v1869 = vld [vmem:[%s312 + $0xfd8] sm:$0xff]
        %v1870 = vld [vmem:[%s312 + $0xfe0] sm:$0xff]
        %v1871 = vld [vmem:[%s312 + $0xfe8] sm:$0xff]
        %v1872 = vld [vmem:[%s312 + $0xff0] sm:$0xff]
        %v1873 = vld [vmem:[%s312 + $0xff8] sm:$0xff]
        %s1874 = smul.u32 %s21, 8
        %s1875 = scalar_lea.vmem [#allocation8], %s1874
        %v1876 = vld [vmem:[%s1875] sm:$0xff]
        %v1878 = vlaneseq
        %v1879 = vshrl.u32 %v1878, 7
        %v1880 = vsub.s32 0, %v1879
        %v1881 = vrot.slane %v1876, %v1880
        %v1882 = vlaneseq
        %v1883 = vshrl.u32 %v1882, 7
        %v1884 = vsub.s32 1, %v1883
        %v1885 = vrot.slane %v1876, %v1884
        %v1886 = vlaneseq
        %v1887 = vshrl.u32 %v1886, 7
        %v1888 = vsub.s32 2, %v1887
        %v1889 = vrot.slane %v1876, %v1888
        %v1890 = vlaneseq
        %v1891 = vshrl.u32 %v1890, 7
        %v1892 = vsub.s32 3, %v1891
        %v1893 = vrot.slane %v1876, %v1892
        %v1894 = vlaneseq
        %v1895 = vshrl.u32 %v1894, 7
        %v1896 = vsub.s32 4, %v1895
        %v1897 = vrot.slane %v1876, %v1896
        %v1898 = vlaneseq
        %v1899 = vshrl.u32 %v1898, 7
        %v1900 = vsub.s32 5, %v1899
        %v1901 = vrot.slane %v1876, %v1900
        %v1902 = vlaneseq
        %v1903 = vshrl.u32 %v1902, 7
        %v1904 = vsub.s32 6, %v1903
        %v1905 = vrot.slane %v1876, %v1904
        %v1906 = vlaneseq
        %v1907 = vshrl.u32 %v1906, 7
        %v1908 = vsub.s32 7, %v1907
        %v1909 = vrot.slane %v1876, %v1908
        %v2430 = vunpack.c.l.b16 %v1362
        %v2431 = vunpack.c.h.b16 %v1362
        %v2432 = vunpack.c.l.b16 %v1363
        %v2433 = vunpack.c.h.b16 %v1363
        %v2434 = vunpack.c.l.b16 %v1364
        %v2435 = vunpack.c.h.b16 %v1364
        %v2436 = vunpack.c.l.b16 %v1365
        %v2437 = vunpack.c.h.b16 %v1365
        %v2438 = vunpack.c.l.b16 %v1366
        %v2439 = vunpack.c.h.b16 %v1366
        %v2440 = vunpack.c.l.b16 %v1367
        %v2441 = vunpack.c.h.b16 %v1367
        %v2442 = vunpack.c.l.b16 %v1368
        %v2443 = vunpack.c.h.b16 %v1368
        %v2444 = vunpack.c.l.b16 %v1369
        %v2445 = vunpack.c.h.b16 %v1369
        %v2446 = vunpack.c.l.b16 %v1370
        %v2447 = vunpack.c.h.b16 %v1370
        %v2448 = vunpack.c.l.b16 %v1371
        %v2449 = vunpack.c.h.b16 %v1371
        %v2450 = vunpack.c.l.b16 %v1372
        %v2451 = vunpack.c.h.b16 %v1372
        %v2452 = vunpack.c.l.b16 %v1373
        %v2453 = vunpack.c.h.b16 %v1373
        %v2454 = vunpack.c.l.b16 %v1374
        %v2455 = vunpack.c.h.b16 %v1374
        %v2456 = vunpack.c.l.b16 %v1375
        %v2457 = vunpack.c.h.b16 %v1375
        %v2458 = vunpack.c.l.b16 %v1376
        %v2459 = vunpack.c.h.b16 %v1376
        %v2460 = vunpack.c.l.b16 %v1377
        %v2461 = vunpack.c.h.b16 %v1377
        %v2462 = vunpack.c.l.b16 %v1378
        %v2463 = vunpack.c.h.b16 %v1378
        %v2464 = vunpack.c.l.b16 %v1379
        %v2465 = vunpack.c.h.b16 %v1379
        %v2466 = vunpack.c.l.b16 %v1380
        %v2467 = vunpack.c.h.b16 %v1380
        %v2468 = vunpack.c.l.b16 %v1381
        %v2469 = vunpack.c.h.b16 %v1381
        %v2470 = vunpack.c.l.b16 %v1382
        %v2471 = vunpack.c.h.b16 %v1382
        %v2472 = vunpack.c.l.b16 %v1383
        %v2473 = vunpack.c.h.b16 %v1383
        %v2474 = vunpack.c.l.b16 %v1384
        %v2475 = vunpack.c.h.b16 %v1384
        %v2476 = vunpack.c.l.b16 %v1385
        %v2477 = vunpack.c.h.b16 %v1385
        %v2478 = vunpack.c.l.b16 %v1386
        %v2479 = vunpack.c.h.b16 %v1386
        %v2480 = vunpack.c.l.b16 %v1387
        %v2481 = vunpack.c.h.b16 %v1387
        %v2482 = vunpack.c.l.b16 %v1388
        %v2483 = vunpack.c.h.b16 %v1388
        %v2484 = vunpack.c.l.b16 %v1389
        %v2485 = vunpack.c.h.b16 %v1389
        %v2486 = vunpack.c.l.b16 %v1390
        %v2487 = vunpack.c.h.b16 %v1390
        %v2488 = vunpack.c.l.b16 %v1391
        %v2489 = vunpack.c.h.b16 %v1391
        %v2490 = vunpack.c.l.b16 %v1392
        %v2491 = vunpack.c.h.b16 %v1392
        %v2492 = vunpack.c.l.b16 %v1393
        %v2493 = vunpack.c.h.b16 %v1393
        %v2494 = vunpack.c.l.b16 %v1394
        %v2495 = vunpack.c.h.b16 %v1394
        %v2496 = vunpack.c.l.b16 %v1395
        %v2497 = vunpack.c.h.b16 %v1395
        %v2498 = vunpack.c.l.b16 %v1396
        %v2499 = vunpack.c.h.b16 %v1396
        %v2500 = vunpack.c.l.b16 %v1397
        %v2501 = vunpack.c.h.b16 %v1397
        %v2502 = vunpack.c.l.b16 %v1398
        %v2503 = vunpack.c.h.b16 %v1398
        %v2504 = vunpack.c.l.b16 %v1399
        %v2505 = vunpack.c.h.b16 %v1399
        %v2506 = vunpack.c.l.b16 %v1400
        %v2507 = vunpack.c.h.b16 %v1400
        %v2508 = vunpack.c.l.b16 %v1401
        %v2509 = vunpack.c.h.b16 %v1401
        %v2510 = vunpack.c.l.b16 %v1402
        %v2511 = vunpack.c.h.b16 %v1402
        %v2512 = vunpack.c.l.b16 %v1403
        %v2513 = vunpack.c.h.b16 %v1403
        %v2514 = vunpack.c.l.b16 %v1404
        %v2515 = vunpack.c.h.b16 %v1404
        %v2516 = vunpack.c.l.b16 %v1405
        %v2517 = vunpack.c.h.b16 %v1405
        %v2518 = vunpack.c.l.b16 %v1406
        %v2519 = vunpack.c.h.b16 %v1406
        %v2520 = vunpack.c.l.b16 %v1407
        %v2521 = vunpack.c.h.b16 %v1407
        %v2522 = vunpack.c.l.b16 %v1408
        %v2523 = vunpack.c.h.b16 %v1408
        %v2524 = vunpack.c.l.b16 %v1409
        %v2525 = vunpack.c.h.b16 %v1409
        %v2526 = vunpack.c.l.b16 %v1410
        %v2527 = vunpack.c.h.b16 %v1410
        %v2528 = vunpack.c.l.b16 %v1411
        %v2529 = vunpack.c.h.b16 %v1411
        %v2530 = vunpack.c.l.b16 %v1412
        %v2531 = vunpack.c.h.b16 %v1412
        %v2532 = vunpack.c.l.b16 %v1413
        %v2533 = vunpack.c.h.b16 %v1413
        %v2534 = vunpack.c.l.b16 %v1414
        %v2535 = vunpack.c.h.b16 %v1414
        %v2536 = vunpack.c.l.b16 %v1415
        %v2537 = vunpack.c.h.b16 %v1415
        %v2538 = vunpack.c.l.b16 %v1416
        %v2539 = vunpack.c.h.b16 %v1416
        %v2540 = vunpack.c.l.b16 %v1417
        %v2541 = vunpack.c.h.b16 %v1417
        %v2542 = vunpack.c.l.b16 %v1418
        %v2543 = vunpack.c.h.b16 %v1418
        %v2544 = vunpack.c.l.b16 %v1419
        %v2545 = vunpack.c.h.b16 %v1419
        %v2546 = vunpack.c.l.b16 %v1420
        %v2547 = vunpack.c.h.b16 %v1420
        %v2548 = vunpack.c.l.b16 %v1421
        %v2549 = vunpack.c.h.b16 %v1421
        %v2550 = vunpack.c.l.b16 %v1422
        %v2551 = vunpack.c.h.b16 %v1422
        %v2552 = vunpack.c.l.b16 %v1423
        %v2553 = vunpack.c.h.b16 %v1423
        %v2554 = vunpack.c.l.b16 %v1424
        %v2555 = vunpack.c.h.b16 %v1424
        %v2556 = vunpack.c.l.b16 %v1425
        %v2557 = vunpack.c.h.b16 %v1425
        %v2558 = vunpack.c.l.b16 %v1426
        %v2559 = vunpack.c.h.b16 %v1426
        %v2560 = vunpack.c.l.b16 %v1427
        %v2561 = vunpack.c.h.b16 %v1427
        %v2562 = vunpack.c.l.b16 %v1428
        %v2563 = vunpack.c.h.b16 %v1428
        %v2564 = vunpack.c.l.b16 %v1429
        %v2565 = vunpack.c.h.b16 %v1429
        %v2566 = vunpack.c.l.b16 %v1430
        %v2567 = vunpack.c.h.b16 %v1430
        %v2568 = vunpack.c.l.b16 %v1431
        %v2569 = vunpack.c.h.b16 %v1431
        %v2570 = vunpack.c.l.b16 %v1432
        %v2571 = vunpack.c.h.b16 %v1432
        %v2572 = vunpack.c.l.b16 %v1433
        %v2573 = vunpack.c.h.b16 %v1433
        %v2574 = vunpack.c.l.b16 %v1434
        %v2575 = vunpack.c.h.b16 %v1434
        %v2576 = vunpack.c.l.b16 %v1435
        %v2577 = vunpack.c.h.b16 %v1435
        %v2578 = vunpack.c.l.b16 %v1436
        %v2579 = vunpack.c.h.b16 %v1436
        %v2580 = vunpack.c.l.b16 %v1437
        %v2581 = vunpack.c.h.b16 %v1437
        %v2582 = vunpack.c.l.b16 %v1438
        %v2583 = vunpack.c.h.b16 %v1438
        %v2584 = vunpack.c.l.b16 %v1439
        %v2585 = vunpack.c.h.b16 %v1439
        %v2586 = vunpack.c.l.b16 %v1440
        %v2587 = vunpack.c.h.b16 %v1440
        %v2588 = vunpack.c.l.b16 %v1441
        %v2589 = vunpack.c.h.b16 %v1441
        %v2590 = vunpack.c.l.b16 %v1442
        %v2591 = vunpack.c.h.b16 %v1442
        %v2592 = vunpack.c.l.b16 %v1443
        %v2593 = vunpack.c.h.b16 %v1443
        %v2594 = vunpack.c.l.b16 %v1444
        %v2595 = vunpack.c.h.b16 %v1444
        %v2596 = vunpack.c.l.b16 %v1445
        %v2597 = vunpack.c.h.b16 %v1445
        %v2598 = vunpack.c.l.b16 %v1446
        %v2599 = vunpack.c.h.b16 %v1446
        %v2600 = vunpack.c.l.b16 %v1447
        %v2601 = vunpack.c.h.b16 %v1447
        %v2602 = vunpack.c.l.b16 %v1448
        %v2603 = vunpack.c.h.b16 %v1448
        %v2604 = vunpack.c.l.b16 %v1449
        %v2605 = vunpack.c.h.b16 %v1449
        %v2606 = vunpack.c.l.b16 %v1450
        %v2607 = vunpack.c.h.b16 %v1450
        %v2608 = vunpack.c.l.b16 %v1451
        %v2609 = vunpack.c.h.b16 %v1451
        %v2610 = vunpack.c.l.b16 %v1452
        %v2611 = vunpack.c.h.b16 %v1452
        %v2612 = vunpack.c.l.b16 %v1453
        %v2613 = vunpack.c.h.b16 %v1453
        %v2614 = vunpack.c.l.b16 %v1454
        %v2615 = vunpack.c.h.b16 %v1454
        %v2616 = vunpack.c.l.b16 %v1455
        %v2617 = vunpack.c.h.b16 %v1455
        %v2618 = vunpack.c.l.b16 %v1456
        %v2619 = vunpack.c.h.b16 %v1456
        %v2620 = vunpack.c.l.b16 %v1457
        %v2621 = vunpack.c.h.b16 %v1457
        %v2622 = vunpack.c.l.b16 %v1458
        %v2623 = vunpack.c.h.b16 %v1458
        %v2624 = vunpack.c.l.b16 %v1459
        %v2625 = vunpack.c.h.b16 %v1459
        %v2626 = vunpack.c.l.b16 %v1460
        %v2627 = vunpack.c.h.b16 %v1460
        %v2628 = vunpack.c.l.b16 %v1461
        %v2629 = vunpack.c.h.b16 %v1461
        %v2630 = vunpack.c.l.b16 %v1462
        %v2631 = vunpack.c.h.b16 %v1462
        %v2632 = vunpack.c.l.b16 %v1463
        %v2633 = vunpack.c.h.b16 %v1463
        %v2634 = vunpack.c.l.b16 %v1464
        %v2635 = vunpack.c.h.b16 %v1464
        %v2636 = vunpack.c.l.b16 %v1465
        %v2637 = vunpack.c.h.b16 %v1465
        %v2638 = vunpack.c.l.b16 %v1466
        %v2639 = vunpack.c.h.b16 %v1466
        %v2640 = vunpack.c.l.b16 %v1467
        %v2641 = vunpack.c.h.b16 %v1467
        %v2642 = vunpack.c.l.b16 %v1468
        %v2643 = vunpack.c.h.b16 %v1468
        %v2644 = vunpack.c.l.b16 %v1469
        %v2645 = vunpack.c.h.b16 %v1469
        %v2646 = vunpack.c.l.b16 %v1470
        %v2647 = vunpack.c.h.b16 %v1470
        %v2648 = vunpack.c.l.b16 %v1471
        %v2649 = vunpack.c.h.b16 %v1471
        %v2650 = vunpack.c.l.b16 %v1472
        %v2651 = vunpack.c.h.b16 %v1472
        %v2652 = vunpack.c.l.b16 %v1473
        %v2653 = vunpack.c.h.b16 %v1473
        %v2654 = vunpack.c.l.b16 %v1474
        %v2655 = vunpack.c.h.b16 %v1474
        %v2656 = vunpack.c.l.b16 %v1475
        %v2657 = vunpack.c.h.b16 %v1475
        %v2658 = vunpack.c.l.b16 %v1476
        %v2659 = vunpack.c.h.b16 %v1476
        %v2660 = vunpack.c.l.b16 %v1477
        %v2661 = vunpack.c.h.b16 %v1477
        %v2662 = vunpack.c.l.b16 %v1478
        %v2663 = vunpack.c.h.b16 %v1478
        %v2664 = vunpack.c.l.b16 %v1479
        %v2665 = vunpack.c.h.b16 %v1479
        %v2666 = vunpack.c.l.b16 %v1480
        %v2667 = vunpack.c.h.b16 %v1480
        %v2668 = vunpack.c.l.b16 %v1481
        %v2669 = vunpack.c.h.b16 %v1481
        %v2670 = vunpack.c.l.b16 %v1482
        %v2671 = vunpack.c.h.b16 %v1482
        %v2672 = vunpack.c.l.b16 %v1483
        %v2673 = vunpack.c.h.b16 %v1483
        %v2674 = vunpack.c.l.b16 %v1484
        %v2675 = vunpack.c.h.b16 %v1484
        %v2676 = vunpack.c.l.b16 %v1485
        %v2677 = vunpack.c.h.b16 %v1485
        %v2678 = vunpack.c.l.b16 %v1486
        %v2679 = vunpack.c.h.b16 %v1486
        %v2680 = vunpack.c.l.b16 %v1487
        %v2681 = vunpack.c.h.b16 %v1487
        %v2682 = vunpack.c.l.b16 %v1488
        %v2683 = vunpack.c.h.b16 %v1488
        %v2684 = vunpack.c.l.b16 %v1489
        %v2685 = vunpack.c.h.b16 %v1489
        %v2686 = vunpack.c.l.b16 %v1490
        %v2687 = vunpack.c.h.b16 %v1490
        %v2688 = vunpack.c.l.b16 %v1491
        %v2689 = vunpack.c.h.b16 %v1491
        %v2690 = vunpack.c.l.b16 %v1492
        %v2691 = vunpack.c.h.b16 %v1492
        %v2692 = vunpack.c.l.b16 %v1493
        %v2693 = vunpack.c.h.b16 %v1493
        %v2694 = vunpack.c.l.b16 %v1494
        %v2695 = vunpack.c.h.b16 %v1494
        %v2696 = vunpack.c.l.b16 %v1495
        %v2697 = vunpack.c.h.b16 %v1495
        %v2698 = vunpack.c.l.b16 %v1496
        %v2699 = vunpack.c.h.b16 %v1496
        %v2700 = vunpack.c.l.b16 %v1497
        %v2701 = vunpack.c.h.b16 %v1497
        %v2702 = vunpack.c.l.b16 %v1498
        %v2703 = vunpack.c.h.b16 %v1498
        %v2704 = vunpack.c.l.b16 %v1499
        %v2705 = vunpack.c.h.b16 %v1499
        %v2706 = vunpack.c.l.b16 %v1500
        %v2707 = vunpack.c.h.b16 %v1500
        %v2708 = vunpack.c.l.b16 %v1501
        %v2709 = vunpack.c.h.b16 %v1501
        %v2710 = vunpack.c.l.b16 %v1502
        %v2711 = vunpack.c.h.b16 %v1502
        %v2712 = vunpack.c.l.b16 %v1503
        %v2713 = vunpack.c.h.b16 %v1503
        %v2714 = vunpack.c.l.b16 %v1504
        %v2715 = vunpack.c.h.b16 %v1504
        %v2716 = vunpack.c.l.b16 %v1505
        %v2717 = vunpack.c.h.b16 %v1505
        %v2718 = vunpack.c.l.b16 %v1506
        %v2719 = vunpack.c.h.b16 %v1506
        %v2720 = vunpack.c.l.b16 %v1507
        %v2721 = vunpack.c.h.b16 %v1507
        %v2722 = vunpack.c.l.b16 %v1508
        %v2723 = vunpack.c.h.b16 %v1508
        %v2724 = vunpack.c.l.b16 %v1509
        %v2725 = vunpack.c.h.b16 %v1509
        %v2726 = vunpack.c.l.b16 %v1510
        %v2727 = vunpack.c.h.b16 %v1510
        %v2728 = vunpack.c.l.b16 %v1511
        %v2729 = vunpack.c.h.b16 %v1511
        %v2730 = vunpack.c.l.b16 %v1512
        %v2731 = vunpack.c.h.b16 %v1512
        %v2732 = vunpack.c.l.b16 %v1513
        %v2733 = vunpack.c.h.b16 %v1513
        %v2734 = vunpack.c.l.b16 %v1514
        %v2735 = vunpack.c.h.b16 %v1514
        %v2736 = vunpack.c.l.b16 %v1515
        %v2737 = vunpack.c.h.b16 %v1515
        %v2738 = vunpack.c.l.b16 %v1516
        %v2739 = vunpack.c.h.b16 %v1516
        %v2740 = vunpack.c.l.b16 %v1517
        %v2741 = vunpack.c.h.b16 %v1517
        %v2742 = vunpack.c.l.b16 %v1518
        %v2743 = vunpack.c.h.b16 %v1518
        %v2744 = vunpack.c.l.b16 %v1519
        %v2745 = vunpack.c.h.b16 %v1519
        %v2746 = vunpack.c.l.b16 %v1520
        %v2747 = vunpack.c.h.b16 %v1520
        %v2748 = vunpack.c.l.b16 %v1521
        %v2749 = vunpack.c.h.b16 %v1521
        %v2750 = vunpack.c.l.b16 %v1522
        %v2751 = vunpack.c.h.b16 %v1522
        %v2752 = vunpack.c.l.b16 %v1523
        %v2753 = vunpack.c.h.b16 %v1523
        %v2754 = vunpack.c.l.b16 %v1524
        %v2755 = vunpack.c.h.b16 %v1524
        %v2756 = vunpack.c.l.b16 %v1525
        %v2757 = vunpack.c.h.b16 %v1525
        %v2758 = vunpack.c.l.b16 %v1526
        %v2759 = vunpack.c.h.b16 %v1526
        %v2760 = vunpack.c.l.b16 %v1527
        %v2761 = vunpack.c.h.b16 %v1527
        %v2762 = vunpack.c.l.b16 %v1528
        %v2763 = vunpack.c.h.b16 %v1528
        %v2764 = vunpack.c.l.b16 %v1529
        %v2765 = vunpack.c.h.b16 %v1529
        %v2766 = vunpack.c.l.b16 %v1530
        %v2767 = vunpack.c.h.b16 %v1530
        %v2768 = vunpack.c.l.b16 %v1531
        %v2769 = vunpack.c.h.b16 %v1531
        %v2770 = vunpack.c.l.b16 %v1532
        %v2771 = vunpack.c.h.b16 %v1532
        %v2772 = vunpack.c.l.b16 %v1533
        %v2773 = vunpack.c.h.b16 %v1533
        %v2774 = vunpack.c.l.b16 %v1534
        %v2775 = vunpack.c.h.b16 %v1534
        %v2776 = vunpack.c.l.b16 %v1535
        %v2777 = vunpack.c.h.b16 %v1535
        %v2778 = vunpack.c.l.b16 %v1536
        %v2779 = vunpack.c.h.b16 %v1536
        %v2780 = vunpack.c.l.b16 %v1537
        %v2781 = vunpack.c.h.b16 %v1537
        %v2782 = vunpack.c.l.b16 %v1538
        %v2783 = vunpack.c.h.b16 %v1538
        %v2784 = vunpack.c.l.b16 %v1539
        %v2785 = vunpack.c.h.b16 %v1539
        %v2786 = vunpack.c.l.b16 %v1540
        %v2787 = vunpack.c.h.b16 %v1540
        %v2788 = vunpack.c.l.b16 %v1541
        %v2789 = vunpack.c.h.b16 %v1541
        %v2790 = vunpack.c.l.b16 %v1542
        %v2791 = vunpack.c.h.b16 %v1542
        %v2792 = vunpack.c.l.b16 %v1543
        %v2793 = vunpack.c.h.b16 %v1543
        %v2794 = vunpack.c.l.b16 %v1544
        %v2795 = vunpack.c.h.b16 %v1544
        %v2796 = vunpack.c.l.b16 %v1545
        %v2797 = vunpack.c.h.b16 %v1545
        %v2798 = vunpack.c.l.b16 %v1546
        %v2799 = vunpack.c.h.b16 %v1546
        %v2800 = vunpack.c.l.b16 %v1547
        %v2801 = vunpack.c.h.b16 %v1547
        %v2802 = vunpack.c.l.b16 %v1548
        %v2803 = vunpack.c.h.b16 %v1548
        %v2804 = vunpack.c.l.b16 %v1549
        %v2805 = vunpack.c.h.b16 %v1549
        %v2806 = vunpack.c.l.b16 %v1550
        %v2807 = vunpack.c.h.b16 %v1550
        %v2808 = vunpack.c.l.b16 %v1551
        %v2809 = vunpack.c.h.b16 %v1551
        %v2810 = vunpack.c.l.b16 %v1552
        %v2811 = vunpack.c.h.b16 %v1552
        %v2812 = vunpack.c.l.b16 %v1553
        %v2813 = vunpack.c.h.b16 %v1553
        %v2814 = vunpack.c.l.b16 %v1554
        %v2815 = vunpack.c.h.b16 %v1554
        %v2816 = vunpack.c.l.b16 %v1555
        %v2817 = vunpack.c.h.b16 %v1555
        %v2818 = vunpack.c.l.b16 %v1556
        %v2819 = vunpack.c.h.b16 %v1556
        %v2820 = vunpack.c.l.b16 %v1557
        %v2821 = vunpack.c.h.b16 %v1557
        %v2822 = vunpack.c.l.b16 %v1558
        %v2823 = vunpack.c.h.b16 %v1558
        %v2824 = vunpack.c.l.b16 %v1559
        %v2825 = vunpack.c.h.b16 %v1559
        %v2826 = vunpack.c.l.b16 %v1560
        %v2827 = vunpack.c.h.b16 %v1560
        %v2828 = vunpack.c.l.b16 %v1561
        %v2829 = vunpack.c.h.b16 %v1561
        %v2830 = vunpack.c.l.b16 %v1562
        %v2831 = vunpack.c.h.b16 %v1562
        %v2832 = vunpack.c.l.b16 %v1563
        %v2833 = vunpack.c.h.b16 %v1563
        %v2834 = vunpack.c.l.b16 %v1564
        %v2835 = vunpack.c.h.b16 %v1564
        %v2836 = vunpack.c.l.b16 %v1565
        %v2837 = vunpack.c.h.b16 %v1565
        %v2838 = vunpack.c.l.b16 %v1566
        %v2839 = vunpack.c.h.b16 %v1566
        %v2840 = vunpack.c.l.b16 %v1567
        %v2841 = vunpack.c.h.b16 %v1567
        %v2842 = vunpack.c.l.b16 %v1568
        %v2843 = vunpack.c.h.b16 %v1568
        %v2844 = vunpack.c.l.b16 %v1569
        %v2845 = vunpack.c.h.b16 %v1569
        %v2846 = vunpack.c.l.b16 %v1570
        %v2847 = vunpack.c.h.b16 %v1570
        %v2848 = vunpack.c.l.b16 %v1571
        %v2849 = vunpack.c.h.b16 %v1571
        %v2850 = vunpack.c.l.b16 %v1572
        %v2851 = vunpack.c.h.b16 %v1572
        %v2852 = vunpack.c.l.b16 %v1573
        %v2853 = vunpack.c.h.b16 %v1573
        %v2854 = vunpack.c.l.b16 %v1574
        %v2855 = vunpack.c.h.b16 %v1574
        %v2856 = vunpack.c.l.b16 %v1575
        %v2857 = vunpack.c.h.b16 %v1575
        %v2858 = vunpack.c.l.b16 %v1576
        %v2859 = vunpack.c.h.b16 %v1576
        %v2860 = vunpack.c.l.b16 %v1577
        %v2861 = vunpack.c.h.b16 %v1577
        %v2862 = vunpack.c.l.b16 %v1578
        %v2863 = vunpack.c.h.b16 %v1578
        %v2864 = vunpack.c.l.b16 %v1579
        %v2865 = vunpack.c.h.b16 %v1579
        %v2866 = vunpack.c.l.b16 %v1580
        %v2867 = vunpack.c.h.b16 %v1580
        %v2868 = vunpack.c.l.b16 %v1581
        %v2869 = vunpack.c.h.b16 %v1581
        %v2870 = vunpack.c.l.b16 %v1582
        %v2871 = vunpack.c.h.b16 %v1582
        %v2872 = vunpack.c.l.b16 %v1583
        %v2873 = vunpack.c.h.b16 %v1583
        %v2874 = vunpack.c.l.b16 %v1584
        %v2875 = vunpack.c.h.b16 %v1584
        %v2876 = vunpack.c.l.b16 %v1585
        %v2877 = vunpack.c.h.b16 %v1585
        %v2878 = vunpack.c.l.b16 %v1586
        %v2879 = vunpack.c.h.b16 %v1586
        %v2880 = vunpack.c.l.b16 %v1587
        %v2881 = vunpack.c.h.b16 %v1587
        %v2882 = vunpack.c.l.b16 %v1588
        %v2883 = vunpack.c.h.b16 %v1588
        %v2884 = vunpack.c.l.b16 %v1589
        %v2885 = vunpack.c.h.b16 %v1589
        %v2886 = vunpack.c.l.b16 %v1590
        %v2887 = vunpack.c.h.b16 %v1590
        %v2888 = vunpack.c.l.b16 %v1591
        %v2889 = vunpack.c.h.b16 %v1591
        %v2890 = vunpack.c.l.b16 %v1592
        %v2891 = vunpack.c.h.b16 %v1592
        %v2892 = vunpack.c.l.b16 %v1593
        %v2893 = vunpack.c.h.b16 %v1593
        %v2894 = vunpack.c.l.b16 %v1594
        %v2895 = vunpack.c.h.b16 %v1594
        %v2896 = vunpack.c.l.b16 %v1595
        %v2897 = vunpack.c.h.b16 %v1595
        %v2898 = vunpack.c.l.b16 %v1596
        %v2899 = vunpack.c.h.b16 %v1596
        %v2900 = vunpack.c.l.b16 %v1597
        %v2901 = vunpack.c.h.b16 %v1597
        %v2902 = vunpack.c.l.b16 %v1598
        %v2903 = vunpack.c.h.b16 %v1598
        %v2904 = vunpack.c.l.b16 %v1599
        %v2905 = vunpack.c.h.b16 %v1599
        %v2906 = vunpack.c.l.b16 %v1600
        %v2907 = vunpack.c.h.b16 %v1600
        %v2908 = vunpack.c.l.b16 %v1601
        %v2909 = vunpack.c.h.b16 %v1601
        %v2910 = vunpack.c.l.b16 %v1602
        %v2911 = vunpack.c.h.b16 %v1602
        %v2912 = vunpack.c.l.b16 %v1603
        %v2913 = vunpack.c.h.b16 %v1603
        %v2914 = vunpack.c.l.b16 %v1604
        %v2915 = vunpack.c.h.b16 %v1604
        %v2916 = vunpack.c.l.b16 %v1605
        %v2917 = vunpack.c.h.b16 %v1605
        %v2918 = vunpack.c.l.b16 %v1606
        %v2919 = vunpack.c.h.b16 %v1606
        %v2920 = vunpack.c.l.b16 %v1607
        %v2921 = vunpack.c.h.b16 %v1607
        %v2922 = vunpack.c.l.b16 %v1608
        %v2923 = vunpack.c.h.b16 %v1608
        %v2924 = vunpack.c.l.b16 %v1609
        %v2925 = vunpack.c.h.b16 %v1609
        %v2926 = vunpack.c.l.b16 %v1610
        %v2927 = vunpack.c.h.b16 %v1610
        %v2928 = vunpack.c.l.b16 %v1611
        %v2929 = vunpack.c.h.b16 %v1611
        %v2930 = vunpack.c.l.b16 %v1612
        %v2931 = vunpack.c.h.b16 %v1612
        %v2932 = vunpack.c.l.b16 %v1613
        %v2933 = vunpack.c.h.b16 %v1613
        %v2934 = vunpack.c.l.b16 %v1614
        %v2935 = vunpack.c.h.b16 %v1614
        %v2936 = vunpack.c.l.b16 %v1615
        %v2937 = vunpack.c.h.b16 %v1615
        %v2938 = vunpack.c.l.b16 %v1616
        %v2939 = vunpack.c.h.b16 %v1616
        %v2940 = vunpack.c.l.b16 %v1617
        %v2941 = vunpack.c.h.b16 %v1617
        %v2942 = vunpack.c.l.b16 %v1618
        %v2943 = vunpack.c.h.b16 %v1618
        %v2944 = vunpack.c.l.b16 %v1619
        %v2945 = vunpack.c.h.b16 %v1619
        %v2946 = vunpack.c.l.b16 %v1620
        %v2947 = vunpack.c.h.b16 %v1620
        %v2948 = vunpack.c.l.b16 %v1621
        %v2949 = vunpack.c.h.b16 %v1621
        %v2950 = vunpack.c.l.b16 %v1622
        %v2951 = vunpack.c.h.b16 %v1622
        %v2952 = vunpack.c.l.b16 %v1623
        %v2953 = vunpack.c.h.b16 %v1623
        %v2954 = vunpack.c.l.b16 %v1624
        %v2955 = vunpack.c.h.b16 %v1624
        %v2956 = vunpack.c.l.b16 %v1625
        %v2957 = vunpack.c.h.b16 %v1625
        %v2958 = vunpack.c.l.b16 %v1626
        %v2959 = vunpack.c.h.b16 %v1626
        %v2960 = vunpack.c.l.b16 %v1627
        %v2961 = vunpack.c.h.b16 %v1627
        %v2962 = vunpack.c.l.b16 %v1628
        %v2963 = vunpack.c.h.b16 %v1628
        %v2964 = vunpack.c.l.b16 %v1629
        %v2965 = vunpack.c.h.b16 %v1629
        %v2966 = vunpack.c.l.b16 %v1630
        %v2967 = vunpack.c.h.b16 %v1630
        %v2968 = vunpack.c.l.b16 %v1631
        %v2969 = vunpack.c.h.b16 %v1631
        %v2970 = vunpack.c.l.b16 %v1632
        %v2971 = vunpack.c.h.b16 %v1632
        %v2972 = vunpack.c.l.b16 %v1633
        %v2973 = vunpack.c.h.b16 %v1633
        %v2974 = vunpack.c.l.b16 %v1634
        %v2975 = vunpack.c.h.b16 %v1634
        %v2976 = vunpack.c.l.b16 %v1635
        %v2977 = vunpack.c.h.b16 %v1635
        %v2978 = vunpack.c.l.b16 %v1636
        %v2979 = vunpack.c.h.b16 %v1636
        %v2980 = vunpack.c.l.b16 %v1637
        %v2981 = vunpack.c.h.b16 %v1637
        %v2982 = vunpack.c.l.b16 %v1638
        %v2983 = vunpack.c.h.b16 %v1638
        %v2984 = vunpack.c.l.b16 %v1639
        %v2985 = vunpack.c.h.b16 %v1639
        %v2986 = vunpack.c.l.b16 %v1640
        %v2987 = vunpack.c.h.b16 %v1640
        %v2988 = vunpack.c.l.b16 %v1641
        %v2989 = vunpack.c.h.b16 %v1641
        %v2990 = vunpack.c.l.b16 %v1642
        %v2991 = vunpack.c.h.b16 %v1642
        %v2992 = vunpack.c.l.b16 %v1643
        %v2993 = vunpack.c.h.b16 %v1643
        %v2994 = vunpack.c.l.b16 %v1644
        %v2995 = vunpack.c.h.b16 %v1644
        %v2996 = vunpack.c.l.b16 %v1645
        %v2997 = vunpack.c.h.b16 %v1645
        %v2998 = vunpack.c.l.b16 %v1646
        %v2999 = vunpack.c.h.b16 %v1646
        %v3000 = vunpack.c.l.b16 %v1647
        %v3001 = vunpack.c.h.b16 %v1647
        %v3002 = vunpack.c.l.b16 %v1648
        %v3003 = vunpack.c.h.b16 %v1648
        %v3004 = vunpack.c.l.b16 %v1649
        %v3005 = vunpack.c.h.b16 %v1649
        %v3006 = vunpack.c.l.b16 %v1650
        %v3007 = vunpack.c.h.b16 %v1650
        %v3008 = vunpack.c.l.b16 %v1651
        %v3009 = vunpack.c.h.b16 %v1651
        %v3010 = vunpack.c.l.b16 %v1652
        %v3011 = vunpack.c.h.b16 %v1652
        %v3012 = vunpack.c.l.b16 %v1653
        %v3013 = vunpack.c.h.b16 %v1653
        %v3014 = vunpack.c.l.b16 %v1654
        %v3015 = vunpack.c.h.b16 %v1654
        %v3016 = vunpack.c.l.b16 %v1655
        %v3017 = vunpack.c.h.b16 %v1655
        %v3018 = vunpack.c.l.b16 %v1656
        %v3019 = vunpack.c.h.b16 %v1656
        %v3020 = vunpack.c.l.b16 %v1657
        %v3021 = vunpack.c.h.b16 %v1657
        %v3022 = vunpack.c.l.b16 %v1658
        %v3023 = vunpack.c.h.b16 %v1658
        %v3024 = vunpack.c.l.b16 %v1659
        %v3025 = vunpack.c.h.b16 %v1659
        %v3026 = vunpack.c.l.b16 %v1660
        %v3027 = vunpack.c.h.b16 %v1660
        %v3028 = vunpack.c.l.b16 %v1661
        %v3029 = vunpack.c.h.b16 %v1661
        %v3030 = vunpack.c.l.b16 %v1662
        %v3031 = vunpack.c.h.b16 %v1662
        %v3032 = vunpack.c.l.b16 %v1663
        %v3033 = vunpack.c.h.b16 %v1663
        %v3034 = vunpack.c.l.b16 %v1664
        %v3035 = vunpack.c.h.b16 %v1664
        %v3036 = vunpack.c.l.b16 %v1665
        %v3037 = vunpack.c.h.b16 %v1665
        %v3038 = vunpack.c.l.b16 %v1666
        %v3039 = vunpack.c.h.b16 %v1666
        %v3040 = vunpack.c.l.b16 %v1667
        %v3041 = vunpack.c.h.b16 %v1667
        %v3042 = vunpack.c.l.b16 %v1668
        %v3043 = vunpack.c.h.b16 %v1668
        %v3044 = vunpack.c.l.b16 %v1669
        %v3045 = vunpack.c.h.b16 %v1669
        %v3046 = vunpack.c.l.b16 %v1670
        %v3047 = vunpack.c.h.b16 %v1670
        %v3048 = vunpack.c.l.b16 %v1671
        %v3049 = vunpack.c.h.b16 %v1671
        %v3050 = vunpack.c.l.b16 %v1672
        %v3051 = vunpack.c.h.b16 %v1672
        %v3052 = vunpack.c.l.b16 %v1673
        %v3053 = vunpack.c.h.b16 %v1673
        %v3054 = vunpack.c.l.b16 %v1674
        %v3055 = vunpack.c.h.b16 %v1674
        %v3056 = vunpack.c.l.b16 %v1675
        %v3057 = vunpack.c.h.b16 %v1675
        %v3058 = vunpack.c.l.b16 %v1676
        %v3059 = vunpack.c.h.b16 %v1676
        %v3060 = vunpack.c.l.b16 %v1677
        %v3061 = vunpack.c.h.b16 %v1677
        %v3062 = vunpack.c.l.b16 %v1678
        %v3063 = vunpack.c.h.b16 %v1678
        %v3064 = vunpack.c.l.b16 %v1679
        %v3065 = vunpack.c.h.b16 %v1679
        %v3066 = vunpack.c.l.b16 %v1680
        %v3067 = vunpack.c.h.b16 %v1680
        %v3068 = vunpack.c.l.b16 %v1681
        %v3069 = vunpack.c.h.b16 %v1681
        %v3070 = vunpack.c.l.b16 %v1682
        %v3071 = vunpack.c.h.b16 %v1682
        %v3072 = vunpack.c.l.b16 %v1683
        %v3073 = vunpack.c.h.b16 %v1683
        %v3074 = vunpack.c.l.b16 %v1684
        %v3075 = vunpack.c.h.b16 %v1684
        %v3076 = vunpack.c.l.b16 %v1685
        %v3077 = vunpack.c.h.b16 %v1685
        %v3078 = vunpack.c.l.b16 %v1686
        %v3079 = vunpack.c.h.b16 %v1686
        %v3080 = vunpack.c.l.b16 %v1687
        %v3081 = vunpack.c.h.b16 %v1687
        %v3082 = vunpack.c.l.b16 %v1688
        %v3083 = vunpack.c.h.b16 %v1688
        %v3084 = vunpack.c.l.b16 %v1689
        %v3085 = vunpack.c.h.b16 %v1689
        %v3086 = vunpack.c.l.b16 %v1690
        %v3087 = vunpack.c.h.b16 %v1690
        %v3088 = vunpack.c.l.b16 %v1691
        %v3089 = vunpack.c.h.b16 %v1691
        %v3090 = vunpack.c.l.b16 %v1692
        %v3091 = vunpack.c.h.b16 %v1692
        %v3092 = vunpack.c.l.b16 %v1693
        %v3093 = vunpack.c.h.b16 %v1693
        %v3094 = vunpack.c.l.b16 %v1694
        %v3095 = vunpack.c.h.b16 %v1694
        %v3096 = vunpack.c.l.b16 %v1695
        %v3097 = vunpack.c.h.b16 %v1695
        %v3098 = vunpack.c.l.b16 %v1696
        %v3099 = vunpack.c.h.b16 %v1696
        %v3100 = vunpack.c.l.b16 %v1697
        %v3101 = vunpack.c.h.b16 %v1697
        %v3102 = vunpack.c.l.b16 %v1698
        %v3103 = vunpack.c.h.b16 %v1698
        %v3104 = vunpack.c.l.b16 %v1699
        %v3105 = vunpack.c.h.b16 %v1699
        %v3106 = vunpack.c.l.b16 %v1700
        %v3107 = vunpack.c.h.b16 %v1700
        %v3108 = vunpack.c.l.b16 %v1701
        %v3109 = vunpack.c.h.b16 %v1701
        %v3110 = vunpack.c.l.b16 %v1702
        %v3111 = vunpack.c.h.b16 %v1702
        %v3112 = vunpack.c.l.b16 %v1703
        %v3113 = vunpack.c.h.b16 %v1703
        %v3114 = vunpack.c.l.b16 %v1704
        %v3115 = vunpack.c.h.b16 %v1704
        %v3116 = vunpack.c.l.b16 %v1705
        %v3117 = vunpack.c.h.b16 %v1705
        %v3118 = vunpack.c.l.b16 %v1706
        %v3119 = vunpack.c.h.b16 %v1706
        %v3120 = vunpack.c.l.b16 %v1707
        %v3121 = vunpack.c.h.b16 %v1707
        %v3122 = vunpack.c.l.b16 %v1708
        %v3123 = vunpack.c.h.b16 %v1708
        %v3124 = vunpack.c.l.b16 %v1709
        %v3125 = vunpack.c.h.b16 %v1709
        %v3126 = vunpack.c.l.b16 %v1710
        %v3127 = vunpack.c.h.b16 %v1710
        %v3128 = vunpack.c.l.b16 %v1711
        %v3129 = vunpack.c.h.b16 %v1711
        %v3130 = vunpack.c.l.b16 %v1712
        %v3131 = vunpack.c.h.b16 %v1712
        %v3132 = vunpack.c.l.b16 %v1713
        %v3133 = vunpack.c.h.b16 %v1713
        %v3134 = vunpack.c.l.b16 %v1714
        %v3135 = vunpack.c.h.b16 %v1714
        %v3136 = vunpack.c.l.b16 %v1715
        %v3137 = vunpack.c.h.b16 %v1715
        %v3138 = vunpack.c.l.b16 %v1716
        %v3139 = vunpack.c.h.b16 %v1716
        %v3140 = vunpack.c.l.b16 %v1717
        %v3141 = vunpack.c.h.b16 %v1717
        %v3142 = vunpack.c.l.b16 %v1718
        %v3143 = vunpack.c.h.b16 %v1718
        %v3144 = vunpack.c.l.b16 %v1719
        %v3145 = vunpack.c.h.b16 %v1719
        %v3146 = vunpack.c.l.b16 %v1720
        %v3147 = vunpack.c.h.b16 %v1720
        %v3148 = vunpack.c.l.b16 %v1721
        %v3149 = vunpack.c.h.b16 %v1721
        %v3150 = vunpack.c.l.b16 %v1722
        %v3151 = vunpack.c.h.b16 %v1722
        %v3152 = vunpack.c.l.b16 %v1723
        %v3153 = vunpack.c.h.b16 %v1723
        %v3154 = vunpack.c.l.b16 %v1724
        %v3155 = vunpack.c.h.b16 %v1724
        %v3156 = vunpack.c.l.b16 %v1725
        %v3157 = vunpack.c.h.b16 %v1725
        %v3158 = vunpack.c.l.b16 %v1726
        %v3159 = vunpack.c.h.b16 %v1726
        %v3160 = vunpack.c.l.b16 %v1727
        %v3161 = vunpack.c.h.b16 %v1727
        %v3162 = vunpack.c.l.b16 %v1728
        %v3163 = vunpack.c.h.b16 %v1728
        %v3164 = vunpack.c.l.b16 %v1729
        %v3165 = vunpack.c.h.b16 %v1729
        %v3166 = vunpack.c.l.b16 %v1730
        %v3167 = vunpack.c.h.b16 %v1730
        %v3168 = vunpack.c.l.b16 %v1731
        %v3169 = vunpack.c.h.b16 %v1731
        %v3170 = vunpack.c.l.b16 %v1732
        %v3171 = vunpack.c.h.b16 %v1732
        %v3172 = vunpack.c.l.b16 %v1733
        %v3173 = vunpack.c.h.b16 %v1733
        %v3174 = vunpack.c.l.b16 %v1734
        %v3175 = vunpack.c.h.b16 %v1734
        %v3176 = vunpack.c.l.b16 %v1735
        %v3177 = vunpack.c.h.b16 %v1735
        %v3178 = vunpack.c.l.b16 %v1736
        %v3179 = vunpack.c.h.b16 %v1736
        %v3180 = vunpack.c.l.b16 %v1737
        %v3181 = vunpack.c.h.b16 %v1737
        %v3182 = vunpack.c.l.b16 %v1738
        %v3183 = vunpack.c.h.b16 %v1738
        %v3184 = vunpack.c.l.b16 %v1739
        %v3185 = vunpack.c.h.b16 %v1739
        %v3186 = vunpack.c.l.b16 %v1740
        %v3187 = vunpack.c.h.b16 %v1740
        %v3188 = vunpack.c.l.b16 %v1741
        %v3189 = vunpack.c.h.b16 %v1741
        %v3190 = vunpack.c.l.b16 %v1742
        %v3191 = vunpack.c.h.b16 %v1742
        %v3192 = vunpack.c.l.b16 %v1743
        %v3193 = vunpack.c.h.b16 %v1743
        %v3194 = vunpack.c.l.b16 %v1744
        %v3195 = vunpack.c.h.b16 %v1744
        %v3196 = vunpack.c.l.b16 %v1745
        %v3197 = vunpack.c.h.b16 %v1745
        %v3198 = vunpack.c.l.b16 %v1746
        %v3199 = vunpack.c.h.b16 %v1746
        %v3200 = vunpack.c.l.b16 %v1747
        %v3201 = vunpack.c.h.b16 %v1747
        %v3202 = vunpack.c.l.b16 %v1748
        %v3203 = vunpack.c.h.b16 %v1748
        %v3204 = vunpack.c.l.b16 %v1749
        %v3205 = vunpack.c.h.b16 %v1749
        %v3206 = vunpack.c.l.b16 %v1750
        %v3207 = vunpack.c.h.b16 %v1750
        %v3208 = vunpack.c.l.b16 %v1751
        %v3209 = vunpack.c.h.b16 %v1751
        %v3210 = vunpack.c.l.b16 %v1752
        %v3211 = vunpack.c.h.b16 %v1752
        %v3212 = vunpack.c.l.b16 %v1753
        %v3213 = vunpack.c.h.b16 %v1753
        %v3214 = vunpack.c.l.b16 %v1754
        %v3215 = vunpack.c.h.b16 %v1754
        %v3216 = vunpack.c.l.b16 %v1755
        %v3217 = vunpack.c.h.b16 %v1755
        %v3218 = vunpack.c.l.b16 %v1756
        %v3219 = vunpack.c.h.b16 %v1756
        %v3220 = vunpack.c.l.b16 %v1757
        %v3221 = vunpack.c.h.b16 %v1757
        %v3222 = vunpack.c.l.b16 %v1758
        %v3223 = vunpack.c.h.b16 %v1758
        %v3224 = vunpack.c.l.b16 %v1759
        %v3225 = vunpack.c.h.b16 %v1759
        %v3226 = vunpack.c.l.b16 %v1760
        %v3227 = vunpack.c.h.b16 %v1760
        %v3228 = vunpack.c.l.b16 %v1761
        %v3229 = vunpack.c.h.b16 %v1761
        %v3230 = vunpack.c.l.b16 %v1762
        %v3231 = vunpack.c.h.b16 %v1762
        %v3232 = vunpack.c.l.b16 %v1763
        %v3233 = vunpack.c.h.b16 %v1763
        %v3234 = vunpack.c.l.b16 %v1764
        %v3235 = vunpack.c.h.b16 %v1764
        %v3236 = vunpack.c.l.b16 %v1765
        %v3237 = vunpack.c.h.b16 %v1765
        %v3238 = vunpack.c.l.b16 %v1766
        %v3239 = vunpack.c.h.b16 %v1766
        %v3240 = vunpack.c.l.b16 %v1767
        %v3241 = vunpack.c.h.b16 %v1767
        %v3242 = vunpack.c.l.b16 %v1768
        %v3243 = vunpack.c.h.b16 %v1768
        %v3244 = vunpack.c.l.b16 %v1769
        %v3245 = vunpack.c.h.b16 %v1769
        %v3246 = vunpack.c.l.b16 %v1770
        %v3247 = vunpack.c.h.b16 %v1770
        %v3248 = vunpack.c.l.b16 %v1771
        %v3249 = vunpack.c.h.b16 %v1771
        %v3250 = vunpack.c.l.b16 %v1772
        %v3251 = vunpack.c.h.b16 %v1772
        %v3252 = vunpack.c.l.b16 %v1773
        %v3253 = vunpack.c.h.b16 %v1773
        %v3254 = vunpack.c.l.b16 %v1774
        %v3255 = vunpack.c.h.b16 %v1774
        %v3256 = vunpack.c.l.b16 %v1775
        %v3257 = vunpack.c.h.b16 %v1775
        %v3258 = vunpack.c.l.b16 %v1776
        %v3259 = vunpack.c.h.b16 %v1776
        %v3260 = vunpack.c.l.b16 %v1777
        %v3261 = vunpack.c.h.b16 %v1777
        %v3262 = vunpack.c.l.b16 %v1778
        %v3263 = vunpack.c.h.b16 %v1778
        %v3264 = vunpack.c.l.b16 %v1779
        %v3265 = vunpack.c.h.b16 %v1779
        %v3266 = vunpack.c.l.b16 %v1780
        %v3267 = vunpack.c.h.b16 %v1780
        %v3268 = vunpack.c.l.b16 %v1781
        %v3269 = vunpack.c.h.b16 %v1781
        %v3270 = vunpack.c.l.b16 %v1782
        %v3271 = vunpack.c.h.b16 %v1782
        %v3272 = vunpack.c.l.b16 %v1783
        %v3273 = vunpack.c.h.b16 %v1783
        %v3274 = vunpack.c.l.b16 %v1784
        %v3275 = vunpack.c.h.b16 %v1784
        %v3276 = vunpack.c.l.b16 %v1785
        %v3277 = vunpack.c.h.b16 %v1785
        %v3278 = vunpack.c.l.b16 %v1786
        %v3279 = vunpack.c.h.b16 %v1786
        %v3280 = vunpack.c.l.b16 %v1787
        %v3281 = vunpack.c.h.b16 %v1787
        %v3282 = vunpack.c.l.b16 %v1788
        %v3283 = vunpack.c.h.b16 %v1788
        %v3284 = vunpack.c.l.b16 %v1789
        %v3285 = vunpack.c.h.b16 %v1789
        %v3286 = vunpack.c.l.b16 %v1790
        %v3287 = vunpack.c.h.b16 %v1790
        %v3288 = vunpack.c.l.b16 %v1791
        %v3289 = vunpack.c.h.b16 %v1791
        %v3290 = vunpack.c.l.b16 %v1792
        %v3291 = vunpack.c.h.b16 %v1792
        %v3292 = vunpack.c.l.b16 %v1793
        %v3293 = vunpack.c.h.b16 %v1793
        %v3294 = vunpack.c.l.b16 %v1794
        %v3295 = vunpack.c.h.b16 %v1794
        %v3296 = vunpack.c.l.b16 %v1795
        %v3297 = vunpack.c.h.b16 %v1795
        %v3298 = vunpack.c.l.b16 %v1796
        %v3299 = vunpack.c.h.b16 %v1796
        %v3300 = vunpack.c.l.b16 %v1797
        %v3301 = vunpack.c.h.b16 %v1797
        %v3302 = vunpack.c.l.b16 %v1798
        %v3303 = vunpack.c.h.b16 %v1798
        %v3304 = vunpack.c.l.b16 %v1799
        %v3305 = vunpack.c.h.b16 %v1799
        %v3306 = vunpack.c.l.b16 %v1800
        %v3307 = vunpack.c.h.b16 %v1800
        %v3308 = vunpack.c.l.b16 %v1801
        %v3309 = vunpack.c.h.b16 %v1801
        %v3310 = vunpack.c.l.b16 %v1802
        %v3311 = vunpack.c.h.b16 %v1802
        %v3312 = vunpack.c.l.b16 %v1803
        %v3313 = vunpack.c.h.b16 %v1803
        %v3314 = vunpack.c.l.b16 %v1804
        %v3315 = vunpack.c.h.b16 %v1804
        %v3316 = vunpack.c.l.b16 %v1805
        %v3317 = vunpack.c.h.b16 %v1805
        %v3318 = vunpack.c.l.b16 %v1806
        %v3319 = vunpack.c.h.b16 %v1806
        %v3320 = vunpack.c.l.b16 %v1807
        %v3321 = vunpack.c.h.b16 %v1807
        %v3322 = vunpack.c.l.b16 %v1808
        %v3323 = vunpack.c.h.b16 %v1808
        %v3324 = vunpack.c.l.b16 %v1809
        %v3325 = vunpack.c.h.b16 %v1809
        %v3326 = vunpack.c.l.b16 %v1810
        %v3327 = vunpack.c.h.b16 %v1810
        %v3328 = vunpack.c.l.b16 %v1811
        %v3329 = vunpack.c.h.b16 %v1811
        %v3330 = vunpack.c.l.b16 %v1812
        %v3331 = vunpack.c.h.b16 %v1812
        %v3332 = vunpack.c.l.b16 %v1813
        %v3333 = vunpack.c.h.b16 %v1813
        %v3334 = vunpack.c.l.b16 %v1814
        %v3335 = vunpack.c.h.b16 %v1814
        %v3336 = vunpack.c.l.b16 %v1815
        %v3337 = vunpack.c.h.b16 %v1815
        %v3338 = vunpack.c.l.b16 %v1816
        %v3339 = vunpack.c.h.b16 %v1816
        %v3340 = vunpack.c.l.b16 %v1817
        %v3341 = vunpack.c.h.b16 %v1817
        %v3342 = vunpack.c.l.b16 %v1818
        %v3343 = vunpack.c.h.b16 %v1818
        %v3344 = vunpack.c.l.b16 %v1819
        %v3345 = vunpack.c.h.b16 %v1819
        %v3346 = vunpack.c.l.b16 %v1820
        %v3347 = vunpack.c.h.b16 %v1820
        %v3348 = vunpack.c.l.b16 %v1821
        %v3349 = vunpack.c.h.b16 %v1821
        %v3350 = vunpack.c.l.b16 %v1822
        %v3351 = vunpack.c.h.b16 %v1822
        %v3352 = vunpack.c.l.b16 %v1823
        %v3353 = vunpack.c.h.b16 %v1823
        %v3354 = vunpack.c.l.b16 %v1824
        %v3355 = vunpack.c.h.b16 %v1824
        %v3356 = vunpack.c.l.b16 %v1825
        %v3357 = vunpack.c.h.b16 %v1825
        %v3358 = vunpack.c.l.b16 %v1826
        %v3359 = vunpack.c.h.b16 %v1826
        %v3360 = vunpack.c.l.b16 %v1827
        %v3361 = vunpack.c.h.b16 %v1827
        %v3362 = vunpack.c.l.b16 %v1828
        %v3363 = vunpack.c.h.b16 %v1828
        %v3364 = vunpack.c.l.b16 %v1829
        %v3365 = vunpack.c.h.b16 %v1829
        %v3366 = vunpack.c.l.b16 %v1830
        %v3367 = vunpack.c.h.b16 %v1830
        %v3368 = vunpack.c.l.b16 %v1831
        %v3369 = vunpack.c.h.b16 %v1831
        %v3370 = vunpack.c.l.b16 %v1832
        %v3371 = vunpack.c.h.b16 %v1832
        %v3372 = vunpack.c.l.b16 %v1833
        %v3373 = vunpack.c.h.b16 %v1833
        %v3374 = vunpack.c.l.b16 %v1834
        %v3375 = vunpack.c.h.b16 %v1834
        %v3376 = vunpack.c.l.b16 %v1835
        %v3377 = vunpack.c.h.b16 %v1835
        %v3378 = vunpack.c.l.b16 %v1836
        %v3379 = vunpack.c.h.b16 %v1836
        %v3380 = vunpack.c.l.b16 %v1837
        %v3381 = vunpack.c.h.b16 %v1837
        %v3382 = vunpack.c.l.b16 %v1838
        %v3383 = vunpack.c.h.b16 %v1838
        %v3384 = vunpack.c.l.b16 %v1839
        %v3385 = vunpack.c.h.b16 %v1839
        %v3386 = vunpack.c.l.b16 %v1840
        %v3387 = vunpack.c.h.b16 %v1840
        %v3388 = vunpack.c.l.b16 %v1841
        %v3389 = vunpack.c.h.b16 %v1841
        %v3390 = vunpack.c.l.b16 %v1842
        %v3391 = vunpack.c.h.b16 %v1842
        %v3392 = vunpack.c.l.b16 %v1843
        %v3393 = vunpack.c.h.b16 %v1843
        %v3394 = vunpack.c.l.b16 %v1844
        %v3395 = vunpack.c.h.b16 %v1844
        %v3396 = vunpack.c.l.b16 %v1845
        %v3397 = vunpack.c.h.b16 %v1845
        %v3398 = vunpack.c.l.b16 %v1846
        %v3399 = vunpack.c.h.b16 %v1846
        %v3400 = vunpack.c.l.b16 %v1847
        %v3401 = vunpack.c.h.b16 %v1847
        %v3402 = vunpack.c.l.b16 %v1848
        %v3403 = vunpack.c.h.b16 %v1848
        %v3404 = vunpack.c.l.b16 %v1849
        %v3405 = vunpack.c.h.b16 %v1849
        %v3406 = vunpack.c.l.b16 %v1850
        %v3407 = vunpack.c.h.b16 %v1850
        %v3408 = vunpack.c.l.b16 %v1851
        %v3409 = vunpack.c.h.b16 %v1851
        %v3410 = vunpack.c.l.b16 %v1852
        %v3411 = vunpack.c.h.b16 %v1852
        %v3412 = vunpack.c.l.b16 %v1853
        %v3413 = vunpack.c.h.b16 %v1853
        %v3414 = vunpack.c.l.b16 %v1854
        %v3415 = vunpack.c.h.b16 %v1854
        %v3416 = vunpack.c.l.b16 %v1855
        %v3417 = vunpack.c.h.b16 %v1855
        %v3418 = vunpack.c.l.b16 %v1856
        %v3419 = vunpack.c.h.b16 %v1856
        %v3420 = vunpack.c.l.b16 %v1857
        %v3421 = vunpack.c.h.b16 %v1857
        %v3422 = vunpack.c.l.b16 %v1858
        %v3423 = vunpack.c.h.b16 %v1858
        %v3424 = vunpack.c.l.b16 %v1859
        %v3425 = vunpack.c.h.b16 %v1859
        %v3426 = vunpack.c.l.b16 %v1860
        %v3427 = vunpack.c.h.b16 %v1860
        %v3428 = vunpack.c.l.b16 %v1861
        %v3429 = vunpack.c.h.b16 %v1861
        %v3430 = vunpack.c.l.b16 %v1862
        %v3431 = vunpack.c.h.b16 %v1862
        %v3432 = vunpack.c.l.b16 %v1863
        %v3433 = vunpack.c.h.b16 %v1863
        %v3434 = vunpack.c.l.b16 %v1864
        %v3435 = vunpack.c.h.b16 %v1864
        %v3436 = vunpack.c.l.b16 %v1865
        %v3437 = vunpack.c.h.b16 %v1865
        %v3438 = vunpack.c.l.b16 %v1866
        %v3439 = vunpack.c.h.b16 %v1866
        %v3440 = vunpack.c.l.b16 %v1867
        %v3441 = vunpack.c.h.b16 %v1867
        %v3442 = vunpack.c.l.b16 %v1868
        %v3443 = vunpack.c.h.b16 %v1868
        %v3444 = vunpack.c.l.b16 %v1869
        %v3445 = vunpack.c.h.b16 %v1869
        %v3446 = vunpack.c.l.b16 %v1870
        %v3447 = vunpack.c.h.b16 %v1870
        %v3448 = vunpack.c.l.b16 %v1871
        %v3449 = vunpack.c.h.b16 %v1871
        %v3450 = vunpack.c.l.b16 %v1872
        %v3451 = vunpack.c.h.b16 %v1872
        %v3452 = vunpack.c.l.b16 %v1873
        %v3453 = vunpack.c.h.b16 %v1873
        %v3454 = vpack.c.b16 %v2438, %v2430
        %v3455 = vpack.c.b16 %v2439, %v2431
        %v3456 = vpack.c.b16 %v2440, %v2432
        %v3457 = vpack.c.b16 %v2441, %v2433
        %v3458 = vpack.c.b16 %v2442, %v2434
        %v3459 = vpack.c.b16 %v2443, %v2435
        %v3460 = vpack.c.b16 %v2444, %v2436
        %v3461 = vpack.c.b16 %v2445, %v2437
        %v3462 = vpack.c.b16 %v2454, %v2446
        %v3463 = vpack.c.b16 %v2455, %v2447
        %v3464 = vpack.c.b16 %v2456, %v2448
        %v3465 = vpack.c.b16 %v2457, %v2449
        %v3466 = vpack.c.b16 %v2458, %v2450
        %v3467 = vpack.c.b16 %v2459, %v2451
        %v3468 = vpack.c.b16 %v2460, %v2452
        %v3469 = vpack.c.b16 %v2461, %v2453
        %v3470 = vpack.c.b16 %v2470, %v2462
        %v3471 = vpack.c.b16 %v2471, %v2463
        %v3472 = vpack.c.b16 %v2472, %v2464
        %v3473 = vpack.c.b16 %v2473, %v2465
        %v3474 = vpack.c.b16 %v2474, %v2466
        %v3475 = vpack.c.b16 %v2475, %v2467
        %v3476 = vpack.c.b16 %v2476, %v2468
        %v3477 = vpack.c.b16 %v2477, %v2469
        %v3478 = vpack.c.b16 %v2486, %v2478
        %v3479 = vpack.c.b16 %v2487, %v2479
        %v3480 = vpack.c.b16 %v2488, %v2480
        %v3481 = vpack.c.b16 %v2489, %v2481
        %v3482 = vpack.c.b16 %v2490, %v2482
        %v3483 = vpack.c.b16 %v2491, %v2483
        %v3484 = vpack.c.b16 %v2492, %v2484
        %v3485 = vpack.c.b16 %v2493, %v2485
        %v3486 = vpack.c.b16 %v2502, %v2494
        %v3487 = vpack.c.b16 %v2503, %v2495
        %v3488 = vpack.c.b16 %v2504, %v2496
        %v3489 = vpack.c.b16 %v2505, %v2497
        %v3490 = vpack.c.b16 %v2506, %v2498
        %v3491 = vpack.c.b16 %v2507, %v2499
        %v3492 = vpack.c.b16 %v2508, %v2500
        %v3493 = vpack.c.b16 %v2509, %v2501
        %v3494 = vpack.c.b16 %v2518, %v2510
        %v3495 = vpack.c.b16 %v2519, %v2511
        %v3496 = vpack.c.b16 %v2520, %v2512
        %v3497 = vpack.c.b16 %v2521, %v2513
        %v3498 = vpack.c.b16 %v2522, %v2514
        %v3499 = vpack.c.b16 %v2523, %v2515
        %v3500 = vpack.c.b16 %v2524, %v2516
        %v3501 = vpack.c.b16 %v2525, %v2517
        %v3502 = vpack.c.b16 %v2534, %v2526
        %v3503 = vpack.c.b16 %v2535, %v2527
        %v3504 = vpack.c.b16 %v2536, %v2528
        %v3505 = vpack.c.b16 %v2537, %v2529
        %v3506 = vpack.c.b16 %v2538, %v2530
        %v3507 = vpack.c.b16 %v2539, %v2531
        %v3508 = vpack.c.b16 %v2540, %v2532
        %v3509 = vpack.c.b16 %v2541, %v2533
        %v3510 = vpack.c.b16 %v2550, %v2542
        %v3511 = vpack.c.b16 %v2551, %v2543
        %v3512 = vpack.c.b16 %v2552, %v2544
        %v3513 = vpack.c.b16 %v2553, %v2545
        %v3514 = vpack.c.b16 %v2554, %v2546
        %v3515 = vpack.c.b16 %v2555, %v2547
        %v3516 = vpack.c.b16 %v2556, %v2548
        %v3517 = vpack.c.b16 %v2557, %v2549
        %v3518 = vpack.c.b16 %v2566, %v2558
        %v3519 = vpack.c.b16 %v2567, %v2559
        %v3520 = vpack.c.b16 %v2568, %v2560
        %v3521 = vpack.c.b16 %v2569, %v2561
        %v3522 = vpack.c.b16 %v2570, %v2562
        %v3523 = vpack.c.b16 %v2571, %v2563
        %v3524 = vpack.c.b16 %v2572, %v2564
        %v3525 = vpack.c.b16 %v2573, %v2565
        %v3526 = vpack.c.b16 %v2582, %v2574
        %v3527 = vpack.c.b16 %v2583, %v2575
        %v3528 = vpack.c.b16 %v2584, %v2576
        %v3529 = vpack.c.b16 %v2585, %v2577
        %v3530 = vpack.c.b16 %v2586, %v2578
        %v3531 = vpack.c.b16 %v2587, %v2579
        %v3532 = vpack.c.b16 %v2588, %v2580
        %v3533 = vpack.c.b16 %v2589, %v2581
        %v3534 = vpack.c.b16 %v2598, %v2590
        %v3535 = vpack.c.b16 %v2599, %v2591
        %v3536 = vpack.c.b16 %v2600, %v2592
        %v3537 = vpack.c.b16 %v2601, %v2593
        %v3538 = vpack.c.b16 %v2602, %v2594
        %v3539 = vpack.c.b16 %v2603, %v2595
        %v3540 = vpack.c.b16 %v2604, %v2596
        %v3541 = vpack.c.b16 %v2605, %v2597
        %v3542 = vpack.c.b16 %v2614, %v2606
        %v3543 = vpack.c.b16 %v2615, %v2607
        %v3544 = vpack.c.b16 %v2616, %v2608
        %v3545 = vpack.c.b16 %v2617, %v2609
        %v3546 = vpack.c.b16 %v2618, %v2610
        %v3547 = vpack.c.b16 %v2619, %v2611
        %v3548 = vpack.c.b16 %v2620, %v2612
        %v3549 = vpack.c.b16 %v2621, %v2613
        %v3550 = vpack.c.b16 %v2630, %v2622
        %v3551 = vpack.c.b16 %v2631, %v2623
        %v3552 = vpack.c.b16 %v2632, %v2624
        %v3553 = vpack.c.b16 %v2633, %v2625
        %v3554 = vpack.c.b16 %v2634, %v2626
        %v3555 = vpack.c.b16 %v2635, %v2627
        %v3556 = vpack.c.b16 %v2636, %v2628
        %v3557 = vpack.c.b16 %v2637, %v2629
        %v3558 = vpack.c.b16 %v2646, %v2638
        %v3559 = vpack.c.b16 %v2647, %v2639
        %v3560 = vpack.c.b16 %v2648, %v2640
        %v3561 = vpack.c.b16 %v2649, %v2641
        %v3562 = vpack.c.b16 %v2650, %v2642
        %v3563 = vpack.c.b16 %v2651, %v2643
        %v3564 = vpack.c.b16 %v2652, %v2644
        %v3565 = vpack.c.b16 %v2653, %v2645
        %v3566 = vpack.c.b16 %v2662, %v2654
        %v3567 = vpack.c.b16 %v2663, %v2655
        %v3568 = vpack.c.b16 %v2664, %v2656
        %v3569 = vpack.c.b16 %v2665, %v2657
        %v3570 = vpack.c.b16 %v2666, %v2658
        %v3571 = vpack.c.b16 %v2667, %v2659
        %v3572 = vpack.c.b16 %v2668, %v2660
        %v3573 = vpack.c.b16 %v2669, %v2661
        %v3574 = vpack.c.b16 %v2678, %v2670
        %v3575 = vpack.c.b16 %v2679, %v2671
        %v3576 = vpack.c.b16 %v2680, %v2672
        %v3577 = vpack.c.b16 %v2681, %v2673
        %v3578 = vpack.c.b16 %v2682, %v2674
        %v3579 = vpack.c.b16 %v2683, %v2675
        %v3580 = vpack.c.b16 %v2684, %v2676
        %v3581 = vpack.c.b16 %v2685, %v2677
        %v3582 = vpack.c.b16 %v2694, %v2686
        %v3583 = vpack.c.b16 %v2695, %v2687
        %v3584 = vpack.c.b16 %v2696, %v2688
        %v3585 = vpack.c.b16 %v2697, %v2689
        %v3586 = vpack.c.b16 %v2698, %v2690
        %v3587 = vpack.c.b16 %v2699, %v2691
        %v3588 = vpack.c.b16 %v2700, %v2692
        %v3589 = vpack.c.b16 %v2701, %v2693
        %v3590 = vpack.c.b16 %v2710, %v2702
        %v3591 = vpack.c.b16 %v2711, %v2703
        %v3592 = vpack.c.b16 %v2712, %v2704
        %v3593 = vpack.c.b16 %v2713, %v2705
        %v3594 = vpack.c.b16 %v2714, %v2706
        %v3595 = vpack.c.b16 %v2715, %v2707
        %v3596 = vpack.c.b16 %v2716, %v2708
        %v3597 = vpack.c.b16 %v2717, %v2709
        %v3598 = vpack.c.b16 %v2726, %v2718
        %v3599 = vpack.c.b16 %v2727, %v2719
        %v3600 = vpack.c.b16 %v2728, %v2720
        %v3601 = vpack.c.b16 %v2729, %v2721
        %v3602 = vpack.c.b16 %v2730, %v2722
        %v3603 = vpack.c.b16 %v2731, %v2723
        %v3604 = vpack.c.b16 %v2732, %v2724
        %v3605 = vpack.c.b16 %v2733, %v2725
        %v3606 = vpack.c.b16 %v2742, %v2734
        %v3607 = vpack.c.b16 %v2743, %v2735
        %v3608 = vpack.c.b16 %v2744, %v2736
        %v3609 = vpack.c.b16 %v2745, %v2737
        %v3610 = vpack.c.b16 %v2746, %v2738
        %v3611 = vpack.c.b16 %v2747, %v2739
        %v3612 = vpack.c.b16 %v2748, %v2740
        %v3613 = vpack.c.b16 %v2749, %v2741
        %v3614 = vpack.c.b16 %v2758, %v2750
        %v3615 = vpack.c.b16 %v2759, %v2751
        %v3616 = vpack.c.b16 %v2760, %v2752
        %v3617 = vpack.c.b16 %v2761, %v2753
        %v3618 = vpack.c.b16 %v2762, %v2754
        %v3619 = vpack.c.b16 %v2763, %v2755
        %v3620 = vpack.c.b16 %v2764, %v2756
        %v3621 = vpack.c.b16 %v2765, %v2757
        %v3622 = vpack.c.b16 %v2774, %v2766
        %v3623 = vpack.c.b16 %v2775, %v2767
        %v3624 = vpack.c.b16 %v2776, %v2768
        %v3625 = vpack.c.b16 %v2777, %v2769
        %v3626 = vpack.c.b16 %v2778, %v2770
        %v3627 = vpack.c.b16 %v2779, %v2771
        %v3628 = vpack.c.b16 %v2780, %v2772
        %v3629 = vpack.c.b16 %v2781, %v2773
        %v3630 = vpack.c.b16 %v2790, %v2782
        %v3631 = vpack.c.b16 %v2791, %v2783
        %v3632 = vpack.c.b16 %v2792, %v2784
        %v3633 = vpack.c.b16 %v2793, %v2785
        %v3634 = vpack.c.b16 %v2794, %v2786
        %v3635 = vpack.c.b16 %v2795, %v2787
        %v3636 = vpack.c.b16 %v2796, %v2788
        %v3637 = vpack.c.b16 %v2797, %v2789
        %v3638 = vpack.c.b16 %v2806, %v2798
        %v3639 = vpack.c.b16 %v2807, %v2799
        %v3640 = vpack.c.b16 %v2808, %v2800
        %v3641 = vpack.c.b16 %v2809, %v2801
        %v3642 = vpack.c.b16 %v2810, %v2802
        %v3643 = vpack.c.b16 %v2811, %v2803
        %v3644 = vpack.c.b16 %v2812, %v2804
        %v3645 = vpack.c.b16 %v2813, %v2805
        %v3646 = vpack.c.b16 %v2822, %v2814
        %v3647 = vpack.c.b16 %v2823, %v2815
        %v3648 = vpack.c.b16 %v2824, %v2816
        %v3649 = vpack.c.b16 %v2825, %v2817
        %v3650 = vpack.c.b16 %v2826, %v2818
        %v3651 = vpack.c.b16 %v2827, %v2819
        %v3652 = vpack.c.b16 %v2828, %v2820
        %v3653 = vpack.c.b16 %v2829, %v2821
        %v3654 = vpack.c.b16 %v2838, %v2830
        %v3655 = vpack.c.b16 %v2839, %v2831
        %v3656 = vpack.c.b16 %v2840, %v2832
        %v3657 = vpack.c.b16 %v2841, %v2833
        %v3658 = vpack.c.b16 %v2842, %v2834
        %v3659 = vpack.c.b16 %v2843, %v2835
        %v3660 = vpack.c.b16 %v2844, %v2836
        %v3661 = vpack.c.b16 %v2845, %v2837
        %v3662 = vpack.c.b16 %v2854, %v2846
        %v3663 = vpack.c.b16 %v2855, %v2847
        %v3664 = vpack.c.b16 %v2856, %v2848
        %v3665 = vpack.c.b16 %v2857, %v2849
        %v3666 = vpack.c.b16 %v2858, %v2850
        %v3667 = vpack.c.b16 %v2859, %v2851
        %v3668 = vpack.c.b16 %v2860, %v2852
        %v3669 = vpack.c.b16 %v2861, %v2853
        %v3670 = vpack.c.b16 %v2870, %v2862
        %v3671 = vpack.c.b16 %v2871, %v2863
        %v3672 = vpack.c.b16 %v2872, %v2864
        %v3673 = vpack.c.b16 %v2873, %v2865
        %v3674 = vpack.c.b16 %v2874, %v2866
        %v3675 = vpack.c.b16 %v2875, %v2867
        %v3676 = vpack.c.b16 %v2876, %v2868
        %v3677 = vpack.c.b16 %v2877, %v2869
        %v3678 = vpack.c.b16 %v2886, %v2878
        %v3679 = vpack.c.b16 %v2887, %v2879
        %v3680 = vpack.c.b16 %v2888, %v2880
        %v3681 = vpack.c.b16 %v2889, %v2881
        %v3682 = vpack.c.b16 %v2890, %v2882
        %v3683 = vpack.c.b16 %v2891, %v2883
        %v3684 = vpack.c.b16 %v2892, %v2884
        %v3685 = vpack.c.b16 %v2893, %v2885
        %v3686 = vpack.c.b16 %v2902, %v2894
        %v3687 = vpack.c.b16 %v2903, %v2895
        %v3688 = vpack.c.b16 %v2904, %v2896
        %v3689 = vpack.c.b16 %v2905, %v2897
        %v3690 = vpack.c.b16 %v2906, %v2898
        %v3691 = vpack.c.b16 %v2907, %v2899
        %v3692 = vpack.c.b16 %v2908, %v2900
        %v3693 = vpack.c.b16 %v2909, %v2901
        %v3694 = vpack.c.b16 %v2918, %v2910
        %v3695 = vpack.c.b16 %v2919, %v2911
        %v3696 = vpack.c.b16 %v2920, %v2912
        %v3697 = vpack.c.b16 %v2921, %v2913
        %v3698 = vpack.c.b16 %v2922, %v2914
        %v3699 = vpack.c.b16 %v2923, %v2915
        %v3700 = vpack.c.b16 %v2924, %v2916
        %v3701 = vpack.c.b16 %v2925, %v2917
        %v3702 = vpack.c.b16 %v2934, %v2926
        %v3703 = vpack.c.b16 %v2935, %v2927
        %v3704 = vpack.c.b16 %v2936, %v2928
        %v3705 = vpack.c.b16 %v2937, %v2929
        %v3706 = vpack.c.b16 %v2938, %v2930
        %v3707 = vpack.c.b16 %v2939, %v2931
        %v3708 = vpack.c.b16 %v2940, %v2932
        %v3709 = vpack.c.b16 %v2941, %v2933
        %v3710 = vpack.c.b16 %v2950, %v2942
        %v3711 = vpack.c.b16 %v2951, %v2943
        %v3712 = vpack.c.b16 %v2952, %v2944
        %v3713 = vpack.c.b16 %v2953, %v2945
        %v3714 = vpack.c.b16 %v2954, %v2946
        %v3715 = vpack.c.b16 %v2955, %v2947
        %v3716 = vpack.c.b16 %v2956, %v2948
        %v3717 = vpack.c.b16 %v2957, %v2949
        %v3718 = vpack.c.b16 %v2966, %v2958
        %v3719 = vpack.c.b16 %v2967, %v2959
        %v3720 = vpack.c.b16 %v2968, %v2960
        %v3721 = vpack.c.b16 %v2969, %v2961
        %v3722 = vpack.c.b16 %v2970, %v2962
        %v3723 = vpack.c.b16 %v2971, %v2963
        %v3724 = vpack.c.b16 %v2972, %v2964
        %v3725 = vpack.c.b16 %v2973, %v2965
        %v3726 = vpack.c.b16 %v2982, %v2974
        %v3727 = vpack.c.b16 %v2983, %v2975
        %v3728 = vpack.c.b16 %v2984, %v2976
        %v3729 = vpack.c.b16 %v2985, %v2977
        %v3730 = vpack.c.b16 %v2986, %v2978
        %v3731 = vpack.c.b16 %v2987, %v2979
        %v3732 = vpack.c.b16 %v2988, %v2980
        %v3733 = vpack.c.b16 %v2989, %v2981
        %v3734 = vpack.c.b16 %v2998, %v2990
        %v3735 = vpack.c.b16 %v2999, %v2991
        %v3736 = vpack.c.b16 %v3000, %v2992
        %v3737 = vpack.c.b16 %v3001, %v2993
        %v3738 = vpack.c.b16 %v3002, %v2994
        %v3739 = vpack.c.b16 %v3003, %v2995
        %v3740 = vpack.c.b16 %v3004, %v2996
        %v3741 = vpack.c.b16 %v3005, %v2997
        %v3742 = vpack.c.b16 %v3014, %v3006
        %v3743 = vpack.c.b16 %v3015, %v3007
        %v3744 = vpack.c.b16 %v3016, %v3008
        %v3745 = vpack.c.b16 %v3017, %v3009
        %v3746 = vpack.c.b16 %v3018, %v3010
        %v3747 = vpack.c.b16 %v3019, %v3011
        %v3748 = vpack.c.b16 %v3020, %v3012
        %v3749 = vpack.c.b16 %v3021, %v3013
        %v3750 = vpack.c.b16 %v3030, %v3022
        %v3751 = vpack.c.b16 %v3031, %v3023
        %v3752 = vpack.c.b16 %v3032, %v3024
        %v3753 = vpack.c.b16 %v3033, %v3025
        %v3754 = vpack.c.b16 %v3034, %v3026
        %v3755 = vpack.c.b16 %v3035, %v3027
        %v3756 = vpack.c.b16 %v3036, %v3028
        %v3757 = vpack.c.b16 %v3037, %v3029
        %v3758 = vpack.c.b16 %v3046, %v3038
        %v3759 = vpack.c.b16 %v3047, %v3039
        %v3760 = vpack.c.b16 %v3048, %v3040
        %v3761 = vpack.c.b16 %v3049, %v3041
        %v3762 = vpack.c.b16 %v3050, %v3042
        %v3763 = vpack.c.b16 %v3051, %v3043
        %v3764 = vpack.c.b16 %v3052, %v3044
        %v3765 = vpack.c.b16 %v3053, %v3045
        %v3766 = vpack.c.b16 %v3062, %v3054
        %v3767 = vpack.c.b16 %v3063, %v3055
        %v3768 = vpack.c.b16 %v3064, %v3056
        %v3769 = vpack.c.b16 %v3065, %v3057
        %v3770 = vpack.c.b16 %v3066, %v3058
        %v3771 = vpack.c.b16 %v3067, %v3059
        %v3772 = vpack.c.b16 %v3068, %v3060
        %v3773 = vpack.c.b16 %v3069, %v3061
        %v3774 = vpack.c.b16 %v3078, %v3070
        %v3775 = vpack.c.b16 %v3079, %v3071
        %v3776 = vpack.c.b16 %v3080, %v3072
        %v3777 = vpack.c.b16 %v3081, %v3073
        %v3778 = vpack.c.b16 %v3082, %v3074
        %v3779 = vpack.c.b16 %v3083, %v3075
        %v3780 = vpack.c.b16 %v3084, %v3076
        %v3781 = vpack.c.b16 %v3085, %v3077
        %v3782 = vpack.c.b16 %v3094, %v3086
        %v3783 = vpack.c.b16 %v3095, %v3087
        %v3784 = vpack.c.b16 %v3096, %v3088
        %v3785 = vpack.c.b16 %v3097, %v3089
        %v3786 = vpack.c.b16 %v3098, %v3090
        %v3787 = vpack.c.b16 %v3099, %v3091
        %v3788 = vpack.c.b16 %v3100, %v3092
        %v3789 = vpack.c.b16 %v3101, %v3093
        %v3790 = vpack.c.b16 %v3110, %v3102
        %v3791 = vpack.c.b16 %v3111, %v3103
        %v3792 = vpack.c.b16 %v3112, %v3104
        %v3793 = vpack.c.b16 %v3113, %v3105
        %v3794 = vpack.c.b16 %v3114, %v3106
        %v3795 = vpack.c.b16 %v3115, %v3107
        %v3796 = vpack.c.b16 %v3116, %v3108
        %v3797 = vpack.c.b16 %v3117, %v3109
        %v3798 = vpack.c.b16 %v3126, %v3118
        %v3799 = vpack.c.b16 %v3127, %v3119
        %v3800 = vpack.c.b16 %v3128, %v3120
        %v3801 = vpack.c.b16 %v3129, %v3121
        %v3802 = vpack.c.b16 %v3130, %v3122
        %v3803 = vpack.c.b16 %v3131, %v3123
        %v3804 = vpack.c.b16 %v3132, %v3124
        %v3805 = vpack.c.b16 %v3133, %v3125
        %v3806 = vpack.c.b16 %v3142, %v3134
        %v3807 = vpack.c.b16 %v3143, %v3135
        %v3808 = vpack.c.b16 %v3144, %v3136
        %v3809 = vpack.c.b16 %v3145, %v3137
        %v3810 = vpack.c.b16 %v3146, %v3138
        %v3811 = vpack.c.b16 %v3147, %v3139
        %v3812 = vpack.c.b16 %v3148, %v3140
        %v3813 = vpack.c.b16 %v3149, %v3141
        %v3814 = vpack.c.b16 %v3158, %v3150
        %v3815 = vpack.c.b16 %v3159, %v3151
        %v3816 = vpack.c.b16 %v3160, %v3152
        %v3817 = vpack.c.b16 %v3161, %v3153
        %v3818 = vpack.c.b16 %v3162, %v3154
        %v3819 = vpack.c.b16 %v3163, %v3155
        %v3820 = vpack.c.b16 %v3164, %v3156
        %v3821 = vpack.c.b16 %v3165, %v3157
        %v3822 = vpack.c.b16 %v3174, %v3166
        %v3823 = vpack.c.b16 %v3175, %v3167
        %v3824 = vpack.c.b16 %v3176, %v3168
        %v3825 = vpack.c.b16 %v3177, %v3169
        %v3826 = vpack.c.b16 %v3178, %v3170
        %v3827 = vpack.c.b16 %v3179, %v3171
        %v3828 = vpack.c.b16 %v3180, %v3172
        %v3829 = vpack.c.b16 %v3181, %v3173
        %v3830 = vpack.c.b16 %v3190, %v3182
        %v3831 = vpack.c.b16 %v3191, %v3183
        %v3832 = vpack.c.b16 %v3192, %v3184
        %v3833 = vpack.c.b16 %v3193, %v3185
        %v3834 = vpack.c.b16 %v3194, %v3186
        %v3835 = vpack.c.b16 %v3195, %v3187
        %v3836 = vpack.c.b16 %v3196, %v3188
        %v3837 = vpack.c.b16 %v3197, %v3189
        %v3838 = vpack.c.b16 %v3206, %v3198
        %v3839 = vpack.c.b16 %v3207, %v3199
        %v3840 = vpack.c.b16 %v3208, %v3200
        %v3841 = vpack.c.b16 %v3209, %v3201
        %v3842 = vpack.c.b16 %v3210, %v3202
        %v3843 = vpack.c.b16 %v3211, %v3203
        %v3844 = vpack.c.b16 %v3212, %v3204
        %v3845 = vpack.c.b16 %v3213, %v3205
        %v3846 = vpack.c.b16 %v3222, %v3214
        %v3847 = vpack.c.b16 %v3223, %v3215
        %v3848 = vpack.c.b16 %v3224, %v3216
        %v3849 = vpack.c.b16 %v3225, %v3217
        %v3850 = vpack.c.b16 %v3226, %v3218
        %v3851 = vpack.c.b16 %v3227, %v3219
        %v3852 = vpack.c.b16 %v3228, %v3220
        %v3853 = vpack.c.b16 %v3229, %v3221
        %v3854 = vpack.c.b16 %v3238, %v3230
        %v3855 = vpack.c.b16 %v3239, %v3231
        %v3856 = vpack.c.b16 %v3240, %v3232
        %v3857 = vpack.c.b16 %v3241, %v3233
        %v3858 = vpack.c.b16 %v3242, %v3234
        %v3859 = vpack.c.b16 %v3243, %v3235
        %v3860 = vpack.c.b16 %v3244, %v3236
        %v3861 = vpack.c.b16 %v3245, %v3237
        %v3862 = vpack.c.b16 %v3254, %v3246
        %v3863 = vpack.c.b16 %v3255, %v3247
        %v3864 = vpack.c.b16 %v3256, %v3248
        %v3865 = vpack.c.b16 %v3257, %v3249
        %v3866 = vpack.c.b16 %v3258, %v3250
        %v3867 = vpack.c.b16 %v3259, %v3251
        %v3868 = vpack.c.b16 %v3260, %v3252
        %v3869 = vpack.c.b16 %v3261, %v3253
        %v3870 = vpack.c.b16 %v3270, %v3262
        %v3871 = vpack.c.b16 %v3271, %v3263
        %v3872 = vpack.c.b16 %v3272, %v3264
        %v3873 = vpack.c.b16 %v3273, %v3265
        %v3874 = vpack.c.b16 %v3274, %v3266
        %v3875 = vpack.c.b16 %v3275, %v3267
        %v3876 = vpack.c.b16 %v3276, %v3268
        %v3877 = vpack.c.b16 %v3277, %v3269
        %v3878 = vpack.c.b16 %v3286, %v3278
        %v3879 = vpack.c.b16 %v3287, %v3279
        %v3880 = vpack.c.b16 %v3288, %v3280
        %v3881 = vpack.c.b16 %v3289, %v3281
        %v3882 = vpack.c.b16 %v3290, %v3282
        %v3883 = vpack.c.b16 %v3291, %v3283
        %v3884 = vpack.c.b16 %v3292, %v3284
        %v3885 = vpack.c.b16 %v3293, %v3285
        %v3886 = vpack.c.b16 %v3302, %v3294
        %v3887 = vpack.c.b16 %v3303, %v3295
        %v3888 = vpack.c.b16 %v3304, %v3296
        %v3889 = vpack.c.b16 %v3305, %v3297
        %v3890 = vpack.c.b16 %v3306, %v3298
        %v3891 = vpack.c.b16 %v3307, %v3299
        %v3892 = vpack.c.b16 %v3308, %v3300
        %v3893 = vpack.c.b16 %v3309, %v3301
        %v3894 = vpack.c.b16 %v3318, %v3310
        %v3895 = vpack.c.b16 %v3319, %v3311
        %v3896 = vpack.c.b16 %v3320, %v3312
        %v3897 = vpack.c.b16 %v3321, %v3313
        %v3898 = vpack.c.b16 %v3322, %v3314
        %v3899 = vpack.c.b16 %v3323, %v3315
        %v3900 = vpack.c.b16 %v3324, %v3316
        %v3901 = vpack.c.b16 %v3325, %v3317
        %v3902 = vpack.c.b16 %v3334, %v3326
        %v3903 = vpack.c.b16 %v3335, %v3327
        %v3904 = vpack.c.b16 %v3336, %v3328
        %v3905 = vpack.c.b16 %v3337, %v3329
        %v3906 = vpack.c.b16 %v3338, %v3330
        %v3907 = vpack.c.b16 %v3339, %v3331
        %v3908 = vpack.c.b16 %v3340, %v3332
        %v3909 = vpack.c.b16 %v3341, %v3333
        %v3910 = vpack.c.b16 %v3350, %v3342
        %v3911 = vpack.c.b16 %v3351, %v3343
        %v3912 = vpack.c.b16 %v3352, %v3344
        %v3913 = vpack.c.b16 %v3353, %v3345
        %v3914 = vpack.c.b16 %v3354, %v3346
        %v3915 = vpack.c.b16 %v3355, %v3347
        %v3916 = vpack.c.b16 %v3356, %v3348
        %v3917 = vpack.c.b16 %v3357, %v3349
        %v3918 = vpack.c.b16 %v3366, %v3358
        %v3919 = vpack.c.b16 %v3367, %v3359
        %v3920 = vpack.c.b16 %v3368, %v3360
        %v3921 = vpack.c.b16 %v3369, %v3361
        %v3922 = vpack.c.b16 %v3370, %v3362
        %v3923 = vpack.c.b16 %v3371, %v3363
        %v3924 = vpack.c.b16 %v3372, %v3364
        %v3925 = vpack.c.b16 %v3373, %v3365
        %v3926 = vpack.c.b16 %v3382, %v3374
        %v3927 = vpack.c.b16 %v3383, %v3375
        %v3928 = vpack.c.b16 %v3384, %v3376
        %v3929 = vpack.c.b16 %v3385, %v3377
        %v3930 = vpack.c.b16 %v3386, %v3378
        %v3931 = vpack.c.b16 %v3387, %v3379
        %v3932 = vpack.c.b16 %v3388, %v3380
        %v3933 = vpack.c.b16 %v3389, %v3381
        %v3934 = vpack.c.b16 %v3398, %v3390
        %v3935 = vpack.c.b16 %v3399, %v3391
        %v3936 = vpack.c.b16 %v3400, %v3392
        %v3937 = vpack.c.b16 %v3401, %v3393
        %v3938 = vpack.c.b16 %v3402, %v3394
        %v3939 = vpack.c.b16 %v3403, %v3395
        %v3940 = vpack.c.b16 %v3404, %v3396
        %v3941 = vpack.c.b16 %v3405, %v3397
        %v3942 = vpack.c.b16 %v3414, %v3406
        %v3943 = vpack.c.b16 %v3415, %v3407
        %v3944 = vpack.c.b16 %v3416, %v3408
        %v3945 = vpack.c.b16 %v3417, %v3409
        %v3946 = vpack.c.b16 %v3418, %v3410
        %v3947 = vpack.c.b16 %v3419, %v3411
        %v3948 = vpack.c.b16 %v3420, %v3412
        %v3949 = vpack.c.b16 %v3421, %v3413
        %v3950 = vpack.c.b16 %v3430, %v3422
        %v3951 = vpack.c.b16 %v3431, %v3423
        %v3952 = vpack.c.b16 %v3432, %v3424
        %v3953 = vpack.c.b16 %v3433, %v3425
        %v3954 = vpack.c.b16 %v3434, %v3426
        %v3955 = vpack.c.b16 %v3435, %v3427
        %v3956 = vpack.c.b16 %v3436, %v3428
        %v3957 = vpack.c.b16 %v3437, %v3429
        %v3958 = vpack.c.b16 %v3446, %v3438
        %v3959 = vpack.c.b16 %v3447, %v3439
        %v3960 = vpack.c.b16 %v3448, %v3440
        %v3961 = vpack.c.b16 %v3449, %v3441
        %v3962 = vpack.c.b16 %v3450, %v3442
        %v3963 = vpack.c.b16 %v3451, %v3443
        %v3964 = vpack.c.b16 %v3452, %v3444
        %v3965 = vpack.c.b16 %v3453, %v3445
        %4478 = vmatprep.subr.bf16.mxu0 %v3455
        %4479 = vmatpush1.bf16.msra.mxu0 %v3454
        %4480 = vmatprep.subr.bf16.mxu0 %v3463
        %4481 = vmatpush1.bf16.msra.mxu0 %v3462
        %4482 = vmatprep.subr.bf16.mxu0 %v3471
        %4483 = vmatpush1.bf16.msra.mxu0 %v3470
        %4484 = vmatprep.subr.bf16.mxu0 %v3479
        %4485 = vmatpush1.bf16.msra.mxu0 %v3478
        %4486 = vmatprep.subr.bf16.mxu0 %v3487
        %4487 = vmatpush1.bf16.msra.mxu0 %v3486
        %4488 = vmatprep.subr.bf16.mxu0 %v3495
        %4489 = vmatpush1.bf16.msra.mxu0 %v3494
        %4490 = vmatprep.subr.bf16.mxu0 %v3503
        %4491 = vmatpush1.bf16.msra.mxu0 %v3502
        %4492 = vmatprep.subr.bf16.mxu0 %v3511
        %4493 = vmatpush1.bf16.msra.mxu0 %v3510
        %4494 = vmatprep.subr.bf16.mxu0 %v3519
        %4495 = vmatpush1.bf16.msra.mxu0 %v3518
        %4496 = vmatprep.subr.bf16.mxu0 %v3527
        %4497 = vmatpush1.bf16.msra.mxu0 %v3526
        %4498 = vmatprep.subr.bf16.mxu0 %v3535
        %4499 = vmatpush1.bf16.msra.mxu0 %v3534
        %4500 = vmatprep.subr.bf16.mxu0 %v3543
        %4501 = vmatpush1.bf16.msra.mxu0 %v3542
        %4502 = vmatprep.subr.bf16.mxu0 %v3551
        %4503 = vmatpush1.bf16.msra.mxu0 %v3550
        %4504 = vmatprep.subr.bf16.mxu0 %v3559
        %4505 = vmatpush1.bf16.msra.mxu0 %v3558
        %4506 = vmatprep.subr.bf16.mxu0 %v3567
        %4507 = vmatpush1.bf16.msra.mxu0 %v3566
        %4508 = vmatprep.subr.bf16.mxu0 %v3575
        %4509 = vmatpush1.bf16.msra.mxu0 %v3574
        %4510 = vmatprep.mubr.bf16.mxu0 %v1299
        %4511 = vmatmul.mubr.bf16.gmra.mrb[0].mxu0 %v1298
        %v4512 = vpop.f32.mrb[0].mxu0
        %v4513 = vadd.f32 %v1881, %v4512
        %v4514 = vpop.f32.mrb[0].mxu0
        %v4515 = vadd.f32 %v1885, %v4514
        %v4516 = vpop.f32.mrb[0].mxu0
        %v4517 = vadd.f32 %v1881, %v4516
        %v4518 = vpop.f32.mrb[0].mxu0
        %v4519 = vadd.f32 %v1885, %v4518
        %4520 = vmatprep.mubr.bf16.mxu0 %v1307
        %4521 = vmatmul.mubr.bf16.gmra.mrb[0].mxu0 %v1306
        %v4522 = vpop.f32.mrb[0].mxu0
        %v4523 = vadd.f32 %v1881, %v4522
        %v4524 = vpop.f32.mrb[0].mxu0
        %v4525 = vadd.f32 %v1885, %v4524
        %v4526 = vpop.f32.mrb[0].mxu0
        %v4527 = vadd.f32 %v1881, %v4526
        %v4528 = vpop.f32.mrb[0].mxu0
        %v4529 = vadd.f32 %v1885, %v4528
        %4530 = vmatprep.mubr.bf16.mxu0 %v1315
        %4531 = vmatmul.mubr.bf16.gmra.mrb[0].mxu0 %v1314
        %v4532 = vpop.f32.mrb[0].mxu0
        %v4533 = vadd.f32 %v1881, %v4532
        %v4534 = vpop.f32.mrb[0].mxu0
        %v4535 = vadd.f32 %v1885, %v4534
        %v4536 = vpop.f32.mrb[0].mxu0
        %v4537 = vadd.f32 %v1881, %v4536
        %v4538 = vpop.f32.mrb[0].mxu0
        %v4539 = vadd.f32 %v1885, %v4538
        %4540 = vmatprep.mubr.bf16.mxu0 %v1323
        %4541 = vmatmul.mubr.bf16.gmra.mrb[0].mxu0 %v1322
        %v4542 = vpop.f32.mrb[0].mxu0
        %v4543 = vadd.f32 %v1881, %v4542
        %v4544 = vpop.f32.mrb[0].mxu0
        %v4545 = vadd.f32 %v1885, %v4544
        %v4546 = vpop.f32.mrb[0].mxu0
        %v4547 = vadd.f32 %v1881, %v4546
        %v4548 = vpop.f32.mrb[0].mxu0
        %v4549 = vadd.f32 %v1885, %v4548
        %4550 = vmatprep.mubr.bf16.mxu0 %v1331
        %4551 = vmatmul.mubr.bf16.gmra.mrb[0].mxu0 %v1330
        %v4552 = vpop.f32.mrb[0].mxu0
        %v4553 = vadd.f32 %v1881, %v4552
        %v4554 = vpop.f32.mrb[0].mxu0
        %v4555 = vadd.f32 %v1885, %v4554
        %v4556 = vpop.f32.mrb[0].mxu0
        %v4557 = vadd.f32 %v1881, %v4556
        %v4558 = vpop.f32.mrb[0].mxu0
        %v4559 = vadd.f32 %v1885, %v4558
        %4560 = vmatprep.mubr.bf16.mxu0 %v1339
        %4561 = vmatmul.mubr.bf16.gmra.mrb[0].mxu0 %v1338
        %v4562 = vpop.f32.mrb[0].mxu0
        %v4563 = vadd.f32 %v1881, %v4562
        %v4564 = vpop.f32.mrb[0].mxu0
        %v4565 = vadd.f32 %v1885, %v4564
        %v4566 = vpop.f32.mrb[0].mxu0
        %v4567 = vadd.f32 %v1881, %v4566
        %v4568 = vpop.f32.mrb[0].mxu0
        %v4569 = vadd.f32 %v1885, %v4568
        %4570 = vmatprep.mubr.bf16.mxu0 %v1347
        %4571 = vmatmul.mubr.bf16.gmra.mrb[0].mxu0 %v1346
        %v4572 = vpop.f32.mrb[0].mxu0
        %v4573 = vadd.f32 %v1881, %v4572
        %v4574 = vpop.f32.mrb[0].mxu0
        %v4575 = vadd.f32 %v1885, %v4574
        %v4576 = vpop.f32.mrb[0].mxu0
        %v4577 = vadd.f32 %v1881, %v4576
        %v4578 = vpop.f32.mrb[0].mxu0
        %v4579 = vadd.f32 %v1885, %v4578
        %4580 = vmatprep.mubr.bf16.mxu0 %v1355
        %4581 = vmatmul.mubr.bf16.gmra.mrb[0].mxu0 %v1354
        %v4582 = vpop.f32.mrb[0].mxu0
        %v4583 = vadd.f32 %v1881, %v4582
        %v4584 = vpop.f32.mrb[0].mxu0
        %v4585 = vadd.f32 %v1885, %v4584
        %v4586 = vpop.f32.mrb[0].mxu0
        %v4587 = vadd.f32 %v1881, %v4586
        %v4588 = vpop.f32.mrb[0].mxu0
        %v4589 = vadd.f32 %v1885, %v4588
        %4590 = vdwg.mxu0
        %4591 = vmatprep.subr.bf16.mxu0 %v3583
        %4592 = vmatpush1.bf16.msra.mxu0 %v3582
        %4593 = vmatprep.subr.bf16.mxu0 %v3591
        %4594 = vmatpush1.bf16.msra.mxu0 %v3590
        %4595 = vmatprep.subr.bf16.mxu0 %v3599
        %4596 = vmatpush1.bf16.msra.mxu0 %v3598
        %4597 = vmatprep.subr.bf16.mxu0 %v3607
        %4598 = vmatpush1.bf16.msra.mxu0 %v3606
        %4599 = vmatprep.subr.bf16.mxu0 %v3615
        %4600 = vmatpush1.bf16.msra.mxu0 %v3614
        %4601 = vmatprep.subr.bf16.mxu0 %v3623
        %4602 = vmatpush1.bf16.msra.mxu0 %v3622
        %4603 = vmatprep.subr.bf16.mxu0 %v3631
        %4604 = vmatpush1.bf16.msra.mxu0 %v3630
        %4605 = vmatprep.subr.bf16.mxu0 %v3639
        %4606 = vmatpush1.bf16.msra.mxu0 %v3638
        %4607 = vmatprep.subr.bf16.mxu0 %v3647
        %4608 = vmatpush1.bf16.msra.mxu0 %v3646
        %4609 = vmatprep.subr.bf16.mxu0 %v3655
        %4610 = vmatpush1.bf16.msra.mxu0 %v3654
        %4611 = vmatprep.subr.bf16.mxu0 %v3663
        %4612 = vmatpush1.bf16.msra.mxu0 %v3662
        %4613 = vmatprep.subr.bf16.mxu0 %v3671
        %4614 = vmatpush1.bf16.msra.mxu0 %v3670
        %4615 = vmatprep.subr.bf16.mxu0 %v3679
        %4616 = vmatpush1.bf16.msra.mxu0 %v3678
        %4617 = vmatprep.subr.bf16.mxu0 %v3687
        %4618 = vmatpush1.bf16.msra.mxu0 %v3686
        %4619 = vmatprep.subr.bf16.mxu0 %v3695
        %4620 = vmatpush1.bf16.msra.mxu0 %v3694
        %4621 = vmatprep.subr.bf16.mxu0 %v3703
        %4622 = vmatpush1.bf16.msra.mxu0 %v3702
        %4623 = vmatprep.mubr.bf16.mxu0 %v1301
        %4624 = vmatmul.mubr.bf16.gmra.mrb[0].mxu0 %v1300
        %v4625 = vpop.f32.mrb[0].mxu0
        %v4626 = vadd.f32 %v4513, %v4625
        %v4627 = vpop.f32.mrb[0].mxu0
        %v4628 = vadd.f32 %v4515, %v4627
        %v4629 = vpop.f32.mrb[0].mxu0
        %v4630 = vadd.f32 %v4517, %v4629
        %v4631 = vpop.f32.mrb[0].mxu0
        %v4632 = vadd.f32 %v4519, %v4631
        %4633 = vmatprep.mubr.bf16.mxu0 %v1309
        %4634 = vmatmul.mubr.bf16.gmra.mrb[0].mxu0 %v1308
        %v4635 = vpop.f32.mrb[0].mxu0
        %v4636 = vadd.f32 %v4523, %v4635
        %v4637 = vpop.f32.mrb[0].mxu0
        %v4638 = vadd.f32 %v4525, %v4637
        %v4639 = vpop.f32.mrb[0].mxu0
        %v4640 = vadd.f32 %v4527, %v4639
        %v4641 = vpop.f32.mrb[0].mxu0
        %v4642 = vadd.f32 %v4529, %v4641
        %4643 = vmatprep.mubr.bf16.mxu0 %v1317
        %4644 = vmatmul.mubr.bf16.gmra.mrb[0].mxu0 %v1316
        %v4645 = vpop.f32.mrb[0].mxu0
        %v4646 = vadd.f32 %v4533, %v4645
        %v4647 = vpop.f32.mrb[0].mxu0
        %v4648 = vadd.f32 %v4535, %v4647
        %v4649 = vpop.f32.mrb[0].mxu0
        %v4650 = vadd.f32 %v4537, %v4649
        %v4651 = vpop.f32.mrb[0].mxu0
        %v4652 = vadd.f32 %v4539, %v4651
        %4653 = vmatprep.mubr.bf16.mxu0 %v1325
        %4654 = vmatmul.mubr.bf16.gmra.mrb[0].mxu0 %v1324
        %v4655 = vpop.f32.mrb[0].mxu0
        %v4656 = vadd.f32 %v4543, %v4655
        %v4657 = vpop.f32.mrb[0].mxu0
        %v4658 = vadd.f32 %v4545, %v4657
        %v4659 = vpop.f32.mrb[0].mxu0
        %v4660 = vadd.f32 %v4547, %v4659
        %v4661 = vpop.f32.mrb[0].mxu0
        %v4662 = vadd.f32 %v4549, %v4661
        %4663 = vmatprep.mubr.bf16.mxu0 %v1333
        %4664 = vmatmul.mubr.bf16.gmra.mrb[0].mxu0 %v1332
        %v4665 = vpop.f32.mrb[0].mxu0
        %v4666 = vadd.f32 %v4553, %v4665
        %v4667 = vpop.f32.mrb[0].mxu0
        %v4668 = vadd.f32 %v4555, %v4667
        %v4669 = vpop.f32.mrb[0].mxu0
        %v4670 = vadd.f32 %v4557, %v4669
        %v4671 = vpop.f32.mrb[0].mxu0
        %v4672 = vadd.f32 %v4559, %v4671
        %4673 = vmatprep.mubr.bf16.mxu0 %v1341
        %4674 = vmatmul.mubr.bf16.gmra.mrb[0].mxu0 %v1340
        %v4675 = vpop.f32.mrb[0].mxu0
        %v4676 = vadd.f32 %v4563, %v4675
        %v4677 = vpop.f32.mrb[0].mxu0
        %v4678 = vadd.f32 %v4565, %v4677
        %v4679 = vpop.f32.mrb[0].mxu0
        %v4680 = vadd.f32 %v4567, %v4679
        %v4681 = vpop.f32.mrb[0].mxu0
        %v4682 = vadd.f32 %v4569, %v4681
        %4683 = vmatprep.mubr.bf16.mxu0 %v1349
        %4684 = vmatmul.mubr.bf16.gmra.mrb[0].mxu0 %v1348
        %v4685 = vpop.f32.mrb[0].mxu0
        %v4686 = vadd.f32 %v4573, %v4685
        %v4687 = vpop.f32.mrb[0].mxu0
        %v4688 = vadd.f32 %v4575, %v4687
        %v4689 = vpop.f32.mrb[0].mxu0
        %v4690 = vadd.f32 %v4577, %v4689
        %v4691 = vpop.f32.mrb[0].mxu0
        %v4692 = vadd.f32 %v4579, %v4691
        %4693 = vmatprep.mubr.bf16.mxu0 %v1357
        %4694 = vmatmul.mubr.bf16.gmra.mrb[0].mxu0 %v1356
        %v4695 = vpop.f32.mrb[0].mxu0
        %v4696 = vadd.f32 %v4583, %v4695
        %v4697 = vpop.f32.mrb[0].mxu0
        %v4698 = vadd.f32 %v4585, %v4697
        %v4699 = vpop.f32.mrb[0].mxu0
        %v4700 = vadd.f32 %v4587, %v4699
        %v4701 = vpop.f32.mrb[0].mxu0
        %v4702 = vadd.f32 %v4589, %v4701
        %4703 = vdwg.mxu0
        %4704 = vmatprep.subr.bf16.mxu0 %v3711
        %4705 = vmatpush1.bf16.msra.mxu0 %v3710
        %4706 = vmatprep.subr.bf16.mxu0 %v3719
        %4707 = vmatpush1.bf16.msra.mxu0 %v3718
        %4708 = vmatprep.subr.bf16.mxu0 %v3727
        %4709 = vmatpush1.bf16.msra.mxu0 %v3726
        %4710 = vmatprep.subr.bf16.mxu0 %v3735
        %4711 = vmatpush1.bf16.msra.mxu0 %v3734
        %4712 = vmatprep.subr.bf16.mxu0 %v3743
        %4713 = vmatpush1.bf16.msra.mxu0 %v3742
        %4714 = vmatprep.subr.bf16.mxu0 %v3751
        %4715 = vmatpush1.bf16.msra.mxu0 %v3750
        %4716 = vmatprep.subr.bf16.mxu0 %v3759
        %4717 = vmatpush1.bf16.msra.mxu0 %v3758
        %4718 = vmatprep.subr.bf16.mxu0 %v3767
        %4719 = vmatpush1.bf16.msra.mxu0 %v3766
        %4720 = vmatprep.subr.bf16.mxu0 %v3775
        %4721 = vmatpush1.bf16.msra.mxu0 %v3774
        %4722 = vmatprep.subr.bf16.mxu0 %v3783
        %4723 = vmatpush1.bf16.msra.mxu0 %v3782
        %4724 = vmatprep.subr.bf16.mxu0 %v3791
        %4725 = vmatpush1.bf16.msra.mxu0 %v3790
        %4726 = vmatprep.subr.bf16.mxu0 %v3799
        %4727 = vmatpush1.bf16.msra.mxu0 %v3798
        %4728 = vmatprep.subr.bf16.mxu0 %v3807
        %4729 = vmatpush1.bf16.msra.mxu0 %v3806
        %4730 = vmatprep.subr.bf16.mxu0 %v3815
        %4731 = vmatpush1.bf16.msra.mxu0 %v3814
        %4732 = vmatprep.subr.bf16.mxu0 %v3823
        %4733 = vmatpush1.bf16.msra.mxu0 %v3822
        %4734 = vmatprep.subr.bf16.mxu0 %v3831
        %4735 = vmatpush1.bf16.msra.mxu0 %v3830
        %4736 = vmatprep.mubr.bf16.mxu0 %v1303
        %4737 = vmatmul.mubr.bf16.gmra.mrb[0].mxu0 %v1302
        %v4738 = vpop.f32.mrb[0].mxu0
        %v4739 = vadd.f32 %v4626, %v4738
        %v4740 = vpop.f32.mrb[0].mxu0
        %v4741 = vadd.f32 %v4628, %v4740
        %v4742 = vpop.f32.mrb[0].mxu0
        %v4743 = vadd.f32 %v4630, %v4742
        %v4744 = vpop.f32.mrb[0].mxu0
        %v4745 = vadd.f32 %v4632, %v4744
        %4746 = vmatprep.mubr.bf16.mxu0 %v1311
        %4747 = vmatmul.mubr.bf16.gmra.mrb[0].mxu0 %v1310
        %v4748 = vpop.f32.mrb[0].mxu0
        %v4749 = vadd.f32 %v4636, %v4748
        %v4750 = vpop.f32.mrb[0].mxu0
        %v4751 = vadd.f32 %v4638, %v4750
        %v4752 = vpop.f32.mrb[0].mxu0
        %v4753 = vadd.f32 %v4640, %v4752
        %v4754 = vpop.f32.mrb[0].mxu0
        %v4755 = vadd.f32 %v4642, %v4754
        %4756 = vmatprep.mubr.bf16.mxu0 %v1319
        %4757 = vmatmul.mubr.bf16.gmra.mrb[0].mxu0 %v1318
        %v4758 = vpop.f32.mrb[0].mxu0
        %v4759 = vadd.f32 %v4646, %v4758
        %v4760 = vpop.f32.mrb[0].mxu0
        %v4761 = vadd.f32 %v4648, %v4760
        %v4762 = vpop.f32.mrb[0].mxu0
        %v4763 = vadd.f32 %v4650, %v4762
        %v4764 = vpop.f32.mrb[0].mxu0
        %v4765 = vadd.f32 %v4652, %v4764
        %4766 = vmatprep.mubr.bf16.mxu0 %v1327
        %4767 = vmatmul.mubr.bf16.gmra.mrb[0].mxu0 %v1326
        %v4768 = vpop.f32.mrb[0].mxu0
        %v4769 = vadd.f32 %v4656, %v4768
        %v4770 = vpop.f32.mrb[0].mxu0
        %v4771 = vadd.f32 %v4658, %v4770
        %v4772 = vpop.f32.mrb[0].mxu0
        %v4773 = vadd.f32 %v4660, %v4772
        %v4774 = vpop.f32.mrb[0].mxu0
        %v4775 = vadd.f32 %v4662, %v4774
        %4776 = vmatprep.mubr.bf16.mxu0 %v1335
        %4777 = vmatmul.mubr.bf16.gmra.mrb[0].mxu0 %v1334
        %v4778 = vpop.f32.mrb[0].mxu0
        %v4779 = vadd.f32 %v4666, %v4778
        %v4780 = vpop.f32.mrb[0].mxu0
        %v4781 = vadd.f32 %v4668, %v4780
        %v4782 = vpop.f32.mrb[0].mxu0
        %v4783 = vadd.f32 %v4670, %v4782
        %v4784 = vpop.f32.mrb[0].mxu0
        %v4785 = vadd.f32 %v4672, %v4784
        %4786 = vmatprep.mubr.bf16.mxu0 %v1343
        %4787 = vmatmul.mubr.bf16.gmra.mrb[0].mxu0 %v1342
        %v4788 = vpop.f32.mrb[0].mxu0
        %v4789 = vadd.f32 %v4676, %v4788
        %v4790 = vpop.f32.mrb[0].mxu0
        %v4791 = vadd.f32 %v4678, %v4790
        %v4792 = vpop.f32.mrb[0].mxu0
        %v4793 = vadd.f32 %v4680, %v4792
        %v4794 = vpop.f32.mrb[0].mxu0
        %v4795 = vadd.f32 %v4682, %v4794
        %4796 = vmatprep.mubr.bf16.mxu0 %v1351
        %4797 = vmatmul.mubr.bf16.gmra.mrb[0].mxu0 %v1350
        %v4798 = vpop.f32.mrb[0].mxu0
        %v4799 = vadd.f32 %v4686, %v4798
        %v4800 = vpop.f32.mrb[0].mxu0
        %v4801 = vadd.f32 %v4688, %v4800
        %v4802 = vpop.f32.mrb[0].mxu0
        %v4803 = vadd.f32 %v4690, %v4802
        %v4804 = vpop.f32.mrb[0].mxu0
        %v4805 = vadd.f32 %v4692, %v4804
        %4806 = vmatprep.mubr.bf16.mxu0 %v1359
        %4807 = vmatmul.mubr.bf16.gmra.mrb[0].mxu0 %v1358
        %v4808 = vpop.f32.mrb[0].mxu0
        %v4809 = vadd.f32 %v4696, %v4808
        %v4810 = vpop.f32.mrb[0].mxu0
        %v4811 = vadd.f32 %v4698, %v4810
        %v4812 = vpop.f32.mrb[0].mxu0
        %v4813 = vadd.f32 %v4700, %v4812
        %v4814 = vpop.f32.mrb[0].mxu0
        %v4815 = vadd.f32 %v4702, %v4814
        %4816 = vdwg.mxu0
        %4817 = vmatprep.subr.bf16.mxu0 %v3839
        %4818 = vmatpush1.bf16.msra.mxu0 %v3838
        %4819 = vmatprep.subr.bf16.mxu0 %v3847
        %4820 = vmatpush1.bf16.msra.mxu0 %v3846
        %4821 = vmatprep.subr.bf16.mxu0 %v3855
        %4822 = vmatpush1.bf16.msra.mxu0 %v3854
        %4823 = vmatprep.subr.bf16.mxu0 %v3863
        %4824 = vmatpush1.bf16.msra.mxu0 %v3862
        %4825 = vmatprep.subr.bf16.mxu0 %v3871
        %4826 = vmatpush1.bf16.msra.mxu0 %v3870
        %4827 = vmatprep.subr.bf16.mxu0 %v3879
        %4828 = vmatpush1.bf16.msra.mxu0 %v3878
        %4829 = vmatprep.subr.bf16.mxu0 %v3887
        %4830 = vmatpush1.bf16.msra.mxu0 %v3886
        %4831 = vmatprep.subr.bf16.mxu0 %v3895
        %4832 = vmatpush1.bf16.msra.mxu0 %v3894
        %4833 = vmatprep.subr.bf16.mxu0 %v3903
        %4834 = vmatpush1.bf16.msra.mxu0 %v3902
        %4835 = vmatprep.subr.bf16.mxu0 %v3911
        %4836 = vmatpush1.bf16.msra.mxu0 %v3910
        %4837 = vmatprep.subr.bf16.mxu0 %v3919
        %4838 = vmatpush1.bf16.msra.mxu0 %v3918
        %4839 = vmatprep.subr.bf16.mxu0 %v3927
        %4840 = vmatpush1.bf16.msra.mxu0 %v3926
        %4841 = vmatprep.subr.bf16.mxu0 %v3935
        %4842 = vmatpush1.bf16.msra.mxu0 %v3934
        %4843 = vmatprep.subr.bf16.mxu0 %v3943
        %4844 = vmatpush1.bf16.msra.mxu0 %v3942
        %4845 = vmatprep.subr.bf16.mxu0 %v3951
        %4846 = vmatpush1.bf16.msra.mxu0 %v3950
        %4847 = vmatprep.subr.bf16.mxu0 %v3959
        %4848 = vmatpush1.bf16.msra.mxu0 %v3958
        %4849 = vmatprep.mubr.bf16.mxu0 %v1305
        %4850 = vmatmul.mubr.bf16.gmra.mrb[0].mxu0 %v1304
        %v4851 = vpop.f32.mrb[0].mxu0
        %v4852 = vadd.f32 %v4739, %v4851
        %v4853 = vpop.f32.mrb[0].mxu0
        %v4854 = vadd.f32 %v4741, %v4853
        %v4855 = vpop.f32.mrb[0].mxu0
        %v4856 = vadd.f32 %v4743, %v4855
        %v4857 = vpop.f32.mrb[0].mxu0
        %v4858 = vadd.f32 %v4745, %v4857
        %4859 = vmatprep.mubr.bf16.mxu0 %v1313
        %4860 = vmatmul.mubr.bf16.gmra.mrb[0].mxu0 %v1312
        %v4861 = vpop.f32.mrb[0].mxu0
        %v4862 = vadd.f32 %v4749, %v4861
        %v4863 = vpop.f32.mrb[0].mxu0
        %v4864 = vadd.f32 %v4751, %v4863
        %v4865 = vpop.f32.mrb[0].mxu0
        %v4866 = vadd.f32 %v4753, %v4865
        %v4867 = vpop.f32.mrb[0].mxu0
        %v4868 = vadd.f32 %v4755, %v4867
        %4869 = vmatprep.mubr.bf16.mxu0 %v1321
        %4870 = vmatmul.mubr.bf16.gmra.mrb[0].mxu0 %v1320
        %v4871 = vpop.f32.mrb[0].mxu0
        %v4872 = vadd.f32 %v4759, %v4871
        %v4873 = vpop.f32.mrb[0].mxu0
        %v4874 = vadd.f32 %v4761, %v4873
        %v4875 = vpop.f32.mrb[0].mxu0
        %v4876 = vadd.f32 %v4763, %v4875
        %v4877 = vpop.f32.mrb[0].mxu0
        %v4878 = vadd.f32 %v4765, %v4877
        %4879 = vmatprep.mubr.bf16.mxu0 %v1329
        %4880 = vmatmul.mubr.bf16.gmra.mrb[0].mxu0 %v1328
        %v4881 = vpop.f32.mrb[0].mxu0
        %v4882 = vadd.f32 %v4769, %v4881
        %v4883 = vpop.f32.mrb[0].mxu0
        %v4884 = vadd.f32 %v4771, %v4883
        %v4885 = vpop.f32.mrb[0].mxu0
        %v4886 = vadd.f32 %v4773, %v4885
        %v4887 = vpop.f32.mrb[0].mxu0
        %v4888 = vadd.f32 %v4775, %v4887
        %4889 = vmatprep.mubr.bf16.mxu0 %v1337
        %4890 = vmatmul.mubr.bf16.gmra.mrb[0].mxu0 %v1336
        %v4891 = vpop.f32.mrb[0].mxu0
        %v4892 = vadd.f32 %v4779, %v4891
        %v4893 = vpop.f32.mrb[0].mxu0
        %v4894 = vadd.f32 %v4781, %v4893
        %v4895 = vpop.f32.mrb[0].mxu0
        %v4896 = vadd.f32 %v4783, %v4895
        %v4897 = vpop.f32.mrb[0].mxu0
        %v4898 = vadd.f32 %v4785, %v4897
        %4899 = vmatprep.mubr.bf16.mxu0 %v1345
        %4900 = vmatmul.mubr.bf16.gmra.mrb[0].mxu0 %v1344
        %v4901 = vpop.f32.mrb[0].mxu0
        %v4902 = vadd.f32 %v4789, %v4901
        %v4903 = vpop.f32.mrb[0].mxu0
        %v4904 = vadd.f32 %v4791, %v4903
        %v4905 = vpop.f32.mrb[0].mxu0
        %v4906 = vadd.f32 %v4793, %v4905
        %v4907 = vpop.f32.mrb[0].mxu0
        %v4908 = vadd.f32 %v4795, %v4907
        %4909 = vmatprep.mubr.bf16.mxu0 %v1353
        %4910 = vmatmul.mubr.bf16.gmra.mrb[0].mxu0 %v1352
        %v4911 = vpop.f32.mrb[0].mxu0
        %v4912 = vadd.f32 %v4799, %v4911
        %v4913 = vpop.f32.mrb[0].mxu0
        %v4914 = vadd.f32 %v4801, %v4913
        %v4915 = vpop.f32.mrb[0].mxu0
        %v4916 = vadd.f32 %v4803, %v4915
        %v4917 = vpop.f32.mrb[0].mxu0
        %v4918 = vadd.f32 %v4805, %v4917
        %4919 = vmatprep.mubr.bf16.mxu0 %v1361
        %4920 = vmatmul.mubr.bf16.gmra.mrb[0].mxu0 %v1360
        %v4921 = vpop.f32.mrb[0].mxu0
        %v4922 = vadd.f32 %v4809, %v4921
        %v4923 = vpop.f32.mrb[0].mxu0
        %v4924 = vadd.f32 %v4811, %v4923
        %v4925 = vpop.f32.mrb[0].mxu0
        %v4926 = vadd.f32 %v4813, %v4925
        %v4927 = vpop.f32.mrb[0].mxu0
        %v4928 = vadd.f32 %v4815, %v4927
        %4929 = vdwg.mxu0
        %4930 = vmatprep.subr.bf16.mxu0 %v3457
        %4931 = vmatpush1.bf16.msra.mxu0 %v3456
        %4932 = vmatprep.subr.bf16.mxu0 %v3465
        %4933 = vmatpush1.bf16.msra.mxu0 %v3464
        %4934 = vmatprep.subr.bf16.mxu0 %v3473
        %4935 = vmatpush1.bf16.msra.mxu0 %v3472
        %4936 = vmatprep.subr.bf16.mxu0 %v3481
        %4937 = vmatpush1.bf16.msra.mxu0 %v3480
        %4938 = vmatprep.subr.bf16.mxu0 %v3489
        %4939 = vmatpush1.bf16.msra.mxu0 %v3488
        %4940 = vmatprep.subr.bf16.mxu0 %v3497
        %4941 = vmatpush1.bf16.msra.mxu0 %v3496
        %4942 = vmatprep.subr.bf16.mxu0 %v3505
        %4943 = vmatpush1.bf16.msra.mxu0 %v3504
        %4944 = vmatprep.subr.bf16.mxu0 %v3513
        %4945 = vmatpush1.bf16.msra.mxu0 %v3512
        %4946 = vmatprep.subr.bf16.mxu0 %v3521
        %4947 = vmatpush1.bf16.msra.mxu0 %v3520
        %4948 = vmatprep.subr.bf16.mxu0 %v3529
        %4949 = vmatpush1.bf16.msra.mxu0 %v3528
        %4950 = vmatprep.subr.bf16.mxu0 %v3537
        %4951 = vmatpush1.bf16.msra.mxu0 %v3536
        %4952 = vmatprep.subr.bf16.mxu0 %v3545
        %4953 = vmatpush1.bf16.msra.mxu0 %v3544
        %4954 = vmatprep.subr.bf16.mxu0 %v3553
        %4955 = vmatpush1.bf16.msra.mxu0 %v3552
        %4956 = vmatprep.subr.bf16.mxu0 %v3561
        %4957 = vmatpush1.bf16.msra.mxu0 %v3560
        %4958 = vmatprep.subr.bf16.mxu0 %v3569
        %4959 = vmatpush1.bf16.msra.mxu0 %v3568
        %4960 = vmatprep.subr.bf16.mxu0 %v3577
        %4961 = vmatpush1.bf16.msra.mxu0 %v3576
        %4962 = vmatprep.mubr.bf16.mxu0 %v1299
        %4963 = vmatmul.mubr.bf16.gmra.mrb[0].mxu0 %v1298
        %v4964 = vpop.f32.mrb[0].mxu0
        %v4965 = vadd.f32 %v1889, %v4964
        %v4966 = vpop.f32.mrb[0].mxu0
        %v4967 = vadd.f32 %v1893, %v4966
        %v4968 = vpop.f32.mrb[0].mxu0
        %v4969 = vadd.f32 %v1889, %v4968
        %v4970 = vpop.f32.mrb[0].mxu0
        %v4971 = vadd.f32 %v1893, %v4970
        %4972 = vmatprep.mubr.bf16.mxu0 %v1307
        %4973 = vmatmul.mubr.bf16.gmra.mrb[0].mxu0 %v1306
        %v4974 = vpop.f32.mrb[0].mxu0
        %v4975 = vadd.f32 %v1889, %v4974
        %v4976 = vpop.f32.mrb[0].mxu0
        %v4977 = vadd.f32 %v1893, %v4976
        %v4978 = vpop.f32.mrb[0].mxu0
        %v4979 = vadd.f32 %v1889, %v4978
        %v4980 = vpop.f32.mrb[0].mxu0
        %v4981 = vadd.f32 %v1893, %v4980
        %4982 = vmatprep.mubr.bf16.mxu0 %v1315
        %4983 = vmatmul.mubr.bf16.gmra.mrb[0].mxu0 %v1314
        %v4984 = vpop.f32.mrb[0].mxu0
        %v4985 = vadd.f32 %v1889, %v4984
        %v4986 = vpop.f32.mrb[0].mxu0
        %v4987 = vadd.f32 %v1893, %v4986
        %v4988 = vpop.f32.mrb[0].mxu0
        %v4989 = vadd.f32 %v1889, %v4988
        %v4990 = vpop.f32.mrb[0].mxu0
        %v4991 = vadd.f32 %v1893, %v4990
        %4992 = vmatprep.mubr.bf16.mxu0 %v1323
        %4993 = vmatmul.mubr.bf16.gmra.mrb[0].mxu0 %v1322
        %v4994 = vpop.f32.mrb[0].mxu0
        %v4995 = vadd.f32 %v1889, %v4994
        %v4996 = vpop.f32.mrb[0].mxu0
        %v4997 = vadd.f32 %v1893, %v4996
        %v4998 = vpop.f32.mrb[0].mxu0
        %v4999 = vadd.f32 %v1889, %v4998
        %v5000 = vpop.f32.mrb[0].mxu0
        %v5001 = vadd.f32 %v1893, %v5000
        %5002 = vmatprep.mubr.bf16.mxu0 %v1331
        %5003 = vmatmul.mubr.bf16.gmra.mrb[0].mxu0 %v1330
        %v5004 = vpop.f32.mrb[0].mxu0
        %v5005 = vadd.f32 %v1889, %v5004
        %v5006 = vpop.f32.mrb[0].mxu0
        %v5007 = vadd.f32 %v1893, %v5006
        %v5008 = vpop.f32.mrb[0].mxu0
        %v5009 = vadd.f32 %v1889, %v5008
        %v5010 = vpop.f32.mrb[0].mxu0
        %v5011 = vadd.f32 %v1893, %v5010
        %5012 = vmatprep.mubr.bf16.mxu0 %v1339
        %5013 = vmatmul.mubr.bf16.gmra.mrb[0].mxu0 %v1338
        %v5014 = vpop.f32.mrb[0].mxu0
        %v5015 = vadd.f32 %v1889, %v5014
        %v5016 = vpop.f32.mrb[0].mxu0
        %v5017 = vadd.f32 %v1893, %v5016
        %v5018 = vpop.f32.mrb[0].mxu0
        %v5019 = vadd.f32 %v1889, %v5018
        %v5020 = vpop.f32.mrb[0].mxu0
        %v5021 = vadd.f32 %v1893, %v5020
        %5022 = vmatprep.mubr.bf16.mxu0 %v1347
        %5023 = vmatmul.mubr.bf16.gmra.mrb[0].mxu0 %v1346
        %v5024 = vpop.f32.mrb[0].mxu0
        %v5025 = vadd.f32 %v1889, %v5024
        %v5026 = vpop.f32.mrb[0].mxu0
        %v5027 = vadd.f32 %v1893, %v5026
        %v5028 = vpop.f32.mrb[0].mxu0
        %v5029 = vadd.f32 %v1889, %v5028
        %v5030 = vpop.f32.mrb[0].mxu0
        %v5031 = vadd.f32 %v1893, %v5030
        %5032 = vmatprep.mubr.bf16.mxu0 %v1355
        %5033 = vmatmul.mubr.bf16.gmra.mrb[0].mxu0 %v1354
        %v5034 = vpop.f32.mrb[0].mxu0
        %v5035 = vadd.f32 %v1889, %v5034
        %v5036 = vpop.f32.mrb[0].mxu0
        %v5037 = vadd.f32 %v1893, %v5036
        %v5038 = vpop.f32.mrb[0].mxu0
        %v5039 = vadd.f32 %v1889, %v5038
        %v5040 = vpop.f32.mrb[0].mxu0
        %v5041 = vadd.f32 %v1893, %v5040
        %5042 = vdwg.mxu0
        %5043 = vmatprep.subr.bf16.mxu0 %v3585
        %5044 = vmatpush1.bf16.msra.mxu0 %v3584
        %5045 = vmatprep.subr.bf16.mxu0 %v3593
        %5046 = vmatpush1.bf16.msra.mxu0 %v3592
        %5047 = vmatprep.subr.bf16.mxu0 %v3601
        %5048 = vmatpush1.bf16.msra.mxu0 %v3600
        %5049 = vmatprep.subr.bf16.mxu0 %v3609
        %5050 = vmatpush1.bf16.msra.mxu0 %v3608
        %5051 = vmatprep.subr.bf16.mxu0 %v3617
        %5052 = vmatpush1.bf16.msra.mxu0 %v3616
        %5053 = vmatprep.subr.bf16.mxu0 %v3625
        %5054 = vmatpush1.bf16.msra.mxu0 %v3624
        %5055 = vmatprep.subr.bf16.mxu0 %v3633
        %5056 = vmatpush1.bf16.msra.mxu0 %v3632
        %5057 = vmatprep.subr.bf16.mxu0 %v3641
        %5058 = vmatpush1.bf16.msra.mxu0 %v3640
        %5059 = vmatprep.subr.bf16.mxu0 %v3649
        %5060 = vmatpush1.bf16.msra.mxu0 %v3648
        %5061 = vmatprep.subr.bf16.mxu0 %v3657
        %5062 = vmatpush1.bf16.msra.mxu0 %v3656
        %5063 = vmatprep.subr.bf16.mxu0 %v3665
        %5064 = vmatpush1.bf16.msra.mxu0 %v3664
        %5065 = vmatprep.subr.bf16.mxu0 %v3673
        %5066 = vmatpush1.bf16.msra.mxu0 %v3672
        %5067 = vmatprep.subr.bf16.mxu0 %v3681
        %5068 = vmatpush1.bf16.msra.mxu0 %v3680
        %5069 = vmatprep.subr.bf16.mxu0 %v3689
        %5070 = vmatpush1.bf16.msra.mxu0 %v3688
        %5071 = vmatprep.subr.bf16.mxu0 %v3697
        %5072 = vmatpush1.bf16.msra.mxu0 %v3696
        %5073 = vmatprep.subr.bf16.mxu0 %v3705
        %5074 = vmatpush1.bf16.msra.mxu0 %v3704
        %5075 = vmatprep.mubr.bf16.mxu0 %v1301
        %5076 = vmatmul.mubr.bf16.gmra.mrb[0].mxu0 %v1300
        %v5077 = vpop.f32.mrb[0].mxu0
        %v5078 = vadd.f32 %v4965, %v5077
        %v5079 = vpop.f32.mrb[0].mxu0
        %v5080 = vadd.f32 %v4967, %v5079
        %v5081 = vpop.f32.mrb[0].mxu0
        %v5082 = vadd.f32 %v4969, %v5081
        %v5083 = vpop.f32.mrb[0].mxu0
        %v5084 = vadd.f32 %v4971, %v5083
        %5085 = vmatprep.mubr.bf16.mxu0 %v1309
        %5086 = vmatmul.mubr.bf16.gmra.mrb[0].mxu0 %v1308
        %v5087 = vpop.f32.mrb[0].mxu0
        %v5088 = vadd.f32 %v4975, %v5087
        %v5089 = vpop.f32.mrb[0].mxu0
        %v5090 = vadd.f32 %v4977, %v5089
        %v5091 = vpop.f32.mrb[0].mxu0
        %v5092 = vadd.f32 %v4979, %v5091
        %v5093 = vpop.f32.mrb[0].mxu0
        %v5094 = vadd.f32 %v4981, %v5093
        %5095 = vmatprep.mubr.bf16.mxu0 %v1317
        %5096 = vmatmul.mubr.bf16.gmra.mrb[0].mxu0 %v1316
        %v5097 = vpop.f32.mrb[0].mxu0
        %v5098 = vadd.f32 %v4985, %v5097
        %v5099 = vpop.f32.mrb[0].mxu0
        %v5100 = vadd.f32 %v4987, %v5099
        %v5101 = vpop.f32.mrb[0].mxu0
        %v5102 = vadd.f32 %v4989, %v5101
        %v5103 = vpop.f32.mrb[0].mxu0
        %v5104 = vadd.f32 %v4991, %v5103
        %5105 = vmatprep.mubr.bf16.mxu0 %v1325
        %5106 = vmatmul.mubr.bf16.gmra.mrb[0].mxu0 %v1324
        %v5107 = vpop.f32.mrb[0].mxu0
        %v5108 = vadd.f32 %v4995, %v5107
        %v5109 = vpop.f32.mrb[0].mxu0
        %v5110 = vadd.f32 %v4997, %v5109
        %v5111 = vpop.f32.mrb[0].mxu0
        %v5112 = vadd.f32 %v4999, %v5111
        %v5113 = vpop.f32.mrb[0].mxu0
        %v5114 = vadd.f32 %v5001, %v5113
        %5115 = vmatprep.mubr.bf16.mxu0 %v1333
        %5116 = vmatmul.mubr.bf16.gmra.mrb[0].mxu0 %v1332
        %v5117 = vpop.f32.mrb[0].mxu0
        %v5118 = vadd.f32 %v5005, %v5117
        %v5119 = vpop.f32.mrb[0].mxu0
        %v5120 = vadd.f32 %v5007, %v5119
        %v5121 = vpop.f32.mrb[0].mxu0
        %v5122 = vadd.f32 %v5009, %v5121
        %v5123 = vpop.f32.mrb[0].mxu0
        %v5124 = vadd.f32 %v5011, %v5123
        %5125 = vmatprep.mubr.bf16.mxu0 %v1341
        %5126 = vmatmul.mubr.bf16.gmra.mrb[0].mxu0 %v1340
        %v5127 = vpop.f32.mrb[0].mxu0
        %v5128 = vadd.f32 %v5015, %v5127
        %v5129 = vpop.f32.mrb[0].mxu0
        %v5130 = vadd.f32 %v5017, %v5129
        %v5131 = vpop.f32.mrb[0].mxu0
        %v5132 = vadd.f32 %v5019, %v5131
        %v5133 = vpop.f32.mrb[0].mxu0
        %v5134 = vadd.f32 %v5021, %v5133
        %5135 = vmatprep.mubr.bf16.mxu0 %v1349
        %5136 = vmatmul.mubr.bf16.gmra.mrb[0].mxu0 %v1348
        %v5137 = vpop.f32.mrb[0].mxu0
        %v5138 = vadd.f32 %v5025, %v5137
        %v5139 = vpop.f32.mrb[0].mxu0
        %v5140 = vadd.f32 %v5027, %v5139
        %v5141 = vpop.f32.mrb[0].mxu0
        %v5142 = vadd.f32 %v5029, %v5141
        %v5143 = vpop.f32.mrb[0].mxu0
        %v5144 = vadd.f32 %v5031, %v5143
        %5145 = vmatprep.mubr.bf16.mxu0 %v1357
        %5146 = vmatmul.mubr.bf16.gmra.mrb[0].mxu0 %v1356
        %v5147 = vpop.f32.mrb[0].mxu0
        %v5148 = vadd.f32 %v5035, %v5147
        %v5149 = vpop.f32.mrb[0].mxu0
        %v5150 = vadd.f32 %v5037, %v5149
        %v5151 = vpop.f32.mrb[0].mxu0
        %v5152 = vadd.f32 %v5039, %v5151
        %v5153 = vpop.f32.mrb[0].mxu0
        %v5154 = vadd.f32 %v5041, %v5153
        %5155 = vdwg.mxu0
        %5156 = vmatprep.subr.bf16.mxu0 %v3713
        %5157 = vmatpush1.bf16.msra.mxu0 %v3712
        %5158 = vmatprep.subr.bf16.mxu0 %v3721
        %5159 = vmatpush1.bf16.msra.mxu0 %v3720
        %5160 = vmatprep.subr.bf16.mxu0 %v3729
        %5161 = vmatpush1.bf16.msra.mxu0 %v3728
        %5162 = vmatprep.subr.bf16.mxu0 %v3737
        %5163 = vmatpush1.bf16.msra.mxu0 %v3736
        %5164 = vmatprep.subr.bf16.mxu0 %v3745
        %5165 = vmatpush1.bf16.msra.mxu0 %v3744
        %5166 = vmatprep.subr.bf16.mxu0 %v3753
        %5167 = vmatpush1.bf16.msra.mxu0 %v3752
        %5168 = vmatprep.subr.bf16.mxu0 %v3761
        %5169 = vmatpush1.bf16.msra.mxu0 %v3760
        %5170 = vmatprep.subr.bf16.mxu0 %v3769
        %5171 = vmatpush1.bf16.msra.mxu0 %v3768
        %5172 = vmatprep.subr.bf16.mxu0 %v3777
        %5173 = vmatpush1.bf16.msra.mxu0 %v3776
        %5174 = vmatprep.subr.bf16.mxu0 %v3785
        %5175 = vmatpush1.bf16.msra.mxu0 %v3784
        %5176 = vmatprep.subr.bf16.mxu0 %v3793
        %5177 = vmatpush1.bf16.msra.mxu0 %v3792
        %5178 = vmatprep.subr.bf16.mxu0 %v3801
        %5179 = vmatpush1.bf16.msra.mxu0 %v3800
        %5180 = vmatprep.subr.bf16.mxu0 %v3809
        %5181 = vmatpush1.bf16.msra.mxu0 %v3808
        %5182 = vmatprep.subr.bf16.mxu0 %v3817
        %5183 = vmatpush1.bf16.msra.mxu0 %v3816
        %5184 = vmatprep.subr.bf16.mxu0 %v3825
        %5185 = vmatpush1.bf16.msra.mxu0 %v3824
        %5186 = vmatprep.subr.bf16.mxu0 %v3833
        %5187 = vmatpush1.bf16.msra.mxu0 %v3832
        %5188 = vmatprep.mubr.bf16.mxu0 %v1303
        %5189 = vmatmul.mubr.bf16.gmra.mrb[0].mxu0 %v1302
        %v5190 = vpop.f32.mrb[0].mxu0
        %v5191 = vadd.f32 %v5078, %v5190
        %v5192 = vpop.f32.mrb[0].mxu0
        %v5193 = vadd.f32 %v5080, %v5192
        %v5194 = vpop.f32.mrb[0].mxu0
        %v5195 = vadd.f32 %v5082, %v5194
        %v5196 = vpop.f32.mrb[0].mxu0
        %v5197 = vadd.f32 %v5084, %v5196
        %5198 = vmatprep.mubr.bf16.mxu0 %v1311
        %5199 = vmatmul.mubr.bf16.gmra.mrb[0].mxu0 %v1310
        %v5200 = vpop.f32.mrb[0].mxu0
        %v5201 = vadd.f32 %v5088, %v5200
        %v5202 = vpop.f32.mrb[0].mxu0
        %v5203 = vadd.f32 %v5090, %v5202
        %v5204 = vpop.f32.mrb[0].mxu0
        %v5205 = vadd.f32 %v5092, %v5204
        %v5206 = vpop.f32.mrb[0].mxu0
        %v5207 = vadd.f32 %v5094, %v5206
        %5208 = vmatprep.mubr.bf16.mxu0 %v1319
        %5209 = vmatmul.mubr.bf16.gmra.mrb[0].mxu0 %v1318
        %v5210 = vpop.f32.mrb[0].mxu0
        %v5211 = vadd.f32 %v5098, %v5210
        %v5212 = vpop.f32.mrb[0].mxu0
        %v5213 = vadd.f32 %v5100, %v5212
        %v5214 = vpop.f32.mrb[0].mxu0
        %v5215 = vadd.f32 %v5102, %v5214
        %v5216 = vpop.f32.mrb[0].mxu0
        %v5217 = vadd.f32 %v5104, %v5216
        %5218 = vmatprep.mubr.bf16.mxu0 %v1327
        %5219 = vmatmul.mubr.bf16.gmra.mrb[0].mxu0 %v1326
        %v5220 = vpop.f32.mrb[0].mxu0
        %v5221 = vadd.f32 %v5108, %v5220
        %v5222 = vpop.f32.mrb[0].mxu0
        %v5223 = vadd.f32 %v5110, %v5222
        %v5224 = vpop.f32.mrb[0].mxu0
        %v5225 = vadd.f32 %v5112, %v5224
        %v5226 = vpop.f32.mrb[0].mxu0
        %v5227 = vadd.f32 %v5114, %v5226
        %5228 = vmatprep.mubr.bf16.mxu0 %v1335
        %5229 = vmatmul.mubr.bf16.gmra.mrb[0].mxu0 %v1334
        %v5230 = vpop.f32.mrb[0].mxu0
        %v5231 = vadd.f32 %v5118, %v5230
        %v5232 = vpop.f32.mrb[0].mxu0
        %v5233 = vadd.f32 %v5120, %v5232
        %v5234 = vpop.f32.mrb[0].mxu0
        %v5235 = vadd.f32 %v5122, %v5234
        %v5236 = vpop.f32.mrb[0].mxu0
        %v5237 = vadd.f32 %v5124, %v5236
        %5238 = vmatprep.mubr.bf16.mxu0 %v1343
        %5239 = vmatmul.mubr.bf16.gmra.mrb[0].mxu0 %v1342
        %v5240 = vpop.f32.mrb[0].mxu0
        %v5241 = vadd.f32 %v5128, %v5240
        %v5242 = vpop.f32.mrb[0].mxu0
        %v5243 = vadd.f32 %v5130, %v5242
        %v5244 = vpop.f32.mrb[0].mxu0
        %v5245 = vadd.f32 %v5132, %v5244
        %v5246 = vpop.f32.mrb[0].mxu0
        %v5247 = vadd.f32 %v5134, %v5246
        %5248 = vmatprep.mubr.bf16.mxu0 %v1351
        %5249 = vmatmul.mubr.bf16.gmra.mrb[0].mxu0 %v1350
        %v5250 = vpop.f32.mrb[0].mxu0
        %v5251 = vadd.f32 %v5138, %v5250
        %v5252 = vpop.f32.mrb[0].mxu0
        %v5253 = vadd.f32 %v5140, %v5252
        %v5254 = vpop.f32.mrb[0].mxu0
        %v5255 = vadd.f32 %v5142, %v5254
        %v5256 = vpop.f32.mrb[0].mxu0
        %v5257 = vadd.f32 %v5144, %v5256
        %5258 = vmatprep.mubr.bf16.mxu0 %v1359
        %5259 = vmatmul.mubr.bf16.gmra.mrb[0].mxu0 %v1358
        %v5260 = vpop.f32.mrb[0].mxu0
        %v5261 = vadd.f32 %v5148, %v5260
        %v5262 = vpop.f32.mrb[0].mxu0
        %v5263 = vadd.f32 %v5150, %v5262
        %v5264 = vpop.f32.mrb[0].mxu0
        %v5265 = vadd.f32 %v5152, %v5264
        %v5266 = vpop.f32.mrb[0].mxu0
        %v5267 = vadd.f32 %v5154, %v5266
        %5268 = vdwg.mxu0
        %5269 = vmatprep.subr.bf16.mxu0 %v3841
        %5270 = vmatpush1.bf16.msra.mxu0 %v3840
        %5271 = vmatprep.subr.bf16.mxu0 %v3849
        %5272 = vmatpush1.bf16.msra.mxu0 %v3848
        %5273 = vmatprep.subr.bf16.mxu0 %v3857
        %5274 = vmatpush1.bf16.msra.mxu0 %v3856
        %5275 = vmatprep.subr.bf16.mxu0 %v3865
        %5276 = vmatpush1.bf16.msra.mxu0 %v3864
        %5277 = vmatprep.subr.bf16.mxu0 %v3873
        %5278 = vmatpush1.bf16.msra.mxu0 %v3872
        %5279 = vmatprep.subr.bf16.mxu0 %v3881
        %5280 = vmatpush1.bf16.msra.mxu0 %v3880
        %5281 = vmatprep.subr.bf16.mxu0 %v3889
        %5282 = vmatpush1.bf16.msra.mxu0 %v3888
        %5283 = vmatprep.subr.bf16.mxu0 %v3897
        %5284 = vmatpush1.bf16.msra.mxu0 %v3896
        %5285 = vmatprep.subr.bf16.mxu0 %v3905
        %5286 = vmatpush1.bf16.msra.mxu0 %v3904
        %5287 = vmatprep.subr.bf16.mxu0 %v3913
        %5288 = vmatpush1.bf16.msra.mxu0 %v3912
        %5289 = vmatprep.subr.bf16.mxu0 %v3921
        %5290 = vmatpush1.bf16.msra.mxu0 %v3920
        %5291 = vmatprep.subr.bf16.mxu0 %v3929
        %5292 = vmatpush1.bf16.msra.mxu0 %v3928
        %5293 = vmatprep.subr.bf16.mxu0 %v3937
        %5294 = vmatpush1.bf16.msra.mxu0 %v3936
        %5295 = vmatprep.subr.bf16.mxu0 %v3945
        %5296 = vmatpush1.bf16.msra.mxu0 %v3944
        %5297 = vmatprep.subr.bf16.mxu0 %v3953
        %5298 = vmatpush1.bf16.msra.mxu0 %v3952
        %5299 = vmatprep.subr.bf16.mxu0 %v3961
        %5300 = vmatpush1.bf16.msra.mxu0 %v3960
        %5301 = vmatprep.mubr.bf16.mxu0 %v1305
        %5302 = vmatmul.mubr.bf16.gmra.mrb[0].mxu0 %v1304
        %v5303 = vpop.f32.mrb[0].mxu0
        %v5304 = vadd.f32 %v5191, %v5303
        %v5305 = vpop.f32.mrb[0].mxu0
        %v5306 = vadd.f32 %v5193, %v5305
        %v5307 = vpop.f32.mrb[0].mxu0
        %v5308 = vadd.f32 %v5195, %v5307
        %v5309 = vpop.f32.mrb[0].mxu0
        %v5310 = vadd.f32 %v5197, %v5309
        %5311 = vmatprep.mubr.bf16.mxu0 %v1313
        %5312 = vmatmul.mubr.bf16.gmra.mrb[0].mxu0 %v1312
        %v5313 = vpop.f32.mrb[0].mxu0
        %v5314 = vadd.f32 %v5201, %v5313
        %v5315 = vpop.f32.mrb[0].mxu0
        %v5316 = vadd.f32 %v5203, %v5315
        %v5317 = vpop.f32.mrb[0].mxu0
        %v5318 = vadd.f32 %v5205, %v5317
        %v5319 = vpop.f32.mrb[0].mxu0
        %v5320 = vadd.f32 %v5207, %v5319
        %5321 = vmatprep.mubr.bf16.mxu0 %v1321
        %5322 = vmatmul.mubr.bf16.gmra.mrb[0].mxu0 %v1320
        %v5323 = vpop.f32.mrb[0].mxu0
        %v5324 = vadd.f32 %v5211, %v5323
        %v5325 = vpop.f32.mrb[0].mxu0
        %v5326 = vadd.f32 %v5213, %v5325
        %v5327 = vpop.f32.mrb[0].mxu0
        %v5328 = vadd.f32 %v5215, %v5327
        %v5329 = vpop.f32.mrb[0].mxu0
        %v5330 = vadd.f32 %v5217, %v5329
        %5331 = vmatprep.mubr.bf16.mxu0 %v1329
        %5332 = vmatmul.mubr.bf16.gmra.mrb[0].mxu0 %v1328
        %v5333 = vpop.f32.mrb[0].mxu0
        %v5334 = vadd.f32 %v5221, %v5333
        %v5335 = vpop.f32.mrb[0].mxu0
        %v5336 = vadd.f32 %v5223, %v5335
        %v5337 = vpop.f32.mrb[0].mxu0
        %v5338 = vadd.f32 %v5225, %v5337
        %v5339 = vpop.f32.mrb[0].mxu0
        %v5340 = vadd.f32 %v5227, %v5339
        %5341 = vmatprep.mubr.bf16.mxu0 %v1337
        %5342 = vmatmul.mubr.bf16.gmra.mrb[0].mxu0 %v1336
        %v5343 = vpop.f32.mrb[0].mxu0
        %v5344 = vadd.f32 %v5231, %v5343
        %v5345 = vpop.f32.mrb[0].mxu0
        %v5346 = vadd.f32 %v5233, %v5345
        %v5347 = vpop.f32.mrb[0].mxu0
        %v5348 = vadd.f32 %v5235, %v5347
        %v5349 = vpop.f32.mrb[0].mxu0
        %v5350 = vadd.f32 %v5237, %v5349
        %5351 = vmatprep.mubr.bf16.mxu0 %v1345
        %5352 = vmatmul.mubr.bf16.gmra.mrb[0].mxu0 %v1344
        %v5353 = vpop.f32.mrb[0].mxu0
        %v5354 = vadd.f32 %v5241, %v5353
        %v5355 = vpop.f32.mrb[0].mxu0
        %v5356 = vadd.f32 %v5243, %v5355
        %v5357 = vpop.f32.mrb[0].mxu0
        %v5358 = vadd.f32 %v5245, %v5357
        %v5359 = vpop.f32.mrb[0].mxu0
        %v5360 = vadd.f32 %v5247, %v5359
        %5361 = vmatprep.mubr.bf16.mxu0 %v1353
        %5362 = vmatmul.mubr.bf16.gmra.mrb[0].mxu0 %v1352
        %v5363 = vpop.f32.mrb[0].mxu0
        %v5364 = vadd.f32 %v5251, %v5363
        %v5365 = vpop.f32.mrb[0].mxu0
        %v5366 = vadd.f32 %v5253, %v5365
        %v5367 = vpop.f32.mrb[0].mxu0
        %v5368 = vadd.f32 %v5255, %v5367
        %v5369 = vpop.f32.mrb[0].mxu0
        %v5370 = vadd.f32 %v5257, %v5369
        %5371 = vmatprep.mubr.bf16.mxu0 %v1361
        %5372 = vmatmul.mubr.bf16.gmra.mrb[0].mxu0 %v1360
        %v5373 = vpop.f32.mrb[0].mxu0
        %v5374 = vadd.f32 %v5261, %v5373
        %v5375 = vpop.f32.mrb[0].mxu0
        %v5376 = vadd.f32 %v5263, %v5375
        %v5377 = vpop.f32.mrb[0].mxu0
        %v5378 = vadd.f32 %v5265, %v5377
        %v5379 = vpop.f32.mrb[0].mxu0
        %v5380 = vadd.f32 %v5267, %v5379
        %5381 = vdwg.mxu0
        %5382 = vmatprep.subr.bf16.mxu0 %v3459
        %5383 = vmatpush1.bf16.msra.mxu0 %v3458
        %5384 = vmatprep.subr.bf16.mxu0 %v3467
        %5385 = vmatpush1.bf16.msra.mxu0 %v3466
        %5386 = vmatprep.subr.bf16.mxu0 %v3475
        %5387 = vmatpush1.bf16.msra.mxu0 %v3474
        %5388 = vmatprep.subr.bf16.mxu0 %v3483
        %5389 = vmatpush1.bf16.msra.mxu0 %v3482
        %5390 = vmatprep.subr.bf16.mxu0 %v3491
        %5391 = vmatpush1.bf16.msra.mxu0 %v3490
        %5392 = vmatprep.subr.bf16.mxu0 %v3499
        %5393 = vmatpush1.bf16.msra.mxu0 %v3498
        %5394 = vmatprep.subr.bf16.mxu0 %v3507
        %5395 = vmatpush1.bf16.msra.mxu0 %v3506
        %5396 = vmatprep.subr.bf16.mxu0 %v3515
        %5397 = vmatpush1.bf16.msra.mxu0 %v3514
        %5398 = vmatprep.subr.bf16.mxu0 %v3523
        %5399 = vmatpush1.bf16.msra.mxu0 %v3522
        %5400 = vmatprep.subr.bf16.mxu0 %v3531
        %5401 = vmatpush1.bf16.msra.mxu0 %v3530
        %5402 = vmatprep.subr.bf16.mxu0 %v3539
        %5403 = vmatpush1.bf16.msra.mxu0 %v3538
        %5404 = vmatprep.subr.bf16.mxu0 %v3547
        %5405 = vmatpush1.bf16.msra.mxu0 %v3546
        %5406 = vmatprep.subr.bf16.mxu0 %v3555
        %5407 = vmatpush1.bf16.msra.mxu0 %v3554
        %5408 = vmatprep.subr.bf16.mxu0 %v3563
        %5409 = vmatpush1.bf16.msra.mxu0 %v3562
        %5410 = vmatprep.subr.bf16.mxu0 %v3571
        %5411 = vmatpush1.bf16.msra.mxu0 %v3570
        %5412 = vmatprep.subr.bf16.mxu0 %v3579
        %5413 = vmatpush1.bf16.msra.mxu0 %v3578
        %5414 = vmatprep.mubr.bf16.mxu0 %v1299
        %5415 = vmatmul.mubr.bf16.gmra.mrb[0].mxu0 %v1298
        %v5416 = vpop.f32.mrb[0].mxu0
        %v5417 = vadd.f32 %v1897, %v5416
        %v5418 = vpop.f32.mrb[0].mxu0
        %v5419 = vadd.f32 %v1901, %v5418
        %v5420 = vpop.f32.mrb[0].mxu0
        %v5421 = vadd.f32 %v1897, %v5420
        %v5422 = vpop.f32.mrb[0].mxu0
        %v5423 = vadd.f32 %v1901, %v5422
        %5424 = vmatprep.mubr.bf16.mxu0 %v1307
        %5425 = vmatmul.mubr.bf16.gmra.mrb[0].mxu0 %v1306
        %v5426 = vpop.f32.mrb[0].mxu0
        %v5427 = vadd.f32 %v1897, %v5426
        %v5428 = vpop.f32.mrb[0].mxu0
        %v5429 = vadd.f32 %v1901, %v5428
        %v5430 = vpop.f32.mrb[0].mxu0
        %v5431 = vadd.f32 %v1897, %v5430
        %v5432 = vpop.f32.mrb[0].mxu0
        %v5433 = vadd.f32 %v1901, %v5432
        %5434 = vmatprep.mubr.bf16.mxu0 %v1315
        %5435 = vmatmul.mubr.bf16.gmra.mrb[0].mxu0 %v1314
        %v5436 = vpop.f32.mrb[0].mxu0
        %v5437 = vadd.f32 %v1897, %v5436
        %v5438 = vpop.f32.mrb[0].mxu0
        %v5439 = vadd.f32 %v1901, %v5438
        %v5440 = vpop.f32.mrb[0].mxu0
        %v5441 = vadd.f32 %v1897, %v5440
        %v5442 = vpop.f32.mrb[0].mxu0
        %v5443 = vadd.f32 %v1901, %v5442
        %5444 = vmatprep.mubr.bf16.mxu0 %v1323
        %5445 = vmatmul.mubr.bf16.gmra.mrb[0].mxu0 %v1322
        %v5446 = vpop.f32.mrb[0].mxu0
        %v5447 = vadd.f32 %v1897, %v5446
        %v5448 = vpop.f32.mrb[0].mxu0
        %v5449 = vadd.f32 %v1901, %v5448
        %v5450 = vpop.f32.mrb[0].mxu0
        %v5451 = vadd.f32 %v1897, %v5450
        %v5452 = vpop.f32.mrb[0].mxu0
        %v5453 = vadd.f32 %v1901, %v5452
        %5454 = vmatprep.mubr.bf16.mxu0 %v1331
        %5455 = vmatmul.mubr.bf16.gmra.mrb[0].mxu0 %v1330
        %v5456 = vpop.f32.mrb[0].mxu0
        %v5457 = vadd.f32 %v1897, %v5456
        %v5458 = vpop.f32.mrb[0].mxu0
        %v5459 = vadd.f32 %v1901, %v5458
        %v5460 = vpop.f32.mrb[0].mxu0
        %v5461 = vadd.f32 %v1897, %v5460
        %v5462 = vpop.f32.mrb[0].mxu0
        %v5463 = vadd.f32 %v1901, %v5462
        %5464 = vmatprep.mubr.bf16.mxu0 %v1339
        %5465 = vmatmul.mubr.bf16.gmra.mrb[0].mxu0 %v1338
        %v5466 = vpop.f32.mrb[0].mxu0
        %v5467 = vadd.f32 %v1897, %v5466
        %v5468 = vpop.f32.mrb[0].mxu0
        %v5469 = vadd.f32 %v1901, %v5468
        %v5470 = vpop.f32.mrb[0].mxu0
        %v5471 = vadd.f32 %v1897, %v5470
        %v5472 = vpop.f32.mrb[0].mxu0
        %v5473 = vadd.f32 %v1901, %v5472
        %5474 = vmatprep.mubr.bf16.mxu0 %v1347
        %5475 = vmatmul.mubr.bf16.gmra.mrb[0].mxu0 %v1346
        %v5476 = vpop.f32.mrb[0].mxu0
        %v5477 = vadd.f32 %v1897, %v5476
        %v5478 = vpop.f32.mrb[0].mxu0
        %v5479 = vadd.f32 %v1901, %v5478
        %v5480 = vpop.f32.mrb[0].mxu0
        %v5481 = vadd.f32 %v1897, %v5480
        %v5482 = vpop.f32.mrb[0].mxu0
        %v5483 = vadd.f32 %v1901, %v5482
        %5484 = vmatprep.mubr.bf16.mxu0 %v1355
        %5485 = vmatmul.mubr.bf16.gmra.mrb[0].mxu0 %v1354
        %v5486 = vpop.f32.mrb[0].mxu0
        %v5487 = vadd.f32 %v1897, %v5486
        %v5488 = vpop.f32.mrb[0].mxu0
        %v5489 = vadd.f32 %v1901, %v5488
        %v5490 = vpop.f32.mrb[0].mxu0
        %v5491 = vadd.f32 %v1897, %v5490
        %v5492 = vpop.f32.mrb[0].mxu0
        %v5493 = vadd.f32 %v1901, %v5492
        %5494 = vdwg.mxu0
        %5495 = vmatprep.subr.bf16.mxu0 %v3587
        %5496 = vmatpush1.bf16.msra.mxu0 %v3586
        %5497 = vmatprep.subr.bf16.mxu0 %v3595
        %5498 = vmatpush1.bf16.msra.mxu0 %v3594
        %5499 = vmatprep.subr.bf16.mxu0 %v3603
        %5500 = vmatpush1.bf16.msra.mxu0 %v3602
        %5501 = vmatprep.subr.bf16.mxu0 %v3611
        %5502 = vmatpush1.bf16.msra.mxu0 %v3610
        %5503 = vmatprep.subr.bf16.mxu0 %v3619
        %5504 = vmatpush1.bf16.msra.mxu0 %v3618
        %5505 = vmatprep.subr.bf16.mxu0 %v3627
        %5506 = vmatpush1.bf16.msra.mxu0 %v3626
        %5507 = vmatprep.subr.bf16.mxu0 %v3635
        %5508 = vmatpush1.bf16.msra.mxu0 %v3634
        %5509 = vmatprep.subr.bf16.mxu0 %v3643
        %5510 = vmatpush1.bf16.msra.mxu0 %v3642
        %5511 = vmatprep.subr.bf16.mxu0 %v3651
        %5512 = vmatpush1.bf16.msra.mxu0 %v3650
        %5513 = vmatprep.subr.bf16.mxu0 %v3659
        %5514 = vmatpush1.bf16.msra.mxu0 %v3658
        %5515 = vmatprep.subr.bf16.mxu0 %v3667
        %5516 = vmatpush1.bf16.msra.mxu0 %v3666
        %5517 = vmatprep.subr.bf16.mxu0 %v3675
        %5518 = vmatpush1.bf16.msra.mxu0 %v3674
        %5519 = vmatprep.subr.bf16.mxu0 %v3683
        %5520 = vmatpush1.bf16.msra.mxu0 %v3682
        %5521 = vmatprep.subr.bf16.mxu0 %v3691
        %5522 = vmatpush1.bf16.msra.mxu0 %v3690
        %5523 = vmatprep.subr.bf16.mxu0 %v3699
        %5524 = vmatpush1.bf16.msra.mxu0 %v3698
        %5525 = vmatprep.subr.bf16.mxu0 %v3707
        %5526 = vmatpush1.bf16.msra.mxu0 %v3706
        %5527 = vmatprep.mubr.bf16.mxu0 %v1301
        %5528 = vmatmul.mubr.bf16.gmra.mrb[0].mxu0 %v1300
        %v5529 = vpop.f32.mrb[0].mxu0
        %v5530 = vadd.f32 %v5417, %v5529
        %v5531 = vpop.f32.mrb[0].mxu0
        %v5532 = vadd.f32 %v5419, %v5531
        %v5533 = vpop.f32.mrb[0].mxu0
        %v5534 = vadd.f32 %v5421, %v5533
        %v5535 = vpop.f32.mrb[0].mxu0
        %v5536 = vadd.f32 %v5423, %v5535
        %5537 = vmatprep.mubr.bf16.mxu0 %v1309
        %5538 = vmatmul.mubr.bf16.gmra.mrb[0].mxu0 %v1308
        %v5539 = vpop.f32.mrb[0].mxu0
        %v5540 = vadd.f32 %v5427, %v5539
        %v5541 = vpop.f32.mrb[0].mxu0
        %v5542 = vadd.f32 %v5429, %v5541
        %v5543 = vpop.f32.mrb[0].mxu0
        %v5544 = vadd.f32 %v5431, %v5543
        %v5545 = vpop.f32.mrb[0].mxu0
        %v5546 = vadd.f32 %v5433, %v5545
        %5547 = vmatprep.mubr.bf16.mxu0 %v1317
        %5548 = vmatmul.mubr.bf16.gmra.mrb[0].mxu0 %v1316
        %v5549 = vpop.f32.mrb[0].mxu0
        %v5550 = vadd.f32 %v5437, %v5549
        %v5551 = vpop.f32.mrb[0].mxu0
        %v5552 = vadd.f32 %v5439, %v5551
        %v5553 = vpop.f32.mrb[0].mxu0
        %v5554 = vadd.f32 %v5441, %v5553
        %v5555 = vpop.f32.mrb[0].mxu0
        %v5556 = vadd.f32 %v5443, %v5555
        %5557 = vmatprep.mubr.bf16.mxu0 %v1325
        %5558 = vmatmul.mubr.bf16.gmra.mrb[0].mxu0 %v1324
        %v5559 = vpop.f32.mrb[0].mxu0
        %v5560 = vadd.f32 %v5447, %v5559
        %v5561 = vpop.f32.mrb[0].mxu0
        %v5562 = vadd.f32 %v5449, %v5561
        %v5563 = vpop.f32.mrb[0].mxu0
        %v5564 = vadd.f32 %v5451, %v5563
        %v5565 = vpop.f32.mrb[0].mxu0
        %v5566 = vadd.f32 %v5453, %v5565
        %5567 = vmatprep.mubr.bf16.mxu0 %v1333
        %5568 = vmatmul.mubr.bf16.gmra.mrb[0].mxu0 %v1332
        %v5569 = vpop.f32.mrb[0].mxu0
        %v5570 = vadd.f32 %v5457, %v5569
        %v5571 = vpop.f32.mrb[0].mxu0
        %v5572 = vadd.f32 %v5459, %v5571
        %v5573 = vpop.f32.mrb[0].mxu0
        %v5574 = vadd.f32 %v5461, %v5573
        %v5575 = vpop.f32.mrb[0].mxu0
        %v5576 = vadd.f32 %v5463, %v5575
        %5577 = vmatprep.mubr.bf16.mxu0 %v1341
        %5578 = vmatmul.mubr.bf16.gmra.mrb[0].mxu0 %v1340
        %v5579 = vpop.f32.mrb[0].mxu0
        %v5580 = vadd.f32 %v5467, %v5579
        %v5581 = vpop.f32.mrb[0].mxu0
        %v5582 = vadd.f32 %v5469, %v5581
        %v5583 = vpop.f32.mrb[0].mxu0
        %v5584 = vadd.f32 %v5471, %v5583
        %v5585 = vpop.f32.mrb[0].mxu0
        %v5586 = vadd.f32 %v5473, %v5585
        %5587 = vmatprep.mubr.bf16.mxu0 %v1349
        %5588 = vmatmul.mubr.bf16.gmra.mrb[0].mxu0 %v1348
        %v5589 = vpop.f32.mrb[0].mxu0
        %v5590 = vadd.f32 %v5477, %v5589
        %v5591 = vpop.f32.mrb[0].mxu0
        %v5592 = vadd.f32 %v5479, %v5591
        %v5593 = vpop.f32.mrb[0].mxu0
        %v5594 = vadd.f32 %v5481, %v5593
        %v5595 = vpop.f32.mrb[0].mxu0
        %v5596 = vadd.f32 %v5483, %v5595
        %5597 = vmatprep.mubr.bf16.mxu0 %v1357
        %5598 = vmatmul.mubr.bf16.gmra.mrb[0].mxu0 %v1356
        %v5599 = vpop.f32.mrb[0].mxu0
        %v5600 = vadd.f32 %v5487, %v5599
        %v5601 = vpop.f32.mrb[0].mxu0
        %v5602 = vadd.f32 %v5489, %v5601
        %v5603 = vpop.f32.mrb[0].mxu0
        %v5604 = vadd.f32 %v5491, %v5603
        %v5605 = vpop.f32.mrb[0].mxu0
        %v5606 = vadd.f32 %v5493, %v5605
        %5607 = vdwg.mxu0
        %5608 = vmatprep.subr.bf16.mxu0 %v3715
        %5609 = vmatpush1.bf16.msra.mxu0 %v3714
        %5610 = vmatprep.subr.bf16.mxu0 %v3723
        %5611 = vmatpush1.bf16.msra.mxu0 %v3722
        %5612 = vmatprep.subr.bf16.mxu0 %v3731
        %5613 = vmatpush1.bf16.msra.mxu0 %v3730
        %5614 = vmatprep.subr.bf16.mxu0 %v3739
        %5615 = vmatpush1.bf16.msra.mxu0 %v3738
        %5616 = vmatprep.subr.bf16.mxu0 %v3747
        %5617 = vmatpush1.bf16.msra.mxu0 %v3746
        %5618 = vmatprep.subr.bf16.mxu0 %v3755
        %5619 = vmatpush1.bf16.msra.mxu0 %v3754
        %5620 = vmatprep.subr.bf16.mxu0 %v3763
        %5621 = vmatpush1.bf16.msra.mxu0 %v3762
        %5622 = vmatprep.subr.bf16.mxu0 %v3771
        %5623 = vmatpush1.bf16.msra.mxu0 %v3770
        %5624 = vmatprep.subr.bf16.mxu0 %v3779
        %5625 = vmatpush1.bf16.msra.mxu0 %v3778
        %5626 = vmatprep.subr.bf16.mxu0 %v3787
        %5627 = vmatpush1.bf16.msra.mxu0 %v3786
        %5628 = vmatprep.subr.bf16.mxu0 %v3795
        %5629 = vmatpush1.bf16.msra.mxu0 %v3794
        %5630 = vmatprep.subr.bf16.mxu0 %v3803
        %5631 = vmatpush1.bf16.msra.mxu0 %v3802
        %5632 = vmatprep.subr.bf16.mxu0 %v3811
        %5633 = vmatpush1.bf16.msra.mxu0 %v3810
        %5634 = vmatprep.subr.bf16.mxu0 %v3819
        %5635 = vmatpush1.bf16.msra.mxu0 %v3818
        %5636 = vmatprep.subr.bf16.mxu0 %v3827
        %5637 = vmatpush1.bf16.msra.mxu0 %v3826
        %5638 = vmatprep.subr.bf16.mxu0 %v3835
        %5639 = vmatpush1.bf16.msra.mxu0 %v3834
        %5640 = vmatprep.mubr.bf16.mxu0 %v1303
        %5641 = vmatmul.mubr.bf16.gmra.mrb[0].mxu0 %v1302
        %v5642 = vpop.f32.mrb[0].mxu0
        %v5643 = vadd.f32 %v5530, %v5642
        %v5644 = vpop.f32.mrb[0].mxu0
        %v5645 = vadd.f32 %v5532, %v5644
        %v5646 = vpop.f32.mrb[0].mxu0
        %v5647 = vadd.f32 %v5534, %v5646
        %v5648 = vpop.f32.mrb[0].mxu0
        %v5649 = vadd.f32 %v5536, %v5648
        %5650 = vmatprep.mubr.bf16.mxu0 %v1311
        %5651 = vmatmul.mubr.bf16.gmra.mrb[0].mxu0 %v1310
        %v5652 = vpop.f32.mrb[0].mxu0
        %v5653 = vadd.f32 %v5540, %v5652
        %v5654 = vpop.f32.mrb[0].mxu0
        %v5655 = vadd.f32 %v5542, %v5654
        %v5656 = vpop.f32.mrb[0].mxu0
        %v5657 = vadd.f32 %v5544, %v5656
        %v5658 = vpop.f32.mrb[0].mxu0
        %v5659 = vadd.f32 %v5546, %v5658
        %5660 = vmatprep.mubr.bf16.mxu0 %v1319
        %5661 = vmatmul.mubr.bf16.gmra.mrb[0].mxu0 %v1318
        %v5662 = vpop.f32.mrb[0].mxu0
        %v5663 = vadd.f32 %v5550, %v5662
        %v5664 = vpop.f32.mrb[0].mxu0
        %v5665 = vadd.f32 %v5552, %v5664
        %v5666 = vpop.f32.mrb[0].mxu0
        %v5667 = vadd.f32 %v5554, %v5666
        %v5668 = vpop.f32.mrb[0].mxu0
        %v5669 = vadd.f32 %v5556, %v5668
        %5670 = vmatprep.mubr.bf16.mxu0 %v1327
        %5671 = vmatmul.mubr.bf16.gmra.mrb[0].mxu0 %v1326
        %v5672 = vpop.f32.mrb[0].mxu0
        %v5673 = vadd.f32 %v5560, %v5672
        %v5674 = vpop.f32.mrb[0].mxu0
        %v5675 = vadd.f32 %v5562, %v5674
        %v5676 = vpop.f32.mrb[0].mxu0
        %v5677 = vadd.f32 %v5564, %v5676
        %v5678 = vpop.f32.mrb[0].mxu0
        %v5679 = vadd.f32 %v5566, %v5678
        %5680 = vmatprep.mubr.bf16.mxu0 %v1335
        %5681 = vmatmul.mubr.bf16.gmra.mrb[0].mxu0 %v1334
        %v5682 = vpop.f32.mrb[0].mxu0
        %v5683 = vadd.f32 %v5570, %v5682
        %v5684 = vpop.f32.mrb[0].mxu0
        %v5685 = vadd.f32 %v5572, %v5684
        %v5686 = vpop.f32.mrb[0].mxu0
        %v5687 = vadd.f32 %v5574, %v5686
        %v5688 = vpop.f32.mrb[0].mxu0
        %v5689 = vadd.f32 %v5576, %v5688
        %5690 = vmatprep.mubr.bf16.mxu0 %v1343
        %5691 = vmatmul.mubr.bf16.gmra.mrb[0].mxu0 %v1342
        %v5692 = vpop.f32.mrb[0].mxu0
        %v5693 = vadd.f32 %v5580, %v5692
        %v5694 = vpop.f32.mrb[0].mxu0
        %v5695 = vadd.f32 %v5582, %v5694
        %v5696 = vpop.f32.mrb[0].mxu0
        %v5697 = vadd.f32 %v5584, %v5696
        %v5698 = vpop.f32.mrb[0].mxu0
        %v5699 = vadd.f32 %v5586, %v5698
        %5700 = vmatprep.mubr.bf16.mxu0 %v1351
        %5701 = vmatmul.mubr.bf16.gmra.mrb[0].mxu0 %v1350
        %v5702 = vpop.f32.mrb[0].mxu0
        %v5703 = vadd.f32 %v5590, %v5702
        %v5704 = vpop.f32.mrb[0].mxu0
        %v5705 = vadd.f32 %v5592, %v5704
        %v5706 = vpop.f32.mrb[0].mxu0
        %v5707 = vadd.f32 %v5594, %v5706
        %v5708 = vpop.f32.mrb[0].mxu0
        %v5709 = vadd.f32 %v5596, %v5708
        %5710 = vmatprep.mubr.bf16.mxu0 %v1359
        %5711 = vmatmul.mubr.bf16.gmra.mrb[0].mxu0 %v1358
        %v5712 = vpop.f32.mrb[0].mxu0
        %v5713 = vadd.f32 %v5600, %v5712
        %v5714 = vpop.f32.mrb[0].mxu0
        %v5715 = vadd.f32 %v5602, %v5714
        %v5716 = vpop.f32.mrb[0].mxu0
        %v5717 = vadd.f32 %v5604, %v5716
        %v5718 = vpop.f32.mrb[0].mxu0
        %v5719 = vadd.f32 %v5606, %v5718
        %5720 = vdwg.mxu0
        %5721 = vmatprep.subr.bf16.mxu0 %v3843
        %5722 = vmatpush1.bf16.msra.mxu0 %v3842
        %5723 = vmatprep.subr.bf16.mxu0 %v3851
        %5724 = vmatpush1.bf16.msra.mxu0 %v3850
        %5725 = vmatprep.subr.bf16.mxu0 %v3859
        %5726 = vmatpush1.bf16.msra.mxu0 %v3858
        %5727 = vmatprep.subr.bf16.mxu0 %v3867
        %5728 = vmatpush1.bf16.msra.mxu0 %v3866
        %5729 = vmatprep.subr.bf16.mxu0 %v3875
        %5730 = vmatpush1.bf16.msra.mxu0 %v3874
        %5731 = vmatprep.subr.bf16.mxu0 %v3883
        %5732 = vmatpush1.bf16.msra.mxu0 %v3882
        %5733 = vmatprep.subr.bf16.mxu0 %v3891
        %5734 = vmatpush1.bf16.msra.mxu0 %v3890
        %5735 = vmatprep.subr.bf16.mxu0 %v3899
        %5736 = vmatpush1.bf16.msra.mxu0 %v3898
        %5737 = vmatprep.subr.bf16.mxu0 %v3907
        %5738 = vmatpush1.bf16.msra.mxu0 %v3906
        %5739 = vmatprep.subr.bf16.mxu0 %v3915
        %5740 = vmatpush1.bf16.msra.mxu0 %v3914
        %5741 = vmatprep.subr.bf16.mxu0 %v3923
        %5742 = vmatpush1.bf16.msra.mxu0 %v3922
        %5743 = vmatprep.subr.bf16.mxu0 %v3931
        %5744 = vmatpush1.bf16.msra.mxu0 %v3930
        %5745 = vmatprep.subr.bf16.mxu0 %v3939
        %5746 = vmatpush1.bf16.msra.mxu0 %v3938
        %5747 = vmatprep.subr.bf16.mxu0 %v3947
        %5748 = vmatpush1.bf16.msra.mxu0 %v3946
        %5749 = vmatprep.subr.bf16.mxu0 %v3955
        %5750 = vmatpush1.bf16.msra.mxu0 %v3954
        %5751 = vmatprep.subr.bf16.mxu0 %v3963
        %5752 = vmatpush1.bf16.msra.mxu0 %v3962
        %5753 = vmatprep.mubr.bf16.mxu0 %v1305
        %5754 = vmatmul.mubr.bf16.gmra.mrb[0].mxu0 %v1304
        %v5755 = vpop.f32.mrb[0].mxu0
        %v5756 = vadd.f32 %v5643, %v5755
        %v5757 = vpop.f32.mrb[0].mxu0
        %v5758 = vadd.f32 %v5645, %v5757
        %v5759 = vpop.f32.mrb[0].mxu0
        %v5760 = vadd.f32 %v5647, %v5759
        %v5761 = vpop.f32.mrb[0].mxu0
        %v5762 = vadd.f32 %v5649, %v5761
        %5763 = vmatprep.mubr.bf16.mxu0 %v1313
        %5764 = vmatmul.mubr.bf16.gmra.mrb[0].mxu0 %v1312
        %v5765 = vpop.f32.mrb[0].mxu0
        %v5766 = vadd.f32 %v5653, %v5765
        %v5767 = vpop.f32.mrb[0].mxu0
        %v5768 = vadd.f32 %v5655, %v5767
        %v5769 = vpop.f32.mrb[0].mxu0
        %v5770 = vadd.f32 %v5657, %v5769
        %v5771 = vpop.f32.mrb[0].mxu0
        %v5772 = vadd.f32 %v5659, %v5771
        %5773 = vmatprep.mubr.bf16.mxu0 %v1321
        %5774 = vmatmul.mubr.bf16.gmra.mrb[0].mxu0 %v1320
        %v5775 = vpop.f32.mrb[0].mxu0
        %v5776 = vadd.f32 %v5663, %v5775
        %v5777 = vpop.f32.mrb[0].mxu0
        %v5778 = vadd.f32 %v5665, %v5777
        %v5779 = vpop.f32.mrb[0].mxu0
        %v5780 = vadd.f32 %v5667, %v5779
        %v5781 = vpop.f32.mrb[0].mxu0
        %v5782 = vadd.f32 %v5669, %v5781
        %5783 = vmatprep.mubr.bf16.mxu0 %v1329
        %5784 = vmatmul.mubr.bf16.gmra.mrb[0].mxu0 %v1328
        %v5785 = vpop.f32.mrb[0].mxu0
        %v5786 = vadd.f32 %v5673, %v5785
        %v5787 = vpop.f32.mrb[0].mxu0
        %v5788 = vadd.f32 %v5675, %v5787
        %v5789 = vpop.f32.mrb[0].mxu0
        %v5790 = vadd.f32 %v5677, %v5789
        %v5791 = vpop.f32.mrb[0].mxu0
        %v5792 = vadd.f32 %v5679, %v5791
        %5793 = vmatprep.mubr.bf16.mxu0 %v1337
        %5794 = vmatmul.mubr.bf16.gmra.mrb[0].mxu0 %v1336
        %v5795 = vpop.f32.mrb[0].mxu0
        %v5796 = vadd.f32 %v5683, %v5795
        %v5797 = vpop.f32.mrb[0].mxu0
        %v5798 = vadd.f32 %v5685, %v5797
        %v5799 = vpop.f32.mrb[0].mxu0
        %v5800 = vadd.f32 %v5687, %v5799
        %v5801 = vpop.f32.mrb[0].mxu0
        %v5802 = vadd.f32 %v5689, %v5801
        %5803 = vmatprep.mubr.bf16.mxu0 %v1345
        %5804 = vmatmul.mubr.bf16.gmra.mrb[0].mxu0 %v1344
        %v5805 = vpop.f32.mrb[0].mxu0
        %v5806 = vadd.f32 %v5693, %v5805
        %v5807 = vpop.f32.mrb[0].mxu0
        %v5808 = vadd.f32 %v5695, %v5807
        %v5809 = vpop.f32.mrb[0].mxu0
        %v5810 = vadd.f32 %v5697, %v5809
        %v5811 = vpop.f32.mrb[0].mxu0
        %v5812 = vadd.f32 %v5699, %v5811
        %5813 = vmatprep.mubr.bf16.mxu0 %v1353
        %5814 = vmatmul.mubr.bf16.gmra.mrb[0].mxu0 %v1352
        %v5815 = vpop.f32.mrb[0].mxu0
        %v5816 = vadd.f32 %v5703, %v5815
        %v5817 = vpop.f32.mrb[0].mxu0
        %v5818 = vadd.f32 %v5705, %v5817
        %v5819 = vpop.f32.mrb[0].mxu0
        %v5820 = vadd.f32 %v5707, %v5819
        %v5821 = vpop.f32.mrb[0].mxu0
        %v5822 = vadd.f32 %v5709, %v5821
        %5823 = vmatprep.mubr.bf16.mxu0 %v1361
        %5824 = vmatmul.mubr.bf16.gmra.mrb[0].mxu0 %v1360
        %v5825 = vpop.f32.mrb[0].mxu0
        %v5826 = vadd.f32 %v5713, %v5825
        %v5827 = vpop.f32.mrb[0].mxu0
        %v5828 = vadd.f32 %v5715, %v5827
        %v5829 = vpop.f32.mrb[0].mxu0
        %v5830 = vadd.f32 %v5717, %v5829
        %v5831 = vpop.f32.mrb[0].mxu0
        %v5832 = vadd.f32 %v5719, %v5831
        %5833 = vdwg.mxu0
        %5834 = vmatprep.subr.bf16.mxu0 %v3461
        %5835 = vmatpush1.bf16.msra.mxu0 %v3460
        %5836 = vmatprep.subr.bf16.mxu0 %v3469
        %5837 = vmatpush1.bf16.msra.mxu0 %v3468
        %5838 = vmatprep.subr.bf16.mxu0 %v3477
        %5839 = vmatpush1.bf16.msra.mxu0 %v3476
        %5840 = vmatprep.subr.bf16.mxu0 %v3485
        %5841 = vmatpush1.bf16.msra.mxu0 %v3484
        %5842 = vmatprep.subr.bf16.mxu0 %v3493
        %5843 = vmatpush1.bf16.msra.mxu0 %v3492
        %5844 = vmatprep.subr.bf16.mxu0 %v3501
        %5845 = vmatpush1.bf16.msra.mxu0 %v3500
        %5846 = vmatprep.subr.bf16.mxu0 %v3509
        %5847 = vmatpush1.bf16.msra.mxu0 %v3508
        %5848 = vmatprep.subr.bf16.mxu0 %v3517
        %5849 = vmatpush1.bf16.msra.mxu0 %v3516
        %5850 = vmatprep.subr.bf16.mxu0 %v3525
        %5851 = vmatpush1.bf16.msra.mxu0 %v3524
        %5852 = vmatprep.subr.bf16.mxu0 %v3533
        %5853 = vmatpush1.bf16.msra.mxu0 %v3532
        %5854 = vmatprep.subr.bf16.mxu0 %v3541
        %5855 = vmatpush1.bf16.msra.mxu0 %v3540
        %5856 = vmatprep.subr.bf16.mxu0 %v3549
        %5857 = vmatpush1.bf16.msra.mxu0 %v3548
        %5858 = vmatprep.subr.bf16.mxu0 %v3557
        %5859 = vmatpush1.bf16.msra.mxu0 %v3556
        %5860 = vmatprep.subr.bf16.mxu0 %v3565
        %5861 = vmatpush1.bf16.msra.mxu0 %v3564
        %5862 = vmatprep.subr.bf16.mxu0 %v3573
        %5863 = vmatpush1.bf16.msra.mxu0 %v3572
        %5864 = vmatprep.subr.bf16.mxu0 %v3581
        %5865 = vmatpush1.bf16.msra.mxu0 %v3580
        %5866 = vmatprep.mubr.bf16.mxu0 %v1299
        %5867 = vmatmul.mubr.bf16.gmra.mrb[0].mxu0 %v1298
        %v5868 = vpop.f32.mrb[0].mxu0
        %v5869 = vadd.f32 %v1905, %v5868
        %v5870 = vpop.f32.mrb[0].mxu0
        %v5871 = vadd.f32 %v1909, %v5870
        %v5872 = vpop.f32.mrb[0].mxu0
        %v5873 = vadd.f32 %v1905, %v5872
        %v5874 = vpop.f32.mrb[0].mxu0
        %v5875 = vadd.f32 %v1909, %v5874
        %5876 = vmatprep.mubr.bf16.mxu0 %v1307
        %5877 = vmatmul.mubr.bf16.gmra.mrb[0].mxu0 %v1306
        %v5878 = vpop.f32.mrb[0].mxu0
        %v5879 = vadd.f32 %v1905, %v5878
        %v5880 = vpop.f32.mrb[0].mxu0
        %v5881 = vadd.f32 %v1909, %v5880
        %v5882 = vpop.f32.mrb[0].mxu0
        %v5883 = vadd.f32 %v1905, %v5882
        %v5884 = vpop.f32.mrb[0].mxu0
        %v5885 = vadd.f32 %v1909, %v5884
        %5886 = vmatprep.mubr.bf16.mxu0 %v1315
        %5887 = vmatmul.mubr.bf16.gmra.mrb[0].mxu0 %v1314
        %v5888 = vpop.f32.mrb[0].mxu0
        %v5889 = vadd.f32 %v1905, %v5888
        %v5890 = vpop.f32.mrb[0].mxu0
        %v5891 = vadd.f32 %v1909, %v5890
        %v5892 = vpop.f32.mrb[0].mxu0
        %v5893 = vadd.f32 %v1905, %v5892
        %v5894 = vpop.f32.mrb[0].mxu0
        %v5895 = vadd.f32 %v1909, %v5894
        %5896 = vmatprep.mubr.bf16.mxu0 %v1323
        %5897 = vmatmul.mubr.bf16.gmra.mrb[0].mxu0 %v1322
        %v5898 = vpop.f32.mrb[0].mxu0
        %v5899 = vadd.f32 %v1905, %v5898
        %v5900 = vpop.f32.mrb[0].mxu0
        %v5901 = vadd.f32 %v1909, %v5900
        %v5902 = vpop.f32.mrb[0].mxu0
        %v5903 = vadd.f32 %v1905, %v5902
        %v5904 = vpop.f32.mrb[0].mxu0
        %v5905 = vadd.f32 %v1909, %v5904
        %5906 = vmatprep.mubr.bf16.mxu0 %v1331
        %5907 = vmatmul.mubr.bf16.gmra.mrb[0].mxu0 %v1330
        %v5908 = vpop.f32.mrb[0].mxu0
        %v5909 = vadd.f32 %v1905, %v5908
        %v5910 = vpop.f32.mrb[0].mxu0
        %v5911 = vadd.f32 %v1909, %v5910
        %v5912 = vpop.f32.mrb[0].mxu0
        %v5913 = vadd.f32 %v1905, %v5912
        %v5914 = vpop.f32.mrb[0].mxu0
        %v5915 = vadd.f32 %v1909, %v5914
        %5916 = vmatprep.mubr.bf16.mxu0 %v1339
        %5917 = vmatmul.mubr.bf16.gmra.mrb[0].mxu0 %v1338
        %v5918 = vpop.f32.mrb[0].mxu0
        %v5919 = vadd.f32 %v1905, %v5918
        %v5920 = vpop.f32.mrb[0].mxu0
        %v5921 = vadd.f32 %v1909, %v5920
        %v5922 = vpop.f32.mrb[0].mxu0
        %v5923 = vadd.f32 %v1905, %v5922
        %v5924 = vpop.f32.mrb[0].mxu0
        %v5925 = vadd.f32 %v1909, %v5924
        %5926 = vmatprep.mubr.bf16.mxu0 %v1347
        %5927 = vmatmul.mubr.bf16.gmra.mrb[0].mxu0 %v1346
        %v5928 = vpop.f32.mrb[0].mxu0
        %v5929 = vadd.f32 %v1905, %v5928
        %v5930 = vpop.f32.mrb[0].mxu0
        %v5931 = vadd.f32 %v1909, %v5930
        %v5932 = vpop.f32.mrb[0].mxu0
        %v5933 = vadd.f32 %v1905, %v5932
        %v5934 = vpop.f32.mrb[0].mxu0
        %v5935 = vadd.f32 %v1909, %v5934
        %5936 = vmatprep.mubr.bf16.mxu0 %v1355
        %5937 = vmatmul.mubr.bf16.gmra.mrb[0].mxu0 %v1354
        %v5938 = vpop.f32.mrb[0].mxu0
        %v5939 = vadd.f32 %v1905, %v5938
        %v5940 = vpop.f32.mrb[0].mxu0
        %v5941 = vadd.f32 %v1909, %v5940
        %v5942 = vpop.f32.mrb[0].mxu0
        %v5943 = vadd.f32 %v1905, %v5942
        %v5944 = vpop.f32.mrb[0].mxu0
        %v5945 = vadd.f32 %v1909, %v5944
        %5946 = vdwg.mxu0
        %5947 = vmatprep.subr.bf16.mxu0 %v3589
        %5948 = vmatpush1.bf16.msra.mxu0 %v3588
        %5949 = vmatprep.subr.bf16.mxu0 %v3597
        %5950 = vmatpush1.bf16.msra.mxu0 %v3596
        %5951 = vmatprep.subr.bf16.mxu0 %v3605
        %5952 = vmatpush1.bf16.msra.mxu0 %v3604
        %5953 = vmatprep.subr.bf16.mxu0 %v3613
        %5954 = vmatpush1.bf16.msra.mxu0 %v3612
        %5955 = vmatprep.subr.bf16.mxu0 %v3621
        %5956 = vmatpush1.bf16.msra.mxu0 %v3620
        %5957 = vmatprep.subr.bf16.mxu0 %v3629
        %5958 = vmatpush1.bf16.msra.mxu0 %v3628
        %5959 = vmatprep.subr.bf16.mxu0 %v3637
        %5960 = vmatpush1.bf16.msra.mxu0 %v3636
        %5961 = vmatprep.subr.bf16.mxu0 %v3645
        %5962 = vmatpush1.bf16.msra.mxu0 %v3644
        %5963 = vmatprep.subr.bf16.mxu0 %v3653
        %5964 = vmatpush1.bf16.msra.mxu0 %v3652
        %5965 = vmatprep.subr.bf16.mxu0 %v3661
        %5966 = vmatpush1.bf16.msra.mxu0 %v3660
        %5967 = vmatprep.subr.bf16.mxu0 %v3669
        %5968 = vmatpush1.bf16.msra.mxu0 %v3668
        %5969 = vmatprep.subr.bf16.mxu0 %v3677
        %5970 = vmatpush1.bf16.msra.mxu0 %v3676
        %5971 = vmatprep.subr.bf16.mxu0 %v3685
        %5972 = vmatpush1.bf16.msra.mxu0 %v3684
        %5973 = vmatprep.subr.bf16.mxu0 %v3693
        %5974 = vmatpush1.bf16.msra.mxu0 %v3692
        %5975 = vmatprep.subr.bf16.mxu0 %v3701
        %5976 = vmatpush1.bf16.msra.mxu0 %v3700
        %5977 = vmatprep.subr.bf16.mxu0 %v3709
        %5978 = vmatpush1.bf16.msra.mxu0 %v3708
        %5979 = vmatprep.mubr.bf16.mxu0 %v1301
        %5980 = vmatmul.mubr.bf16.gmra.mrb[0].mxu0 %v1300
        %v5981 = vpop.f32.mrb[0].mxu0
        %v5982 = vadd.f32 %v5869, %v5981
        %v5983 = vpop.f32.mrb[0].mxu0
        %v5984 = vadd.f32 %v5871, %v5983
        %v5985 = vpop.f32.mrb[0].mxu0
        %v5986 = vadd.f32 %v5873, %v5985
        %v5987 = vpop.f32.mrb[0].mxu0
        %v5988 = vadd.f32 %v5875, %v5987
        %5989 = vmatprep.mubr.bf16.mxu0 %v1309
        %5990 = vmatmul.mubr.bf16.gmra.mrb[0].mxu0 %v1308
        %v5991 = vpop.f32.mrb[0].mxu0
        %v5992 = vadd.f32 %v5879, %v5991
        %v5993 = vpop.f32.mrb[0].mxu0
        %v5994 = vadd.f32 %v5881, %v5993
        %v5995 = vpop.f32.mrb[0].mxu0
        %v5996 = vadd.f32 %v5883, %v5995
        %v5997 = vpop.f32.mrb[0].mxu0
        %v5998 = vadd.f32 %v5885, %v5997
        %5999 = vmatprep.mubr.bf16.mxu0 %v1317
        %6000 = vmatmul.mubr.bf16.gmra.mrb[0].mxu0 %v1316
        %v6001 = vpop.f32.mrb[0].mxu0
        %v6002 = vadd.f32 %v5889, %v6001
        %v6003 = vpop.f32.mrb[0].mxu0
        %v6004 = vadd.f32 %v5891, %v6003
        %v6005 = vpop.f32.mrb[0].mxu0
        %v6006 = vadd.f32 %v5893, %v6005
        %v6007 = vpop.f32.mrb[0].mxu0
        %v6008 = vadd.f32 %v5895, %v6007
        %6009 = vmatprep.mubr.bf16.mxu0 %v1325
        %6010 = vmatmul.mubr.bf16.gmra.mrb[0].mxu0 %v1324
        %v6011 = vpop.f32.mrb[0].mxu0
        %v6012 = vadd.f32 %v5899, %v6011
        %v6013 = vpop.f32.mrb[0].mxu0
        %v6014 = vadd.f32 %v5901, %v6013
        %v6015 = vpop.f32.mrb[0].mxu0
        %v6016 = vadd.f32 %v5903, %v6015
        %v6017 = vpop.f32.mrb[0].mxu0
        %v6018 = vadd.f32 %v5905, %v6017
        %6019 = vmatprep.mubr.bf16.mxu0 %v1333
        %6020 = vmatmul.mubr.bf16.gmra.mrb[0].mxu0 %v1332
        %v6021 = vpop.f32.mrb[0].mxu0
        %v6022 = vadd.f32 %v5909, %v6021
        %v6023 = vpop.f32.mrb[0].mxu0
        %v6024 = vadd.f32 %v5911, %v6023
        %v6025 = vpop.f32.mrb[0].mxu0
        %v6026 = vadd.f32 %v5913, %v6025
        %v6027 = vpop.f32.mrb[0].mxu0
        %v6028 = vadd.f32 %v5915, %v6027
        %6029 = vmatprep.mubr.bf16.mxu0 %v1341
        %6030 = vmatmul.mubr.bf16.gmra.mrb[0].mxu0 %v1340
        %v6031 = vpop.f32.mrb[0].mxu0
        %v6032 = vadd.f32 %v5919, %v6031
        %v6033 = vpop.f32.mrb[0].mxu0
        %v6034 = vadd.f32 %v5921, %v6033
        %v6035 = vpop.f32.mrb[0].mxu0
        %v6036 = vadd.f32 %v5923, %v6035
        %v6037 = vpop.f32.mrb[0].mxu0
        %v6038 = vadd.f32 %v5925, %v6037
        %6039 = vmatprep.mubr.bf16.mxu0 %v1349
        %6040 = vmatmul.mubr.bf16.gmra.mrb[0].mxu0 %v1348
        %v6041 = vpop.f32.mrb[0].mxu0
        %v6042 = vadd.f32 %v5929, %v6041
        %v6043 = vpop.f32.mrb[0].mxu0
        %v6044 = vadd.f32 %v5931, %v6043
        %v6045 = vpop.f32.mrb[0].mxu0
        %v6046 = vadd.f32 %v5933, %v6045
        %v6047 = vpop.f32.mrb[0].mxu0
        %v6048 = vadd.f32 %v5935, %v6047
        %6049 = vmatprep.mubr.bf16.mxu0 %v1357
        %6050 = vmatmul.mubr.bf16.gmra.mrb[0].mxu0 %v1356
        %v6051 = vpop.f32.mrb[0].mxu0
        %v6052 = vadd.f32 %v5939, %v6051
        %v6053 = vpop.f32.mrb[0].mxu0
        %v6054 = vadd.f32 %v5941, %v6053
        %v6055 = vpop.f32.mrb[0].mxu0
        %v6056 = vadd.f32 %v5943, %v6055
        %v6057 = vpop.f32.mrb[0].mxu0
        %v6058 = vadd.f32 %v5945, %v6057
        %6059 = vdwg.mxu0
        %6060 = vmatprep.subr.bf16.mxu0 %v3717
        %6061 = vmatpush1.bf16.msra.mxu0 %v3716
        %6062 = vmatprep.subr.bf16.mxu0 %v3725
        %6063 = vmatpush1.bf16.msra.mxu0 %v3724
        %6064 = vmatprep.subr.bf16.mxu0 %v3733
        %6065 = vmatpush1.bf16.msra.mxu0 %v3732
        %6066 = vmatprep.subr.bf16.mxu0 %v3741
        %6067 = vmatpush1.bf16.msra.mxu0 %v3740
        %6068 = vmatprep.subr.bf16.mxu0 %v3749
        %6069 = vmatpush1.bf16.msra.mxu0 %v3748
        %6070 = vmatprep.subr.bf16.mxu0 %v3757
        %6071 = vmatpush1.bf16.msra.mxu0 %v3756
        %6072 = vmatprep.subr.bf16.mxu0 %v3765
        %6073 = vmatpush1.bf16.msra.mxu0 %v3764
        %6074 = vmatprep.subr.bf16.mxu0 %v3773
        %6075 = vmatpush1.bf16.msra.mxu0 %v3772
        %6076 = vmatprep.subr.bf16.mxu0 %v3781
        %6077 = vmatpush1.bf16.msra.mxu0 %v3780
        %6078 = vmatprep.subr.bf16.mxu0 %v3789
        %6079 = vmatpush1.bf16.msra.mxu0 %v3788
        %6080 = vmatprep.subr.bf16.mxu0 %v3797
        %6081 = vmatpush1.bf16.msra.mxu0 %v3796
        %6082 = vmatprep.subr.bf16.mxu0 %v3805
        %6083 = vmatpush1.bf16.msra.mxu0 %v3804
        %6084 = vmatprep.subr.bf16.mxu0 %v3813
        %6085 = vmatpush1.bf16.msra.mxu0 %v3812
        %6086 = vmatprep.subr.bf16.mxu0 %v3821
        %6087 = vmatpush1.bf16.msra.mxu0 %v3820
        %6088 = vmatprep.subr.bf16.mxu0 %v3829
        %6089 = vmatpush1.bf16.msra.mxu0 %v3828
        %6090 = vmatprep.subr.bf16.mxu0 %v3837
        %6091 = vmatpush1.bf16.msra.mxu0 %v3836
        %6092 = vmatprep.mubr.bf16.mxu0 %v1303
        %6093 = vmatmul.mubr.bf16.gmra.mrb[0].mxu0 %v1302
        %v6094 = vpop.f32.mrb[0].mxu0
        %v6095 = vadd.f32 %v5982, %v6094
        %v6096 = vpop.f32.mrb[0].mxu0
        %v6097 = vadd.f32 %v5984, %v6096
        %v6098 = vpop.f32.mrb[0].mxu0
        %v6099 = vadd.f32 %v5986, %v6098
        %v6100 = vpop.f32.mrb[0].mxu0
        %v6101 = vadd.f32 %v5988, %v6100
        %6102 = vmatprep.mubr.bf16.mxu0 %v1311
        %6103 = vmatmul.mubr.bf16.gmra.mrb[0].mxu0 %v1310
        %v6104 = vpop.f32.mrb[0].mxu0
        %v6105 = vadd.f32 %v5992, %v6104
        %v6106 = vpop.f32.mrb[0].mxu0
        %v6107 = vadd.f32 %v5994, %v6106
        %v6108 = vpop.f32.mrb[0].mxu0
        %v6109 = vadd.f32 %v5996, %v6108
        %v6110 = vpop.f32.mrb[0].mxu0
        %v6111 = vadd.f32 %v5998, %v6110
        %6112 = vmatprep.mubr.bf16.mxu0 %v1319
        %6113 = vmatmul.mubr.bf16.gmra.mrb[0].mxu0 %v1318
        %v6114 = vpop.f32.mrb[0].mxu0
        %v6115 = vadd.f32 %v6002, %v6114
        %v6116 = vpop.f32.mrb[0].mxu0
        %v6117 = vadd.f32 %v6004, %v6116
        %v6118 = vpop.f32.mrb[0].mxu0
        %v6119 = vadd.f32 %v6006, %v6118
        %v6120 = vpop.f32.mrb[0].mxu0
        %v6121 = vadd.f32 %v6008, %v6120
        %6122 = vmatprep.mubr.bf16.mxu0 %v1327
        %6123 = vmatmul.mubr.bf16.gmra.mrb[0].mxu0 %v1326
        %v6124 = vpop.f32.mrb[0].mxu0
        %v6125 = vadd.f32 %v6012, %v6124
        %v6126 = vpop.f32.mrb[0].mxu0
        %v6127 = vadd.f32 %v6014, %v6126
        %v6128 = vpop.f32.mrb[0].mxu0
        %v6129 = vadd.f32 %v6016, %v6128
        %v6130 = vpop.f32.mrb[0].mxu0
        %v6131 = vadd.f32 %v6018, %v6130
        %6132 = vmatprep.mubr.bf16.mxu0 %v1335
        %6133 = vmatmul.mubr.bf16.gmra.mrb[0].mxu0 %v1334
        %v6134 = vpop.f32.mrb[0].mxu0
        %v6135 = vadd.f32 %v6022, %v6134
        %v6136 = vpop.f32.mrb[0].mxu0
        %v6137 = vadd.f32 %v6024, %v6136
        %v6138 = vpop.f32.mrb[0].mxu0
        %v6139 = vadd.f32 %v6026, %v6138
        %v6140 = vpop.f32.mrb[0].mxu0
        %v6141 = vadd.f32 %v6028, %v6140
        %6142 = vmatprep.mubr.bf16.mxu0 %v1343
        %6143 = vmatmul.mubr.bf16.gmra.mrb[0].mxu0 %v1342
        %v6144 = vpop.f32.mrb[0].mxu0
        %v6145 = vadd.f32 %v6032, %v6144
        %v6146 = vpop.f32.mrb[0].mxu0
        %v6147 = vadd.f32 %v6034, %v6146
        %v6148 = vpop.f32.mrb[0].mxu0
        %v6149 = vadd.f32 %v6036, %v6148
        %v6150 = vpop.f32.mrb[0].mxu0
        %v6151 = vadd.f32 %v6038, %v6150
        %6152 = vmatprep.mubr.bf16.mxu0 %v1351
        %6153 = vmatmul.mubr.bf16.gmra.mrb[0].mxu0 %v1350
        %v6154 = vpop.f32.mrb[0].mxu0
        %v6155 = vadd.f32 %v6042, %v6154
        %v6156 = vpop.f32.mrb[0].mxu0
        %v6157 = vadd.f32 %v6044, %v6156
        %v6158 = vpop.f32.mrb[0].mxu0
        %v6159 = vadd.f32 %v6046, %v6158
        %v6160 = vpop.f32.mrb[0].mxu0
        %v6161 = vadd.f32 %v6048, %v6160
        %6162 = vmatprep.mubr.bf16.mxu0 %v1359
        %6163 = vmatmul.mubr.bf16.gmra.mrb[0].mxu0 %v1358
        %v6164 = vpop.f32.mrb[0].mxu0
        %v6165 = vadd.f32 %v6052, %v6164
        %v6166 = vpop.f32.mrb[0].mxu0
        %v6167 = vadd.f32 %v6054, %v6166
        %v6168 = vpop.f32.mrb[0].mxu0
        %v6169 = vadd.f32 %v6056, %v6168
        %v6170 = vpop.f32.mrb[0].mxu0
        %v6171 = vadd.f32 %v6058, %v6170
        %6172 = vdwg.mxu0
        %6173 = vmatprep.subr.bf16.mxu0 %v3845
        %6174 = vmatpush1.bf16.msra.mxu0 %v3844
        %6175 = vmatprep.subr.bf16.mxu0 %v3853
        %6176 = vmatpush1.bf16.msra.mxu0 %v3852
        %6177 = vmatprep.subr.bf16.mxu0 %v3861
        %6178 = vmatpush1.bf16.msra.mxu0 %v3860
        %6179 = vmatprep.subr.bf16.mxu0 %v3869
        %6180 = vmatpush1.bf16.msra.mxu0 %v3868
        %6181 = vmatprep.subr.bf16.mxu0 %v3877
        %6182 = vmatpush1.bf16.msra.mxu0 %v3876
        %6183 = vmatprep.subr.bf16.mxu0 %v3885
        %6184 = vmatpush1.bf16.msra.mxu0 %v3884
        %6185 = vmatprep.subr.bf16.mxu0 %v3893
        %6186 = vmatpush1.bf16.msra.mxu0 %v3892
        %6187 = vmatprep.subr.bf16.mxu0 %v3901
        %6188 = vmatpush1.bf16.msra.mxu0 %v3900
        %6189 = vmatprep.subr.bf16.mxu0 %v3909
        %6190 = vmatpush1.bf16.msra.mxu0 %v3908
        %6191 = vmatprep.subr.bf16.mxu0 %v3917
        %6192 = vmatpush1.bf16.msra.mxu0 %v3916
        %6193 = vmatprep.subr.bf16.mxu0 %v3925
        %6194 = vmatpush1.bf16.msra.mxu0 %v3924
        %6195 = vmatprep.subr.bf16.mxu0 %v3933
        %6196 = vmatpush1.bf16.msra.mxu0 %v3932
        %6197 = vmatprep.subr.bf16.mxu0 %v3941
        %6198 = vmatpush1.bf16.msra.mxu0 %v3940
        %6199 = vmatprep.subr.bf16.mxu0 %v3949
        %6200 = vmatpush1.bf16.msra.mxu0 %v3948
        %6201 = vmatprep.subr.bf16.mxu0 %v3957
        %6202 = vmatpush1.bf16.msra.mxu0 %v3956
        %6203 = vmatprep.subr.bf16.mxu0 %v3965
        %6204 = vmatpush1.bf16.msra.mxu0 %v3964
        %6205 = vmatprep.mubr.bf16.mxu0 %v1305
        %6206 = vmatmul.mubr.bf16.gmra.mrb[0].mxu0 %v1304
        %v6207 = vpop.f32.mrb[0].mxu0
        %v6208 = vadd.f32 %v6095, %v6207
        %v6209 = vpop.f32.mrb[0].mxu0
        %v6210 = vadd.f32 %v6097, %v6209
        %v6211 = vpop.f32.mrb[0].mxu0
        %v6212 = vadd.f32 %v6099, %v6211
        %v6213 = vpop.f32.mrb[0].mxu0
        %v6214 = vadd.f32 %v6101, %v6213
        %6215 = vmatprep.mubr.bf16.mxu0 %v1313
        %6216 = vmatmul.mubr.bf16.gmra.mrb[0].mxu0 %v1312
        %v6217 = vpop.f32.mrb[0].mxu0
        %v6218 = vadd.f32 %v6105, %v6217
        %v6219 = vpop.f32.mrb[0].mxu0
        %v6220 = vadd.f32 %v6107, %v6219
        %v6221 = vpop.f32.mrb[0].mxu0
        %v6222 = vadd.f32 %v6109, %v6221
        %v6223 = vpop.f32.mrb[0].mxu0
        %v6224 = vadd.f32 %v6111, %v6223
        %6225 = vmatprep.mubr.bf16.mxu0 %v1321
        %6226 = vmatmul.mubr.bf16.gmra.mrb[0].mxu0 %v1320
        %v6227 = vpop.f32.mrb[0].mxu0
        %v6228 = vadd.f32 %v6115, %v6227
        %v6229 = vpop.f32.mrb[0].mxu0
        %v6230 = vadd.f32 %v6117, %v6229
        %v6231 = vpop.f32.mrb[0].mxu0
        %v6232 = vadd.f32 %v6119, %v6231
        %v6233 = vpop.f32.mrb[0].mxu0
        %v6234 = vadd.f32 %v6121, %v6233
        %6235 = vmatprep.mubr.bf16.mxu0 %v1329
        %6236 = vmatmul.mubr.bf16.gmra.mrb[0].mxu0 %v1328
        %v6237 = vpop.f32.mrb[0].mxu0
        %v6238 = vadd.f32 %v6125, %v6237
        %v6239 = vpop.f32.mrb[0].mxu0
        %v6240 = vadd.f32 %v6127, %v6239
        %v6241 = vpop.f32.mrb[0].mxu0
        %v6242 = vadd.f32 %v6129, %v6241
        %v6243 = vpop.f32.mrb[0].mxu0
        %v6244 = vadd.f32 %v6131, %v6243
        %6245 = vmatprep.mubr.bf16.mxu0 %v1337
        %6246 = vmatmul.mubr.bf16.gmra.mrb[0].mxu0 %v1336
        %v6247 = vpop.f32.mrb[0].mxu0
        %v6248 = vadd.f32 %v6135, %v6247
        %v6249 = vpop.f32.mrb[0].mxu0
        %v6250 = vadd.f32 %v6137, %v6249
        %v6251 = vpop.f32.mrb[0].mxu0
        %v6252 = vadd.f32 %v6139, %v6251
        %v6253 = vpop.f32.mrb[0].mxu0
        %v6254 = vadd.f32 %v6141, %v6253
        %6255 = vmatprep.mubr.bf16.mxu0 %v1345
        %6256 = vmatmul.mubr.bf16.gmra.mrb[0].mxu0 %v1344
        %v6257 = vpop.f32.mrb[0].mxu0
        %v6258 = vadd.f32 %v6145, %v6257
        %v6259 = vpop.f32.mrb[0].mxu0
        %v6260 = vadd.f32 %v6147, %v6259
        %v6261 = vpop.f32.mrb[0].mxu0
        %v6262 = vadd.f32 %v6149, %v6261
        %v6263 = vpop.f32.mrb[0].mxu0
        %v6264 = vadd.f32 %v6151, %v6263
        %6265 = vmatprep.mubr.bf16.mxu0 %v1353
        %6266 = vmatmul.mubr.bf16.gmra.mrb[0].mxu0 %v1352
        %v6267 = vpop.f32.mrb[0].mxu0
        %v6268 = vadd.f32 %v6155, %v6267
        %v6269 = vpop.f32.mrb[0].mxu0
        %v6270 = vadd.f32 %v6157, %v6269
        %v6271 = vpop.f32.mrb[0].mxu0
        %v6272 = vadd.f32 %v6159, %v6271
        %v6273 = vpop.f32.mrb[0].mxu0
        %v6274 = vadd.f32 %v6161, %v6273
        %6275 = vmatprep.mubr.bf16.mxu0 %v1361
        %6276 = vmatmul.mubr.bf16.gmra.mrb[0].mxu0 %v1360
        %v6277 = vpop.f32.mrb[0].mxu0
        %v6278 = vadd.f32 %v6165, %v6277
        %v6279 = vpop.f32.mrb[0].mxu0
        %v6280 = vadd.f32 %v6167, %v6279
        %v6281 = vpop.f32.mrb[0].mxu0
        %v6282 = vadd.f32 %v6169, %v6281
        %v6283 = vpop.f32.mrb[0].mxu0
        %v6284 = vadd.f32 %v6171, %v6283
        %6285 = vdwg.mxu0
        %v6286 = vmax.f32 %v4852, 0.0
        %v6287 = vmax.f32 %v4854, 0.0
        %v6288 = vmax.f32 %v5304, 0.0
        %v6289 = vmax.f32 %v5306, 0.0
        %v6290 = vmax.f32 %v5756, 0.0
        %v6291 = vmax.f32 %v5758, 0.0
        %v6292 = vmax.f32 %v6208, 0.0
        %v6293 = vmax.f32 %v6210, 0.0
        %v6294 = vmax.f32 %v4856, 0.0
        %v6295 = vmax.f32 %v4858, 0.0
        %v6296 = vmax.f32 %v5308, 0.0
        %v6297 = vmax.f32 %v5310, 0.0
        %v6298 = vmax.f32 %v5760, 0.0
        %v6299 = vmax.f32 %v5762, 0.0
        %v6300 = vmax.f32 %v6212, 0.0
        %v6301 = vmax.f32 %v6214, 0.0
        %v6302 = vmax.f32 %v4862, 0.0
        %v6303 = vmax.f32 %v4864, 0.0
        %v6304 = vmax.f32 %v5314, 0.0
        %v6305 = vmax.f32 %v5316, 0.0
        %v6306 = vmax.f32 %v5766, 0.0
        %v6307 = vmax.f32 %v5768, 0.0
        %v6308 = vmax.f32 %v6218, 0.0
        %v6309 = vmax.f32 %v6220, 0.0
        %v6310 = vmax.f32 %v4866, 0.0
        %v6311 = vmax.f32 %v4868, 0.0
        %v6312 = vmax.f32 %v5318, 0.0
        %v6313 = vmax.f32 %v5320, 0.0
        %v6314 = vmax.f32 %v5770, 0.0
        %v6315 = vmax.f32 %v5772, 0.0
        %v6316 = vmax.f32 %v6222, 0.0
        %v6317 = vmax.f32 %v6224, 0.0
        %v6318 = vmax.f32 %v4872, 0.0
        %v6319 = vmax.f32 %v4874, 0.0
        %v6320 = vmax.f32 %v5324, 0.0
        %v6321 = vmax.f32 %v5326, 0.0
        %v6322 = vmax.f32 %v5776, 0.0
        %v6323 = vmax.f32 %v5778, 0.0
        %v6324 = vmax.f32 %v6228, 0.0
        %v6325 = vmax.f32 %v6230, 0.0
        %v6326 = vmax.f32 %v4876, 0.0
        %v6327 = vmax.f32 %v4878, 0.0
        %v6328 = vmax.f32 %v5328, 0.0
        %v6329 = vmax.f32 %v5330, 0.0
        %v6330 = vmax.f32 %v5780, 0.0
        %v6331 = vmax.f32 %v5782, 0.0
        %v6332 = vmax.f32 %v6232, 0.0
        %v6333 = vmax.f32 %v6234, 0.0
        %v6334 = vmax.f32 %v4882, 0.0
        %v6335 = vmax.f32 %v4884, 0.0
        %v6336 = vmax.f32 %v5334, 0.0
        %v6337 = vmax.f32 %v5336, 0.0
        %v6338 = vmax.f32 %v5786, 0.0
        %v6339 = vmax.f32 %v5788, 0.0
        %v6340 = vmax.f32 %v6238, 0.0
        %v6341 = vmax.f32 %v6240, 0.0
        %v6342 = vmax.f32 %v4886, 0.0
        %v6343 = vmax.f32 %v4888, 0.0
        %v6344 = vmax.f32 %v5338, 0.0
        %v6345 = vmax.f32 %v5340, 0.0
        %v6346 = vmax.f32 %v5790, 0.0
        %v6347 = vmax.f32 %v5792, 0.0
        %v6348 = vmax.f32 %v6242, 0.0
        %v6349 = vmax.f32 %v6244, 0.0
        %v6350 = vmax.f32 %v4892, 0.0
        %v6351 = vmax.f32 %v4894, 0.0
        %v6352 = vmax.f32 %v5344, 0.0
        %v6353 = vmax.f32 %v5346, 0.0
        %v6354 = vmax.f32 %v5796, 0.0
        %v6355 = vmax.f32 %v5798, 0.0
        %v6356 = vmax.f32 %v6248, 0.0
        %v6357 = vmax.f32 %v6250, 0.0
        %v6358 = vmax.f32 %v4896, 0.0
        %v6359 = vmax.f32 %v4898, 0.0
        %v6360 = vmax.f32 %v5348, 0.0
        %v6361 = vmax.f32 %v5350, 0.0
        %v6362 = vmax.f32 %v5800, 0.0
        %v6363 = vmax.f32 %v5802, 0.0
        %v6364 = vmax.f32 %v6252, 0.0
        %v6365 = vmax.f32 %v6254, 0.0
        %v6366 = vmax.f32 %v4902, 0.0
        %v6367 = vmax.f32 %v4904, 0.0
        %v6368 = vmax.f32 %v5354, 0.0
        %v6369 = vmax.f32 %v5356, 0.0
        %v6370 = vmax.f32 %v5806, 0.0
        %v6371 = vmax.f32 %v5808, 0.0
        %v6372 = vmax.f32 %v6258, 0.0
        %v6373 = vmax.f32 %v6260, 0.0
        %v6374 = vmax.f32 %v4906, 0.0
        %v6375 = vmax.f32 %v4908, 0.0
        %v6376 = vmax.f32 %v5358, 0.0
        %v6377 = vmax.f32 %v5360, 0.0
        %v6378 = vmax.f32 %v5810, 0.0
        %v6379 = vmax.f32 %v5812, 0.0
        %v6380 = vmax.f32 %v6262, 0.0
        %v6381 = vmax.f32 %v6264, 0.0
        %v6382 = vmax.f32 %v4912, 0.0
        %v6383 = vmax.f32 %v4914, 0.0
        %v6384 = vmax.f32 %v5364, 0.0
        %v6385 = vmax.f32 %v5366, 0.0
        %v6386 = vmax.f32 %v5816, 0.0
        %v6387 = vmax.f32 %v5818, 0.0
        %v6388 = vmax.f32 %v6268, 0.0
        %v6389 = vmax.f32 %v6270, 0.0
        %v6390 = vmax.f32 %v4916, 0.0
        %v6391 = vmax.f32 %v4918, 0.0
        %v6392 = vmax.f32 %v5368, 0.0
        %v6393 = vmax.f32 %v5370, 0.0
        %v6394 = vmax.f32 %v5820, 0.0
        %v6395 = vmax.f32 %v5822, 0.0
        %v6396 = vmax.f32 %v6272, 0.0
        %v6397 = vmax.f32 %v6274, 0.0
        %v6398 = vmax.f32 %v4922, 0.0
        %v6399 = vmax.f32 %v4924, 0.0
        %v6400 = vmax.f32 %v5374, 0.0
        %v6401 = vmax.f32 %v5376, 0.0
        %v6402 = vmax.f32 %v5826, 0.0
        %v6403 = vmax.f32 %v5828, 0.0
        %v6404 = vmax.f32 %v6278, 0.0
        %v6405 = vmax.f32 %v6280, 0.0
        %v6406 = vmax.f32 %v4926, 0.0
        %v6407 = vmax.f32 %v4928, 0.0
        %v6408 = vmax.f32 %v5378, 0.0
        %v6409 = vmax.f32 %v5380, 0.0
        %v6410 = vmax.f32 %v5830, 0.0
        %v6411 = vmax.f32 %v5832, 0.0
        %v6412 = vmax.f32 %v6282, 0.0
        %v6413 = vmax.f32 %v6284, 0.0
        %v6414 = vpack.c.bf16 %v6294, %v6286
        %v6415 = vpack.c.bf16 %v6295, %v6287
        %v6416 = vpack.c.bf16 %v6296, %v6288
        %v6417 = vpack.c.bf16 %v6297, %v6289
        %v6418 = vpack.c.bf16 %v6298, %v6290
        %v6419 = vpack.c.bf16 %v6299, %v6291
        %v6420 = vpack.c.bf16 %v6300, %v6292
        %v6421 = vpack.c.bf16 %v6301, %v6293
        %v6422 = vpack.c.bf16 %v6310, %v6302
        %v6423 = vpack.c.bf16 %v6311, %v6303
        %v6424 = vpack.c.bf16 %v6312, %v6304
        %v6425 = vpack.c.bf16 %v6313, %v6305
        %v6426 = vpack.c.bf16 %v6314, %v6306
        %v6427 = vpack.c.bf16 %v6315, %v6307
        %v6428 = vpack.c.bf16 %v6316, %v6308
        %v6429 = vpack.c.bf16 %v6317, %v6309
        %v6430 = vpack.c.bf16 %v6326, %v6318
        %v6431 = vpack.c.bf16 %v6327, %v6319
        %v6432 = vpack.c.bf16 %v6328, %v6320
        %v6433 = vpack.c.bf16 %v6329, %v6321
        %v6434 = vpack.c.bf16 %v6330, %v6322
        %v6435 = vpack.c.bf16 %v6331, %v6323
        %v6436 = vpack.c.bf16 %v6332, %v6324
        %v6437 = vpack.c.bf16 %v6333, %v6325
        %v6438 = vpack.c.bf16 %v6342, %v6334
        %v6439 = vpack.c.bf16 %v6343, %v6335
        %v6440 = vpack.c.bf16 %v6344, %v6336
        %v6441 = vpack.c.bf16 %v6345, %v6337
        %v6442 = vpack.c.bf16 %v6346, %v6338
        %v6443 = vpack.c.bf16 %v6347, %v6339
        %v6444 = vpack.c.bf16 %v6348, %v6340
        %v6445 = vpack.c.bf16 %v6349, %v6341
        %v6446 = vpack.c.bf16 %v6358, %v6350
        %v6447 = vpack.c.bf16 %v6359, %v6351
        %v6448 = vpack.c.bf16 %v6360, %v6352
        %v6449 = vpack.c.bf16 %v6361, %v6353
        %v6450 = vpack.c.bf16 %v6362, %v6354
        %v6451 = vpack.c.bf16 %v6363, %v6355
        %v6452 = vpack.c.bf16 %v6364, %v6356
        %v6453 = vpack.c.bf16 %v6365, %v6357
        %v6454 = vpack.c.bf16 %v6374, %v6366
        %v6455 = vpack.c.bf16 %v6375, %v6367
        %v6456 = vpack.c.bf16 %v6376, %v6368
        %v6457 = vpack.c.bf16 %v6377, %v6369
        %v6458 = vpack.c.bf16 %v6378, %v6370
        %v6459 = vpack.c.bf16 %v6379, %v6371
        %v6460 = vpack.c.bf16 %v6380, %v6372
        %v6461 = vpack.c.bf16 %v6381, %v6373
        %v6462 = vpack.c.bf16 %v6390, %v6382
        %v6463 = vpack.c.bf16 %v6391, %v6383
        %v6464 = vpack.c.bf16 %v6392, %v6384
        %v6465 = vpack.c.bf16 %v6393, %v6385
        %v6466 = vpack.c.bf16 %v6394, %v6386
        %v6467 = vpack.c.bf16 %v6395, %v6387
        %v6468 = vpack.c.bf16 %v6396, %v6388
        %v6469 = vpack.c.bf16 %v6397, %v6389
        %v6470 = vpack.c.bf16 %v6406, %v6398
        %v6471 = vpack.c.bf16 %v6407, %v6399
        %v6472 = vpack.c.bf16 %v6408, %v6400
        %v6473 = vpack.c.bf16 %v6409, %v6401
        %v6474 = vpack.c.bf16 %v6410, %v6402
        %v6475 = vpack.c.bf16 %v6411, %v6403
        %v6476 = vpack.c.bf16 %v6412, %v6404
        %v6477 = vpack.c.bf16 %v6413, %v6405
        %s6478 = smul.u32 %s1294, 64
        %s6479 = smul.addr %s6478, 8
        %s6480 = scalar_lea.vmem [#allocation2], %s6479
        %6481 = vst [vmem:[%s6480] sm:$0xff] %v6414
        %6482 = vst [vmem:[%s6480 + $0x8] sm:$0xff] %v6415
        %6483 = vst [vmem:[%s6480 + $0x10] sm:$0xff] %v6416
        %6484 = vst [vmem:[%s6480 + $0x18] sm:$0xff] %v6417
        %6485 = vst [vmem:[%s6480 + $0x20] sm:$0xff] %v6418
        %6486 = vst [vmem:[%s6480 + $0x28] sm:$0xff] %v6419
        %6487 = vst [vmem:[%s6480 + $0x30] sm:$0xff] %v6420
        %6488 = vst [vmem:[%s6480 + $0x38] sm:$0xff] %v6421
        %6489 = vst [vmem:[%s6480 + $0x40] sm:$0xff] %v6422
        %6490 = vst [vmem:[%s6480 + $0x48] sm:$0xff] %v6423
        %6491 = vst [vmem:[%s6480 + $0x50] sm:$0xff] %v6424
        %6492 = vst [vmem:[%s6480 + $0x58] sm:$0xff] %v6425
        %6493 = vst [vmem:[%s6480 + $0x60] sm:$0xff] %v6426
        %6494 = vst [vmem:[%s6480 + $0x68] sm:$0xff] %v6427
        %6495 = vst [vmem:[%s6480 + $0x70] sm:$0xff] %v6428
        %6496 = vst [vmem:[%s6480 + $0x78] sm:$0xff] %v6429
        %6497 = vst [vmem:[%s6480 + $0x80] sm:$0xff] %v6430
        %6498 = vst [vmem:[%s6480 + $0x88] sm:$0xff] %v6431
        %6499 = vst [vmem:[%s6480 + $0x90] sm:$0xff] %v6432
        %6500 = vst [vmem:[%s6480 + $0x98] sm:$0xff] %v6433
        %6501 = vst [vmem:[%s6480 + $0xa0] sm:$0xff] %v6434
        %6502 = vst [vmem:[%s6480 + $0xa8] sm:$0xff] %v6435
        %6503 = vst [vmem:[%s6480 + $0xb0] sm:$0xff] %v6436
        %6504 = vst [vmem:[%s6480 + $0xb8] sm:$0xff] %v6437
        %6505 = vst [vmem:[%s6480 + $0xc0] sm:$0xff] %v6438
        %6506 = vst [vmem:[%s6480 + $0xc8] sm:$0xff] %v6439
        %6507 = vst [vmem:[%s6480 + $0xd0] sm:$0xff] %v6440
        %6508 = vst [vmem:[%s6480 + $0xd8] sm:$0xff] %v6441
        %6509 = vst [vmem:[%s6480 + $0xe0] sm:$0xff] %v6442
        %6510 = vst [vmem:[%s6480 + $0xe8] sm:$0xff] %v6443
        %6511 = vst [vmem:[%s6480 + $0xf0] sm:$0xff] %v6444
        %6512 = vst [vmem:[%s6480 + $0xf8] sm:$0xff] %v6445
        %6513 = vst [vmem:[%s6480 + $0x100] sm:$0xff] %v6446
        %6514 = vst [vmem:[%s6480 + $0x108] sm:$0xff] %v6447
        %6515 = vst [vmem:[%s6480 + $0x110] sm:$0xff] %v6448
        %6516 = vst [vmem:[%s6480 + $0x118] sm:$0xff] %v6449
        %6517 = vst [vmem:[%s6480 + $0x120] sm:$0xff] %v6450
        %6518 = vst [vmem:[%s6480 + $0x128] sm:$0xff] %v6451
        %6519 = vst [vmem:[%s6480 + $0x130] sm:$0xff] %v6452
        %6520 = vst [vmem:[%s6480 + $0x138] sm:$0xff] %v6453
        %6521 = vst [vmem:[%s6480 + $0x140] sm:$0xff] %v6454
        %6522 = vst [vmem:[%s6480 + $0x148] sm:$0xff] %v6455
        %6523 = vst [vmem:[%s6480 + $0x150] sm:$0xff] %v6456
        %6524 = vst [vmem:[%s6480 + $0x158] sm:$0xff] %v6457
        %6525 = vst [vmem:[%s6480 + $0x160] sm:$0xff] %v6458
        %6526 = vst [vmem:[%s6480 + $0x168] sm:$0xff] %v6459
        %6527 = vst [vmem:[%s6480 + $0x170] sm:$0xff] %v6460
        %6528 = vst [vmem:[%s6480 + $0x178] sm:$0xff] %v6461
        %6529 = vst [vmem:[%s6480 + $0x180] sm:$0xff] %v6462
        %6530 = vst [vmem:[%s6480 + $0x188] sm:$0xff] %v6463
        %6531 = vst [vmem:[%s6480 + $0x190] sm:$0xff] %v6464
        %6532 = vst [vmem:[%s6480 + $0x198] sm:$0xff] %v6465
        %6533 = vst [vmem:[%s6480 + $0x1a0] sm:$0xff] %v6466
        %6534 = vst [vmem:[%s6480 + $0x1a8] sm:$0xff] %v6467
        %6535 = vst [vmem:[%s6480 + $0x1b0] sm:$0xff] %v6468
        %6536 = vst [vmem:[%s6480 + $0x1b8] sm:$0xff] %v6469
        %6537 = vst [vmem:[%s6480 + $0x1c0] sm:$0xff] %v6470
        %6538 = vst [vmem:[%s6480 + $0x1c8] sm:$0xff] %v6471
        %6539 = vst [vmem:[%s6480 + $0x1d0] sm:$0xff] %v6472
        %6540 = vst [vmem:[%s6480 + $0x1d8] sm:$0xff] %v6473
        %6541 = vst [vmem:[%s6480 + $0x1e0] sm:$0xff] %v6474
        %6542 = vst [vmem:[%s6480 + $0x1e8] sm:$0xff] %v6475
        %6543 = vst [vmem:[%s6480 + $0x1f0] sm:$0xff] %v6476
        %6544 = vst [vmem:[%s6480 + $0x1f8] sm:$0xff] %v6477
        %p6545 = scmp.eq.s32.totalorder %s21, 2
        // Predicated region
        $region77: #{mlp_forward.1} parent=47 // pred_check
          %p6546 = pneg %p6545
        $region78: #{mlp_forward.1} parent=47 // pred_check_branch
          %6548 = sbr.rel (%p6546) target = $region80
        $region79: #{mlp_forward.1} parent=47 // pred_region
          %v6549 = vld [vmem:[%s6480] sm:$0xff]
          %v6550 = vld [vmem:[%s6480 + $0x8] sm:$0xff]
          %v6551 = vld [vmem:[%s6480 + $0x10] sm:$0xff]
          %v6552 = vld [vmem:[%s6480 + $0x18] sm:$0xff]
          %v6553 = vld [vmem:[%s6480 + $0x20] sm:$0xff]
          %v6554 = vld [vmem:[%s6480 + $0x28] sm:$0xff]
          %v6555 = vld [vmem:[%s6480 + $0x30] sm:$0xff]
          %v6556 = vld [vmem:[%s6480 + $0x38] sm:$0xff]
          %v6557 = vld [vmem:[%s6480 + $0x40] sm:$0xff]
          %v6558 = vld [vmem:[%s6480 + $0x48] sm:$0xff]
          %v6559 = vld [vmem:[%s6480 + $0x50] sm:$0xff]
          %v6560 = vld [vmem:[%s6480 + $0x58] sm:$0xff]
          %v6561 = vld [vmem:[%s6480 + $0x60] sm:$0xff]
          %v6562 = vld [vmem:[%s6480 + $0x68] sm:$0xff]
          %v6563 = vld [vmem:[%s6480 + $0x70] sm:$0xff]
          %v6564 = vld [vmem:[%s6480 + $0x78] sm:$0xff]
          %v6565 = vld [vmem:[%s6480 + $0x80] sm:$0xff]
          %v6566 = vld [vmem:[%s6480 + $0x88] sm:$0xff]
          %v6567 = vld [vmem:[%s6480 + $0x90] sm:$0xff]
          %v6568 = vld [vmem:[%s6480 + $0x98] sm:$0xff]
          %v6569 = vld [vmem:[%s6480 + $0xa0] sm:$0xff]
          %v6570 = vld [vmem:[%s6480 + $0xa8] sm:$0xff]
          %v6571 = vld [vmem:[%s6480 + $0xb0] sm:$0xff]
          %v6572 = vld [vmem:[%s6480 + $0xb8] sm:$0xff]
          %v6573 = vld [vmem:[%s6480 + $0xc0] sm:$0xff]
          %v6574 = vld [vmem:[%s6480 + $0xc8] sm:$0xff]
          %v6575 = vld [vmem:[%s6480 + $0xd0] sm:$0xff]
          %v6576 = vld [vmem:[%s6480 + $0xd8] sm:$0xff]
          %v6577 = vld [vmem:[%s6480 + $0xe0] sm:$0xff]
          %v6578 = vld [vmem:[%s6480 + $0xe8] sm:$0xff]
          %v6579 = vld [vmem:[%s6480 + $0xf0] sm:$0xff]
          %v6580 = vld [vmem:[%s6480 + $0xf8] sm:$0xff]
          %v6581 = vld [vmem:[%s6480 + $0x100] sm:$0xff]
          %v6582 = vld [vmem:[%s6480 + $0x108] sm:$0xff]
          %v6583 = vld [vmem:[%s6480 + $0x110] sm:$0xff]
          %v6584 = vld [vmem:[%s6480 + $0x118] sm:$0xff]
          %v6585 = vld [vmem:[%s6480 + $0x120] sm:$0xff]
          %v6586 = vld [vmem:[%s6480 + $0x128] sm:$0xff]
          %v6587 = vld [vmem:[%s6480 + $0x130] sm:$0xff]
          %v6588 = vld [vmem:[%s6480 + $0x138] sm:$0xff]
          %v6589 = vld [vmem:[%s6480 + $0x140] sm:$0xff]
          %v6590 = vld [vmem:[%s6480 + $0x148] sm:$0xff]
          %v6591 = vld [vmem:[%s6480 + $0x150] sm:$0xff]
          %v6592 = vld [vmem:[%s6480 + $0x158] sm:$0xff]
          %v6593 = vld [vmem:[%s6480 + $0x160] sm:$0xff]
          %v6594 = vld [vmem:[%s6480 + $0x168] sm:$0xff]
          %v6595 = vld [vmem:[%s6480 + $0x170] sm:$0xff]
          %v6596 = vld [vmem:[%s6480 + $0x178] sm:$0xff]
          %v6597 = vld [vmem:[%s6480 + $0x180] sm:$0xff]
          %v6598 = vld [vmem:[%s6480 + $0x188] sm:$0xff]
          %v6599 = vld [vmem:[%s6480 + $0x190] sm:$0xff]
          %v6600 = vld [vmem:[%s6480 + $0x198] sm:$0xff]
          %v6601 = vld [vmem:[%s6480 + $0x1a0] sm:$0xff]
          %v6602 = vld [vmem:[%s6480 + $0x1a8] sm:$0xff]
          %v6603 = vld [vmem:[%s6480 + $0x1b0] sm:$0xff]
          %v6604 = vld [vmem:[%s6480 + $0x1b8] sm:$0xff]
          %v6605 = vld [vmem:[%s6480 + $0x1c0] sm:$0xff]
          %v6606 = vld [vmem:[%s6480 + $0x1c8] sm:$0xff]
          %v6607 = vld [vmem:[%s6480 + $0x1d0] sm:$0xff]
          %v6608 = vld [vmem:[%s6480 + $0x1d8] sm:$0xff]
          %v6609 = vld [vmem:[%s6480 + $0x1e0] sm:$0xff]
          %v6610 = vld [vmem:[%s6480 + $0x1e8] sm:$0xff]
          %v6611 = vld [vmem:[%s6480 + $0x1f0] sm:$0xff]
          %v6612 = vld [vmem:[%s6480 + $0x1f8] sm:$0xff]
          %v6613 = vld [vmem:[#allocation9] sm:$0xf]
          %v6614 = vld [vmem:[#allocation9 + $0x4] sm:$0xf]
          %v6615 = vld [vmem:[#allocation9 + $0x8] sm:$0xf]
          %v6616 = vld [vmem:[#allocation9 + $0xc] sm:$0xf]
          %v6617 = vld [vmem:[#allocation9 + $0x10] sm:$0xf]
          %v6618 = vld [vmem:[#allocation9 + $0x14] sm:$0xf]
          %v6619 = vld [vmem:[#allocation9 + $0x18] sm:$0xf]
          %v6620 = vld [vmem:[#allocation9 + $0x1c] sm:$0xf]
          %v6621 = vld [vmem:[#allocation9 + $0x20] sm:$0xf]
          %v6622 = vld [vmem:[#allocation9 + $0x24] sm:$0xf]
          %v6623 = vld [vmem:[#allocation9 + $0x28] sm:$0xf]
          %v6624 = vld [vmem:[#allocation9 + $0x2c] sm:$0xf]
          %v6625 = vld [vmem:[#allocation9 + $0x30] sm:$0xf]
          %v6626 = vld [vmem:[#allocation9 + $0x34] sm:$0xf]
          %v6627 = vld [vmem:[#allocation9 + $0x38] sm:$0xf]
          %v6628 = vld [vmem:[#allocation9 + $0x3c] sm:$0xf]
          %v6629 = vld [vmem:[#allocation9 + $0x40] sm:$0xf]
          %v6630 = vld [vmem:[#allocation9 + $0x44] sm:$0xf]
          %v6631 = vld [vmem:[#allocation9 + $0x48] sm:$0xf]
          %v6632 = vld [vmem:[#allocation9 + $0x4c] sm:$0xf]
          %v6633 = vld [vmem:[#allocation9 + $0x50] sm:$0xf]
          %v6634 = vld [vmem:[#allocation9 + $0x54] sm:$0xf]
          %v6635 = vld [vmem:[#allocation9 + $0x58] sm:$0xf]
          %v6636 = vld [vmem:[#allocation9 + $0x5c] sm:$0xf]
          %v6637 = vld [vmem:[#allocation9 + $0x60] sm:$0xf]
          %v6638 = vld [vmem:[#allocation9 + $0x64] sm:$0xf]
          %v6639 = vld [vmem:[#allocation9 + $0x68] sm:$0xf]
          %v6640 = vld [vmem:[#allocation9 + $0x6c] sm:$0xf]
          %v6641 = vld [vmem:[#allocation9 + $0x70] sm:$0xf]
          %v6642 = vld [vmem:[#allocation9 + $0x74] sm:$0xf]
          %v6643 = vld [vmem:[#allocation9 + $0x78] sm:$0xf]
          %v6644 = vld [vmem:[#allocation9 + $0x7c] sm:$0xf]
          %v6645 = vld [vmem:[#allocation9 + $0x80] sm:$0xf]
          %v6646 = vld [vmem:[#allocation9 + $0x84] sm:$0xf]
          %v6647 = vld [vmem:[#allocation9 + $0x88] sm:$0xf]
          %v6648 = vld [vmem:[#allocation9 + $0x8c] sm:$0xf]
          %v6649 = vld [vmem:[#allocation9 + $0x90] sm:$0xf]
          %v6650 = vld [vmem:[#allocation9 + $0x94] sm:$0xf]
          %v6651 = vld [vmem:[#allocation9 + $0x98] sm:$0xf]
          %v6652 = vld [vmem:[#allocation9 + $0x9c] sm:$0xf]
          %v6653 = vld [vmem:[#allocation9 + $0xa0] sm:$0xf]
          %v6654 = vld [vmem:[#allocation9 + $0xa4] sm:$0xf]
          %v6655 = vld [vmem:[#allocation9 + $0xa8] sm:$0xf]
          %v6656 = vld [vmem:[#allocation9 + $0xac] sm:$0xf]
          %v6657 = vld [vmem:[#allocation9 + $0xb0] sm:$0xf]
          %v6658 = vld [vmem:[#allocation9 + $0xb4] sm:$0xf]
          %v6659 = vld [vmem:[#allocation9 + $0xb8] sm:$0xf]
          %v6660 = vld [vmem:[#allocation9 + $0xbc] sm:$0xf]
          %v6661 = vld [vmem:[#allocation9 + $0xc0] sm:$0xf]
          %v6662 = vld [vmem:[#allocation9 + $0xc4] sm:$0xf]
          %v6663 = vld [vmem:[#allocation9 + $0xc8] sm:$0xf]
          %v6664 = vld [vmem:[#allocation9 + $0xcc] sm:$0xf]
          %v6665 = vld [vmem:[#allocation9 + $0xd0] sm:$0xf]
          %v6666 = vld [vmem:[#allocation9 + $0xd4] sm:$0xf]
          %v6667 = vld [vmem:[#allocation9 + $0xd8] sm:$0xf]
          %v6668 = vld [vmem:[#allocation9 + $0xdc] sm:$0xf]
          %v6669 = vld [vmem:[#allocation9 + $0xe0] sm:$0xf]
          %v6670 = vld [vmem:[#allocation9 + $0xe4] sm:$0xf]
          %v6671 = vld [vmem:[#allocation9 + $0xe8] sm:$0xf]
          %v6672 = vld [vmem:[#allocation9 + $0xec] sm:$0xf]
          %v6673 = vld [vmem:[#allocation9 + $0xf0] sm:$0xf]
          %v6674 = vld [vmem:[#allocation9 + $0xf4] sm:$0xf]
          %v6675 = vld [vmem:[#allocation9 + $0xf8] sm:$0xf]
          %v6676 = vld [vmem:[#allocation9 + $0xfc] sm:$0xf]
          %v6677 = vld [vmem:[#allocation9 + $0x100] sm:$0xf]
          %v6678 = vld [vmem:[#allocation9 + $0x104] sm:$0xf]
          %v6679 = vld [vmem:[#allocation9 + $0x108] sm:$0xf]
          %v6680 = vld [vmem:[#allocation9 + $0x10c] sm:$0xf]
          %v6681 = vld [vmem:[#allocation9 + $0x110] sm:$0xf]
          %v6682 = vld [vmem:[#allocation9 + $0x114] sm:$0xf]
          %v6683 = vld [vmem:[#allocation9 + $0x118] sm:$0xf]
          %v6684 = vld [vmem:[#allocation9 + $0x11c] sm:$0xf]
          %v6685 = vld [vmem:[#allocation9 + $0x120] sm:$0xf]
          %v6686 = vld [vmem:[#allocation9 + $0x124] sm:$0xf]
          %v6687 = vld [vmem:[#allocation9 + $0x128] sm:$0xf]
          %v6688 = vld [vmem:[#allocation9 + $0x12c] sm:$0xf]
          %v6689 = vld [vmem:[#allocation9 + $0x130] sm:$0xf]
          %v6690 = vld [vmem:[#allocation9 + $0x134] sm:$0xf]
          %v6691 = vld [vmem:[#allocation9 + $0x138] sm:$0xf]
          %v6692 = vld [vmem:[#allocation9 + $0x13c] sm:$0xf]
          %v6693 = vld [vmem:[#allocation9 + $0x140] sm:$0xf]
          %v6694 = vld [vmem:[#allocation9 + $0x144] sm:$0xf]
          %v6695 = vld [vmem:[#allocation9 + $0x148] sm:$0xf]
          %v6696 = vld [vmem:[#allocation9 + $0x14c] sm:$0xf]
          %v6697 = vld [vmem:[#allocation9 + $0x150] sm:$0xf]
          %v6698 = vld [vmem:[#allocation9 + $0x154] sm:$0xf]
          %v6699 = vld [vmem:[#allocation9 + $0x158] sm:$0xf]
          %v6700 = vld [vmem:[#allocation9 + $0x15c] sm:$0xf]
          %v6701 = vld [vmem:[#allocation9 + $0x160] sm:$0xf]
          %v6702 = vld [vmem:[#allocation9 + $0x164] sm:$0xf]
          %v6703 = vld [vmem:[#allocation9 + $0x168] sm:$0xf]
          %v6704 = vld [vmem:[#allocation9 + $0x16c] sm:$0xf]
          %v6705 = vld [vmem:[#allocation9 + $0x170] sm:$0xf]
          %v6706 = vld [vmem:[#allocation9 + $0x174] sm:$0xf]
          %v6707 = vld [vmem:[#allocation9 + $0x178] sm:$0xf]
          %v6708 = vld [vmem:[#allocation9 + $0x17c] sm:$0xf]
          %v6709 = vld [vmem:[#allocation9 + $0x180] sm:$0xf]
          %v6710 = vld [vmem:[#allocation9 + $0x184] sm:$0xf]
          %v6711 = vld [vmem:[#allocation9 + $0x188] sm:$0xf]
          %v6712 = vld [vmem:[#allocation9 + $0x18c] sm:$0xf]
          %v6713 = vld [vmem:[#allocation9 + $0x190] sm:$0xf]
          %v6714 = vld [vmem:[#allocation9 + $0x194] sm:$0xf]
          %v6715 = vld [vmem:[#allocation9 + $0x198] sm:$0xf]
          %v6716 = vld [vmem:[#allocation9 + $0x19c] sm:$0xf]
          %v6717 = vld [vmem:[#allocation9 + $0x1a0] sm:$0xf]
          %v6718 = vld [vmem:[#allocation9 + $0x1a4] sm:$0xf]
          %v6719 = vld [vmem:[#allocation9 + $0x1a8] sm:$0xf]
          %v6720 = vld [vmem:[#allocation9 + $0x1ac] sm:$0xf]
          %v6721 = vld [vmem:[#allocation9 + $0x1b0] sm:$0xf]
          %v6722 = vld [vmem:[#allocation9 + $0x1b4] sm:$0xf]
          %v6723 = vld [vmem:[#allocation9 + $0x1b8] sm:$0xf]
          %v6724 = vld [vmem:[#allocation9 + $0x1bc] sm:$0xf]
          %v6725 = vld [vmem:[#allocation9 + $0x1c0] sm:$0xf]
          %v6726 = vld [vmem:[#allocation9 + $0x1c4] sm:$0xf]
          %v6727 = vld [vmem:[#allocation9 + $0x1c8] sm:$0xf]
          %v6728 = vld [vmem:[#allocation9 + $0x1cc] sm:$0xf]
          %v6729 = vld [vmem:[#allocation9 + $0x1d0] sm:$0xf]
          %v6730 = vld [vmem:[#allocation9 + $0x1d4] sm:$0xf]
          %v6731 = vld [vmem:[#allocation9 + $0x1d8] sm:$0xf]
          %v6732 = vld [vmem:[#allocation9 + $0x1dc] sm:$0xf]
          %v6733 = vld [vmem:[#allocation9 + $0x1e0] sm:$0xf]
          %v6734 = vld [vmem:[#allocation9 + $0x1e4] sm:$0xf]
          %v6735 = vld [vmem:[#allocation9 + $0x1e8] sm:$0xf]
          %v6736 = vld [vmem:[#allocation9 + $0x1ec] sm:$0xf]
          %v6737 = vld [vmem:[#allocation9 + $0x1f0] sm:$0xf]
          %v6738 = vld [vmem:[#allocation9 + $0x1f4] sm:$0xf]
          %v6739 = vld [vmem:[#allocation9 + $0x1f8] sm:$0xf]
          %v6740 = vld [vmem:[#allocation9 + $0x1fc] sm:$0xf]
          %v6741 = vld [vmem:[#allocation11] sm:$0x1]
          %v6743 = vlaneseq
          %v6744 = vshrl.u32 %v6743, 7
          %v6745 = vsub.s32 0, %v6744
          %v6746 = vrot.slane %v6741, %v6745
          %v6876 = vunpack.c.l.b16 %v6613
          %v6877 = vunpack.c.l.b16 %v6614
          %v6878 = vunpack.c.l.b16 %v6615
          %v6879 = vunpack.c.l.b16 %v6616
          %v6880 = vunpack.c.l.b16 %v6617
          %v6881 = vunpack.c.l.b16 %v6618
          %v6882 = vunpack.c.l.b16 %v6619
          %v6883 = vunpack.c.l.b16 %v6620
          %v6884 = vunpack.c.l.b16 %v6621
          %v6885 = vunpack.c.l.b16 %v6622
          %v6886 = vunpack.c.l.b16 %v6623
          %v6887 = vunpack.c.l.b16 %v6624
          %v6888 = vunpack.c.l.b16 %v6625
          %v6889 = vunpack.c.l.b16 %v6626
          %v6890 = vunpack.c.l.b16 %v6627
          %v6891 = vunpack.c.l.b16 %v6628
          %v6892 = vunpack.c.l.b16 %v6629
          %v6893 = vunpack.c.l.b16 %v6630
          %v6894 = vunpack.c.l.b16 %v6631
          %v6895 = vunpack.c.l.b16 %v6632
          %v6896 = vunpack.c.l.b16 %v6633
          %v6897 = vunpack.c.l.b16 %v6634
          %v6898 = vunpack.c.l.b16 %v6635
          %v6899 = vunpack.c.l.b16 %v6636
          %v6900 = vunpack.c.l.b16 %v6637
          %v6901 = vunpack.c.l.b16 %v6638
          %v6902 = vunpack.c.l.b16 %v6639
          %v6903 = vunpack.c.l.b16 %v6640
          %v6904 = vunpack.c.l.b16 %v6641
          %v6905 = vunpack.c.l.b16 %v6642
          %v6906 = vunpack.c.l.b16 %v6643
          %v6907 = vunpack.c.l.b16 %v6644
          %v6908 = vunpack.c.l.b16 %v6645
          %v6909 = vunpack.c.l.b16 %v6646
          %v6910 = vunpack.c.l.b16 %v6647
          %v6911 = vunpack.c.l.b16 %v6648
          %v6912 = vunpack.c.l.b16 %v6649
          %v6913 = vunpack.c.l.b16 %v6650
          %v6914 = vunpack.c.l.b16 %v6651
          %v6915 = vunpack.c.l.b16 %v6652
          %v6916 = vunpack.c.l.b16 %v6653
          %v6917 = vunpack.c.l.b16 %v6654
          %v6918 = vunpack.c.l.b16 %v6655
          %v6919 = vunpack.c.l.b16 %v6656
          %v6920 = vunpack.c.l.b16 %v6657
          %v6921 = vunpack.c.l.b16 %v6658
          %v6922 = vunpack.c.l.b16 %v6659
          %v6923 = vunpack.c.l.b16 %v6660
          %v6924 = vunpack.c.l.b16 %v6661
          %v6925 = vunpack.c.l.b16 %v6662
          %v6926 = vunpack.c.l.b16 %v6663
          %v6927 = vunpack.c.l.b16 %v6664
          %v6928 = vunpack.c.l.b16 %v6665
          %v6929 = vunpack.c.l.b16 %v6666
          %v6930 = vunpack.c.l.b16 %v6667
          %v6931 = vunpack.c.l.b16 %v6668
          %v6932 = vunpack.c.l.b16 %v6669
          %v6933 = vunpack.c.l.b16 %v6670
          %v6934 = vunpack.c.l.b16 %v6671
          %v6935 = vunpack.c.l.b16 %v6672
          %v6936 = vunpack.c.l.b16 %v6673
          %v6937 = vunpack.c.l.b16 %v6674
          %v6938 = vunpack.c.l.b16 %v6675
          %v6939 = vunpack.c.l.b16 %v6676
          %v6940 = vunpack.c.l.b16 %v6677
          %v6941 = vunpack.c.l.b16 %v6678
          %v6942 = vunpack.c.l.b16 %v6679
          %v6943 = vunpack.c.l.b16 %v6680
          %v6944 = vunpack.c.l.b16 %v6681
          %v6945 = vunpack.c.l.b16 %v6682
          %v6946 = vunpack.c.l.b16 %v6683
          %v6947 = vunpack.c.l.b16 %v6684
          %v6948 = vunpack.c.l.b16 %v6685
          %v6949 = vunpack.c.l.b16 %v6686
          %v6950 = vunpack.c.l.b16 %v6687
          %v6951 = vunpack.c.l.b16 %v6688
          %v6952 = vunpack.c.l.b16 %v6689
          %v6953 = vunpack.c.l.b16 %v6690
          %v6954 = vunpack.c.l.b16 %v6691
          %v6955 = vunpack.c.l.b16 %v6692
          %v6956 = vunpack.c.l.b16 %v6693
          %v6957 = vunpack.c.l.b16 %v6694
          %v6958 = vunpack.c.l.b16 %v6695
          %v6959 = vunpack.c.l.b16 %v6696
          %v6960 = vunpack.c.l.b16 %v6697
          %v6961 = vunpack.c.l.b16 %v6698
          %v6962 = vunpack.c.l.b16 %v6699
          %v6963 = vunpack.c.l.b16 %v6700
          %v6964 = vunpack.c.l.b16 %v6701
          %v6965 = vunpack.c.l.b16 %v6702
          %v6966 = vunpack.c.l.b16 %v6703
          %v6967 = vunpack.c.l.b16 %v6704
          %v6968 = vunpack.c.l.b16 %v6705
          %v6969 = vunpack.c.l.b16 %v6706
          %v6970 = vunpack.c.l.b16 %v6707
          %v6971 = vunpack.c.l.b16 %v6708
          %v6972 = vunpack.c.l.b16 %v6709
          %v6973 = vunpack.c.l.b16 %v6710
          %v6974 = vunpack.c.l.b16 %v6711
          %v6975 = vunpack.c.l.b16 %v6712
          %v6976 = vunpack.c.l.b16 %v6713
          %v6977 = vunpack.c.l.b16 %v6714
          %v6978 = vunpack.c.l.b16 %v6715
          %v6979 = vunpack.c.l.b16 %v6716
          %v6980 = vunpack.c.l.b16 %v6717
          %v6981 = vunpack.c.l.b16 %v6718
          %v6982 = vunpack.c.l.b16 %v6719
          %v6983 = vunpack.c.l.b16 %v6720
          %v6984 = vunpack.c.l.b16 %v6721
          %v6985 = vunpack.c.l.b16 %v6722
          %v6986 = vunpack.c.l.b16 %v6723
          %v6987 = vunpack.c.l.b16 %v6724
          %v6988 = vunpack.c.l.b16 %v6725
          %v6989 = vunpack.c.l.b16 %v6726
          %v6990 = vunpack.c.l.b16 %v6727
          %v6991 = vunpack.c.l.b16 %v6728
          %v6992 = vunpack.c.l.b16 %v6729
          %v6993 = vunpack.c.l.b16 %v6730
          %v6994 = vunpack.c.l.b16 %v6731
          %v6995 = vunpack.c.l.b16 %v6732
          %v6996 = vunpack.c.l.b16 %v6733
          %v6997 = vunpack.c.l.b16 %v6734
          %v6998 = vunpack.c.l.b16 %v6735
          %v6999 = vunpack.c.l.b16 %v6736
          %v7000 = vunpack.c.l.b16 %v6737
          %v7001 = vunpack.c.l.b16 %v6738
          %v7002 = vunpack.c.l.b16 %v6739
          %v7003 = vunpack.c.l.b16 %v6740
          %v7004 = vpack.c.b16 %v6877, %v6876
          %v7005 = vpack.c.b16 %v6879, %v6878
          %v7006 = vpack.c.b16 %v6881, %v6880
          %v7007 = vpack.c.b16 %v6883, %v6882
          %v7008 = vpack.c.b16 %v6885, %v6884
          %v7009 = vpack.c.b16 %v6887, %v6886
          %v7010 = vpack.c.b16 %v6889, %v6888
          %v7011 = vpack.c.b16 %v6891, %v6890
          %v7012 = vpack.c.b16 %v6893, %v6892
          %v7013 = vpack.c.b16 %v6895, %v6894
          %v7014 = vpack.c.b16 %v6897, %v6896
          %v7015 = vpack.c.b16 %v6899, %v6898
          %v7016 = vpack.c.b16 %v6901, %v6900
          %v7017 = vpack.c.b16 %v6903, %v6902
          %v7018 = vpack.c.b16 %v6905, %v6904
          %v7019 = vpack.c.b16 %v6907, %v6906
          %v7020 = vpack.c.b16 %v6909, %v6908
          %v7021 = vpack.c.b16 %v6911, %v6910
          %v7022 = vpack.c.b16 %v6913, %v6912
          %v7023 = vpack.c.b16 %v6915, %v6914
          %v7024 = vpack.c.b16 %v6917, %v6916
          %v7025 = vpack.c.b16 %v6919, %v6918
          %v7026 = vpack.c.b16 %v6921, %v6920
          %v7027 = vpack.c.b16 %v6923, %v6922
          %v7028 = vpack.c.b16 %v6925, %v6924
          %v7029 = vpack.c.b16 %v6927, %v6926
          %v7030 = vpack.c.b16 %v6929, %v6928
          %v7031 = vpack.c.b16 %v6931, %v6930
          %v7032 = vpack.c.b16 %v6933, %v6932
          %v7033 = vpack.c.b16 %v6935, %v6934
          %v7034 = vpack.c.b16 %v6937, %v6936
          %v7035 = vpack.c.b16 %v6939, %v6938
          %v7036 = vpack.c.b16 %v6941, %v6940
          %v7037 = vpack.c.b16 %v6943, %v6942
          %v7038 = vpack.c.b16 %v6945, %v6944
          %v7039 = vpack.c.b16 %v6947, %v6946
          %v7040 = vpack.c.b16 %v6949, %v6948
          %v7041 = vpack.c.b16 %v6951, %v6950
          %v7042 = vpack.c.b16 %v6953, %v6952
          %v7043 = vpack.c.b16 %v6955, %v6954
          %v7044 = vpack.c.b16 %v6957, %v6956
          %v7045 = vpack.c.b16 %v6959, %v6958
          %v7046 = vpack.c.b16 %v6961, %v6960
          %v7047 = vpack.c.b16 %v6963, %v6962
          %v7048 = vpack.c.b16 %v6965, %v6964
          %v7049 = vpack.c.b16 %v6967, %v6966
          %v7050 = vpack.c.b16 %v6969, %v6968
          %v7051 = vpack.c.b16 %v6971, %v6970
          %v7052 = vpack.c.b16 %v6973, %v6972
          %v7053 = vpack.c.b16 %v6975, %v6974
          %v7054 = vpack.c.b16 %v6977, %v6976
          %v7055 = vpack.c.b16 %v6979, %v6978
          %v7056 = vpack.c.b16 %v6981, %v6980
          %v7057 = vpack.c.b16 %v6983, %v6982
          %v7058 = vpack.c.b16 %v6985, %v6984
          %v7059 = vpack.c.b16 %v6987, %v6986
          %v7060 = vpack.c.b16 %v6989, %v6988
          %v7061 = vpack.c.b16 %v6991, %v6990
          %v7062 = vpack.c.b16 %v6993, %v6992
          %v7063 = vpack.c.b16 %v6995, %v6994
          %v7064 = vpack.c.b16 %v6997, %v6996
          %v7065 = vpack.c.b16 %v6999, %v6998
          %v7066 = vpack.c.b16 %v7001, %v7000
          %v7067 = vpack.c.b16 %v7003, %v7002
          %7132 = vmatprep.subr.bf16.mxu0 0
          %7133 = vmatpush1.bf16.msra.mxu0 %v7004
          %7134 = vmatprep.subr.bf16.mxu0 0
          %7135 = vmatpush1.bf16.msra.mxu0 %v7005
          %7136 = vmatprep.subr.bf16.mxu0 0
          %7137 = vmatpush1.bf16.msra.mxu0 %v7006
          %7138 = vmatprep.subr.bf16.mxu0 0
          %7139 = vmatpush1.bf16.msra.mxu0 %v7007
          %7140 = vmatprep.subr.bf16.mxu0 0
          %7141 = vmatpush1.bf16.msra.mxu0 %v7008
          %7142 = vmatprep.subr.bf16.mxu0 0
          %7143 = vmatpush1.bf16.msra.mxu0 %v7009
          %7144 = vmatprep.subr.bf16.mxu0 0
          %7145 = vmatpush1.bf16.msra.mxu0 %v7010
          %7146 = vmatprep.subr.bf16.mxu0 0
          %7147 = vmatpush1.bf16.msra.mxu0 %v7011
          %7148 = vmatprep.subr.bf16.mxu0 0
          %7149 = vmatpush1.bf16.msra.mxu0 %v7012
          %7150 = vmatprep.subr.bf16.mxu0 0
          %7151 = vmatpush1.bf16.msra.mxu0 %v7013
          %7152 = vmatprep.subr.bf16.mxu0 0
          %7153 = vmatpush1.bf16.msra.mxu0 %v7014
          %7154 = vmatprep.subr.bf16.mxu0 0
          %7155 = vmatpush1.bf16.msra.mxu0 %v7015
          %7156 = vmatprep.subr.bf16.mxu0 0
          %7157 = vmatpush1.bf16.msra.mxu0 %v7016
          %7158 = vmatprep.subr.bf16.mxu0 0
          %7159 = vmatpush1.bf16.msra.mxu0 %v7017
          %7160 = vmatprep.subr.bf16.mxu0 0
          %7161 = vmatpush1.bf16.msra.mxu0 %v7018
          %7162 = vmatprep.subr.bf16.mxu0 0
          %7163 = vmatpush1.bf16.msra.mxu0 %v7019
          %7164 = vmatprep.mubr.bf16.mxu0 %v6550
          %7165 = vmatmul.mubr.bf16.gmra.mrb[0].mxu0 %v6549
          %v7166 = vpop.f32.mrb[0].mxu0
          %v7167 = vadd.f32 %v6746, %v7166
          %v7168 = vpop.f32.mrb[0].mxu0
          %v7169 = vpop.f32.mrb[0].mxu0
          %v7170 = vadd.f32 %v6746, %v7169
          %v7171 = vpop.f32.mrb[0].mxu0
          %7172 = vmatprep.mubr.bf16.mxu0 %v6558
          %7173 = vmatmul.mubr.bf16.gmra.mrb[0].mxu0 %v6557
          %v7174 = vpop.f32.mrb[0].mxu0
          %v7175 = vadd.f32 %v6746, %v7174
          %v7176 = vpop.f32.mrb[0].mxu0
          %v7177 = vpop.f32.mrb[0].mxu0
          %v7178 = vadd.f32 %v6746, %v7177
          %v7179 = vpop.f32.mrb[0].mxu0
          %7180 = vmatprep.mubr.bf16.mxu0 %v6566
          %7181 = vmatmul.mubr.bf16.gmra.mrb[0].mxu0 %v6565
          %v7182 = vpop.f32.mrb[0].mxu0
          %v7183 = vadd.f32 %v6746, %v7182
          %v7184 = vpop.f32.mrb[0].mxu0
          %v7185 = vpop.f32.mrb[0].mxu0
          %v7186 = vadd.f32 %v6746, %v7185
          %v7187 = vpop.f32.mrb[0].mxu0
          %7188 = vmatprep.mubr.bf16.mxu0 %v6574
          %7189 = vmatmul.mubr.bf16.gmra.mrb[0].mxu0 %v6573
          %v7190 = vpop.f32.mrb[0].mxu0
          %v7191 = vadd.f32 %v6746, %v7190
          %v7192 = vpop.f32.mrb[0].mxu0
          %v7193 = vpop.f32.mrb[0].mxu0
          %v7194 = vadd.f32 %v6746, %v7193
          %v7195 = vpop.f32.mrb[0].mxu0
          %7196 = vmatprep.mubr.bf16.mxu0 %v6582
          %7197 = vmatmul.mubr.bf16.gmra.mrb[0].mxu0 %v6581
          %v7198 = vpop.f32.mrb[0].mxu0
          %v7199 = vadd.f32 %v6746, %v7198
          %v7200 = vpop.f32.mrb[0].mxu0
          %v7201 = vpop.f32.mrb[0].mxu0
          %v7202 = vadd.f32 %v6746, %v7201
          %v7203 = vpop.f32.mrb[0].mxu0
          %7204 = vmatprep.mubr.bf16.mxu0 %v6590
          %7205 = vmatmul.mubr.bf16.gmra.mrb[0].mxu0 %v6589
          %v7206 = vpop.f32.mrb[0].mxu0
          %v7207 = vadd.f32 %v6746, %v7206
          %v7208 = vpop.f32.mrb[0].mxu0
          %v7209 = vpop.f32.mrb[0].mxu0
          %v7210 = vadd.f32 %v6746, %v7209
          %v7211 = vpop.f32.mrb[0].mxu0
          %7212 = vmatprep.mubr.bf16.mxu0 %v6598
          %7213 = vmatmul.mubr.bf16.gmra.mrb[0].mxu0 %v6597
          %v7214 = vpop.f32.mrb[0].mxu0
          %v7215 = vadd.f32 %v6746, %v7214
          %v7216 = vpop.f32.mrb[0].mxu0
          %v7217 = vpop.f32.mrb[0].mxu0
          %v7218 = vadd.f32 %v6746, %v7217
          %v7219 = vpop.f32.mrb[0].mxu0
          %7220 = vmatprep.mubr.bf16.mxu0 %v6606
          %7221 = vmatmul.mubr.bf16.gmra.mrb[0].mxu0 %v6605
          %v7222 = vpop.f32.mrb[0].mxu0
          %v7223 = vadd.f32 %v6746, %v7222
          %v7224 = vpop.f32.mrb[0].mxu0
          %v7225 = vpop.f32.mrb[0].mxu0
          %v7226 = vadd.f32 %v6746, %v7225
          %v7227 = vpop.f32.mrb[0].mxu0
          %7228 = vdwg.mxu0
          %7229 = vmatprep.subr.bf16.mxu0 0
          %7230 = vmatpush1.bf16.msra.mxu0 %v7020
          %7231 = vmatprep.subr.bf16.mxu0 0
          %7232 = vmatpush1.bf16.msra.mxu0 %v7021
          %7233 = vmatprep.subr.bf16.mxu0 0
          %7234 = vmatpush1.bf16.msra.mxu0 %v7022
          %7235 = vmatprep.subr.bf16.mxu0 0
          %7236 = vmatpush1.bf16.msra.mxu0 %v7023
          %7237 = vmatprep.subr.bf16.mxu0 0
          %7238 = vmatpush1.bf16.msra.mxu0 %v7024
          %7239 = vmatprep.subr.bf16.mxu0 0
          %7240 = vmatpush1.bf16.msra.mxu0 %v7025
          %7241 = vmatprep.subr.bf16.mxu0 0
          %7242 = vmatpush1.bf16.msra.mxu0 %v7026
          %7243 = vmatprep.subr.bf16.mxu0 0
          %7244 = vmatpush1.bf16.msra.mxu0 %v7027
          %7245 = vmatprep.subr.bf16.mxu0 0
          %7246 = vmatpush1.bf16.msra.mxu0 %v7028
          %7247 = vmatprep.subr.bf16.mxu0 0
          %7248 = vmatpush1.bf16.msra.mxu0 %v7029
          %7249 = vmatprep.subr.bf16.mxu0 0
          %7250 = vmatpush1.bf16.msra.mxu0 %v7030
          %7251 = vmatprep.subr.bf16.mxu0 0
          %7252 = vmatpush1.bf16.msra.mxu0 %v7031
          %7253 = vmatprep.subr.bf16.mxu0 0
          %7254 = vmatpush1.bf16.msra.mxu0 %v7032
          %7255 = vmatprep.subr.bf16.mxu0 0
          %7256 = vmatpush1.bf16.msra.mxu0 %v7033
          %7257 = vmatprep.subr.bf16.mxu0 0
          %7258 = vmatpush1.bf16.msra.mxu0 %v7034
          %7259 = vmatprep.subr.bf16.mxu0 0
          %7260 = vmatpush1.bf16.msra.mxu0 %v7035
          %7261 = vmatprep.mubr.bf16.mxu0 %v6552
          %7262 = vmatmul.mubr.bf16.gmra.mrb[0].mxu0 %v6551
          %v7263 = vpop.f32.mrb[0].mxu0
          %v7264 = vadd.f32 %v7167, %v7263
          %v7265 = vpop.f32.mrb[0].mxu0
          %v7266 = vpop.f32.mrb[0].mxu0
          %v7267 = vadd.f32 %v7170, %v7266
          %v7268 = vpop.f32.mrb[0].mxu0
          %7269 = vmatprep.mubr.bf16.mxu0 %v6560
          %7270 = vmatmul.mubr.bf16.gmra.mrb[0].mxu0 %v6559
          %v7271 = vpop.f32.mrb[0].mxu0
          %v7272 = vadd.f32 %v7175, %v7271
          %v7273 = vpop.f32.mrb[0].mxu0
          %v7274 = vpop.f32.mrb[0].mxu0
          %v7275 = vadd.f32 %v7178, %v7274
          %v7276 = vpop.f32.mrb[0].mxu0
          %7277 = vmatprep.mubr.bf16.mxu0 %v6568
          %7278 = vmatmul.mubr.bf16.gmra.mrb[0].mxu0 %v6567
          %v7279 = vpop.f32.mrb[0].mxu0
          %v7280 = vadd.f32 %v7183, %v7279
          %v7281 = vpop.f32.mrb[0].mxu0
          %v7282 = vpop.f32.mrb[0].mxu0
          %v7283 = vadd.f32 %v7186, %v7282
          %v7284 = vpop.f32.mrb[0].mxu0
          %7285 = vmatprep.mubr.bf16.mxu0 %v6576
          %7286 = vmatmul.mubr.bf16.gmra.mrb[0].mxu0 %v6575
          %v7287 = vpop.f32.mrb[0].mxu0
          %v7288 = vadd.f32 %v7191, %v7287
          %v7289 = vpop.f32.mrb[0].mxu0
          %v7290 = vpop.f32.mrb[0].mxu0
          %v7291 = vadd.f32 %v7194, %v7290
          %v7292 = vpop.f32.mrb[0].mxu0
          %7293 = vmatprep.mubr.bf16.mxu0 %v6584
          %7294 = vmatmul.mubr.bf16.gmra.mrb[0].mxu0 %v6583
          %v7295 = vpop.f32.mrb[0].mxu0
          %v7296 = vadd.f32 %v7199, %v7295
          %v7297 = vpop.f32.mrb[0].mxu0
          %v7298 = vpop.f32.mrb[0].mxu0
          %v7299 = vadd.f32 %v7202, %v7298
          %v7300 = vpop.f32.mrb[0].mxu0
          %7301 = vmatprep.mubr.bf16.mxu0 %v6592
          %7302 = vmatmul.mubr.bf16.gmra.mrb[0].mxu0 %v6591
          %v7303 = vpop.f32.mrb[0].mxu0
          %v7304 = vadd.f32 %v7207, %v7303
          %v7305 = vpop.f32.mrb[0].mxu0
          %v7306 = vpop.f32.mrb[0].mxu0
          %v7307 = vadd.f32 %v7210, %v7306
          %v7308 = vpop.f32.mrb[0].mxu0
          %7309 = vmatprep.mubr.bf16.mxu0 %v6600
          %7310 = vmatmul.mubr.bf16.gmra.mrb[0].mxu0 %v6599
          %v7311 = vpop.f32.mrb[0].mxu0
          %v7312 = vadd.f32 %v7215, %v7311
          %v7313 = vpop.f32.mrb[0].mxu0
          %v7314 = vpop.f32.mrb[0].mxu0
          %v7315 = vadd.f32 %v7218, %v7314
          %v7316 = vpop.f32.mrb[0].mxu0
          %7317 = vmatprep.mubr.bf16.mxu0 %v6608
          %7318 = vmatmul.mubr.bf16.gmra.mrb[0].mxu0 %v6607
          %v7319 = vpop.f32.mrb[0].mxu0
          %v7320 = vadd.f32 %v7223, %v7319
          %v7321 = vpop.f32.mrb[0].mxu0
          %v7322 = vpop.f32.mrb[0].mxu0
          %v7323 = vadd.f32 %v7226, %v7322
          %v7324 = vpop.f32.mrb[0].mxu0
          %7325 = vdwg.mxu0
          %7326 = vmatprep.subr.bf16.mxu0 0
          %7327 = vmatpush1.bf16.msra.mxu0 %v7036
          %7328 = vmatprep.subr.bf16.mxu0 0
          %7329 = vmatpush1.bf16.msra.mxu0 %v7037
          %7330 = vmatprep.subr.bf16.mxu0 0
          %7331 = vmatpush1.bf16.msra.mxu0 %v7038
          %7332 = vmatprep.subr.bf16.mxu0 0
          %7333 = vmatpush1.bf16.msra.mxu0 %v7039
          %7334 = vmatprep.subr.bf16.mxu0 0
          %7335 = vmatpush1.bf16.msra.mxu0 %v7040
          %7336 = vmatprep.subr.bf16.mxu0 0
          %7337 = vmatpush1.bf16.msra.mxu0 %v7041
          %7338 = vmatprep.subr.bf16.mxu0 0
          %7339 = vmatpush1.bf16.msra.mxu0 %v7042
          %7340 = vmatprep.subr.bf16.mxu0 0
          %7341 = vmatpush1.bf16.msra.mxu0 %v7043
          %7342 = vmatprep.subr.bf16.mxu0 0
          %7343 = vmatpush1.bf16.msra.mxu0 %v7044
          %7344 = vmatprep.subr.bf16.mxu0 0
          %7345 = vmatpush1.bf16.msra.mxu0 %v7045
          %7346 = vmatprep.subr.bf16.mxu0 0
          %7347 = vmatpush1.bf16.msra.mxu0 %v7046
          %7348 = vmatprep.subr.bf16.mxu0 0
          %7349 = vmatpush1.bf16.msra.mxu0 %v7047
          %7350 = vmatprep.subr.bf16.mxu0 0
          %7351 = vmatpush1.bf16.msra.mxu0 %v7048
          %7352 = vmatprep.subr.bf16.mxu0 0
          %7353 = vmatpush1.bf16.msra.mxu0 %v7049
          %7354 = vmatprep.subr.bf16.mxu0 0
          %7355 = vmatpush1.bf16.msra.mxu0 %v7050
          %7356 = vmatprep.subr.bf16.mxu0 0
          %7357 = vmatpush1.bf16.msra.mxu0 %v7051
          %7358 = vmatprep.mubr.bf16.mxu0 %v6554
          %7359 = vmatmul.mubr.bf16.gmra.mrb[0].mxu0 %v6553
          %v7360 = vpop.f32.mrb[0].mxu0
          %v7361 = vadd.f32 %v7264, %v7360
          %v7362 = vpop.f32.mrb[0].mxu0
          %v7363 = vpop.f32.mrb[0].mxu0
          %v7364 = vadd.f32 %v7267, %v7363
          %v7365 = vpop.f32.mrb[0].mxu0
          %7366 = vmatprep.mubr.bf16.mxu0 %v6562
          %7367 = vmatmul.mubr.bf16.gmra.mrb[0].mxu0 %v6561
          %v7368 = vpop.f32.mrb[0].mxu0
          %v7369 = vadd.f32 %v7272, %v7368
          %v7370 = vpop.f32.mrb[0].mxu0
          %v7371 = vpop.f32.mrb[0].mxu0
          %v7372 = vadd.f32 %v7275, %v7371
          %v7373 = vpop.f32.mrb[0].mxu0
          %7374 = vmatprep.mubr.bf16.mxu0 %v6570
          %7375 = vmatmul.mubr.bf16.gmra.mrb[0].mxu0 %v6569
          %v7376 = vpop.f32.mrb[0].mxu0
          %v7377 = vadd.f32 %v7280, %v7376
          %v7378 = vpop.f32.mrb[0].mxu0
          %v7379 = vpop.f32.mrb[0].mxu0
          %v7380 = vadd.f32 %v7283, %v7379
          %v7381 = vpop.f32.mrb[0].mxu0
          %7382 = vmatprep.mubr.bf16.mxu0 %v6578
          %7383 = vmatmul.mubr.bf16.gmra.mrb[0].mxu0 %v6577
          %v7384 = vpop.f32.mrb[0].mxu0
          %v7385 = vadd.f32 %v7288, %v7384
          %v7386 = vpop.f32.mrb[0].mxu0
          %v7387 = vpop.f32.mrb[0].mxu0
          %v7388 = vadd.f32 %v7291, %v7387
          %v7389 = vpop.f32.mrb[0].mxu0
          %7390 = vmatprep.mubr.bf16.mxu0 %v6586
          %7391 = vmatmul.mubr.bf16.gmra.mrb[0].mxu0 %v6585
          %v7392 = vpop.f32.mrb[0].mxu0
          %v7393 = vadd.f32 %v7296, %v7392
          %v7394 = vpop.f32.mrb[0].mxu0
          %v7395 = vpop.f32.mrb[0].mxu0
          %v7396 = vadd.f32 %v7299, %v7395
          %v7397 = vpop.f32.mrb[0].mxu0
          %7398 = vmatprep.mubr.bf16.mxu0 %v6594
          %7399 = vmatmul.mubr.bf16.gmra.mrb[0].mxu0 %v6593
          %v7400 = vpop.f32.mrb[0].mxu0
          %v7401 = vadd.f32 %v7304, %v7400
          %v7402 = vpop.f32.mrb[0].mxu0
          %v7403 = vpop.f32.mrb[0].mxu0
          %v7404 = vadd.f32 %v7307, %v7403
          %v7405 = vpop.f32.mrb[0].mxu0
          %7406 = vmatprep.mubr.bf16.mxu0 %v6602
          %7407 = vmatmul.mubr.bf16.gmra.mrb[0].mxu0 %v6601
          %v7408 = vpop.f32.mrb[0].mxu0
          %v7409 = vadd.f32 %v7312, %v7408
          %v7410 = vpop.f32.mrb[0].mxu0
          %v7411 = vpop.f32.mrb[0].mxu0
          %v7412 = vadd.f32 %v7315, %v7411
          %v7413 = vpop.f32.mrb[0].mxu0
          %7414 = vmatprep.mubr.bf16.mxu0 %v6610
          %7415 = vmatmul.mubr.bf16.gmra.mrb[0].mxu0 %v6609
          %v7416 = vpop.f32.mrb[0].mxu0
          %v7417 = vadd.f32 %v7320, %v7416
          %v7418 = vpop.f32.mrb[0].mxu0
          %v7419 = vpop.f32.mrb[0].mxu0
          %v7420 = vadd.f32 %v7323, %v7419
          %v7421 = vpop.f32.mrb[0].mxu0
          %7422 = vdwg.mxu0
          %7423 = vmatprep.subr.bf16.mxu0 0
          %7424 = vmatpush1.bf16.msra.mxu0 %v7052
          %7425 = vmatprep.subr.bf16.mxu0 0
          %7426 = vmatpush1.bf16.msra.mxu0 %v7053
          %7427 = vmatprep.subr.bf16.mxu0 0
          %7428 = vmatpush1.bf16.msra.mxu0 %v7054
          %7429 = vmatprep.subr.bf16.mxu0 0
          %7430 = vmatpush1.bf16.msra.mxu0 %v7055
          %7431 = vmatprep.subr.bf16.mxu0 0
          %7432 = vmatpush1.bf16.msra.mxu0 %v7056
          %7433 = vmatprep.subr.bf16.mxu0 0
          %7434 = vmatpush1.bf16.msra.mxu0 %v7057
          %7435 = vmatprep.subr.bf16.mxu0 0
          %7436 = vmatpush1.bf16.msra.mxu0 %v7058
          %7437 = vmatprep.subr.bf16.mxu0 0
          %7438 = vmatpush1.bf16.msra.mxu0 %v7059
          %7439 = vmatprep.subr.bf16.mxu0 0
          %7440 = vmatpush1.bf16.msra.mxu0 %v7060
          %7441 = vmatprep.subr.bf16.mxu0 0
          %7442 = vmatpush1.bf16.msra.mxu0 %v7061
          %7443 = vmatprep.subr.bf16.mxu0 0
          %7444 = vmatpush1.bf16.msra.mxu0 %v7062
          %7445 = vmatprep.subr.bf16.mxu0 0
          %7446 = vmatpush1.bf16.msra.mxu0 %v7063
          %7447 = vmatprep.subr.bf16.mxu0 0
          %7448 = vmatpush1.bf16.msra.mxu0 %v7064
          %7449 = vmatprep.subr.bf16.mxu0 0
          %7450 = vmatpush1.bf16.msra.mxu0 %v7065
          %7451 = vmatprep.subr.bf16.mxu0 0
          %7452 = vmatpush1.bf16.msra.mxu0 %v7066
          %7453 = vmatprep.subr.bf16.mxu0 0
          %7454 = vmatpush1.bf16.msra.mxu0 %v7067
          %7455 = vmatprep.mubr.bf16.mxu0 %v6556
          %7456 = vmatmul.mubr.bf16.gmra.mrb[0].mxu0 %v6555
          %v7457 = vpop.f32.mrb[0].mxu0
          %v7458 = vadd.f32 %v7361, %v7457
          %v7459 = vpop.f32.mrb[0].mxu0
          %v7460 = vpop.f32.mrb[0].mxu0
          %v7461 = vadd.f32 %v7364, %v7460
          %v7462 = vpop.f32.mrb[0].mxu0
          %7463 = vmatprep.mubr.bf16.mxu0 %v6564
          %7464 = vmatmul.mubr.bf16.gmra.mrb[0].mxu0 %v6563
          %v7465 = vpop.f32.mrb[0].mxu0
          %v7466 = vadd.f32 %v7369, %v7465
          %v7467 = vpop.f32.mrb[0].mxu0
          %v7468 = vpop.f32.mrb[0].mxu0
          %v7469 = vadd.f32 %v7372, %v7468
          %v7470 = vpop.f32.mrb[0].mxu0
          %7471 = vmatprep.mubr.bf16.mxu0 %v6572
          %7472 = vmatmul.mubr.bf16.gmra.mrb[0].mxu0 %v6571
          %v7473 = vpop.f32.mrb[0].mxu0
          %v7474 = vadd.f32 %v7377, %v7473
          %v7475 = vpop.f32.mrb[0].mxu0
          %v7476 = vpop.f32.mrb[0].mxu0
          %v7477 = vadd.f32 %v7380, %v7476
          %v7478 = vpop.f32.mrb[0].mxu0
          %7479 = vmatprep.mubr.bf16.mxu0 %v6580
          %7480 = vmatmul.mubr.bf16.gmra.mrb[0].mxu0 %v6579
          %v7481 = vpop.f32.mrb[0].mxu0
          %v7482 = vadd.f32 %v7385, %v7481
          %v7483 = vpop.f32.mrb[0].mxu0
          %v7484 = vpop.f32.mrb[0].mxu0
          %v7485 = vadd.f32 %v7388, %v7484
          %v7486 = vpop.f32.mrb[0].mxu0
          %7487 = vmatprep.mubr.bf16.mxu0 %v6588
          %7488 = vmatmul.mubr.bf16.gmra.mrb[0].mxu0 %v6587
          %v7489 = vpop.f32.mrb[0].mxu0
          %v7490 = vadd.f32 %v7393, %v7489
          %v7491 = vpop.f32.mrb[0].mxu0
          %v7492 = vpop.f32.mrb[0].mxu0
          %v7493 = vadd.f32 %v7396, %v7492
          %v7494 = vpop.f32.mrb[0].mxu0
          %7495 = vmatprep.mubr.bf16.mxu0 %v6596
          %7496 = vmatmul.mubr.bf16.gmra.mrb[0].mxu0 %v6595
          %v7497 = vpop.f32.mrb[0].mxu0
          %v7498 = vadd.f32 %v7401, %v7497
          %v7499 = vpop.f32.mrb[0].mxu0
          %v7500 = vpop.f32.mrb[0].mxu0
          %v7501 = vadd.f32 %v7404, %v7500
          %v7502 = vpop.f32.mrb[0].mxu0
          %7503 = vmatprep.mubr.bf16.mxu0 %v6604
          %7504 = vmatmul.mubr.bf16.gmra.mrb[0].mxu0 %v6603
          %v7505 = vpop.f32.mrb[0].mxu0
          %v7506 = vadd.f32 %v7409, %v7505
          %v7507 = vpop.f32.mrb[0].mxu0
          %v7508 = vpop.f32.mrb[0].mxu0
          %v7509 = vadd.f32 %v7412, %v7508
          %v7510 = vpop.f32.mrb[0].mxu0
          %7511 = vmatprep.mubr.bf16.mxu0 %v6612
          %7512 = vmatmul.mubr.bf16.gmra.mrb[0].mxu0 %v6611
          %v7513 = vpop.f32.mrb[0].mxu0
          %v7514 = vadd.f32 %v7417, %v7513
          %v7515 = vpop.f32.mrb[0].mxu0
          %v7516 = vpop.f32.mrb[0].mxu0
          %v7517 = vadd.f32 %v7420, %v7516
          %v7518 = vpop.f32.mrb[0].mxu0
          %7519 = vdwg.mxu0
          %7520 = vst [vmem:[%s7] sm:$0xff] %v7458
          %7521 = vst [vmem:[%s7 + $0x8] sm:$0xff] %v7461
          %7522 = vst [vmem:[%s7 + $0x10] sm:$0xff] %v7466
          %7523 = vst [vmem:[%s7 + $0x18] sm:$0xff] %v7469
          %7524 = vst [vmem:[%s7 + $0x20] sm:$0xff] %v7474
          %7525 = vst [vmem:[%s7 + $0x28] sm:$0xff] %v7477
          %7526 = vst [vmem:[%s7 + $0x30] sm:$0xff] %v7482
          %7527 = vst [vmem:[%s7 + $0x38] sm:$0xff] %v7485
          %7528 = vst [vmem:[%s7 + $0x40] sm:$0xff] %v7490
          %7529 = vst [vmem:[%s7 + $0x48] sm:$0xff] %v7493
          %7530 = vst [vmem:[%s7 + $0x50] sm:$0xff] %v7498
          %7531 = vst [vmem:[%s7 + $0x58] sm:$0xff] %v7501
          %7532 = vst [vmem:[%s7 + $0x60] sm:$0xff] %v7506
          %7533 = vst [vmem:[%s7 + $0x68] sm:$0xff] %v7509
          %7534 = vst [vmem:[%s7 + $0x70] sm:$0xff] %v7514
          %7535 = vst [vmem:[%s7 + $0x78] sm:$0xff] %v7517
        $region80: #{mlp_forward.1} parent=47 // pred_fallthru
          _
        // Predicated region
        $region81: #{mlp_forward.1} parent=47 // pred_check
          %p7536 = pneg %p186
        $region82: #{mlp_forward.1} parent=47 // pred_check_branch
          %7538 = sbr.rel (%p7536) target = $region84
        $region83: #{mlp_forward.1} parent=47 // pred_region
          _
        $region84: #{mlp_forward.1} parent=47 // pred_fallthru
          _
        // Predicated region
        $region85: #{mlp_forward.1} parent=47 // pred_check
          %p7539 = pneg %p186
        $region86: #{mlp_forward.1} parent=47 // pred_check_branch
          %7541 = sbr.rel (%p7539) target = $region88
        $region87: #{mlp_forward.1} parent=47 // pred_region
          _
        $region88: #{mlp_forward.1} parent=47 // pred_fallthru
          _
      $region48: #{mlp_forward.1} parent=5 // pred_fallthru
        _
      %p7542 = scmp.le.s32.totalorder 2, %s16
      // Predicated region
      $region89: #{mlp_forward.1} parent=5 // pred_check
        %p7543 = pneg %p7542
      $region90: #{mlp_forward.1} parent=5 // pred_check_branch
        %7545 = sbr.rel (%p7543) target = $region92
      $region91: #{mlp_forward.1} parent=5 // pred_region
        %s7546 = ssub.s32 %s16, 2
      $region92: #{mlp_forward.1} parent=5 // pred_fallthru
        _
    $region6: #{mlp_forward.1} parent=1 // loop_footer
      %s20 = sadd.s32 1, %s16
    $region7: #{mlp_forward.1} parent=1 // loop_footer_branch
      %15 = sbr.rel target = $region3
    $region8: #{mlp_forward.1} parent=1 // loop_exit
      _
    %7547 = vsyncpa [#allocation4], 1
    %s7548 = scalar_lea.sflag [#allocation4], 1
    %7549 = vsyncpa %s7548, 1
    %7550 = vsyncpa [#allocation6], 1
    %7551 = vsyncpa [#allocation10], 1

</llo_original>
